<compile_context>
chip_gen: v6e
topology: v6e:2x2x1
jax: 0.10.0
libtpu: 0.0.40
codegen_flags: <defaults>
</compile_context>

<pallas_src>
import functools

import jax
import jax.numpy as jnp
from jax import lax
from jax.experimental import pallas as pl
from jax.experimental.pallas import tpu as pltpu


# ----------------------------------------------------------------------------
# Pallas kernel
# ----------------------------------------------------------------------------
def _zero_halo(ref, *, H, W, c):
    """Zero only the 1-pixel border of an (H+2, W+2, c) padded VMEM scratch."""
    zrow = jnp.zeros((1, W + 2, c), ref.dtype)
    zcol = jnp.zeros((H, 1, c), ref.dtype)
    ref[0:1, :, :] = zrow                       # top row (incl. corners)
    ref[H + 1:H + 2, :, :] = zrow               # bottom row (incl. corners)
    ref[1:H + 1, 0:1, :] = zcol                 # left column
    ref[1:H + 1, W + 1:W + 2, :] = zcol         # right column


def _conv3x3_bias_relu(xpad_ref, w_ref, b_ref, *, H, W, cin):
    """3x3 'same' conv on a zero-halo-padded bf16 scratch + bias + ReLU.

    Nine shifted-tap MXU dots with an f32 accumulator (no im2col buffer):
        y[p, co] = sum_k dot(tap_k, w[k])[p, co]
    The BN scale is already folded into w; b is the folded BN bias.
    """
    acc = None
    for k in range(9):
        dy, dx = divmod(k, 3)
        tap = xpad_ref[dy:dy + H, dx:dx + W, :].reshape(H * W, cin)
        y = jnp.dot(tap, w_ref[k], preferred_element_type=jnp.float32)
        acc = y if acc is None else acc + y
    return jnp.maximum(acc + b_ref[...], 0.0)            # (H*W, cout) f32


def _decoder_kernel(xl_ref, xa_ref, a2_ref,
                    wlow_ref, blow_ref,
                    w1_ref, b1_ref,
                    w2_ref, b2_ref,
                    wout_ref, bout_ref,
                    o_ref,
                    x3p_ref, x4p_ref,
                    *, H, W, c_aspp, c_low_red, c_3x3, n_cls):
    f32, bf16 = jnp.float32, jnp.bfloat16
    cc = c_low_red + c_aspp

    # Zero only the 1-pixel halos; interiors are fully overwritten below.
    # (Every grid step, so it is correct under v7x megacore sharding where
    #  program_id(0)==0 only runs on one of the two TensorCores.)
    _zero_halo(x3p_ref, H=H, W=W, c=cc)
    _zero_halo(x4p_ref, H=H, W=W, c=c_3x3)

    # ---- conv_low: 1x1 conv (BN scale folded into weight) + bias + ReLU ----
    x1 = jnp.dot(xl_ref[0], wlow_ref[...], preferred_element_type=f32)
    x1 = jnp.maximum(x1 + blow_ref[...], 0.0)            # (H*W, c_low_red) f32

    # ---- bilinear upsample (align_corners=True) as ONE matmul --------------
    #   x2[p*W+q, c] = sum_{i,j} ah[p,i]*aw[q,j]*xa[i,j,c] = (kron(ah,aw)@xa)
    x2 = jnp.dot(a2_ref[...], xa_ref[0], preferred_element_type=f32)   # (H*W, c_aspp)

    # ---- concat (x1 first == torch.cat dim=1): bf16 interior writes --------
    x3p_ref[1:H + 1, 1:W + 1, 0:c_low_red] = x1.astype(bf16).reshape(H, W, c_low_red)
    x3p_ref[1:H + 1, 1:W + 1, c_low_red:cc] = x2.astype(bf16).reshape(H, W, c_aspp)

    # ---- conv_3x3_1 + BN bias + ReLU (9 tap dots, K = cc) ------------------
    x4 = _conv3x3_bias_relu(x3p_ref, w1_ref, b1_ref, H=H, W=W, cin=cc)
    x4p_ref[1:H + 1, 1:W + 1, :] = x4.astype(bf16).reshape(H, W, c_3x3)

    # ---- conv_3x3_2 + BN bias + ReLU (9 tap dots, K = c_3x3) ---------------
    x5 = _conv3x3_bias_relu(x4p_ref, w2_ref, b2_ref, H=H, W=W, cin=c_3x3)

    # ---- conv_out: 1x1 conv + bias, emitted transposed & lane-dense --------
    #   y_t[c, p] = sum_k w_out[c, k] * x5[p, k] + b[c]   -> (n_pad, H*W)
    y_t = jnp.dot(wout_ref[...], x5.T.astype(bf16), preferred_element_type=f32)
    y_t = y_t + bout_ref[...]
    o_ref[0] = y_t[:n_cls]


# ----------------------------------------------------------------------------
# Wrapper (parameter preprocessing is weight-sized, one-time work)
# ----------------------------------------------------------------------------
def _bilinear_matrix(out_size, in_size):
    """1-D bilinear interpolation matrix (out, in), align_corners=True."""
    if out_size == 1:
        src = jnp.zeros((1,), jnp.float32)
    else:
        src = jnp.arange(out_size, dtype=jnp.float32) * (in_size - 1) / (out_size - 1)
    i0 = jnp.clip(jnp.floor(src).astype(jnp.int32), 0, in_size - 1)
    i1 = jnp.clip(i0 + 1, 0, in_size - 1)
    w1 = src - i0.astype(jnp.float32)
    w0 = 1.0 - w1
    rows = jnp.arange(out_size)
    a = jnp.zeros((out_size, in_size), jnp.float32)
    a = a.at[rows, i0].add(w0)
    a = a.at[rows, i1].add(w1)
    return a


def _fuse_bn(bn, eps):
    gamma, beta, mean, var = bn
    scale = gamma / jnp.sqrt(var + eps)
    return scale, beta - mean * scale


def decoder_forward(features_low, features_aspp, params, eps=0.0003):
    """Inputs NCHW (PyTorch convention); output NCHW (N, num_classes, H, W)."""
    N, c_low, H, W = features_low.shape
    _, c_aspp, h, w = features_aspp.shape
    c_low_red = params["w_low"].shape[1]
    c_3x3 = params["w2"].shape[-1]
    n_cls = params["w_out"].shape[-1]
    cc = c_low_red + c_aspp
    n_pad = ((n_cls + 7) // 8) * 8          # sublane-align the tiny class dim
    bf16 = jnp.bfloat16

    # Channels-last, spatially flattened activations (channels on the 128-lane
    # axis); cast to bf16 once in HBM (the MXU consumes bf16 anyway).
    xl = jnp.transpose(features_low, (0, 2, 3, 1)).reshape(N, H * W, c_low).astype(bf16)
    xa = jnp.transpose(features_aspp, (0, 2, 3, 1)).reshape(N, h * w, c_aspp).astype(bf16)

    # Combined bilinear interpolation matrix: (H*W, h*w) = kron(A_h, A_w).
    a2 = jnp.kron(_bilinear_matrix(H, h), _bilinear_matrix(W, w)).astype(bf16)

    # Fold BN scale into the conv weights; only the folded bias stays in-kernel.
    s_low, b_low = _fuse_bn(params["bn_low"], eps)
    s1, b1 = _fuse_bn(params["bn1"], eps)
    s2, b2 = _fuse_bn(params["bn2"], eps)
    w_low = (params["w_low"] * s_low[None, :]).astype(bf16)            # (c_low, c_low_red)
    w1 = (params["w1"] * s1).reshape(9, cc, c_3x3).astype(bf16)        # (9, cc, c_3x3)
    w2 = (params["w2"] * s2).reshape(9, c_3x3, c_3x3).astype(bf16)     # (9, c_3x3, c_3x3)
    # Final 1x1 conv transposed so logits come out (n_cls, H*W) lane-dense.
    w_out = jnp.zeros((n_pad, c_3x3), jnp.float32).at[:n_cls].set(params["w_out"].T)
    b_out = jnp.zeros((n_pad, 1), jnp.float32).at[:n_cls, 0].set(params["b_out"])

    kernel = functools.partial(
        _decoder_kernel, H=H, W=W, c_aspp=c_aspp, c_low_red=c_low_red,
        c_3x3=c_3x3, n_cls=n_cls)

    def bcast(shape):
        return pl.BlockSpec(shape, lambda n, _s=len(shape): (0,) * _s)

    out = pl.pallas_call(
        kernel,
        out_shape=jax.ShapeDtypeStruct((N, n_cls, H * W), jnp.float32),
        grid=(N,),
        in_specs=[
            pl.BlockSpec((1, H * W, c_low), lambda n: (n, 0, 0)),
            pl.BlockSpec((1, h * w, c_aspp), lambda n: (n, 0, 0)),
            bcast((H * W, h * w)),
            bcast((c_low, c_low_red)), bcast((1, c_low_red)),
            bcast((9, cc, c_3x3)), bcast((1, c_3x3)),
            bcast((9, c_3x3, c_3x3)), bcast((1, c_3x3)),
            bcast((n_pad, c_3x3)), bcast((n_pad, 1)),
        ],
        out_specs=pl.BlockSpec((1, n_cls, H * W), lambda n: (n, 0, 0)),
        scratch_shapes=[
            pltpu.VMEM((H + 2, W + 2, cc), bf16),       # halo-padded concat input
            pltpu.VMEM((H + 2, W + 2, c_3x3), bf16),    # halo-padded conv_3x3_1 output
        ],
        compiler_params=pltpu.CompilerParams(
            dimension_semantics=("parallel",)),
    )(xl, xa, a2,
      w_low, b_low.reshape(1, -1),
      w1, b1.reshape(1, -1),
      w2, b2.reshape(1, -1),
      w_out.astype(bf16), b_out)

    # Channel-major, lane-dense kernel output: only a reshape, no transpose.
    return out.reshape(N, n_cls, H, W)


# ----------------------------------------------------------------------------
# Parameters + pure-JAX f32 reference (for the correctness check)
# ----------------------------------------------------------------------------
def init_params(key, c_low, c_aspp, num_classes, c_low_red, c_3x3):
    ks = jax.random.split(key, 8)

    def bn_params(k, c):
        k1, k2, k3, k4 = jax.random.split(k, 4)
        gamma = 1.0 + 0.1 * jax.random.normal(k1, (c,))
        beta = 0.1 * jax.random.normal(k2, (c,))
        mean = 0.1 * jax.random.normal(k3, (c,))
        var = jax.nn.softplus(jax.random.normal(k4, (c,))) + 0.5
        return (gamma, beta, mean, var)

    cc = c_low_red + c_aspp
    params = {
        "w_low": 0.3 * jax.random.normal(ks[0], (c_low, c_low_red)),   # 1x1 (Cin, Cout)
        "bn_low": bn_params(ks[1], c_low_red),
        "w1": 0.1 * jax.random.normal(ks[2], (3, 3, cc, c_3x3)),       # HWIO
        "bn1": bn_params(ks[3], c_3x3),
        "w2": 0.1 * jax.random.normal(ks[4], (3, 3, c_3x3, c_3x3)),    # HWIO
        "bn2": bn_params(ks[5], c_3x3),
        "w_out": 0.1 * jax.random.normal(ks[6], (c_3x3, num_classes)),
        "b_out": 0.1 * jax.random.normal(ks[7], (num_classes,)),
    }
    return jax.tree.map(lambda a: a.astype(jnp.float32), params)


def reference_forward(features_low, features_aspp, params, eps=0.0003):
    hp = lax.Precision.HIGHEST

    def bn(x, p):
        g, b, m, v = p
        return (x - m) / jnp.sqrt(v + eps) * g + b

    dn = ("NHWC", "HWIO", "NHWC")
    H, W = features_low.shape[2], features_low.shape[3]
    h, w = features_aspp.shape[2], features_aspp.shape[3]

    xl = jnp.transpose(features_low, (0, 2, 3, 1))
    x1 = lax.conv_general_dilated(xl, params["w_low"][None, None], (1, 1), "VALID",
                                  dimension_numbers=dn, precision=hp)
    x1 = jnp.maximum(bn(x1, params["bn_low"]), 0.0)

    ah, aw = _bilinear_matrix(H, h), _bilinear_matrix(W, w)
    x2 = jnp.einsum("ph,nchw,qw->npqc", ah, features_aspp, aw, precision=hp)

    x3 = jnp.concatenate([x1, x2], axis=-1)
    x4 = lax.conv_general_dilated(x3, params["w1"], (1, 1), ((1, 1), (1, 1)),
                                  dimension_numbers=dn, precision=hp)
    x4 = jnp.maximum(bn(x4, params["bn1"]), 0.0)
    x5 = lax.conv_general_dilated(x4, params["w2"], (1, 1), ((1, 1), (1, 1)),
                                  dimension_numbers=dn, precision=hp)
    x5 = jnp.maximum(bn(x5, params["bn2"]), 0.0)
    x6 = lax.conv_general_dilated(x5, params["w_out"][None, None], (1, 1), "VALID",
                                  dimension_numbers=dn, precision=hp) + params["b_out"]
    return jnp.transpose(x6, (0, 3, 1, 2))


# ----------------------------------------------------------------------------
if __name__ == "__main__":
    # Small shapes consistent with the module's forward.
    N, c_low, H, W = 2, 6, 16, 16          # low-level features (larger spatial)
    c_aspp, h, w = 16, 8, 8                # ASPP features (smaller spatial)
    num_classes, c_low_red, c_3x3 = 5, 8, 32
    eps = 0.0003                           # nn.BatchNorm2d(c, momentum) -> eps slot

    key = jax.random.PRNGKey(0)
    k_low, k_aspp, k_params = jax.random.split(key, 3)
    features_low = jax.random.normal(k_low, (N, c_low, H, W), jnp.float32)
    features_aspp = jax.random.normal(k_aspp, (N, c_aspp, h, w), jnp.float32)
    params = init_params(k_params, c_low, c_aspp, num_classes, c_low_red, c_3x3)

    fwd = jax.jit(decoder_forward)
    out = jax.block_until_ready(fwd(features_low, features_aspp, params))
    assert out.shape == (N, num_classes, H, W), out.shape

    ref = reference_forward(features_low, features_aspp, params, eps)
    max_err = float(jnp.max(jnp.abs(out - ref)))
    rel_err = float(jnp.linalg.norm(out - ref) / jnp.linalg.norm(ref))
    # Kernel feeds the MXU bf16 operands (f32 accumulation, BN scale folded into
    # the bf16 weights); compare against the full-f32 HIGHEST-precision reference
    # with bf16-level tolerances.
    assert max_err < 0.25, f"max |diff| = {max_err}"
    assert rel_err < 0.02, f"relative L2 error = {rel_err}"

    print("KERNEL_OK")
</pallas_src>

<mosaic_0001>
module attributes {stable_mosaic.version = 11 : i64} {
  func.func private @main(%arg0: i32) attributes {dimension_semantics = [#tpu.dimension_semantics<core_parallel>], iteration_bounds = array<i64: 2>, tpu.core_type = #tpu.core_type<sc_scalar_subcore>, window_params = []} {
    return
  }
}

module attributes {stable_mosaic.version = 11 : i64} {
  func.func private @main(%arg0: i32) attributes {dimension_semantics = [#tpu.dimension_semantics<core_parallel>], iteration_bounds = array<i64: 2>, tpu.core_type = #tpu.core_type<sc_scalar_subcore>, window_params = []} {
    return
  }
}

module attributes {stable_mosaic.version = 11 : i64} {
  func.func @_decoder_kernel(%arg0: i32, %arg1: memref<1x256x6xbf16, #tpu.memory_space<vmem>>, %arg2: memref<1x64x16xbf16, #tpu.memory_space<vmem>>, %arg3: memref<256x64xbf16, #tpu.memory_space<vmem>>, %arg4: memref<6x8xbf16, #tpu.memory_space<vmem>>, %arg5: memref<1x8xf32, #tpu.memory_space<vmem>>, %arg6: memref<9x24x32xbf16, #tpu.memory_space<vmem>>, %arg7: memref<1x32xf32, #tpu.memory_space<vmem>>, %arg8: memref<9x32x32xbf16, #tpu.memory_space<vmem>>, %arg9: memref<1x32xf32, #tpu.memory_space<vmem>>, %arg10: memref<8x32xbf16, #tpu.memory_space<vmem>>, %arg11: memref<8x1xf32, #tpu.memory_space<vmem>>, %arg12: memref<1x5x256xf32, #tpu.memory_space<vmem>>, %arg13: memref<18x18x24xbf16, #tpu.memory_space<vmem>>, %arg14: memref<18x18x32xbf16, #tpu.memory_space<vmem>>) attributes {dimension_semantics = [#tpu.dimension_semantics<parallel>], iteration_bounds = array<i64: 2>, scalar_prefetch = 0 : i64, scratch_operands = 2 : i64, tpu.core_type = #tpu.core_type<tc>, window_params = [{transform_indices = @transform_0, window_bounds = array<i64: 1, 256, 6>}, {transform_indices = @transform_1, window_bounds = array<i64: 1, 64, 16>}, {pipeline_mode = #tpu.pipeline_mode<synchronous>, transform_indices = @transform_2, window_bounds = array<i64: 256, 64>}, {pipeline_mode = #tpu.pipeline_mode<synchronous>, transform_indices = @transform_3, window_bounds = array<i64: 6, 8>}, {pipeline_mode = #tpu.pipeline_mode<synchronous>, transform_indices = @transform_4, window_bounds = array<i64: 1, 8>}, {pipeline_mode = #tpu.pipeline_mode<synchronous>, transform_indices = @transform_5, window_bounds = array<i64: 9, 24, 32>}, {pipeline_mode = #tpu.pipeline_mode<synchronous>, transform_indices = @transform_6, window_bounds = array<i64: 1, 32>}, {pipeline_mode = #tpu.pipeline_mode<synchronous>, transform_indices = @transform_7, window_bounds = array<i64: 9, 32, 32>}, {pipeline_mode = #tpu.pipeline_mode<synchronous>, transform_indices = @transform_8, window_bounds = array<i64: 1, 32>}, {pipeline_mode = #tpu.pipeline_mode<synchronous>, transform_indices = @transform_9, window_bounds = array<i64: 8, 32>}, {pipeline_mode = #tpu.pipeline_mode<synchronous>, transform_indices = @transform_10, window_bounds = array<i64: 8, 1>}, {transform_indices = @transform_11, window_bounds = array<i64: 1, 5, 256>}]} {
    %cst = arith.constant 0.000000e+00 : bf16
    %0 = vector.broadcast %cst : bf16 to vector<1x18x24xbf16>
    %cst_0 = arith.constant 0.000000e+00 : bf16
    %1 = vector.broadcast %cst_0 : bf16 to vector<16x1x24xbf16>
    %c0 = arith.constant 0 : index
    %c0_1 = arith.constant 0 : index
    %c0_2 = arith.constant 0 : index
    %2 = vector.load %arg13[%c0, %c0_1, %c0_2] : memref<18x18x24xbf16, #tpu.memory_space<vmem>>, vector<1x18x24xbf16>
    tpu.vector_store %arg13[%c0, %c0_1, %c0_2], %0 {strides = array<i32>} : memref<18x18x24xbf16, #tpu.memory_space<vmem>>, vector<1x18x24xbf16>,
    %c17 = arith.constant 17 : index
    %c0_3 = arith.constant 0 : index
    %c0_4 = arith.constant 0 : index
    %3 = vector.load %arg13[%c17, %c0_3, %c0_4] : memref<18x18x24xbf16, #tpu.memory_space<vmem>>, vector<1x18x24xbf16>
    tpu.vector_store %arg13[%c17, %c0_3, %c0_4], %0 {strides = array<i32>} : memref<18x18x24xbf16, #tpu.memory_space<vmem>>, vector<1x18x24xbf16>,
    %c1 = arith.constant 1 : index
    %c0_5 = arith.constant 0 : index
    %c0_6 = arith.constant 0 : index
    %4 = vector.load %arg13[%c1, %c0_5, %c0_6] : memref<18x18x24xbf16, #tpu.memory_space<vmem>>, vector<16x1x24xbf16>
    tpu.vector_store %arg13[%c1, %c0_5, %c0_6], %1 {strides = array<i32>} : memref<18x18x24xbf16, #tpu.memory_space<vmem>>, vector<16x1x24xbf16>,
    %c1_7 = arith.constant 1 : index
    %c17_8 = arith.constant 17 : index
    %c0_9 = arith.constant 0 : index
    %5 = vector.load %arg13[%c1_7, %c17_8, %c0_9] : memref<18x18x24xbf16, #tpu.memory_space<vmem>>, vector<16x1x24xbf16>
    tpu.vector_store %arg13[%c1_7, %c17_8, %c0_9], %1 {strides = array<i32>} : memref<18x18x24xbf16, #tpu.memory_space<vmem>>, vector<16x1x24xbf16>,
    %cst_10 = arith.constant 0.000000e+00 : bf16
    %6 = vector.broadcast %cst_10 : bf16 to vector<1x18x32xbf16>
    %cst_11 = arith.constant 0.000000e+00 : bf16
    %7 = vector.broadcast %cst_11 : bf16 to vector<16x1x32xbf16>
    %c0_12 = arith.constant 0 : index
    %c0_13 = arith.constant 0 : index
    %c0_14 = arith.constant 0 : index
    %8 = vector.load %arg14[%c0_12, %c0_13, %c0_14] : memref<18x18x32xbf16, #tpu.memory_space<vmem>>, vector<1x18x32xbf16>
    tpu.vector_store %arg14[%c0_12, %c0_13, %c0_14], %6 {strides = array<i32>} : memref<18x18x32xbf16, #tpu.memory_space<vmem>>, vector<1x18x32xbf16>,
    %c17_15 = arith.constant 17 : index
    %c0_16 = arith.constant 0 : index
    %c0_17 = arith.constant 0 : index
    %9 = vector.load %arg14[%c17_15, %c0_16, %c0_17] : memref<18x18x32xbf16, #tpu.memory_space<vmem>>, vector<1x18x32xbf16>
    tpu.vector_store %arg14[%c17_15, %c0_16, %c0_17], %6 {strides = array<i32>} : memref<18x18x32xbf16, #tpu.memory_space<vmem>>, vector<1x18x32xbf16>,
    %c1_18 = arith.constant 1 : index
    %c0_19 = arith.constant 0 : index
    %c0_20 = arith.constant 0 : index
    %10 = vector.load %arg14[%c1_18, %c0_19, %c0_20] : memref<18x18x32xbf16, #tpu.memory_space<vmem>>, vector<16x1x32xbf16>
    tpu.vector_store %arg14[%c1_18, %c0_19, %c0_20], %7 {strides = array<i32>} : memref<18x18x32xbf16, #tpu.memory_space<vmem>>, vector<16x1x32xbf16>,
    %c1_21 = arith.constant 1 : index
    %c17_22 = arith.constant 17 : index
    %c0_23 = arith.constant 0 : index
    %11 = vector.load %arg14[%c1_21, %c17_22, %c0_23] : memref<18x18x32xbf16, #tpu.memory_space<vmem>>, vector<16x1x32xbf16>
    tpu.vector_store %arg14[%c1_21, %c17_22, %c0_23], %7 {strides = array<i32>} : memref<18x18x32xbf16, #tpu.memory_space<vmem>>, vector<16x1x32xbf16>,
    %c0_24 = arith.constant 0 : index
    %c0_25 = arith.constant 0 : index
    %c0_26 = arith.constant 0 : index
    %12 = vector.load %arg1[%c0_24, %c0_25, %c0_26] : memref<1x256x6xbf16, #tpu.memory_space<vmem>>, vector<1x256x6xbf16>
    %13 = vector.shape_cast %12 : vector<1x256x6xbf16> to vector<256x6xbf16>
    %c0_27 = arith.constant 0 : index
    %c0_28 = arith.constant 0 : index
    %14 = vector.load %arg4[%c0_27, %c0_28] : memref<6x8xbf16, #tpu.memory_space<vmem>>, vector<6x8xbf16>
    %cst_29 = arith.constant dense<0.000000e+00> : vector<256x8xf32>
    %15 = tpu.matmul %13, %14, %cst_29 {dimension_numbers = #tpu.dot_dimension_numbers<[1], [0], [0], [1], [0, 0, 1, 1], [], []>} : vector<256x6xbf16>, vector<6x8xbf16>, vector<256x8xf32> -> vector<256x8xf32>
    %c0_30 = arith.constant 0 : index
    %c0_31 = arith.constant 0 : index
    %16 = vector.load %arg5[%c0_30, %c0_31] : memref<1x8xf32, #tpu.memory_space<vmem>>, vector<1x8xf32>
    %17 = vector.broadcast %16 : vector<1x8xf32> to vector<256x8xf32>
    %18 = arith.addf %15, %17 : vector<256x8xf32>
    %cst_32 = arith.constant 0.000000e+00 : f32
    %19 = vector.broadcast %cst_32 : f32 to vector<256x8xf32>
    %20 = arith.maximumf %18, %19 : vector<256x8xf32>
    %c0_33 = arith.constant 0 : index
    %c0_34 = arith.constant 0 : index
    %21 = vector.load %arg3[%c0_33, %c0_34] : memref<256x64xbf16, #tpu.memory_space<vmem>>, vector<256x64xbf16>
    %c0_35 = arith.constant 0 : index
    %c0_36 = arith.constant 0 : index
    %c0_37 = arith.constant 0 : index
    %22 = vector.load %arg2[%c0_35, %c0_36, %c0_37] : memref<1x64x16xbf16, #tpu.memory_space<vmem>>, vector<1x64x16xbf16>
    %23 = vector.shape_cast %22 : vector<1x64x16xbf16> to vector<64x16xbf16>
    %cst_38 = arith.constant dense<0.000000e+00> : vector<256x16xf32>
    %24 = tpu.matmul %21, %23, %cst_38 {dimension_numbers = #tpu.dot_dimension_numbers<[1], [0], [0], [1], [0, 0, 1, 1], [], []>} : vector<256x64xbf16>, vector<64x16xbf16>, vector<256x16xf32> -> vector<256x16xf32>
    %25 = arith.truncf %20 : vector<256x8xf32> to vector<256x8xbf16>
    %26 = vector.shape_cast %25 : vector<256x8xbf16> to vector<16x16x8xbf16>
    %c1_39 = arith.constant 1 : index
    %c1_40 = arith.constant 1 : index
    %c0_41 = arith.constant 0 : index
    %27 = vector.load %arg13[%c1_39, %c1_40, %c0_41] : memref<18x18x24xbf16, #tpu.memory_space<vmem>>, vector<16x16x8xbf16>
    tpu.vector_store %arg13[%c1_39, %c1_40, %c0_41], %26 {strides = array<i32>} : memref<18x18x24xbf16, #tpu.memory_space<vmem>>, vector<16x16x8xbf16>,
    %28 = arith.truncf %24 : vector<256x16xf32> to vector<256x16xbf16>
    %29 = vector.shape_cast %28 : vector<256x16xbf16> to vector<16x16x16xbf16>
    %c1_42 = arith.constant 1 : index
    %c1_43 = arith.constant 1 : index
    %c8 = arith.constant 8 : index
    %30 = vector.load %arg13[%c1_42, %c1_43, %c8] : memref<18x18x24xbf16, #tpu.memory_space<vmem>>, vector<16x16x16xbf16>
    tpu.vector_store %arg13[%c1_42, %c1_43, %c8], %29 {strides = array<i32>} : memref<18x18x24xbf16, #tpu.memory_space<vmem>>, vector<16x16x16xbf16>,
    %c0_44 = arith.constant 0 : index
    %c0_45 = arith.constant 0 : index
    %c0_46 = arith.constant 0 : index
    %31 = vector.load %arg13[%c0_44, %c0_45, %c0_46] : memref<18x18x24xbf16, #tpu.memory_space<vmem>>, vector<16x16x24xbf16>
    %32 = vector.shape_cast %31 : vector<16x16x24xbf16> to vector<256x24xbf16>
    %c0_47 = arith.constant 0 : index
    %c0_48 = arith.constant 0 : index
    %c0_49 = arith.constant 0 : index
    %33 = vector.load %arg6[%c0_47, %c0_48, %c0_49] : memref<9x24x32xbf16, #tpu.memory_space<vmem>>, vector<1x24x32xbf16>
    %34 = vector.shape_cast %33 : vector<1x24x32xbf16> to vector<24x32xbf16>
    %cst_50 = arith.constant dense<0.000000e+00> : vector<256x32xf32>
    %35 = tpu.matmul %32, %34, %cst_50 {dimension_numbers = #tpu.dot_dimension_numbers<[1], [0], [0], [1], [0, 0, 1, 1], [], []>} : vector<256x24xbf16>, vector<24x32xbf16>, vector<256x32xf32> -> vector<256x32xf32>
    %c0_51 = arith.constant 0 : index
    %c1_52 = arith.constant 1 : index
    %c0_53 = arith.constant 0 : index
    %36 = vector.load %arg13[%c0_51, %c1_52, %c0_53] : memref<18x18x24xbf16, #tpu.memory_space<vmem>>, vector<16x16x24xbf16>
    %37 = vector.shape_cast %36 : vector<16x16x24xbf16> to vector<256x24xbf16>
    %c1_54 = arith.constant 1 : index
    %c0_55 = arith.constant 0 : index
    %c0_56 = arith.constant 0 : index
    %38 = vector.load %arg6[%c1_54, %c0_55, %c0_56] : memref<9x24x32xbf16, #tpu.memory_space<vmem>>, vector<1x24x32xbf16>
    %39 = vector.shape_cast %38 : vector<1x24x32xbf16> to vector<24x32xbf16>
    %cst_57 = arith.constant dense<0.000000e+00> : vector<256x32xf32>
    %40 = tpu.matmul %37, %39, %cst_57 {dimension_numbers = #tpu.dot_dimension_numbers<[1], [0], [0], [1], [0, 0, 1, 1], [], []>} : vector<256x24xbf16>, vector<24x32xbf16>, vector<256x32xf32> -> vector<256x32xf32>
    %41 = arith.addf %35, %40 : vector<256x32xf32>
    %c0_58 = arith.constant 0 : index
    %c2 = arith.constant 2 : index
    %c0_59 = arith.constant 0 : index
    %42 = vector.load %arg13[%c0_58, %c2, %c0_59] : memref<18x18x24xbf16, #tpu.memory_space<vmem>>, vector<16x16x24xbf16>
    %43 = vector.shape_cast %42 : vector<16x16x24xbf16> to vector<256x24xbf16>
    %c2_60 = arith.constant 2 : index
    %c0_61 = arith.constant 0 : index
    %c0_62 = arith.constant 0 : index
    %44 = vector.load %arg6[%c2_60, %c0_61, %c0_62] : memref<9x24x32xbf16, #tpu.memory_space<vmem>>, vector<1x24x32xbf16>
    %45 = vector.shape_cast %44 : vector<1x24x32xbf16> to vector<24x32xbf16>
    %cst_63 = arith.constant dense<0.000000e+00> : vector<256x32xf32>
    %46 = tpu.matmul %43, %45, %cst_63 {dimension_numbers = #tpu.dot_dimension_numbers<[1], [0], [0], [1], [0, 0, 1, 1], [], []>} : vector<256x24xbf16>, vector<24x32xbf16>, vector<256x32xf32> -> vector<256x32xf32>
    %47 = arith.addf %41, %46 : vector<256x32xf32>
    %c1_64 = arith.constant 1 : index
    %c0_65 = arith.constant 0 : index
    %c0_66 = arith.constant 0 : index
    %48 = vector.load %arg13[%c1_64, %c0_65, %c0_66] : memref<18x18x24xbf16, #tpu.memory_space<vmem>>, vector<16x16x24xbf16>
    %49 = vector.shape_cast %48 : vector<16x16x24xbf16> to vector<256x24xbf16>
    %c3 = arith.constant 3 : index
    %c0_67 = arith.constant 0 : index
    %c0_68 = arith.constant 0 : index
    %50 = vector.load %arg6[%c3, %c0_67, %c0_68] : memref<9x24x32xbf16, #tpu.memory_space<vmem>>, vector<1x24x32xbf16>
    %51 = vector.shape_cast %50 : vector<1x24x32xbf16> to vector<24x32xbf16>
    %cst_69 = arith.constant dense<0.000000e+00> : vector<256x32xf32>
    %52 = tpu.matmul %49, %51, %cst_69 {dimension_numbers = #tpu.dot_dimension_numbers<[1], [0], [0], [1], [0, 0, 1, 1], [], []>} : vector<256x24xbf16>, vector<24x32xbf16>, vector<256x32xf32> -> vector<256x32xf32>
    %53 = arith.addf %47, %52 : vector<256x32xf32>
    %c1_70 = arith.constant 1 : index
    %c1_71 = arith.constant 1 : index
    %c0_72 = arith.constant 0 : index
    %54 = vector.load %arg13[%c1_70, %c1_71, %c0_72] : memref<18x18x24xbf16, #tpu.memory_space<vmem>>, vector<16x16x24xbf16>
    %55 = vector.shape_cast %54 : vector<16x16x24xbf16> to vector<256x24xbf16>
    %c4 = arith.constant 4 : index
    %c0_73 = arith.constant 0 : index
    %c0_74 = arith.constant 0 : index
    %56 = vector.load %arg6[%c4, %c0_73, %c0_74] : memref<9x24x32xbf16, #tpu.memory_space<vmem>>, vector<1x24x32xbf16>
    %57 = vector.shape_cast %56 : vector<1x24x32xbf16> to vector<24x32xbf16>
    %cst_75 = arith.constant dense<0.000000e+00> : vector<256x32xf32>
    %58 = tpu.matmul %55, %57, %cst_75 {dimension_numbers = #tpu.dot_dimension_numbers<[1], [0], [0], [1], [0, 0, 1, 1], [], []>} : vector<256x24xbf16>, vector<24x32xbf16>, vector<256x32xf32> -> vector<256x32xf32>
    %59 = arith.addf %53, %58 : vector<256x32xf32>
    %c1_76 = arith.constant 1 : index
    %c2_77 = arith.constant 2 : index
    %c0_78 = arith.constant 0 : index
    %60 = vector.load %arg13[%c1_76, %c2_77, %c0_78] : memref<18x18x24xbf16, #tpu.memory_space<vmem>>, vector<16x16x24xbf16>
    %61 = vector.shape_cast %60 : vector<16x16x24xbf16> to vector<256x24xbf16>
    %c5 = arith.constant 5 : index
    %c0_79 = arith.constant 0 : index
    %c0_80 = arith.constant 0 : index
    %62 = vector.load %arg6[%c5, %c0_79, %c0_80] : memref<9x24x32xbf16, #tpu.memory_space<vmem>>, vector<1x24x32xbf16>
    %63 = vector.shape_cast %62 : vector<1x24x32xbf16> to vector<24x32xbf16>
    %cst_81 = arith.constant dense<0.000000e+00> : vector<256x32xf32>
    %64 = tpu.matmul %61, %63, %cst_81 {dimension_numbers = #tpu.dot_dimension_numbers<[1], [0], [0], [1], [0, 0, 1, 1], [], []>} : vector<256x24xbf16>, vector<24x32xbf16>, vector<256x32xf32> -> vector<256x32xf32>
    %65 = arith.addf %59, %64 : vector<256x32xf32>
    %c2_82 = arith.constant 2 : index
    %c0_83 = arith.constant 0 : index
    %c0_84 = arith.constant 0 : index
    %66 = vector.load %arg13[%c2_82, %c0_83, %c0_84] : memref<18x18x24xbf16, #tpu.memory_space<vmem>>, vector<16x16x24xbf16>
    %67 = vector.shape_cast %66 : vector<16x16x24xbf16> to vector<256x24xbf16>
    %c6 = arith.constant 6 : index
    %c0_85 = arith.constant 0 : index
    %c0_86 = arith.constant 0 : index
    %68 = vector.load %arg6[%c6, %c0_85, %c0_86] : memref<9x24x32xbf16, #tpu.memory_space<vmem>>, vector<1x24x32xbf16>
    %69 = vector.shape_cast %68 : vector<1x24x32xbf16> to vector<24x32xbf16>
    %cst_87 = arith.constant dense<0.000000e+00> : vector<256x32xf32>
    %70 = tpu.matmul %67, %69, %cst_87 {dimension_numbers = #tpu.dot_dimension_numbers<[1], [0], [0], [1], [0, 0, 1, 1], [], []>} : vector<256x24xbf16>, vector<24x32xbf16>, vector<256x32xf32> -> vector<256x32xf32>
    %71 = arith.addf %65, %70 : vector<256x32xf32>
    %c2_88 = arith.constant 2 : index
    %c1_89 = arith.constant 1 : index
    %c0_90 = arith.constant 0 : index
    %72 = vector.load %arg13[%c2_88, %c1_89, %c0_90] : memref<18x18x24xbf16, #tpu.memory_space<vmem>>, vector<16x16x24xbf16>
    %73 = vector.shape_cast %72 : vector<16x16x24xbf16> to vector<256x24xbf16>
    %c7 = arith.constant 7 : index
    %c0_91 = arith.constant 0 : index
    %c0_92 = arith.constant 0 : index
    %74 = vector.load %arg6[%c7, %c0_91, %c0_92] : memref<9x24x32xbf16, #tpu.memory_space<vmem>>, vector<1x24x32xbf16>
    %75 = vector.shape_cast %74 : vector<1x24x32xbf16> to vector<24x32xbf16>
    %cst_93 = arith.constant dense<0.000000e+00> : vector<256x32xf32>
    %76 = tpu.matmul %73, %75, %cst_93 {dimension_numbers = #tpu.dot_dimension_numbers<[1], [0], [0], [1], [0, 0, 1, 1], [], []>} : vector<256x24xbf16>, vector<24x32xbf16>, vector<256x32xf32> -> vector<256x32xf32>
    %77 = arith.addf %71, %76 : vector<256x32xf32>
    %c2_94 = arith.constant 2 : index
    %c2_95 = arith.constant 2 : index
    %c0_96 = arith.constant 0 : index
    %78 = vector.load %arg13[%c2_94, %c2_95, %c0_96] : memref<18x18x24xbf16, #tpu.memory_space<vmem>>, vector<16x16x24xbf16>
    %79 = vector.shape_cast %78 : vector<16x16x24xbf16> to vector<256x24xbf16>
    %c8_97 = arith.constant 8 : index
    %c0_98 = arith.constant 0 : index
    %c0_99 = arith.constant 0 : index
    %80 = vector.load %arg6[%c8_97, %c0_98, %c0_99] : memref<9x24x32xbf16, #tpu.memory_space<vmem>>, vector<1x24x32xbf16>
    %81 = vector.shape_cast %80 : vector<1x24x32xbf16> to vector<24x32xbf16>
    %cst_100 = arith.constant dense<0.000000e+00> : vector<256x32xf32>
    %82 = tpu.matmul %79, %81, %cst_100 {dimension_numbers = #tpu.dot_dimension_numbers<[1], [0], [0], [1], [0, 0, 1, 1], [], []>} : vector<256x24xbf16>, vector<24x32xbf16>, vector<256x32xf32> -> vector<256x32xf32>
    %83 = arith.addf %77, %82 : vector<256x32xf32>
    %c0_101 = arith.constant 0 : index
    %c0_102 = arith.constant 0 : index
    %84 = vector.load %arg7[%c0_101, %c0_102] : memref<1x32xf32, #tpu.memory_space<vmem>>, vector<1x32xf32>
    %85 = vector.broadcast %84 : vector<1x32xf32> to vector<256x32xf32>
    %86 = arith.addf %83, %85 : vector<256x32xf32>
    %cst_103 = arith.constant 0.000000e+00 : f32
    %87 = vector.broadcast %cst_103 : f32 to vector<256x32xf32>
    %88 = arith.maximumf %86, %87 : vector<256x32xf32>
    %89 = arith.truncf %88 : vector<256x32xf32> to vector<256x32xbf16>
    %90 = vector.shape_cast %89 : vector<256x32xbf16> to vector<16x16x32xbf16>
    %c1_104 = arith.constant 1 : index
    %c1_105 = arith.constant 1 : index
    %c0_106 = arith.constant 0 : index
    %91 = vector.load %arg14[%c1_104, %c1_105, %c0_106] : memref<18x18x32xbf16, #tpu.memory_space<vmem>>, vector<16x16x32xbf16>
    tpu.vector_store %arg14[%c1_104, %c1_105, %c0_106], %90 {strides = array<i32>} : memref<18x18x32xbf16, #tpu.memory_space<vmem>>, vector<16x16x32xbf16>,
    %c0_107 = arith.constant 0 : index
    %c0_108 = arith.constant 0 : index
    %c0_109 = arith.constant 0 : index
    %92 = vector.load %arg14[%c0_107, %c0_108, %c0_109] : memref<18x18x32xbf16, #tpu.memory_space<vmem>>, vector<16x16x32xbf16>
    %93 = vector.shape_cast %92 : vector<16x16x32xbf16> to vector<256x32xbf16>
    %c0_110 = arith.constant 0 : index
    %c0_111 = arith.constant 0 : index
    %c0_112 = arith.constant 0 : index
    %94 = vector.load %arg8[%c0_110, %c0_111, %c0_112] : memref<9x32x32xbf16, #tpu.memory_space<vmem>>, vector<1x32x32xbf16>
    %95 = vector.shape_cast %94 : vector<1x32x32xbf16> to vector<32x32xbf16>
    %cst_113 = arith.constant dense<0.000000e+00> : vector<256x32xf32>
    %96 = tpu.matmul %93, %95, %cst_113 {dimension_numbers = #tpu.dot_dimension_numbers<[1], [0], [0], [1], [0, 0, 1, 1], [], []>} : vector<256x32xbf16>, vector<32x32xbf16>, vector<256x32xf32> -> vector<256x32xf32>
    %c0_114 = arith.constant 0 : index
    %c1_115 = arith.constant 1 : index
    %c0_116 = arith.constant 0 : index
    %97 = vector.load %arg14[%c0_114, %c1_115, %c0_116] : memref<18x18x32xbf16, #tpu.memory_space<vmem>>, vector<16x16x32xbf16>
    %98 = vector.shape_cast %97 : vector<16x16x32xbf16> to vector<256x32xbf16>
    %c1_117 = arith.constant 1 : index
    %c0_118 = arith.constant 0 : index
    %c0_119 = arith.constant 0 : index
    %99 = vector.load %arg8[%c1_117, %c0_118, %c0_119] : memref<9x32x32xbf16, #tpu.memory_space<vmem>>, vector<1x32x32xbf16>
    %100 = vector.shape_cast %99 : vector<1x32x32xbf16> to vector<32x32xbf16>
    %cst_120 = arith.constant dense<0.000000e+00> : vector<256x32xf32>
    %101 = tpu.matmul %98, %100, %cst_120 {dimension_numbers = #tpu.dot_dimension_numbers<[1], [0], [0], [1], [0, 0, 1, 1], [], []>} : vector<256x32xbf16>, vector<32x32xbf16>, vector<256x32xf32> -> vector<256x32xf32>
    %102 = arith.addf %96, %101 : vector<256x32xf32>
    %c0_121 = arith.constant 0 : index
    %c2_122 = arith.constant 2 : index
    %c0_123 = arith.constant 0 : index
    %103 = vector.load %arg14[%c0_121, %c2_122, %c0_123] : memref<18x18x32xbf16, #tpu.memory_space<vmem>>, vector<16x16x32xbf16>
    %104 = vector.shape_cast %103 : vector<16x16x32xbf16> to vector<256x32xbf16>
    %c2_124 = arith.constant 2 : index
    %c0_125 = arith.constant 0 : index
    %c0_126 = arith.constant 0 : index
    %105 = vector.load %arg8[%c2_124, %c0_125, %c0_126] : memref<9x32x32xbf16, #tpu.memory_space<vmem>>, vector<1x32x32xbf16>
    %106 = vector.shape_cast %105 : vector<1x32x32xbf16> to vector<32x32xbf16>
    %cst_127 = arith.constant dense<0.000000e+00> : vector<256x32xf32>
    %107 = tpu.matmul %104, %106, %cst_127 {dimension_numbers = #tpu.dot_dimension_numbers<[1], [0], [0], [1], [0, 0, 1, 1], [], []>} : vector<256x32xbf16>, vector<32x32xbf16>, vector<256x32xf32> -> vector<256x32xf32>
    %108 = arith.addf %102, %107 : vector<256x32xf32>
    %c1_128 = arith.constant 1 : index
    %c0_129 = arith.constant 0 : index
    %c0_130 = arith.constant 0 : index
    %109 = vector.load %arg14[%c1_128, %c0_129, %c0_130] : memref<18x18x32xbf16, #tpu.memory_space<vmem>>, vector<16x16x32xbf16>
    %110 = vector.shape_cast %109 : vector<16x16x32xbf16> to vector<256x32xbf16>
    %c3_131 = arith.constant 3 : index
    %c0_132 = arith.constant 0 : index
    %c0_133 = arith.constant 0 : index
    %111 = vector.load %arg8[%c3_131, %c0_132, %c0_133] : memref<9x32x32xbf16, #tpu.memory_space<vmem>>, vector<1x32x32xbf16>
    %112 = vector.shape_cast %111 : vector<1x32x32xbf16> to vector<32x32xbf16>
    %cst_134 = arith.constant dense<0.000000e+00> : vector<256x32xf32>
    %113 = tpu.matmul %110, %112, %cst_134 {dimension_numbers = #tpu.dot_dimension_numbers<[1], [0], [0], [1], [0, 0, 1, 1], [], []>} : vector<256x32xbf16>, vector<32x32xbf16>, vector<256x32xf32> -> vector<256x32xf32>
    %114 = arith.addf %108, %113 : vector<256x32xf32>
    %c1_135 = arith.constant 1 : index
    %c1_136 = arith.constant 1 : index
    %c0_137 = arith.constant 0 : index
    %115 = vector.load %arg14[%c1_135, %c1_136, %c0_137] : memref<18x18x32xbf16, #tpu.memory_space<vmem>>, vector<16x16x32xbf16>
    %116 = vector.shape_cast %115 : vector<16x16x32xbf16> to vector<256x32xbf16>
    %c4_138 = arith.constant 4 : index
    %c0_139 = arith.constant 0 : index
    %c0_140 = arith.constant 0 : index
    %117 = vector.load %arg8[%c4_138, %c0_139, %c0_140] : memref<9x32x32xbf16, #tpu.memory_space<vmem>>, vector<1x32x32xbf16>
    %118 = vector.shape_cast %117 : vector<1x32x32xbf16> to vector<32x32xbf16>
    %cst_141 = arith.constant dense<0.000000e+00> : vector<256x32xf32>
    %119 = tpu.matmul %116, %118, %cst_141 {dimension_numbers = #tpu.dot_dimension_numbers<[1], [0], [0], [1], [0, 0, 1, 1], [], []>} : vector<256x32xbf16>, vector<32x32xbf16>, vector<256x32xf32> -> vector<256x32xf32>
    %120 = arith.addf %114, %119 : vector<256x32xf32>
    %c1_142 = arith.constant 1 : index
    %c2_143 = arith.constant 2 : index
    %c0_144 = arith.constant 0 : index
    %121 = vector.load %arg14[%c1_142, %c2_143, %c0_144] : memref<18x18x32xbf16, #tpu.memory_space<vmem>>, vector<16x16x32xbf16>
    %122 = vector.shape_cast %121 : vector<16x16x32xbf16> to vector<256x32xbf16>
    %c5_145 = arith.constant 5 : index
    %c0_146 = arith.constant 0 : index
    %c0_147 = arith.constant 0 : index
    %123 = vector.load %arg8[%c5_145, %c0_146, %c0_147] : memref<9x32x32xbf16, #tpu.memory_space<vmem>>, vector<1x32x32xbf16>
    %124 = vector.shape_cast %123 : vector<1x32x32xbf16> to vector<32x32xbf16>
    %cst_148 = arith.constant dense<0.000000e+00> : vector<256x32xf32>
    %125 = tpu.matmul %122, %124, %cst_148 {dimension_numbers = #tpu.dot_dimension_numbers<[1], [0], [0], [1], [0, 0, 1, 1], [], []>} : vector<256x32xbf16>, vector<32x32xbf16>, vector<256x32xf32> -> vector<256x32xf32>
    %126 = arith.addf %120, %125 : vector<256x32xf32>
    %c2_149 = arith.constant 2 : index
    %c0_150 = arith.constant 0 : index
    %c0_151 = arith.constant 0 : index
    %127 = vector.load %arg14[%c2_149, %c0_150, %c0_151] : memref<18x18x32xbf16, #tpu.memory_space<vmem>>, vector<16x16x32xbf16>
    %128 = vector.shape_cast %127 : vector<16x16x32xbf16> to vector<256x32xbf16>
    %c6_152 = arith.constant 6 : index
    %c0_153 = arith.constant 0 : index
    %c0_154 = arith.constant 0 : index
    %129 = vector.load %arg8[%c6_152, %c0_153, %c0_154] : memref<9x32x32xbf16, #tpu.memory_space<vmem>>, vector<1x32x32xbf16>
    %130 = vector.shape_cast %129 : vector<1x32x32xbf16> to vector<32x32xbf16>
    %cst_155 = arith.constant dense<0.000000e+00> : vector<256x32xf32>
    %131 = tpu.matmul %128, %130, %cst_155 {dimension_numbers = #tpu.dot_dimension_numbers<[1], [0], [0], [1], [0, 0, 1, 1], [], []>} : vector<256x32xbf16>, vector<32x32xbf16>, vector<256x32xf32> -> vector<256x32xf32>
    %132 = arith.addf %126, %131 : vector<256x32xf32>
    %c2_156 = arith.constant 2 : index
    %c1_157 = arith.constant 1 : index
    %c0_158 = arith.constant 0 : index
    %133 = vector.load %arg14[%c2_156, %c1_157, %c0_158] : memref<18x18x32xbf16, #tpu.memory_space<vmem>>, vector<16x16x32xbf16>
    %134 = vector.shape_cast %133 : vector<16x16x32xbf16> to vector<256x32xbf16>
    %c7_159 = arith.constant 7 : index
    %c0_160 = arith.constant 0 : index
    %c0_161 = arith.constant 0 : index
    %135 = vector.load %arg8[%c7_159, %c0_160, %c0_161] : memref<9x32x32xbf16, #tpu.memory_space<vmem>>, vector<1x32x32xbf16>
    %136 = vector.shape_cast %135 : vector<1x32x32xbf16> to vector<32x32xbf16>
    %cst_162 = arith.constant dense<0.000000e+00> : vector<256x32xf32>
    %137 = tpu.matmul %134, %136, %cst_162 {dimension_numbers = #tpu.dot_dimension_numbers<[1], [0], [0], [1], [0, 0, 1, 1], [], []>} : vector<256x32xbf16>, vector<32x32xbf16>, vector<256x32xf32> -> vector<256x32xf32>
    %138 = arith.addf %132, %137 : vector<256x32xf32>
    %c2_163 = arith.constant 2 : index
    %c2_164 = arith.constant 2 : index
    %c0_165 = arith.constant 0 : index
    %139 = vector.load %arg14[%c2_163, %c2_164, %c0_165] : memref<18x18x32xbf16, #tpu.memory_space<vmem>>, vector<16x16x32xbf16>
    %140 = vector.shape_cast %139 : vector<16x16x32xbf16> to vector<256x32xbf16>
    %c8_166 = arith.constant 8 : index
    %c0_167 = arith.constant 0 : index
    %c0_168 = arith.constant 0 : index
    %141 = vector.load %arg8[%c8_166, %c0_167, %c0_168] : memref<9x32x32xbf16, #tpu.memory_space<vmem>>, vector<1x32x32xbf16>
    %142 = vector.shape_cast %141 : vector<1x32x32xbf16> to vector<32x32xbf16>
    %cst_169 = arith.constant dense<0.000000e+00> : vector<256x32xf32>
    %143 = tpu.matmul %140, %142, %cst_169 {dimension_numbers = #tpu.dot_dimension_numbers<[1], [0], [0], [1], [0, 0, 1, 1], [], []>} : vector<256x32xbf16>, vector<32x32xbf16>, vector<256x32xf32> -> vector<256x32xf32>
    %144 = arith.addf %138, %143 : vector<256x32xf32>
    %c0_170 = arith.constant 0 : index
    %c0_171 = arith.constant 0 : index
    %145 = vector.load %arg9[%c0_170, %c0_171] : memref<1x32xf32, #tpu.memory_space<vmem>>, vector<1x32xf32>
    %146 = vector.broadcast %145 : vector<1x32xf32> to vector<256x32xf32>
    %147 = arith.addf %144, %146 : vector<256x32xf32>
    %cst_172 = arith.constant 0.000000e+00 : f32
    %148 = vector.broadcast %cst_172 : f32 to vector<256x32xf32>
    %149 = arith.maximumf %147, %148 : vector<256x32xf32>
    %c0_173 = arith.constant 0 : index
    %c0_174 = arith.constant 0 : index
    %150 = vector.load %arg10[%c0_173, %c0_174] : memref<8x32xbf16, #tpu.memory_space<vmem>>, vector<8x32xbf16>
    %151 = tpu.transpose %149, [1, 0] : vector<256x32xf32> -> vector<32x256xf32>
    %152 = arith.truncf %151 : vector<32x256xf32> to vector<32x256xbf16>
    %cst_175 = arith.constant dense<0.000000e+00> : vector<8x256xf32>
    %153 = tpu.matmul %150, %152, %cst_175 {dimension_numbers = #tpu.dot_dimension_numbers<[1], [0], [0], [1], [0, 0, 1, 1], [], []>} : vector<8x32xbf16>, vector<32x256xbf16>, vector<8x256xf32> -> vector<8x256xf32>
    %c0_176 = arith.constant 0 : index
    %c0_177 = arith.constant 0 : index
    %154 = vector.load %arg11[%c0_176, %c0_177] : memref<8x1xf32, #tpu.memory_space<vmem>>, vector<8x1xf32>
    %155 = vector.broadcast %154 : vector<8x1xf32> to vector<8x256xf32>
    %156 = arith.addf %153, %155 : vector<8x256xf32>
    %157 = vector.extract_strided_slice %156 {offsets = [0, 0], sizes = [5, 256], strides = [1, 1]} : vector<8x256xf32> to vector<5x256xf32>
    %c0_178 = arith.constant 0 : index
    %c0_179 = arith.constant 0 : index
    %c0_180 = arith.constant 0 : index
    %158 = vector.load %arg12[%c0_178, %c0_179, %c0_180] : memref<1x5x256xf32, #tpu.memory_space<vmem>>, vector<1x5x256xf32>
    %159 = vector.shape_cast %158 : vector<1x5x256xf32> to vector<5x256xf32>
    %160 = vector.shape_cast %157 : vector<5x256xf32> to vector<1x5x256xf32>
    tpu.vector_store %arg12[%c0_178, %c0_179, %c0_180], %160 {strides = array<i32>} : memref<1x5x256xf32, #tpu.memory_space<vmem>>, vector<1x5x256xf32>,
    return
  }
  func.func @transform_0(%arg0: i32) -> (i32, i32, i32) {
    %c0_i32 = arith.constant 0 : i32
    %c0_i32_0 = arith.constant 0 : i32
    %c0_i32_1 = arith.constant 0 : i32
    return %arg0, %c0_i32, %c0_i32_0 : i32, i32, i32
  }
  func.func @transform_1(%arg0: i32) -> (i32, i32, i32) {
    %c0_i32 = arith.constant 0 : i32
    %c0_i32_0 = arith.constant 0 : i32
    %c0_i32_1 = arith.constant 0 : i32
    return %arg0, %c0_i32, %c0_i32_0 : i32, i32, i32
  }
  func.func @transform_2(%arg0: i32) -> (i32, i32) {
    %c0_i32 = arith.constant 0 : i32
    %c0_i32_0 = arith.constant 0 : i32
    %c0_i32_1 = arith.constant 0 : i32
    return %c0_i32, %c0_i32_0 : i32, i32
  }
  func.func @transform_3(%arg0: i32) -> (i32, i32) {
    %c0_i32 = arith.constant 0 : i32
    %c0_i32_0 = arith.constant 0 : i32
    %c0_i32_1 = arith.constant 0 : i32
    return %c0_i32, %c0_i32_0 : i32, i32
  }
  func.func @transform_4(%arg0: i32) -> (i32, i32) {
    %c0_i32 = arith.constant 0 : i32
    %c0_i32_0 = arith.constant 0 : i32
    %c0_i32_1 = arith.constant 0 : i32
    return %c0_i32, %c0_i32_0 : i32, i32
  }
  func.func @transform_5(%arg0: i32) -> (i32, i32, i32) {
    %c0_i32 = arith.constant 0 : i32
    %c0_i32_0 = arith.constant 0 : i32
    %c0_i32_1 = arith.constant 0 : i32
    %c0_i32_2 = arith.constant 0 : i32
    return %c0_i32, %c0_i32_0, %c0_i32_1 : i32, i32, i32
  }
  func.func @transform_6(%arg0: i32) -> (i32, i32) {
    %c0_i32 = arith.constant 0 : i32
    %c0_i32_0 = arith.constant 0 : i32
    %c0_i32_1 = arith.constant 0 : i32
    return %c0_i32, %c0_i32_0 : i32, i32
  }
  func.func @transform_7(%arg0: i32) -> (i32, i32, i32) {
    %c0_i32 = arith.constant 0 : i32
    %c0_i32_0 = arith.constant 0 : i32
    %c0_i32_1 = arith.constant 0 : i32
    %c0_i32_2 = arith.constant 0 : i32
    return %c0_i32, %c0_i32_0, %c0_i32_1 : i32, i32, i32
  }
  func.func @transform_8(%arg0: i32) -> (i32, i32) {
    %c0_i32 = arith.constant 0 : i32
    %c0_i32_0 = arith.constant 0 : i32
    %c0_i32_1 = arith.constant 0 : i32
    return %c0_i32, %c0_i32_0 : i32, i32
  }
  func.func @transform_9(%arg0: i32) -> (i32, i32) {
    %c0_i32 = arith.constant 0 : i32
    %c0_i32_0 = arith.constant 0 : i32
    %c0_i32_1 = arith.constant 0 : i32
    return %c0_i32, %c0_i32_0 : i32, i32
  }
  func.func @transform_10(%arg0: i32) -> (i32, i32) {
    %c0_i32 = arith.constant 0 : i32
    %c0_i32_0 = arith.constant 0 : i32
    %c0_i32_1 = arith.constant 0 : i32
    return %c0_i32, %c0_i32_0 : i32, i32
  }
  func.func @transform_11(%arg0: i32) -> (i32, i32, i32) {
    %c0_i32 = arith.constant 0 : i32
    %c0_i32_0 = arith.constant 0 : i32
    %c0_i32_1 = arith.constant 0 : i32
    return %arg0, %c0_i32, %c0_i32_0 : i32, i32, i32
  }
}

</mosaic_0001>

<llo_original>
// kernel: decoder_forward.1
$region0: #{decoder_forward.1}
  #allocation0 [shape = 'u32[]', space=smem, size = 0x4, offset = 0x4, fixed_abs, tag = 'smem constant byte address 0x4 - core index']
  #allocation1 [shape = 'u32[144,128]{1,0:T(1,128)}', space=vmem, size = 0x12000, scoped, tag = 'internal scratch']
  #allocation2 [shape = 'bf16[18,18,24]{2,1,0:T(8,128)(2,1)}', space=vmem, size = 0x1b000, scoped, tag = 'scratch operand']
  #allocation3 [shape = 'bf16[18,18,32]{2,1,0:T(8,128)(2,1)}', space=vmem, size = 0x1b000, scoped, tag = 'scratch operand']
  %s0 = inlined_call_operand.vmem [shape: bf16[2,256,6], index: 0, kind: input, shape index: {}]
  %s1 = inlined_call_operand.vmem [shape: bf16[2,64,16], index: 1, kind: input, shape index: {}]
  %s2 = inlined_call_operand.vmem [shape: bf16[256,64], index: 2, kind: input, shape index: {}]
  %s3 = inlined_call_operand.vmem [shape: bf16[6,8], index: 3, kind: input, shape index: {}]
  %s4 = inlined_call_operand.vmem [shape: f32[1,8], index: 4, kind: input, shape index: {}]
  %s5 = inlined_call_operand.vmem [shape: bf16[9,24,32], index: 5, kind: input, shape index: {}]
  %s6 = inlined_call_operand.vmem [shape: f32[1,32], index: 6, kind: input, shape index: {}]
  %s7 = inlined_call_operand.vmem [shape: bf16[9,32,32], index: 7, kind: input, shape index: {}]
  %s8 = inlined_call_operand.vmem [shape: f32[1,32], index: 8, kind: input, shape index: {}]
  %s9 = inlined_call_operand.vmem [shape: bf16[8,32], index: 9, kind: input, shape index: {}]
  %s10 = inlined_call_operand.vmem [shape: f32[8,1], index: 10, kind: input, shape index: {}]
  %s11 = inlined_call_operand.vmem [shape: f32[2,5,256], index: 11, kind: output, shape index: {}]
  %s12 = sld [smem:[#allocation0]]
  $region77: #{decoder_forward.1} parent=0
    _
  %s14 = ssub.s32 1, %s12
  %s15 = scalar_select 0, %s14, %s12
  loop: start=0, step=1, limit=4
  $region2: #{decoder_forward.1} parent=0 // loop_pre_header
    _
  $region3: #{decoder_forward.1} parent=0 // loop_header
    %s17 = sphi 0, %s21
    %p18 = scmp.ge.s32.totalorder %s17, 4
    %s27 = sphi 0, %s29
    %s30 = sphi 0, %s27
    %s31 = sphi 0, %s30
    %s47 = sphi 0, %s31
    %s53 = sphi 0, %s55
    %s56 = sphi 0, %s53
    %s57 = sphi 0, %s56
    %s73 = sphi 0, %s57
    %s77 = sphi 0, %s77
    %s79 = sphi 0, %s77
    %s80 = sphi 0, %s79
    %s94 = sphi 0, %s80
    %s98 = sphi 0, %s98
    %s100 = sphi 0, %s98
    %s101 = sphi 0, %s100
    %s115 = sphi 0, %s101
    %s119 = sphi 0, %s119
    %s121 = sphi 0, %s119
    %s122 = sphi 0, %s121
    %s136 = sphi 0, %s122
    %s140 = sphi 0, %s140
    %s142 = sphi 0, %s140
    %s143 = sphi 0, %s142
    %s157 = sphi 0, %s143
    %s161 = sphi 0, %s161
    %s163 = sphi 0, %s161
    %s164 = sphi 0, %s163
    %s178 = sphi 0, %s164
    %s182 = sphi 0, %s182
    %s184 = sphi 0, %s182
    %s185 = sphi 0, %s184
    %s199 = sphi 0, %s185
    %s203 = sphi 0, %s203
    %s205 = sphi 0, %s203
    %s206 = sphi 0, %s205
    %s220 = sphi 0, %s206
    %s224 = sphi 0, %s224
    %s226 = sphi 0, %s224
    %s227 = sphi 0, %s226
    %s241 = sphi 0, %s227
    %s245 = sphi 0, %s245
    %s247 = sphi 0, %s245
    %s248 = sphi 0, %s247
    %s262 = sphi 0, %s248
    %s268 = sphi 0, %s270
    %s271 = sphi 0, %s268
    %s272 = sphi 0, %s271
    %s288 = sphi 0, %s272
  $region4: #{decoder_forward.1} parent=0 // loop_header_branch
    %20 = sbr.rel (%p18) target = $region8
  $region5: #{decoder_forward.1} parent=0 // loop_body
    %s22 = ssub.s32 %s17, 1
    %s23 = ssub.s32 %s17, 2
    %s24 = sadd.s32 %s17, 1
    %s25 = ssub.s32 %s17, %s24
    %p26 = scmp.eq.s32.totalorder %s25, 0
    %s28 = sadd.s32 %s27, 1
    %s29 = scalar_select %p26, %s27, %s28
    %p32 = pneg %p26
    %p33 = scmp.eq.s32.totalorder %s17, 1
    %p34 = por %p32, %p33
    %p35 = scmp.ne.s32.totalorder %s27, %s30
    %p36 = scmp.eq.s32.totalorder %s17, 0
    %p37 = por %p35, %p36
    %p38 = scmp.ne.s32.totalorder %s27, %s30
    %p39 = scmp.eq.s32.totalorder %s22, 1
    %p40 = por %p38, %p39
    %p41 = scmp.ne.s32.totalorder %s30, %s31
    %p42 = scmp.eq.s32.totalorder %s22, 0
    %p43 = por %p41, %p42
    %p44 = scmp.ne.s32.totalorder %s30, %s31
    %p45 = scmp.eq.s32.totalorder %s23, 1
    %p46 = por %p44, %p45
    %p48 = scmp.ne.s32.totalorder %s31, %s47
    %p49 = scmp.eq.s32.totalorder %s23, 0
    %p50 = por %p48, %p49
    %s51 = ssub.s32 %s17, %s24
    %p52 = scmp.eq.s32.totalorder %s51, 0
    %s54 = sadd.s32 %s53, 1
    %s55 = scalar_select %p52, %s53, %s54
    %p58 = pneg %p52
    %p59 = scmp.eq.s32.totalorder %s17, 1
    %p60 = por %p58, %p59
    %p61 = scmp.ne.s32.totalorder %s53, %s56
    %p62 = scmp.eq.s32.totalorder %s17, 0
    %p63 = por %p61, %p62
    %p64 = scmp.ne.s32.totalorder %s53, %s56
    %p65 = scmp.eq.s32.totalorder %s22, 1
    %p66 = por %p64, %p65
    %p67 = scmp.ne.s32.totalorder %s56, %s57
    %p68 = scmp.eq.s32.totalorder %s22, 0
    %p69 = por %p67, %p68
    %p70 = scmp.ne.s32.totalorder %s56, %s57
    %p71 = scmp.eq.s32.totalorder %s23, 1
    %p72 = por %p70, %p71
    %p74 = scmp.ne.s32.totalorder %s57, %s73
    %p75 = scmp.eq.s32.totalorder %s23, 0
    %p76 = por %p74, %p75
    %s78 = sadd.s32 %s77, 1
    %p81 = scmp.eq.s32.totalorder %s17, 1
    %p82 = scmp.ne.s32.totalorder %s77, %s79
    %p83 = scmp.eq.s32.totalorder %s17, 0
    %p84 = por %p82, %p83
    %p85 = scmp.ne.s32.totalorder %s77, %s79
    %p86 = scmp.eq.s32.totalorder %s22, 1
    %p87 = por %p85, %p86
    %p88 = scmp.ne.s32.totalorder %s79, %s80
    %p89 = scmp.eq.s32.totalorder %s22, 0
    %p90 = por %p88, %p89
    %p91 = scmp.ne.s32.totalorder %s79, %s80
    %p92 = scmp.eq.s32.totalorder %s23, 1
    %p93 = por %p91, %p92
    %p95 = scmp.ne.s32.totalorder %s80, %s94
    %p96 = scmp.eq.s32.totalorder %s23, 0
    %p97 = por %p95, %p96
    %s99 = sadd.s32 %s98, 1
    %p102 = scmp.eq.s32.totalorder %s17, 1
    %p103 = scmp.ne.s32.totalorder %s98, %s100
    %p104 = scmp.eq.s32.totalorder %s17, 0
    %p105 = por %p103, %p104
    %p106 = scmp.ne.s32.totalorder %s98, %s100
    %p107 = scmp.eq.s32.totalorder %s22, 1
    %p108 = por %p106, %p107
    %p109 = scmp.ne.s32.totalorder %s100, %s101
    %p110 = scmp.eq.s32.totalorder %s22, 0
    %p111 = por %p109, %p110
    %p112 = scmp.ne.s32.totalorder %s100, %s101
    %p113 = scmp.eq.s32.totalorder %s23, 1
    %p114 = por %p112, %p113
    %p116 = scmp.ne.s32.totalorder %s101, %s115
    %p117 = scmp.eq.s32.totalorder %s23, 0
    %p118 = por %p116, %p117
    %s120 = sadd.s32 %s119, 1
    %p123 = scmp.eq.s32.totalorder %s17, 1
    %p124 = scmp.ne.s32.totalorder %s119, %s121
    %p125 = scmp.eq.s32.totalorder %s17, 0
    %p126 = por %p124, %p125
    %p127 = scmp.ne.s32.totalorder %s119, %s121
    %p128 = scmp.eq.s32.totalorder %s22, 1
    %p129 = por %p127, %p128
    %p130 = scmp.ne.s32.totalorder %s121, %s122
    %p131 = scmp.eq.s32.totalorder %s22, 0
    %p132 = por %p130, %p131
    %p133 = scmp.ne.s32.totalorder %s121, %s122
    %p134 = scmp.eq.s32.totalorder %s23, 1
    %p135 = por %p133, %p134
    %p137 = scmp.ne.s32.totalorder %s122, %s136
    %p138 = scmp.eq.s32.totalorder %s23, 0
    %p139 = por %p137, %p138
    %s141 = sadd.s32 %s140, 1
    %p144 = scmp.eq.s32.totalorder %s17, 1
    %p145 = scmp.ne.s32.totalorder %s140, %s142
    %p146 = scmp.eq.s32.totalorder %s17, 0
    %p147 = por %p145, %p146
    %p148 = scmp.ne.s32.totalorder %s140, %s142
    %p149 = scmp.eq.s32.totalorder %s22, 1
    %p150 = por %p148, %p149
    %p151 = scmp.ne.s32.totalorder %s142, %s143
    %p152 = scmp.eq.s32.totalorder %s22, 0
    %p153 = por %p151, %p152
    %p154 = scmp.ne.s32.totalorder %s142, %s143
    %p155 = scmp.eq.s32.totalorder %s23, 1
    %p156 = por %p154, %p155
    %p158 = scmp.ne.s32.totalorder %s143, %s157
    %p159 = scmp.eq.s32.totalorder %s23, 0
    %p160 = por %p158, %p159
    %s162 = sadd.s32 %s161, 1
    %p165 = scmp.eq.s32.totalorder %s17, 1
    %p166 = scmp.ne.s32.totalorder %s161, %s163
    %p167 = scmp.eq.s32.totalorder %s17, 0
    %p168 = por %p166, %p167
    %p169 = scmp.ne.s32.totalorder %s161, %s163
    %p170 = scmp.eq.s32.totalorder %s22, 1
    %p171 = por %p169, %p170
    %p172 = scmp.ne.s32.totalorder %s163, %s164
    %p173 = scmp.eq.s32.totalorder %s22, 0
    %p174 = por %p172, %p173
    %p175 = scmp.ne.s32.totalorder %s163, %s164
    %p176 = scmp.eq.s32.totalorder %s23, 1
    %p177 = por %p175, %p176
    %p179 = scmp.ne.s32.totalorder %s164, %s178
    %p180 = scmp.eq.s32.totalorder %s23, 0
    %p181 = por %p179, %p180
    %s183 = sadd.s32 %s182, 1
    %p186 = scmp.eq.s32.totalorder %s17, 1
    %p187 = scmp.ne.s32.totalorder %s182, %s184
    %p188 = scmp.eq.s32.totalorder %s17, 0
    %p189 = por %p187, %p188
    %p190 = scmp.ne.s32.totalorder %s182, %s184
    %p191 = scmp.eq.s32.totalorder %s22, 1
    %p192 = por %p190, %p191
    %p193 = scmp.ne.s32.totalorder %s184, %s185
    %p194 = scmp.eq.s32.totalorder %s22, 0
    %p195 = por %p193, %p194
    %p196 = scmp.ne.s32.totalorder %s184, %s185
    %p197 = scmp.eq.s32.totalorder %s23, 1
    %p198 = por %p196, %p197
    %p200 = scmp.ne.s32.totalorder %s185, %s199
    %p201 = scmp.eq.s32.totalorder %s23, 0
    %p202 = por %p200, %p201
    %s204 = sadd.s32 %s203, 1
    %p207 = scmp.eq.s32.totalorder %s17, 1
    %p208 = scmp.ne.s32.totalorder %s203, %s205
    %p209 = scmp.eq.s32.totalorder %s17, 0
    %p210 = por %p208, %p209
    %p211 = scmp.ne.s32.totalorder %s203, %s205
    %p212 = scmp.eq.s32.totalorder %s22, 1
    %p213 = por %p211, %p212
    %p214 = scmp.ne.s32.totalorder %s205, %s206
    %p215 = scmp.eq.s32.totalorder %s22, 0
    %p216 = por %p214, %p215
    %p217 = scmp.ne.s32.totalorder %s205, %s206
    %p218 = scmp.eq.s32.totalorder %s23, 1
    %p219 = por %p217, %p218
    %p221 = scmp.ne.s32.totalorder %s206, %s220
    %p222 = scmp.eq.s32.totalorder %s23, 0
    %p223 = por %p221, %p222
    %s225 = sadd.s32 %s224, 1
    %p228 = scmp.eq.s32.totalorder %s17, 1
    %p229 = scmp.ne.s32.totalorder %s224, %s226
    %p230 = scmp.eq.s32.totalorder %s17, 0
    %p231 = por %p229, %p230
    %p232 = scmp.ne.s32.totalorder %s224, %s226
    %p233 = scmp.eq.s32.totalorder %s22, 1
    %p234 = por %p232, %p233
    %p235 = scmp.ne.s32.totalorder %s226, %s227
    %p236 = scmp.eq.s32.totalorder %s22, 0
    %p237 = por %p235, %p236
    %p238 = scmp.ne.s32.totalorder %s226, %s227
    %p239 = scmp.eq.s32.totalorder %s23, 1
    %p240 = por %p238, %p239
    %p242 = scmp.ne.s32.totalorder %s227, %s241
    %p243 = scmp.eq.s32.totalorder %s23, 0
    %p244 = por %p242, %p243
    %s246 = sadd.s32 %s245, 1
    %p249 = scmp.eq.s32.totalorder %s17, 1
    %p250 = scmp.ne.s32.totalorder %s245, %s247
    %p251 = scmp.eq.s32.totalorder %s17, 0
    %p252 = por %p250, %p251
    %p253 = scmp.ne.s32.totalorder %s245, %s247
    %p254 = scmp.eq.s32.totalorder %s22, 1
    %p255 = por %p253, %p254
    %p256 = scmp.ne.s32.totalorder %s247, %s248
    %p257 = scmp.eq.s32.totalorder %s22, 0
    %p258 = por %p256, %p257
    %p259 = scmp.ne.s32.totalorder %s247, %s248
    %p260 = scmp.eq.s32.totalorder %s23, 1
    %p261 = por %p259, %p260
    %p263 = scmp.ne.s32.totalorder %s248, %s262
    %p264 = scmp.eq.s32.totalorder %s23, 0
    %p265 = por %p263, %p264
    %s266 = ssub.s32 %s17, %s24
    %p267 = scmp.eq.s32.totalorder %s266, 0
    %s269 = sadd.s32 %s268, 1
    %s270 = scalar_select %p267, %s268, %s269
    %p273 = pneg %p267
    %p274 = scmp.eq.s32.totalorder %s17, 1
    %p275 = por %p273, %p274
    %p276 = scmp.ne.s32.totalorder %s268, %s271
    %p277 = scmp.eq.s32.totalorder %s17, 0
    %p278 = por %p276, %p277
    %p279 = scmp.ne.s32.totalorder %s268, %s271
    %p280 = scmp.eq.s32.totalorder %s22, 1
    %p281 = por %p279, %p280
    %p282 = scmp.ne.s32.totalorder %s271, %s272
    %p283 = scmp.eq.s32.totalorder %s22, 0
    %p284 = por %p282, %p283
    %p285 = scmp.ne.s32.totalorder %s271, %s272
    %p286 = scmp.eq.s32.totalorder %s23, 1
    %p287 = por %p285, %p286
    %p289 = scmp.ne.s32.totalorder %s272, %s288
    %p290 = scmp.eq.s32.totalorder %s23, 0
    %p291 = por %p289, %p290
    %p292 = scmp.le.s32.totalorder 1, %s17
    %p293 = scmp.lt.s32.totalorder %s17, 3
    %p294 = pnand %p292, %p293
    %p295 = pneg %p294
    // Predicated region
    $region9: #{decoder_forward.1} parent=5 // pred_check
      _
    $region10: #{decoder_forward.1} parent=5 // pred_check_branch
      %297 = sbr.rel (%p294) target = $region12
    $region11: #{decoder_forward.1} parent=5 // pred_region
      %s298 = ssub.s32 %s17, 1
      // Predicated region
      $region13: #{decoder_forward.1} parent=11 // pred_check
        %p299 = pneg %p90
      $region14: #{decoder_forward.1} parent=11 // pred_check_branch
        %301 = sbr.rel (%p299) target = $region16
      $region15: #{decoder_forward.1} parent=11 // pred_region
        _
      $region16: #{decoder_forward.1} parent=11 // pred_fallthru
        _
      // Predicated region
      $region17: #{decoder_forward.1} parent=11 // pred_check
        %p302 = pneg %p111
      $region18: #{decoder_forward.1} parent=11 // pred_check_branch
        %304 = sbr.rel (%p302) target = $region20
      $region19: #{decoder_forward.1} parent=11 // pred_region
        _
      $region20: #{decoder_forward.1} parent=11 // pred_fallthru
        _
      // Predicated region
      $region21: #{decoder_forward.1} parent=11 // pred_check
        %p305 = pneg %p132
      $region22: #{decoder_forward.1} parent=11 // pred_check_branch
        %307 = sbr.rel (%p305) target = $region24
      $region23: #{decoder_forward.1} parent=11 // pred_region
        _
      $region24: #{decoder_forward.1} parent=11 // pred_fallthru
        _
      // Predicated region
      $region25: #{decoder_forward.1} parent=11 // pred_check
        %p308 = pneg %p153
      $region26: #{decoder_forward.1} parent=11 // pred_check_branch
        %310 = sbr.rel (%p308) target = $region28
      $region27: #{decoder_forward.1} parent=11 // pred_region
        _
      $region28: #{decoder_forward.1} parent=11 // pred_fallthru
        _
      // Predicated region
      $region29: #{decoder_forward.1} parent=11 // pred_check
        %p311 = pneg %p174
      $region30: #{decoder_forward.1} parent=11 // pred_check_branch
        %313 = sbr.rel (%p311) target = $region32
      $region31: #{decoder_forward.1} parent=11 // pred_region
        _
      $region32: #{decoder_forward.1} parent=11 // pred_fallthru
        _
      // Predicated region
      $region33: #{decoder_forward.1} parent=11 // pred_check
        %p314 = pneg %p195
      $region34: #{decoder_forward.1} parent=11 // pred_check_branch
        %316 = sbr.rel (%p314) target = $region36
      $region35: #{decoder_forward.1} parent=11 // pred_region
        _
      $region36: #{decoder_forward.1} parent=11 // pred_fallthru
        _
      // Predicated region
      $region37: #{decoder_forward.1} parent=11 // pred_check
        %p317 = pneg %p216
      $region38: #{decoder_forward.1} parent=11 // pred_check_branch
        %319 = sbr.rel (%p317) target = $region40
      $region39: #{decoder_forward.1} parent=11 // pred_region
        _
      $region40: #{decoder_forward.1} parent=11 // pred_fallthru
        _
      // Predicated region
      $region41: #{decoder_forward.1} parent=11 // pred_check
        %p320 = pneg %p237
      $region42: #{decoder_forward.1} parent=11 // pred_check_branch
        %322 = sbr.rel (%p320) target = $region44
      $region43: #{decoder_forward.1} parent=11 // pred_region
        _
      $region44: #{decoder_forward.1} parent=11 // pred_fallthru
        _
      // Predicated region
      $region45: #{decoder_forward.1} parent=11 // pred_check
        %p323 = pneg %p258
      $region46: #{decoder_forward.1} parent=11 // pred_check_branch
        %325 = sbr.rel (%p323) target = $region48
      $region47: #{decoder_forward.1} parent=11 // pred_region
        _
      $region48: #{decoder_forward.1} parent=11 // pred_fallthru
        _
    $region12: #{decoder_forward.1} parent=5 // pred_fallthru
      _
    %p326 = scmp.lt.s32.totalorder %s17, 2
    // Predicated region
    $region49: #{decoder_forward.1} parent=5 // pred_check
      %p327 = pneg %p326
    $region50: #{decoder_forward.1} parent=5 // pred_check_branch
      %329 = sbr.rel (%p327) target = $region52
    $region51: #{decoder_forward.1} parent=5 // pred_region
      // Predicated region
      $region53: #{decoder_forward.1} parent=51 // pred_check
        %p330 = pneg %p37
      $region54: #{decoder_forward.1} parent=51 // pred_check_branch
        %332 = sbr.rel (%p330) target = $region56
      $region55: #{decoder_forward.1} parent=51 // pred_region
        %p333 = scmp.lt.s32.totalorder %s17, 1
        %s334 = scalar_select %p333, %s17, 1
        %s335 = smul.addr %s334, 32
        %s336 = smul.addr %s335, 4
        %s337 = scalar_lea.vmem %s0, %s336
      $region56: #{decoder_forward.1} parent=51 // pred_fallthru
        _
      // Predicated region
      $region57: #{decoder_forward.1} parent=51 // pred_check
        %p338 = pneg %p63
      $region58: #{decoder_forward.1} parent=51 // pred_check_branch
        %340 = sbr.rel (%p338) target = $region60
      $region59: #{decoder_forward.1} parent=51 // pred_region
        %p341 = scmp.lt.s32.totalorder %s17, 1
        %s342 = scalar_select %p341, %s17, 1
        %s343 = smul.addr %s342, 8
        %s344 = smul.addr %s343, 4
        %s345 = scalar_lea.vmem %s1, %s344
      $region60: #{decoder_forward.1} parent=51 // pred_fallthru
        _
    $region52: #{decoder_forward.1} parent=5 // pred_fallthru
      _
    %p346 = scmp.le.s32.totalorder 1, %s17
    %p347 = scmp.lt.s32.totalorder %s17, 3
    %p348 = pnand %p346, %p347
    %p349 = pneg %p348
    // Predicated region
    $region61: #{decoder_forward.1} parent=5 // pred_check
      _
    $region62: #{decoder_forward.1} parent=5 // pred_check_branch
      %351 = sbr.rel (%p348) target = $region64
    $region63: #{decoder_forward.1} parent=5 // pred_region
      %s352 = ssub.s32 %s17, 1
      %p353 = scmp.lt.s32.totalorder %s22, 1
      %s354 = scalar_select %p353, %s22, 1
      %s355 = smul.addr %s354, 32
      %s356 = smul.addr %s355, 4
      %s357 = scalar_lea.vmem %s0, %s356
      %p358 = pneg %p43
      %p359 = pneg %p40
      %p360 = scmp.lt.s32.totalorder %s22, 1
      %s361 = scalar_select %p360, %s22, 1
      %s362 = smul.addr %s361, 8
      %s363 = smul.addr %s362, 4
      %s364 = scalar_lea.vmem %s1, %s363
      %p365 = pneg %p69
      %p366 = pneg %p66
      %p367 = pneg %p90
      %p368 = pneg %p87
      %p369 = pneg %p111
      %p370 = pneg %p108
      %p371 = pneg %p132
      %p372 = pneg %p129
      %p373 = pneg %p153
      %p374 = pneg %p150
      %p375 = pneg %p174
      %p376 = pneg %p171
      %p377 = pneg %p195
      %p378 = pneg %p192
      %p379 = pneg %p216
      %p380 = pneg %p213
      %p381 = pneg %p237
      %p382 = pneg %p234
      %p383 = pneg %p258
      %p384 = pneg %p255
      %p385 = pneg %p284
      %p386 = pneg %p281
      %p387 = scmp.lt.s32.totalorder %s22, 1
      %s388 = scalar_select %p387, %s22, 1
      %s389 = smul.addr %s388, 2
      %s390 = smul.addr %s389, 8
      %s391 = scalar_lea.vmem %s11, %s390
      %p392 = scmp.lt.s32.totalorder %s22, 1
      %s393 = scalar_select %p392, %s22, 1
      %s394 = smul.addr %s393, 32
      %s395 = smul.addr %s394, 4
      %s396 = scalar_lea.vmem %s0, %s395
      %p397 = scmp.lt.s32.totalorder %s22, 1
      %s398 = scalar_select %p397, %s22, 1
      %s399 = smul.addr %s398, 8
      %s400 = smul.addr %s399, 4
      %s401 = scalar_lea.vmem %s1, %s400
      %p402 = scmp.lt.s32.totalorder %s22, 1
      %s403 = scalar_select %p402, %s22, 1
      %s404 = smul.addr %s403, 2
      %s405 = smul.addr %s404, 8
      %s406 = scalar_lea.vmem %s11, %s405
      %vm408 = vcmask 191488
      %409 = vst.msk [vmem:[#allocation2] sm:$0xf] %vm408, 0
      %410 = vst.msk [vmem:[#allocation2 + $0x4] sm:$0xf] %vm408, 0
      %vm411 = vcmask 188416
      %412 = vst.msk [vmem:[#allocation2 + $0x8] sm:$0x1] %vm411, 0
      %s413 = scalar_lea.vmem [#allocation2], 204
      %414 = vst.msk [vmem:[%s413] sm:$0xf] %vm408, 0
      %415 = vst.msk [vmem:[%s413 + $0x4] sm:$0xf] %vm408, 0
      %416 = vst.msk [vmem:[%s413 + $0x8] sm:$0x1] %vm411, 0
      %s417 = scalar_lea.vmem [#allocation2], 12
      %vm418 = vcmask 188416
      %vm419 = vsmask.f32 256
      %vm420 = vmand %vm418, %vm419
      %v421 = vld [vmem:[%s417] sm:$0x1]
      %v422 = vsel %vm420, 0, %v421
      %423 = vst [vmem:[%s417] sm:$0x1] %v422
      %v424 = vld [vmem:[%s417 + $0xc] sm:$0x1]
      %v425 = vsel %vm420, 0, %v424
      %426 = vst [vmem:[%s417 + $0xc] sm:$0x1] %v425
      %v427 = vld [vmem:[%s417 + $0x18] sm:$0x1]
      %v428 = vsel %vm420, 0, %v427
      %429 = vst [vmem:[%s417 + $0x18] sm:$0x1] %v428
      %v430 = vld [vmem:[%s417 + $0x24] sm:$0x1]
      %v431 = vsel %vm420, 0, %v430
      %432 = vst [vmem:[%s417 + $0x24] sm:$0x1] %v431
      %v433 = vld [vmem:[%s417 + $0x30] sm:$0x1]
      %v434 = vsel %vm420, 0, %v433
      %435 = vst [vmem:[%s417 + $0x30] sm:$0x1] %v434
      %v436 = vld [vmem:[%s417 + $0x3c] sm:$0x1]
      %v437 = vsel %vm420, 0, %v436
      %438 = vst [vmem:[%s417 + $0x3c] sm:$0x1] %v437
      %v439 = vld [vmem:[%s417 + $0x48] sm:$0x1]
      %v440 = vsel %vm420, 0, %v439
      %441 = vst [vmem:[%s417 + $0x48] sm:$0x1] %v440
      %v442 = vld [vmem:[%s417 + $0x54] sm:$0x1]
      %v443 = vsel %vm420, 0, %v442
      %444 = vst [vmem:[%s417 + $0x54] sm:$0x1] %v443
      %v445 = vld [vmem:[%s417 + $0x60] sm:$0x1]
      %v446 = vsel %vm420, 0, %v445
      %447 = vst [vmem:[%s417 + $0x60] sm:$0x1] %v446
      %v448 = vld [vmem:[%s417 + $0x6c] sm:$0x1]
      %v449 = vsel %vm420, 0, %v448
      %450 = vst [vmem:[%s417 + $0x6c] sm:$0x1] %v449
      %v451 = vld [vmem:[%s417 + $0x78] sm:$0x1]
      %v452 = vsel %vm420, 0, %v451
      %453 = vst [vmem:[%s417 + $0x78] sm:$0x1] %v452
      %v454 = vld [vmem:[%s417 + $0x84] sm:$0x1]
      %v455 = vsel %vm420, 0, %v454
      %456 = vst [vmem:[%s417 + $0x84] sm:$0x1] %v455
      %v457 = vld [vmem:[%s417 + $0x90] sm:$0x1]
      %v458 = vsel %vm420, 0, %v457
      %459 = vst [vmem:[%s417 + $0x90] sm:$0x1] %v458
      %v460 = vld [vmem:[%s417 + $0x9c] sm:$0x1]
      %v461 = vsel %vm420, 0, %v460
      %462 = vst [vmem:[%s417 + $0x9c] sm:$0x1] %v461
      %v463 = vld [vmem:[%s417 + $0xa8] sm:$0x1]
      %v464 = vsel %vm420, 0, %v463
      %465 = vst [vmem:[%s417 + $0xa8] sm:$0x1] %v464
      %v466 = vld [vmem:[%s417 + $0xb4] sm:$0x1]
      %v467 = vsel %vm420, 0, %v466
      %468 = vst [vmem:[%s417 + $0xb4] sm:$0x1] %v467
      %vm469 = vsmask.f32 7938
      %vm470 = vmand %vm418, %vm469
      %v471 = vld [vmem:[%s417 + $0x8] sm:$0x1]
      %v472 = vsel %vm470, 0, %v471
      %473 = vst [vmem:[%s417 + $0x8] sm:$0x1] %v472
      %v474 = vld [vmem:[%s417 + $0x14] sm:$0x1]
      %v475 = vsel %vm470, 0, %v474
      %476 = vst [vmem:[%s417 + $0x14] sm:$0x1] %v475
      %v477 = vld [vmem:[%s417 + $0x20] sm:$0x1]
      %v478 = vsel %vm470, 0, %v477
      %479 = vst [vmem:[%s417 + $0x20] sm:$0x1] %v478
      %v480 = vld [vmem:[%s417 + $0x2c] sm:$0x1]
      %v481 = vsel %vm470, 0, %v480
      %482 = vst [vmem:[%s417 + $0x2c] sm:$0x1] %v481
      %v483 = vld [vmem:[%s417 + $0x38] sm:$0x1]
      %v484 = vsel %vm470, 0, %v483
      %485 = vst [vmem:[%s417 + $0x38] sm:$0x1] %v484
      %v486 = vld [vmem:[%s417 + $0x44] sm:$0x1]
      %v487 = vsel %vm470, 0, %v486
      %488 = vst [vmem:[%s417 + $0x44] sm:$0x1] %v487
      %v489 = vld [vmem:[%s417 + $0x50] sm:$0x1]
      %v490 = vsel %vm470, 0, %v489
      %491 = vst [vmem:[%s417 + $0x50] sm:$0x1] %v490
      %v492 = vld [vmem:[%s417 + $0x5c] sm:$0x1]
      %v493 = vsel %vm470, 0, %v492
      %494 = vst [vmem:[%s417 + $0x5c] sm:$0x1] %v493
      %v495 = vld [vmem:[%s417 + $0x68] sm:$0x1]
      %v496 = vsel %vm470, 0, %v495
      %497 = vst [vmem:[%s417 + $0x68] sm:$0x1] %v496
      %v498 = vld [vmem:[%s417 + $0x74] sm:$0x1]
      %v499 = vsel %vm470, 0, %v498
      %500 = vst [vmem:[%s417 + $0x74] sm:$0x1] %v499
      %v501 = vld [vmem:[%s417 + $0x80] sm:$0x1]
      %v502 = vsel %vm470, 0, %v501
      %503 = vst [vmem:[%s417 + $0x80] sm:$0x1] %v502
      %v504 = vld [vmem:[%s417 + $0x8c] sm:$0x1]
      %v505 = vsel %vm470, 0, %v504
      %506 = vst [vmem:[%s417 + $0x8c] sm:$0x1] %v505
      %v507 = vld [vmem:[%s417 + $0x98] sm:$0x1]
      %v508 = vsel %vm470, 0, %v507
      %509 = vst [vmem:[%s417 + $0x98] sm:$0x1] %v508
      %v510 = vld [vmem:[%s417 + $0xa4] sm:$0x1]
      %v511 = vsel %vm470, 0, %v510
      %512 = vst [vmem:[%s417 + $0xa4] sm:$0x1] %v511
      %v513 = vld [vmem:[%s417 + $0xb0] sm:$0x1]
      %v514 = vsel %vm470, 0, %v513
      %515 = vst [vmem:[%s417 + $0xb0] sm:$0x1] %v514
      %v516 = vld [vmem:[%s417 + $0xbc] sm:$0x1]
      %v517 = vsel %vm470, 0, %v516
      %518 = vst [vmem:[%s417 + $0xbc] sm:$0x1] %v517
      %vm519 = vcmask 257024
      %520 = vst.msk [vmem:[#allocation3] sm:$0xf] %vm519, 0
      %521 = vst.msk [vmem:[#allocation3 + $0x4] sm:$0xf] %vm519, 0
      %vm522 = vcmask 253952
      %523 = vst.msk [vmem:[#allocation3 + $0x8] sm:$0x1] %vm522, 0
      %s524 = scalar_lea.vmem [#allocation3], 204
      %525 = vst.msk [vmem:[%s524] sm:$0xf] %vm519, 0
      %526 = vst.msk [vmem:[%s524 + $0x4] sm:$0xf] %vm519, 0
      %527 = vst.msk [vmem:[%s524 + $0x8] sm:$0x1] %vm522, 0
      %s528 = scalar_lea.vmem [#allocation3], 12
      %vm529 = vcmask 253952
      %vm530 = vmand %vm529, %vm419
      %v531 = vld [vmem:[%s528] sm:$0x1]
      %v532 = vsel %vm530, 0, %v531
      %533 = vst [vmem:[%s528] sm:$0x1] %v532
      %v534 = vld [vmem:[%s528 + $0xc] sm:$0x1]
      %v535 = vsel %vm530, 0, %v534
      %536 = vst [vmem:[%s528 + $0xc] sm:$0x1] %v535
      %v537 = vld [vmem:[%s528 + $0x18] sm:$0x1]
      %v538 = vsel %vm530, 0, %v537
      %539 = vst [vmem:[%s528 + $0x18] sm:$0x1] %v538
      %v540 = vld [vmem:[%s528 + $0x24] sm:$0x1]
      %v541 = vsel %vm530, 0, %v540
      %542 = vst [vmem:[%s528 + $0x24] sm:$0x1] %v541
      %v543 = vld [vmem:[%s528 + $0x30] sm:$0x1]
      %v544 = vsel %vm530, 0, %v543
      %545 = vst [vmem:[%s528 + $0x30] sm:$0x1] %v544
      %v546 = vld [vmem:[%s528 + $0x3c] sm:$0x1]
      %v547 = vsel %vm530, 0, %v546
      %548 = vst [vmem:[%s528 + $0x3c] sm:$0x1] %v547
      %v549 = vld [vmem:[%s528 + $0x48] sm:$0x1]
      %v550 = vsel %vm530, 0, %v549
      %551 = vst [vmem:[%s528 + $0x48] sm:$0x1] %v550
      %v552 = vld [vmem:[%s528 + $0x54] sm:$0x1]
      %v553 = vsel %vm530, 0, %v552
      %554 = vst [vmem:[%s528 + $0x54] sm:$0x1] %v553
      %v555 = vld [vmem:[%s528 + $0x60] sm:$0x1]
      %v556 = vsel %vm530, 0, %v555
      %557 = vst [vmem:[%s528 + $0x60] sm:$0x1] %v556
      %v558 = vld [vmem:[%s528 + $0x6c] sm:$0x1]
      %v559 = vsel %vm530, 0, %v558
      %560 = vst [vmem:[%s528 + $0x6c] sm:$0x1] %v559
      %v561 = vld [vmem:[%s528 + $0x78] sm:$0x1]
      %v562 = vsel %vm530, 0, %v561
      %563 = vst [vmem:[%s528 + $0x78] sm:$0x1] %v562
      %v564 = vld [vmem:[%s528 + $0x84] sm:$0x1]
      %v565 = vsel %vm530, 0, %v564
      %566 = vst [vmem:[%s528 + $0x84] sm:$0x1] %v565
      %v567 = vld [vmem:[%s528 + $0x90] sm:$0x1]
      %v568 = vsel %vm530, 0, %v567
      %569 = vst [vmem:[%s528 + $0x90] sm:$0x1] %v568
      %v570 = vld [vmem:[%s528 + $0x9c] sm:$0x1]
      %v571 = vsel %vm530, 0, %v570
      %572 = vst [vmem:[%s528 + $0x9c] sm:$0x1] %v571
      %v573 = vld [vmem:[%s528 + $0xa8] sm:$0x1]
      %v574 = vsel %vm530, 0, %v573
      %575 = vst [vmem:[%s528 + $0xa8] sm:$0x1] %v574
      %v576 = vld [vmem:[%s528 + $0xb4] sm:$0x1]
      %v577 = vsel %vm530, 0, %v576
      %578 = vst [vmem:[%s528 + $0xb4] sm:$0x1] %v577
      %vm579 = vmand %vm529, %vm469
      %v580 = vld [vmem:[%s528 + $0x8] sm:$0x1]
      %v581 = vsel %vm579, 0, %v580
      %582 = vst [vmem:[%s528 + $0x8] sm:$0x1] %v581
      %v583 = vld [vmem:[%s528 + $0x14] sm:$0x1]
      %v584 = vsel %vm579, 0, %v583
      %585 = vst [vmem:[%s528 + $0x14] sm:$0x1] %v584
      %v586 = vld [vmem:[%s528 + $0x20] sm:$0x1]
      %v587 = vsel %vm579, 0, %v586
      %588 = vst [vmem:[%s528 + $0x20] sm:$0x1] %v587
      %v589 = vld [vmem:[%s528 + $0x2c] sm:$0x1]
      %v590 = vsel %vm579, 0, %v589
      %591 = vst [vmem:[%s528 + $0x2c] sm:$0x1] %v590
      %v592 = vld [vmem:[%s528 + $0x38] sm:$0x1]
      %v593 = vsel %vm579, 0, %v592
      %594 = vst [vmem:[%s528 + $0x38] sm:$0x1] %v593
      %v595 = vld [vmem:[%s528 + $0x44] sm:$0x1]
      %v596 = vsel %vm579, 0, %v595
      %597 = vst [vmem:[%s528 + $0x44] sm:$0x1] %v596
      %v598 = vld [vmem:[%s528 + $0x50] sm:$0x1]
      %v599 = vsel %vm579, 0, %v598
      %600 = vst [vmem:[%s528 + $0x50] sm:$0x1] %v599
      %v601 = vld [vmem:[%s528 + $0x5c] sm:$0x1]
      %v602 = vsel %vm579, 0, %v601
      %603 = vst [vmem:[%s528 + $0x5c] sm:$0x1] %v602
      %v604 = vld [vmem:[%s528 + $0x68] sm:$0x1]
      %v605 = vsel %vm579, 0, %v604
      %606 = vst [vmem:[%s528 + $0x68] sm:$0x1] %v605
      %v607 = vld [vmem:[%s528 + $0x74] sm:$0x1]
      %v608 = vsel %vm579, 0, %v607
      %609 = vst [vmem:[%s528 + $0x74] sm:$0x1] %v608
      %v610 = vld [vmem:[%s528 + $0x80] sm:$0x1]
      %v611 = vsel %vm579, 0, %v610
      %612 = vst [vmem:[%s528 + $0x80] sm:$0x1] %v611
      %v613 = vld [vmem:[%s528 + $0x8c] sm:$0x1]
      %v614 = vsel %vm579, 0, %v613
      %615 = vst [vmem:[%s528 + $0x8c] sm:$0x1] %v614
      %v616 = vld [vmem:[%s528 + $0x98] sm:$0x1]
      %v617 = vsel %vm579, 0, %v616
      %618 = vst [vmem:[%s528 + $0x98] sm:$0x1] %v617
      %v619 = vld [vmem:[%s528 + $0xa4] sm:$0x1]
      %v620 = vsel %vm579, 0, %v619
      %621 = vst [vmem:[%s528 + $0xa4] sm:$0x1] %v620
      %v622 = vld [vmem:[%s528 + $0xb0] sm:$0x1]
      %v623 = vsel %vm579, 0, %v622
      %624 = vst [vmem:[%s528 + $0xb0] sm:$0x1] %v623
      %v625 = vld [vmem:[%s528 + $0xbc] sm:$0x1]
      %v626 = vsel %vm579, 0, %v625
      %627 = vst [vmem:[%s528 + $0xbc] sm:$0x1] %v626
      %v628 = vld [vmem:[%s396] sm:$0xf]
      %v629 = vld [vmem:[%s396 + $0x4] sm:$0xf]
      %v630 = vld [vmem:[%s396 + $0x8] sm:$0xf]
      %v631 = vld [vmem:[%s396 + $0xc] sm:$0xf]
      %v632 = vld [vmem:[%s396 + $0x10] sm:$0xf]
      %v633 = vld [vmem:[%s396 + $0x14] sm:$0xf]
      %v634 = vld [vmem:[%s396 + $0x18] sm:$0xf]
      %v635 = vld [vmem:[%s396 + $0x1c] sm:$0xf]
      %v636 = vld [vmem:[%s396 + $0x20] sm:$0xf]
      %v637 = vld [vmem:[%s396 + $0x24] sm:$0xf]
      %v638 = vld [vmem:[%s396 + $0x28] sm:$0xf]
      %v639 = vld [vmem:[%s396 + $0x2c] sm:$0xf]
      %v640 = vld [vmem:[%s396 + $0x30] sm:$0xf]
      %v641 = vld [vmem:[%s396 + $0x34] sm:$0xf]
      %v642 = vld [vmem:[%s396 + $0x38] sm:$0xf]
      %v643 = vld [vmem:[%s396 + $0x3c] sm:$0xf]
      %v644 = vld [vmem:[%s396 + $0x40] sm:$0xf]
      %v645 = vld [vmem:[%s396 + $0x44] sm:$0xf]
      %v646 = vld [vmem:[%s396 + $0x48] sm:$0xf]
      %v647 = vld [vmem:[%s396 + $0x4c] sm:$0xf]
      %v648 = vld [vmem:[%s396 + $0x50] sm:$0xf]
      %v649 = vld [vmem:[%s396 + $0x54] sm:$0xf]
      %v650 = vld [vmem:[%s396 + $0x58] sm:$0xf]
      %v651 = vld [vmem:[%s396 + $0x5c] sm:$0xf]
      %v652 = vld [vmem:[%s396 + $0x60] sm:$0xf]
      %v653 = vld [vmem:[%s396 + $0x64] sm:$0xf]
      %v654 = vld [vmem:[%s396 + $0x68] sm:$0xf]
      %v655 = vld [vmem:[%s396 + $0x6c] sm:$0xf]
      %v656 = vld [vmem:[%s396 + $0x70] sm:$0xf]
      %v657 = vld [vmem:[%s396 + $0x74] sm:$0xf]
      %v658 = vld [vmem:[%s396 + $0x78] sm:$0xf]
      %v659 = vld [vmem:[%s396 + $0x7c] sm:$0xf]
      %v660 = vld [vmem:[%s3] sm:$0x7]
      %v661 = vld [vmem:[%s4] sm:$0x1]
      %v663 = vlaneseq
      %v664 = vshrl.u32 %v663, 7
      %v665 = vsub.s32 0, %v664
      %v666 = vrot.slane %v661, %v665
      %v700 = vunpack.c.l.b16 %v628
      %v701 = vunpack.c.l.b16 %v629
      %v702 = vunpack.c.l.b16 %v630
      %v703 = vunpack.c.l.b16 %v631
      %v704 = vunpack.c.l.b16 %v632
      %v705 = vunpack.c.l.b16 %v633
      %v706 = vunpack.c.l.b16 %v634
      %v707 = vunpack.c.l.b16 %v635
      %v708 = vunpack.c.l.b16 %v636
      %v709 = vunpack.c.l.b16 %v637
      %v710 = vunpack.c.l.b16 %v638
      %v711 = vunpack.c.l.b16 %v639
      %v712 = vunpack.c.l.b16 %v640
      %v713 = vunpack.c.l.b16 %v641
      %v714 = vunpack.c.l.b16 %v642
      %v715 = vunpack.c.l.b16 %v643
      %v716 = vunpack.c.l.b16 %v644
      %v717 = vunpack.c.l.b16 %v645
      %v718 = vunpack.c.l.b16 %v646
      %v719 = vunpack.c.l.b16 %v647
      %v720 = vunpack.c.l.b16 %v648
      %v721 = vunpack.c.l.b16 %v649
      %v722 = vunpack.c.l.b16 %v650
      %v723 = vunpack.c.l.b16 %v651
      %v724 = vunpack.c.l.b16 %v652
      %v725 = vunpack.c.l.b16 %v653
      %v726 = vunpack.c.l.b16 %v654
      %v727 = vunpack.c.l.b16 %v655
      %v728 = vunpack.c.l.b16 %v656
      %v729 = vunpack.c.l.b16 %v657
      %v730 = vunpack.c.l.b16 %v658
      %v731 = vunpack.c.l.b16 %v659
      %v732 = vpack.c.b16 %v701, %v700
      %v733 = vpack.c.b16 %v703, %v702
      %v734 = vpack.c.b16 %v705, %v704
      %v735 = vpack.c.b16 %v707, %v706
      %v736 = vpack.c.b16 %v709, %v708
      %v737 = vpack.c.b16 %v711, %v710
      %v738 = vpack.c.b16 %v713, %v712
      %v739 = vpack.c.b16 %v715, %v714
      %v740 = vpack.c.b16 %v717, %v716
      %v741 = vpack.c.b16 %v719, %v718
      %v742 = vpack.c.b16 %v721, %v720
      %v743 = vpack.c.b16 %v723, %v722
      %v744 = vpack.c.b16 %v725, %v724
      %v745 = vpack.c.b16 %v727, %v726
      %v746 = vpack.c.b16 %v729, %v728
      %v747 = vpack.c.b16 %v731, %v730
      %vm748 = vcmask 48128
      %v750 = vsel %vm748, %v732, 0
      %v753 = vsel %vm748, %v733, 0
      %v756 = vsel %vm748, %v734, 0
      %v759 = vsel %vm748, %v735, 0
      %v762 = vsel %vm748, %v736, 0
      %v765 = vsel %vm748, %v737, 0
      %v768 = vsel %vm748, %v738, 0
      %v771 = vsel %vm748, %v739, 0
      %v774 = vsel %vm748, %v740, 0
      %v777 = vsel %vm748, %v741, 0
      %v780 = vsel %vm748, %v742, 0
      %v783 = vsel %vm748, %v743, 0
      %v786 = vsel %vm748, %v744, 0
      %v789 = vsel %vm748, %v745, 0
      %v792 = vsel %vm748, %v746, 0
      %v795 = vsel %vm748, %v747, 0
      %vm797 = vcmask 1042432
      %v799 = vsel %vm797, %v660, 0
      %801 = vmatprep.subr.bf16.mxu0 0
      %802 = vmatpush1.bf16.msra.mxu0 0
      %803 = vmatprep.subr.bf16.mxu0 0
      %804 = vmatpush1.bf16.msra.mxu0 0
      %805 = vmatprep.subr.bf16.mxu0 0
      %806 = vmatpush1.bf16.msra.mxu0 0
      %807 = vmatprep.subr.bf16.mxu0 0
      %808 = vmatpush1.bf16.msra.mxu0 0
      %809 = vmatprep.subr.bf16.mxu0 0
      %810 = vmatpush1.bf16.msra.mxu0 0
      %811 = vmatprep.subr.bf16.mxu0 0
      %812 = vmatpush1.bf16.msra.mxu0 0
      %813 = vmatprep.subr.bf16.mxu0 0
      %814 = vmatpush1.bf16.msra.mxu0 0
      %815 = vmatprep.subr.bf16.mxu0 0
      %816 = vmatpush1.bf16.msra.mxu0 %v799
      %817 = vmatprep.subr.bf16.mxu0 0
      %818 = vmatpush2.bf16.msra.mxu0 0
      %819 = vmatprep.subr.bf16.mxu0 0
      %820 = vmatpush2.bf16.msra.mxu0 0
      %821 = vmatprep.subr.bf16.mxu0 0
      %822 = vmatpush2.bf16.msra.mxu0 0
      %823 = vmatprep.subr.bf16.mxu0 0
      %824 = vmatpush2.bf16.msra.mxu0 0
      %825 = vmatprep.subr.bf16.mxu0 0
      %826 = vmatpush2.bf16.msra.mxu0 0
      %827 = vmatprep.subr.bf16.mxu0 0
      %828 = vmatpush2.bf16.msra.mxu0 0
      %829 = vmatprep.subr.bf16.mxu0 0
      %830 = vmatpush2.bf16.msra.mxu0 0
      %831 = vmatprep.subr.bf16.mxu0 0
      %832 = vmatpush2.bf16.msra.mxu0 0
      %833 = vmatprep.mubr.bf16.mxu0 0
      %834 = vmatmul.mubr.bf16.gmra.mxu0 %v750
      %v835 = vpop.f32.mrf.mxu0
      %v836 = vadd.f32 %v666, %v835
      %v837 = vpop.f32.mrf.mxu0
      %v838 = vpop.f32.mrf.mxu0
      %v839 = vadd.f32 %v666, %v838
      %v840 = vpop.f32.mrf.mxu0
      %841 = vmatprep.mubr.bf16.mxu0 0
      %842 = vmatmul.mubr.bf16.gmra.mxu0 %v753
      %v843 = vpop.f32.mrf.mxu0
      %v844 = vadd.f32 %v666, %v843
      %v845 = vpop.f32.mrf.mxu0
      %v846 = vpop.f32.mrf.mxu0
      %v847 = vadd.f32 %v666, %v846
      %v848 = vpop.f32.mrf.mxu0
      %849 = vmatprep.mubr.bf16.mxu0 0
      %850 = vmatmul.mubr.bf16.gmra.mxu0 %v756
      %v851 = vpop.f32.mrf.mxu0
      %v852 = vadd.f32 %v666, %v851
      %v853 = vpop.f32.mrf.mxu0
      %v854 = vpop.f32.mrf.mxu0
      %v855 = vadd.f32 %v666, %v854
      %v856 = vpop.f32.mrf.mxu0
      %857 = vmatprep.mubr.bf16.mxu0 0
      %858 = vmatmul.mubr.bf16.gmra.mxu0 %v759
      %v859 = vpop.f32.mrf.mxu0
      %v860 = vadd.f32 %v666, %v859
      %v861 = vpop.f32.mrf.mxu0
      %v862 = vpop.f32.mrf.mxu0
      %v863 = vadd.f32 %v666, %v862
      %v864 = vpop.f32.mrf.mxu0
      %865 = vmatprep.mubr.bf16.mxu0 0
      %866 = vmatmul.mubr.bf16.gmra.mxu0 %v762
      %v867 = vpop.f32.mrf.mxu0
      %v868 = vadd.f32 %v666, %v867
      %v869 = vpop.f32.mrf.mxu0
      %v870 = vpop.f32.mrf.mxu0
      %v871 = vadd.f32 %v666, %v870
      %v872 = vpop.f32.mrf.mxu0
      %873 = vmatprep.mubr.bf16.mxu0 0
      %874 = vmatmul.mubr.bf16.gmra.mxu0 %v765
      %v875 = vpop.f32.mrf.mxu0
      %v876 = vadd.f32 %v666, %v875
      %v877 = vpop.f32.mrf.mxu0
      %v878 = vpop.f32.mrf.mxu0
      %v879 = vadd.f32 %v666, %v878
      %v880 = vpop.f32.mrf.mxu0
      %881 = vmatprep.mubr.bf16.mxu0 0
      %882 = vmatmul.mubr.bf16.gmra.mxu0 %v768
      %v883 = vpop.f32.mrf.mxu0
      %v884 = vadd.f32 %v666, %v883
      %v885 = vpop.f32.mrf.mxu0
      %v886 = vpop.f32.mrf.mxu0
      %v887 = vadd.f32 %v666, %v886
      %v888 = vpop.f32.mrf.mxu0
      %889 = vmatprep.mubr.bf16.mxu0 0
      %890 = vmatmul.mubr.bf16.gmra.mxu0 %v771
      %v891 = vpop.f32.mrf.mxu0
      %v892 = vadd.f32 %v666, %v891
      %v893 = vpop.f32.mrf.mxu0
      %v894 = vpop.f32.mrf.mxu0
      %v895 = vadd.f32 %v666, %v894
      %v896 = vpop.f32.mrf.mxu0
      %897 = vmatprep.mubr.bf16.mxu0 0
      %898 = vmatmul.mubr.bf16.gmra.mxu0 %v774
      %v899 = vpop.f32.mrf.mxu0
      %v900 = vadd.f32 %v666, %v899
      %v901 = vpop.f32.mrf.mxu0
      %v902 = vpop.f32.mrf.mxu0
      %v903 = vadd.f32 %v666, %v902
      %v904 = vpop.f32.mrf.mxu0
      %905 = vmatprep.mubr.bf16.mxu0 0
      %906 = vmatmul.mubr.bf16.gmra.mxu0 %v777
      %v907 = vpop.f32.mrf.mxu0
      %v908 = vadd.f32 %v666, %v907
      %v909 = vpop.f32.mrf.mxu0
      %v910 = vpop.f32.mrf.mxu0
      %v911 = vadd.f32 %v666, %v910
      %v912 = vpop.f32.mrf.mxu0
      %913 = vmatprep.mubr.bf16.mxu0 0
      %914 = vmatmul.mubr.bf16.gmra.mxu0 %v780
      %v915 = vpop.f32.mrf.mxu0
      %v916 = vadd.f32 %v666, %v915
      %v917 = vpop.f32.mrf.mxu0
      %v918 = vpop.f32.mrf.mxu0
      %v919 = vadd.f32 %v666, %v918
      %v920 = vpop.f32.mrf.mxu0
      %921 = vmatprep.mubr.bf16.mxu0 0
      %922 = vmatmul.mubr.bf16.gmra.mxu0 %v783
      %v923 = vpop.f32.mrf.mxu0
      %v924 = vadd.f32 %v666, %v923
      %v925 = vpop.f32.mrf.mxu0
      %v926 = vpop.f32.mrf.mxu0
      %v927 = vadd.f32 %v666, %v926
      %v928 = vpop.f32.mrf.mxu0
      %929 = vmatprep.mubr.bf16.mxu0 0
      %930 = vmatmul.mubr.bf16.gmra.mxu0 %v786
      %v931 = vpop.f32.mrf.mxu0
      %v932 = vadd.f32 %v666, %v931
      %v933 = vpop.f32.mrf.mxu0
      %v934 = vpop.f32.mrf.mxu0
      %v935 = vadd.f32 %v666, %v934
      %v936 = vpop.f32.mrf.mxu0
      %937 = vmatprep.mubr.bf16.mxu0 0
      %938 = vmatmul.mubr.bf16.gmra.mxu0 %v789
      %v939 = vpop.f32.mrf.mxu0
      %v940 = vadd.f32 %v666, %v939
      %v941 = vpop.f32.mrf.mxu0
      %v942 = vpop.f32.mrf.mxu0
      %v943 = vadd.f32 %v666, %v942
      %v944 = vpop.f32.mrf.mxu0
      %945 = vmatprep.mubr.bf16.mxu0 0
      %946 = vmatmul.mubr.bf16.gmra.mxu0 %v792
      %v947 = vpop.f32.mrf.mxu0
      %v948 = vadd.f32 %v666, %v947
      %v949 = vpop.f32.mrf.mxu0
      %v950 = vpop.f32.mrf.mxu0
      %v951 = vadd.f32 %v666, %v950
      %v952 = vpop.f32.mrf.mxu0
      %953 = vmatprep.mubr.bf16.mxu0 0
      %954 = vmatmul.mubr.bf16.gmra.mxu0 %v795
      %v955 = vpop.f32.mrf.mxu0
      %v956 = vadd.f32 %v666, %v955
      %v957 = vpop.f32.mrf.mxu0
      %v958 = vpop.f32.mrf.mxu0
      %v959 = vadd.f32 %v666, %v958
      %v960 = vpop.f32.mrf.mxu0
      %961 = vdwg.mxu0
      %v962 = vmax.f32 %v836, 0.0
      %v963 = vmax.f32 %v839, 0.0
      %v964 = vmax.f32 %v844, 0.0
      %v965 = vmax.f32 %v847, 0.0
      %v966 = vmax.f32 %v852, 0.0
      %v967 = vmax.f32 %v855, 0.0
      %v968 = vmax.f32 %v860, 0.0
      %v969 = vmax.f32 %v863, 0.0
      %v970 = vmax.f32 %v868, 0.0
      %v971 = vmax.f32 %v871, 0.0
      %v972 = vmax.f32 %v876, 0.0
      %v973 = vmax.f32 %v879, 0.0
      %v974 = vmax.f32 %v884, 0.0
      %v975 = vmax.f32 %v887, 0.0
      %v976 = vmax.f32 %v892, 0.0
      %v977 = vmax.f32 %v895, 0.0
      %v978 = vmax.f32 %v900, 0.0
      %v979 = vmax.f32 %v903, 0.0
      %v980 = vmax.f32 %v908, 0.0
      %v981 = vmax.f32 %v911, 0.0
      %v982 = vmax.f32 %v916, 0.0
      %v983 = vmax.f32 %v919, 0.0
      %v984 = vmax.f32 %v924, 0.0
      %v985 = vmax.f32 %v927, 0.0
      %v986 = vmax.f32 %v932, 0.0
      %v987 = vmax.f32 %v935, 0.0
      %v988 = vmax.f32 %v940, 0.0
      %v989 = vmax.f32 %v943, 0.0
      %v990 = vmax.f32 %v948, 0.0
      %v991 = vmax.f32 %v951, 0.0
      %v992 = vmax.f32 %v956, 0.0
      %v993 = vmax.f32 %v959, 0.0
      %v994 = vld [vmem:[%s2] sm:$0xf]
      %v995 = vld [vmem:[%s2 + $0x4] sm:$0xf]
      %v996 = vld [vmem:[%s2 + $0x8] sm:$0xf]
      %v997 = vld [vmem:[%s2 + $0xc] sm:$0xf]
      %v998 = vld [vmem:[%s2 + $0x10] sm:$0xf]
      %v999 = vld [vmem:[%s2 + $0x14] sm:$0xf]
      %v1000 = vld [vmem:[%s2 + $0x18] sm:$0xf]
      %v1001 = vld [vmem:[%s2 + $0x1c] sm:$0xf]
      %v1002 = vld [vmem:[%s2 + $0x20] sm:$0xf]
      %v1003 = vld [vmem:[%s2 + $0x24] sm:$0xf]
      %v1004 = vld [vmem:[%s2 + $0x28] sm:$0xf]
      %v1005 = vld [vmem:[%s2 + $0x2c] sm:$0xf]
      %v1006 = vld [vmem:[%s2 + $0x30] sm:$0xf]
      %v1007 = vld [vmem:[%s2 + $0x34] sm:$0xf]
      %v1008 = vld [vmem:[%s2 + $0x38] sm:$0xf]
      %v1009 = vld [vmem:[%s2 + $0x3c] sm:$0xf]
      %v1010 = vld [vmem:[%s2 + $0x40] sm:$0xf]
      %v1011 = vld [vmem:[%s2 + $0x44] sm:$0xf]
      %v1012 = vld [vmem:[%s2 + $0x48] sm:$0xf]
      %v1013 = vld [vmem:[%s2 + $0x4c] sm:$0xf]
      %v1014 = vld [vmem:[%s2 + $0x50] sm:$0xf]
      %v1015 = vld [vmem:[%s2 + $0x54] sm:$0xf]
      %v1016 = vld [vmem:[%s2 + $0x58] sm:$0xf]
      %v1017 = vld [vmem:[%s2 + $0x5c] sm:$0xf]
      %v1018 = vld [vmem:[%s2 + $0x60] sm:$0xf]
      %v1019 = vld [vmem:[%s2 + $0x64] sm:$0xf]
      %v1020 = vld [vmem:[%s2 + $0x68] sm:$0xf]
      %v1021 = vld [vmem:[%s2 + $0x6c] sm:$0xf]
      %v1022 = vld [vmem:[%s2 + $0x70] sm:$0xf]
      %v1023 = vld [vmem:[%s2 + $0x74] sm:$0xf]
      %v1024 = vld [vmem:[%s2 + $0x78] sm:$0xf]
      %v1025 = vld [vmem:[%s2 + $0x7c] sm:$0xf]
      %v1026 = vld [vmem:[%s401] sm:$0xf]
      %v1027 = vld [vmem:[%s401 + $0x4] sm:$0xf]
      %v1028 = vld [vmem:[%s401 + $0x8] sm:$0xf]
      %v1029 = vld [vmem:[%s401 + $0xc] sm:$0xf]
      %v1030 = vld [vmem:[%s401 + $0x10] sm:$0xf]
      %v1031 = vld [vmem:[%s401 + $0x14] sm:$0xf]
      %v1032 = vld [vmem:[%s401 + $0x18] sm:$0xf]
      %v1033 = vld [vmem:[%s401 + $0x1c] sm:$0xf]
      %v1066 = vunpack.c.l.b16 %v994
      %v1067 = vunpack.c.l.b16 %v995
      %v1068 = vunpack.c.l.b16 %v996
      %v1069 = vunpack.c.l.b16 %v997
      %v1070 = vunpack.c.l.b16 %v998
      %v1071 = vunpack.c.l.b16 %v999
      %v1072 = vunpack.c.l.b16 %v1000
      %v1073 = vunpack.c.l.b16 %v1001
      %v1074 = vunpack.c.l.b16 %v1002
      %v1075 = vunpack.c.l.b16 %v1003
      %v1076 = vunpack.c.l.b16 %v1004
      %v1077 = vunpack.c.l.b16 %v1005
      %v1078 = vunpack.c.l.b16 %v1006
      %v1079 = vunpack.c.l.b16 %v1007
      %v1080 = vunpack.c.l.b16 %v1008
      %v1081 = vunpack.c.l.b16 %v1009
      %v1082 = vunpack.c.l.b16 %v1010
      %v1083 = vunpack.c.l.b16 %v1011
      %v1084 = vunpack.c.l.b16 %v1012
      %v1085 = vunpack.c.l.b16 %v1013
      %v1086 = vunpack.c.l.b16 %v1014
      %v1087 = vunpack.c.l.b16 %v1015
      %v1088 = vunpack.c.l.b16 %v1016
      %v1089 = vunpack.c.l.b16 %v1017
      %v1090 = vunpack.c.l.b16 %v1018
      %v1091 = vunpack.c.l.b16 %v1019
      %v1092 = vunpack.c.l.b16 %v1020
      %v1093 = vunpack.c.l.b16 %v1021
      %v1094 = vunpack.c.l.b16 %v1022
      %v1095 = vunpack.c.l.b16 %v1023
      %v1096 = vunpack.c.l.b16 %v1024
      %v1097 = vunpack.c.l.b16 %v1025
      %v1098 = vpack.c.b16 %v1067, %v1066
      %v1099 = vpack.c.b16 %v1069, %v1068
      %v1100 = vpack.c.b16 %v1071, %v1070
      %v1101 = vpack.c.b16 %v1073, %v1072
      %v1102 = vpack.c.b16 %v1075, %v1074
      %v1103 = vpack.c.b16 %v1077, %v1076
      %v1104 = vpack.c.b16 %v1079, %v1078
      %v1105 = vpack.c.b16 %v1081, %v1080
      %v1106 = vpack.c.b16 %v1083, %v1082
      %v1107 = vpack.c.b16 %v1085, %v1084
      %v1108 = vpack.c.b16 %v1087, %v1086
      %v1109 = vpack.c.b16 %v1089, %v1088
      %v1110 = vpack.c.b16 %v1091, %v1090
      %v1111 = vpack.c.b16 %v1093, %v1092
      %v1112 = vpack.c.b16 %v1095, %v1094
      %v1113 = vpack.c.b16 %v1097, %v1096
      %v1122 = vunpack.c.l.b16 %v1026
      %v1123 = vunpack.c.l.b16 %v1027
      %v1124 = vunpack.c.l.b16 %v1028
      %v1125 = vunpack.c.l.b16 %v1029
      %v1126 = vunpack.c.l.b16 %v1030
      %v1127 = vunpack.c.l.b16 %v1031
      %v1128 = vunpack.c.l.b16 %v1032
      %v1129 = vunpack.c.l.b16 %v1033
      %v1130 = vpack.c.b16 %v1123, %v1122
      %v1131 = vpack.c.b16 %v1125, %v1124
      %v1132 = vpack.c.b16 %v1127, %v1126
      %v1133 = vpack.c.b16 %v1129, %v1128
      %vm1138 = vcmask 523264
      %v1140 = vsel %vm1138, %v1098, 0
      %v1143 = vsel %vm1138, %v1099, 0
      %v1146 = vsel %vm1138, %v1100, 0
      %v1149 = vsel %vm1138, %v1101, 0
      %v1152 = vsel %vm1138, %v1102, 0
      %v1155 = vsel %vm1138, %v1103, 0
      %v1158 = vsel %vm1138, %v1104, 0
      %v1161 = vsel %vm1138, %v1105, 0
      %v1164 = vsel %vm1138, %v1106, 0
      %v1167 = vsel %vm1138, %v1107, 0
      %v1170 = vsel %vm1138, %v1108, 0
      %v1173 = vsel %vm1138, %v1109, 0
      %v1176 = vsel %vm1138, %v1110, 0
      %v1179 = vsel %vm1138, %v1111, 0
      %v1182 = vsel %vm1138, %v1112, 0
      %v1185 = vsel %vm1138, %v1113, 0
      %1187 = vmatprep.subr.bf16.mxu0 0
      %1188 = vmatpush1.bf16.msra.mxu0 0
      %1189 = vmatprep.subr.bf16.mxu0 0
      %1190 = vmatpush1.bf16.msra.mxu0 0
      %1191 = vmatprep.subr.bf16.mxu0 0
      %1192 = vmatpush1.bf16.msra.mxu0 0
      %1193 = vmatprep.subr.bf16.mxu0 0
      %1194 = vmatpush1.bf16.msra.mxu0 0
      %1195 = vmatprep.subr.bf16.mxu0 0
      %1196 = vmatpush1.bf16.msra.mxu0 %v1133
      %1197 = vmatprep.subr.bf16.mxu0 0
      %1198 = vmatpush1.bf16.msra.mxu0 %v1132
      %1199 = vmatprep.subr.bf16.mxu0 0
      %1200 = vmatpush1.bf16.msra.mxu0 %v1131
      %1201 = vmatprep.subr.bf16.mxu0 0
      %1202 = vmatpush1.bf16.msra.mxu0 %v1130
      %1203 = vmatprep.subr.bf16.mxu0 0
      %1204 = vmatpush2.bf16.msra.mxu0 0
      %1205 = vmatprep.subr.bf16.mxu0 0
      %1206 = vmatpush2.bf16.msra.mxu0 0
      %1207 = vmatprep.subr.bf16.mxu0 0
      %1208 = vmatpush2.bf16.msra.mxu0 0
      %1209 = vmatprep.subr.bf16.mxu0 0
      %1210 = vmatpush2.bf16.msra.mxu0 0
      %1211 = vmatprep.subr.bf16.mxu0 0
      %1212 = vmatpush2.bf16.msra.mxu0 0
      %1213 = vmatprep.subr.bf16.mxu0 0
      %1214 = vmatpush2.bf16.msra.mxu0 0
      %1215 = vmatprep.subr.bf16.mxu0 0
      %1216 = vmatpush2.bf16.msra.mxu0 0
      %1217 = vmatprep.subr.bf16.mxu0 0
      %1218 = vmatpush2.bf16.msra.mxu0 0
      %1219 = vmatprep.mubr.bf16.mxu0 0
      %1220 = vmatmul.mubr.bf16.gmra.mxu0 %v1140
      %v1221 = vpop.f32.mrf.mxu0
      %v1222 = vadd.f32 0.0, %v1221
      %v1223 = vpop.f32.mrf.mxu0
      %v1224 = vpop.f32.mrf.mxu0
      %v1225 = vadd.f32 0.0, %v1224
      %v1226 = vpop.f32.mrf.mxu0
      %1227 = vmatprep.mubr.bf16.mxu0 0
      %1228 = vmatmul.mubr.bf16.gmra.mxu0 %v1143
      %v1229 = vpop.f32.mrf.mxu0
      %v1230 = vadd.f32 0.0, %v1229
      %v1231 = vpop.f32.mrf.mxu0
      %v1232 = vpop.f32.mrf.mxu0
      %v1233 = vadd.f32 0.0, %v1232
      %v1234 = vpop.f32.mrf.mxu0
      %1235 = vmatprep.mubr.bf16.mxu0 0
      %1236 = vmatmul.mubr.bf16.gmra.mxu0 %v1146
      %v1237 = vpop.f32.mrf.mxu0
      %v1238 = vadd.f32 0.0, %v1237
      %v1239 = vpop.f32.mrf.mxu0
      %v1240 = vpop.f32.mrf.mxu0
      %v1241 = vadd.f32 0.0, %v1240
      %v1242 = vpop.f32.mrf.mxu0
      %1243 = vmatprep.mubr.bf16.mxu0 0
      %1244 = vmatmul.mubr.bf16.gmra.mxu0 %v1149
      %v1245 = vpop.f32.mrf.mxu0
      %v1246 = vadd.f32 0.0, %v1245
      %v1247 = vpop.f32.mrf.mxu0
      %v1248 = vpop.f32.mrf.mxu0
      %v1249 = vadd.f32 0.0, %v1248
      %v1250 = vpop.f32.mrf.mxu0
      %1251 = vmatprep.mubr.bf16.mxu0 0
      %1252 = vmatmul.mubr.bf16.gmra.mxu0 %v1152
      %v1253 = vpop.f32.mrf.mxu0
      %v1254 = vadd.f32 0.0, %v1253
      %v1255 = vpop.f32.mrf.mxu0
      %v1256 = vpop.f32.mrf.mxu0
      %v1257 = vadd.f32 0.0, %v1256
      %v1258 = vpop.f32.mrf.mxu0
      %1259 = vmatprep.mubr.bf16.mxu0 0
      %1260 = vmatmul.mubr.bf16.gmra.mxu0 %v1155
      %v1261 = vpop.f32.mrf.mxu0
      %v1262 = vadd.f32 0.0, %v1261
      %v1263 = vpop.f32.mrf.mxu0
      %v1264 = vpop.f32.mrf.mxu0
      %v1265 = vadd.f32 0.0, %v1264
      %v1266 = vpop.f32.mrf.mxu0
      %1267 = vmatprep.mubr.bf16.mxu0 0
      %1268 = vmatmul.mubr.bf16.gmra.mxu0 %v1158
      %v1269 = vpop.f32.mrf.mxu0
      %v1270 = vadd.f32 0.0, %v1269
      %v1271 = vpop.f32.mrf.mxu0
      %v1272 = vpop.f32.mrf.mxu0
      %v1273 = vadd.f32 0.0, %v1272
      %v1274 = vpop.f32.mrf.mxu0
      %1275 = vmatprep.mubr.bf16.mxu0 0
      %1276 = vmatmul.mubr.bf16.gmra.mxu0 %v1161
      %v1277 = vpop.f32.mrf.mxu0
      %v1278 = vadd.f32 0.0, %v1277
      %v1279 = vpop.f32.mrf.mxu0
      %v1280 = vpop.f32.mrf.mxu0
      %v1281 = vadd.f32 0.0, %v1280
      %v1282 = vpop.f32.mrf.mxu0
      %1283 = vmatprep.mubr.bf16.mxu0 0
      %1284 = vmatmul.mubr.bf16.gmra.mxu0 %v1164
      %v1285 = vpop.f32.mrf.mxu0
      %v1286 = vadd.f32 0.0, %v1285
      %v1287 = vpop.f32.mrf.mxu0
      %v1288 = vpop.f32.mrf.mxu0
      %v1289 = vadd.f32 0.0, %v1288
      %v1290 = vpop.f32.mrf.mxu0
      %1291 = vmatprep.mubr.bf16.mxu0 0
      %1292 = vmatmul.mubr.bf16.gmra.mxu0 %v1167
      %v1293 = vpop.f32.mrf.mxu0
      %v1294 = vadd.f32 0.0, %v1293
      %v1295 = vpop.f32.mrf.mxu0
      %v1296 = vpop.f32.mrf.mxu0
      %v1297 = vadd.f32 0.0, %v1296
      %v1298 = vpop.f32.mrf.mxu0
      %1299 = vmatprep.mubr.bf16.mxu0 0
      %1300 = vmatmul.mubr.bf16.gmra.mxu0 %v1170
      %v1301 = vpop.f32.mrf.mxu0
      %v1302 = vadd.f32 0.0, %v1301
      %v1303 = vpop.f32.mrf.mxu0
      %v1304 = vpop.f32.mrf.mxu0
      %v1305 = vadd.f32 0.0, %v1304
      %v1306 = vpop.f32.mrf.mxu0
      %1307 = vmatprep.mubr.bf16.mxu0 0
      %1308 = vmatmul.mubr.bf16.gmra.mxu0 %v1173
      %v1309 = vpop.f32.mrf.mxu0
      %v1310 = vadd.f32 0.0, %v1309
      %v1311 = vpop.f32.mrf.mxu0
      %v1312 = vpop.f32.mrf.mxu0
      %v1313 = vadd.f32 0.0, %v1312
      %v1314 = vpop.f32.mrf.mxu0
      %1315 = vmatprep.mubr.bf16.mxu0 0
      %1316 = vmatmul.mubr.bf16.gmra.mxu0 %v1176
      %v1317 = vpop.f32.mrf.mxu0
      %v1318 = vadd.f32 0.0, %v1317
      %v1319 = vpop.f32.mrf.mxu0
      %v1320 = vpop.f32.mrf.mxu0
      %v1321 = vadd.f32 0.0, %v1320
      %v1322 = vpop.f32.mrf.mxu0
      %1323 = vmatprep.mubr.bf16.mxu0 0
      %1324 = vmatmul.mubr.bf16.gmra.mxu0 %v1179
      %v1325 = vpop.f32.mrf.mxu0
      %v1326 = vadd.f32 0.0, %v1325
      %v1327 = vpop.f32.mrf.mxu0
      %v1328 = vpop.f32.mrf.mxu0
      %v1329 = vadd.f32 0.0, %v1328
      %v1330 = vpop.f32.mrf.mxu0
      %1331 = vmatprep.mubr.bf16.mxu0 0
      %1332 = vmatmul.mubr.bf16.gmra.mxu0 %v1182
      %v1333 = vpop.f32.mrf.mxu0
      %v1334 = vadd.f32 0.0, %v1333
      %v1335 = vpop.f32.mrf.mxu0
      %v1336 = vpop.f32.mrf.mxu0
      %v1337 = vadd.f32 0.0, %v1336
      %v1338 = vpop.f32.mrf.mxu0
      %1339 = vmatprep.mubr.bf16.mxu0 0
      %1340 = vmatmul.mubr.bf16.gmra.mxu0 %v1185
      %v1341 = vpop.f32.mrf.mxu0
      %v1342 = vadd.f32 0.0, %v1341
      %v1343 = vpop.f32.mrf.mxu0
      %v1344 = vpop.f32.mrf.mxu0
      %v1345 = vadd.f32 0.0, %v1344
      %v1346 = vpop.f32.mrf.mxu0
      %1347 = vdwg.mxu0
      %v1348 = vpack.c.bf16 %v963, %v962
      %v1349 = vpack.c.bf16 %v965, %v964
      %v1350 = vpack.c.bf16 %v967, %v966
      %v1351 = vpack.c.bf16 %v969, %v968
      %v1352 = vpack.c.bf16 %v971, %v970
      %v1353 = vpack.c.bf16 %v973, %v972
      %v1354 = vpack.c.bf16 %v975, %v974
      %v1355 = vpack.c.bf16 %v977, %v976
      %v1356 = vpack.c.bf16 %v979, %v978
      %v1357 = vpack.c.bf16 %v981, %v980
      %v1358 = vpack.c.bf16 %v983, %v982
      %v1359 = vpack.c.bf16 %v985, %v984
      %v1360 = vpack.c.bf16 %v987, %v986
      %v1361 = vpack.c.bf16 %v989, %v988
      %v1362 = vpack.c.bf16 %v991, %v990
      %v1363 = vpack.c.bf16 %v993, %v992
      %v1380 = vunpack.c.l.b16 %v1348
      %v1381 = vunpack.c.h.b16 %v1348
      %v1382 = vunpack.c.l.b16 %v1349
      %v1383 = vunpack.c.h.b16 %v1349
      %v1384 = vunpack.c.l.b16 %v1350
      %v1385 = vunpack.c.h.b16 %v1350
      %v1386 = vunpack.c.l.b16 %v1351
      %v1387 = vunpack.c.h.b16 %v1351
      %v1388 = vunpack.c.l.b16 %v1352
      %v1389 = vunpack.c.h.b16 %v1352
      %v1390 = vunpack.c.l.b16 %v1353
      %v1391 = vunpack.c.h.b16 %v1353
      %v1392 = vunpack.c.l.b16 %v1354
      %v1393 = vunpack.c.h.b16 %v1354
      %v1394 = vunpack.c.l.b16 %v1355
      %v1395 = vunpack.c.h.b16 %v1355
      %v1396 = vunpack.c.l.b16 %v1356
      %v1397 = vunpack.c.h.b16 %v1356
      %v1398 = vunpack.c.l.b16 %v1357
      %v1399 = vunpack.c.h.b16 %v1357
      %v1400 = vunpack.c.l.b16 %v1358
      %v1401 = vunpack.c.h.b16 %v1358
      %v1402 = vunpack.c.l.b16 %v1359
      %v1403 = vunpack.c.h.b16 %v1359
      %v1404 = vunpack.c.l.b16 %v1360
      %v1405 = vunpack.c.h.b16 %v1360
      %v1406 = vunpack.c.l.b16 %v1361
      %v1407 = vunpack.c.h.b16 %v1361
      %v1408 = vunpack.c.l.b16 %v1362
      %v1409 = vunpack.c.h.b16 %v1362
      %v1410 = vunpack.c.l.b16 %v1363
      %v1411 = vunpack.c.h.b16 %v1363
      %v1412 = vpack.c.b16 %v1380, %v1380
      %v1413 = vpack.c.b16 %v1381, %v1381
      %v1414 = vpack.c.b16 %v1382, %v1382
      %v1415 = vpack.c.b16 %v1383, %v1383
      %v1416 = vpack.c.b16 %v1384, %v1384
      %v1417 = vpack.c.b16 %v1385, %v1385
      %v1418 = vpack.c.b16 %v1386, %v1386
      %v1419 = vpack.c.b16 %v1387, %v1387
      %v1420 = vpack.c.b16 %v1388, %v1388
      %v1421 = vpack.c.b16 %v1389, %v1389
      %v1422 = vpack.c.b16 %v1390, %v1390
      %v1423 = vpack.c.b16 %v1391, %v1391
      %v1424 = vpack.c.b16 %v1392, %v1392
      %v1425 = vpack.c.b16 %v1393, %v1393
      %v1426 = vpack.c.b16 %v1394, %v1394
      %v1427 = vpack.c.b16 %v1395, %v1395
      %v1428 = vpack.c.b16 %v1396, %v1396
      %v1429 = vpack.c.b16 %v1397, %v1397
      %v1430 = vpack.c.b16 %v1398, %v1398
      %v1431 = vpack.c.b16 %v1399, %v1399
      %v1432 = vpack.c.b16 %v1400, %v1400
      %v1433 = vpack.c.b16 %v1401, %v1401
      %v1434 = vpack.c.b16 %v1402, %v1402
      %v1435 = vpack.c.b16 %v1403, %v1403
      %v1436 = vpack.c.b16 %v1404, %v1404
      %v1437 = vpack.c.b16 %v1405, %v1405
      %v1438 = vpack.c.b16 %v1406, %v1406
      %v1439 = vpack.c.b16 %v1407, %v1407
      %v1440 = vpack.c.b16 %v1408, %v1408
      %v1441 = vpack.c.b16 %v1409, %v1409
      %v1442 = vpack.c.b16 %v1410, %v1410
      %v1443 = vpack.c.b16 %v1411, %v1411
      %vm1444 = vsmask.f32 4368
      %vm1445 = vmor %vm419, %vm1444
      %v1447 = vshrl.u32 %v1412, 16
      %v1449 = vrot.slane %v1447, 7
      %v1450 = vshll.u32 %v1412, 16
      %v1452 = vor.u32 %v1449, %v1450
      %v1453 = vrot.slane %v1449, 4
      %v1455 = vshrl.u32 %v1413, 16
      %v1457 = vrot.slane %v1455, 7
      %v1458 = vshll.u32 %v1413, 16
      %v1460 = vor.u32 %v1457, %v1458
      %v1461 = vsel %vm1445, %v1453, %v1460
      %v1462 = vrot.slane %v1457, 4
      %v1464 = vshrl.u32 %v1414, 16
      %v1466 = vrot.slane %v1464, 7
      %v1467 = vshll.u32 %v1414, 16
      %v1469 = vor.u32 %v1466, %v1467
      %v1470 = vrot.slane %v1466, 4
      %v1472 = vshrl.u32 %v1415, 16
      %v1474 = vrot.slane %v1472, 7
      %v1475 = vshll.u32 %v1415, 16
      %v1477 = vor.u32 %v1474, %v1475
      %v1478 = vsel %vm1445, %v1470, %v1477
      %v1479 = vrot.slane %v1474, 4
      %v1481 = vshrl.u32 %v1416, 16
      %v1483 = vrot.slane %v1481, 7
      %v1484 = vshll.u32 %v1416, 16
      %v1486 = vor.u32 %v1483, %v1484
      %v1487 = vrot.slane %v1483, 4
      %v1489 = vshrl.u32 %v1417, 16
      %v1491 = vrot.slane %v1489, 7
      %v1492 = vshll.u32 %v1417, 16
      %v1494 = vor.u32 %v1491, %v1492
      %v1495 = vsel %vm1445, %v1487, %v1494
      %v1496 = vrot.slane %v1491, 4
      %v1498 = vshrl.u32 %v1418, 16
      %v1500 = vrot.slane %v1498, 7
      %v1501 = vshll.u32 %v1418, 16
      %v1503 = vor.u32 %v1500, %v1501
      %v1504 = vrot.slane %v1500, 4
      %v1506 = vshrl.u32 %v1419, 16
      %v1508 = vrot.slane %v1506, 7
      %v1509 = vshll.u32 %v1419, 16
      %v1511 = vor.u32 %v1508, %v1509
      %v1512 = vsel %vm1445, %v1504, %v1511
      %v1513 = vrot.slane %v1508, 4
      %v1515 = vshrl.u32 %v1420, 16
      %v1517 = vrot.slane %v1515, 7
      %v1518 = vshll.u32 %v1420, 16
      %v1520 = vor.u32 %v1517, %v1518
      %v1521 = vrot.slane %v1517, 4
      %v1523 = vshrl.u32 %v1421, 16
      %v1525 = vrot.slane %v1523, 7
      %v1526 = vshll.u32 %v1421, 16
      %v1528 = vor.u32 %v1525, %v1526
      %v1529 = vsel %vm1445, %v1521, %v1528
      %v1530 = vrot.slane %v1525, 4
      %v1532 = vshrl.u32 %v1422, 16
      %v1534 = vrot.slane %v1532, 7
      %v1535 = vshll.u32 %v1422, 16
      %v1537 = vor.u32 %v1534, %v1535
      %v1538 = vrot.slane %v1534, 4
      %v1540 = vshrl.u32 %v1423, 16
      %v1542 = vrot.slane %v1540, 7
      %v1543 = vshll.u32 %v1423, 16
      %v1545 = vor.u32 %v1542, %v1543
      %v1546 = vsel %vm1445, %v1538, %v1545
      %v1547 = vrot.slane %v1542, 4
      %v1549 = vshrl.u32 %v1424, 16
      %v1551 = vrot.slane %v1549, 7
      %v1552 = vshll.u32 %v1424, 16
      %v1554 = vor.u32 %v1551, %v1552
      %v1555 = vrot.slane %v1551, 4
      %v1557 = vshrl.u32 %v1425, 16
      %v1559 = vrot.slane %v1557, 7
      %v1560 = vshll.u32 %v1425, 16
      %v1562 = vor.u32 %v1559, %v1560
      %v1563 = vsel %vm1445, %v1555, %v1562
      %v1564 = vrot.slane %v1559, 4
      %v1566 = vshrl.u32 %v1426, 16
      %v1568 = vrot.slane %v1566, 7
      %v1569 = vshll.u32 %v1426, 16
      %v1571 = vor.u32 %v1568, %v1569
      %v1572 = vrot.slane %v1568, 4
      %v1574 = vshrl.u32 %v1427, 16
      %v1576 = vrot.slane %v1574, 7
      %v1577 = vshll.u32 %v1427, 16
      %v1579 = vor.u32 %v1576, %v1577
      %v1580 = vsel %vm1445, %v1572, %v1579
      %v1581 = vrot.slane %v1576, 4
      %v1583 = vshrl.u32 %v1428, 16
      %v1585 = vrot.slane %v1583, 7
      %v1586 = vshll.u32 %v1428, 16
      %v1588 = vor.u32 %v1585, %v1586
      %v1589 = vrot.slane %v1585, 4
      %v1591 = vshrl.u32 %v1429, 16
      %v1593 = vrot.slane %v1591, 7
      %v1594 = vshll.u32 %v1429, 16
      %v1596 = vor.u32 %v1593, %v1594
      %v1597 = vsel %vm1445, %v1589, %v1596
      %v1598 = vrot.slane %v1593, 4
      %v1600 = vshrl.u32 %v1430, 16
      %v1602 = vrot.slane %v1600, 7
      %v1603 = vshll.u32 %v1430, 16
      %v1605 = vor.u32 %v1602, %v1603
      %v1606 = vrot.slane %v1602, 4
      %v1608 = vshrl.u32 %v1431, 16
      %v1610 = vrot.slane %v1608, 7
      %v1611 = vshll.u32 %v1431, 16
      %v1613 = vor.u32 %v1610, %v1611
      %v1614 = vsel %vm1445, %v1606, %v1613
      %v1615 = vrot.slane %v1610, 4
      %v1617 = vshrl.u32 %v1432, 16
      %v1619 = vrot.slane %v1617, 7
      %v1620 = vshll.u32 %v1432, 16
      %v1622 = vor.u32 %v1619, %v1620
      %v1623 = vrot.slane %v1619, 4
      %v1625 = vshrl.u32 %v1433, 16
      %v1627 = vrot.slane %v1625, 7
      %v1628 = vshll.u32 %v1433, 16
      %v1630 = vor.u32 %v1627, %v1628
      %v1631 = vsel %vm1445, %v1623, %v1630
      %v1632 = vrot.slane %v1627, 4
      %v1634 = vshrl.u32 %v1434, 16
      %v1636 = vrot.slane %v1634, 7
      %v1637 = vshll.u32 %v1434, 16
      %v1639 = vor.u32 %v1636, %v1637
      %v1640 = vrot.slane %v1636, 4
      %v1642 = vshrl.u32 %v1435, 16
      %v1644 = vrot.slane %v1642, 7
      %v1645 = vshll.u32 %v1435, 16
      %v1647 = vor.u32 %v1644, %v1645
      %v1648 = vsel %vm1445, %v1640, %v1647
      %v1649 = vrot.slane %v1644, 4
      %v1651 = vshrl.u32 %v1436, 16
      %v1653 = vrot.slane %v1651, 7
      %v1654 = vshll.u32 %v1436, 16
      %v1656 = vor.u32 %v1653, %v1654
      %v1657 = vrot.slane %v1653, 4
      %v1659 = vshrl.u32 %v1437, 16
      %v1661 = vrot.slane %v1659, 7
      %v1662 = vshll.u32 %v1437, 16
      %v1664 = vor.u32 %v1661, %v1662
      %v1665 = vsel %vm1445, %v1657, %v1664
      %v1666 = vrot.slane %v1661, 4
      %v1668 = vshrl.u32 %v1438, 16
      %v1670 = vrot.slane %v1668, 7
      %v1671 = vshll.u32 %v1438, 16
      %v1673 = vor.u32 %v1670, %v1671
      %v1674 = vrot.slane %v1670, 4
      %v1676 = vshrl.u32 %v1439, 16
      %v1678 = vrot.slane %v1676, 7
      %v1679 = vshll.u32 %v1439, 16
      %v1681 = vor.u32 %v1678, %v1679
      %v1682 = vsel %vm1445, %v1674, %v1681
      %v1683 = vrot.slane %v1678, 4
      %v1685 = vshrl.u32 %v1440, 16
      %v1687 = vrot.slane %v1685, 7
      %v1688 = vshll.u32 %v1440, 16
      %v1690 = vor.u32 %v1687, %v1688
      %v1691 = vrot.slane %v1687, 4
      %v1693 = vshrl.u32 %v1441, 16
      %v1695 = vrot.slane %v1693, 7
      %v1696 = vshll.u32 %v1441, 16
      %v1698 = vor.u32 %v1695, %v1696
      %v1699 = vsel %vm1445, %v1691, %v1698
      %v1700 = vrot.slane %v1695, 4
      %v1702 = vshrl.u32 %v1442, 16
      %v1704 = vrot.slane %v1702, 7
      %v1705 = vshll.u32 %v1442, 16
      %v1707 = vor.u32 %v1704, %v1705
      %v1708 = vrot.slane %v1704, 4
      %v1710 = vshrl.u32 %v1443, 16
      %v1712 = vrot.slane %v1710, 7
      %v1713 = vshll.u32 %v1443, 16
      %v1715 = vor.u32 %v1712, %v1713
      %v1716 = vsel %vm1445, %v1708, %v1715
      %v1717 = vrot.slane %v1712, 4
      %vm1766 = vcmask 60416
      %vm1767 = vmand %vm1766, %vm469
      %v1768 = vld [vmem:[%s417] sm:$0xf]
      %v1769 = vsel %vm1767, %v1452, %v1768
      %1770 = vst [vmem:[%s417] sm:$0xf] %v1769
      %vm1771 = vcmask 60416
      %1772 = vst.msk [vmem:[%s417 + $0x4] sm:$0xf] %vm1771, %v1461
      %vm1773 = vcmask 57344
      %vm1774 = vmand %vm1773, %vm419
      %v1775 = vld [vmem:[%s417 + $0x8] sm:$0x1]
      %v1776 = vsel %vm1774, %v1462, %v1775
      %1777 = vst [vmem:[%s417 + $0x8] sm:$0x1] %v1776
      %v1778 = vld [vmem:[%s417 + $0xc] sm:$0xf]
      %v1779 = vsel %vm1767, %v1469, %v1778
      %1780 = vst [vmem:[%s417 + $0xc] sm:$0xf] %v1779
      %1781 = vst.msk [vmem:[%s417 + $0x10] sm:$0xf] %vm1771, %v1478
      %v1782 = vld [vmem:[%s417 + $0x14] sm:$0x1]
      %v1783 = vsel %vm1774, %v1479, %v1782
      %1784 = vst [vmem:[%s417 + $0x14] sm:$0x1] %v1783
      %v1785 = vld [vmem:[%s417 + $0x18] sm:$0xf]
      %v1786 = vsel %vm1767, %v1486, %v1785
      %1787 = vst [vmem:[%s417 + $0x18] sm:$0xf] %v1786
      %1788 = vst.msk [vmem:[%s417 + $0x1c] sm:$0xf] %vm1771, %v1495
      %v1789 = vld [vmem:[%s417 + $0x20] sm:$0x1]
      %v1790 = vsel %vm1774, %v1496, %v1789
      %1791 = vst [vmem:[%s417 + $0x20] sm:$0x1] %v1790
      %v1792 = vld [vmem:[%s417 + $0x24] sm:$0xf]
      %v1793 = vsel %vm1767, %v1503, %v1792
      %1794 = vst [vmem:[%s417 + $0x24] sm:$0xf] %v1793
      %1795 = vst.msk [vmem:[%s417 + $0x28] sm:$0xf] %vm1771, %v1512
      %v1796 = vld [vmem:[%s417 + $0x2c] sm:$0x1]
      %v1797 = vsel %vm1774, %v1513, %v1796
      %1798 = vst [vmem:[%s417 + $0x2c] sm:$0x1] %v1797
      %v1799 = vld [vmem:[%s417 + $0x30] sm:$0xf]
      %v1800 = vsel %vm1767, %v1520, %v1799
      %1801 = vst [vmem:[%s417 + $0x30] sm:$0xf] %v1800
      %1802 = vst.msk [vmem:[%s417 + $0x34] sm:$0xf] %vm1771, %v1529
      %v1803 = vld [vmem:[%s417 + $0x38] sm:$0x1]
      %v1804 = vsel %vm1774, %v1530, %v1803
      %1805 = vst [vmem:[%s417 + $0x38] sm:$0x1] %v1804
      %v1806 = vld [vmem:[%s417 + $0x3c] sm:$0xf]
      %v1807 = vsel %vm1767, %v1537, %v1806
      %1808 = vst [vmem:[%s417 + $0x3c] sm:$0xf] %v1807
      %1809 = vst.msk [vmem:[%s417 + $0x40] sm:$0xf] %vm1771, %v1546
      %v1810 = vld [vmem:[%s417 + $0x44] sm:$0x1]
      %v1811 = vsel %vm1774, %v1547, %v1810
      %1812 = vst [vmem:[%s417 + $0x44] sm:$0x1] %v1811
      %v1813 = vld [vmem:[%s417 + $0x48] sm:$0xf]
      %v1814 = vsel %vm1767, %v1554, %v1813
      %1815 = vst [vmem:[%s417 + $0x48] sm:$0xf] %v1814
      %1816 = vst.msk [vmem:[%s417 + $0x4c] sm:$0xf] %vm1771, %v1563
      %v1817 = vld [vmem:[%s417 + $0x50] sm:$0x1]
      %v1818 = vsel %vm1774, %v1564, %v1817
      %1819 = vst [vmem:[%s417 + $0x50] sm:$0x1] %v1818
      %v1820 = vld [vmem:[%s417 + $0x54] sm:$0xf]
      %v1821 = vsel %vm1767, %v1571, %v1820
      %1822 = vst [vmem:[%s417 + $0x54] sm:$0xf] %v1821
      %1823 = vst.msk [vmem:[%s417 + $0x58] sm:$0xf] %vm1771, %v1580
      %v1824 = vld [vmem:[%s417 + $0x5c] sm:$0x1]
      %v1825 = vsel %vm1774, %v1581, %v1824
      %1826 = vst [vmem:[%s417 + $0x5c] sm:$0x1] %v1825
      %v1827 = vld [vmem:[%s417 + $0x60] sm:$0xf]
      %v1828 = vsel %vm1767, %v1588, %v1827
      %1829 = vst [vmem:[%s417 + $0x60] sm:$0xf] %v1828
      %1830 = vst.msk [vmem:[%s417 + $0x64] sm:$0xf] %vm1771, %v1597
      %v1831 = vld [vmem:[%s417 + $0x68] sm:$0x1]
      %v1832 = vsel %vm1774, %v1598, %v1831
      %1833 = vst [vmem:[%s417 + $0x68] sm:$0x1] %v1832
      %v1834 = vld [vmem:[%s417 + $0x6c] sm:$0xf]
      %v1835 = vsel %vm1767, %v1605, %v1834
      %1836 = vst [vmem:[%s417 + $0x6c] sm:$0xf] %v1835
      %1837 = vst.msk [vmem:[%s417 + $0x70] sm:$0xf] %vm1771, %v1614
      %v1838 = vld [vmem:[%s417 + $0x74] sm:$0x1]
      %v1839 = vsel %vm1774, %v1615, %v1838
      %1840 = vst [vmem:[%s417 + $0x74] sm:$0x1] %v1839
      %v1841 = vld [vmem:[%s417 + $0x78] sm:$0xf]
      %v1842 = vsel %vm1767, %v1622, %v1841
      %1843 = vst [vmem:[%s417 + $0x78] sm:$0xf] %v1842
      %1844 = vst.msk [vmem:[%s417 + $0x7c] sm:$0xf] %vm1771, %v1631
      %v1845 = vld [vmem:[%s417 + $0x80] sm:$0x1]
      %v1846 = vsel %vm1774, %v1632, %v1845
      %1847 = vst [vmem:[%s417 + $0x80] sm:$0x1] %v1846
      %v1848 = vld [vmem:[%s417 + $0x84] sm:$0xf]
      %v1849 = vsel %vm1767, %v1639, %v1848
      %1850 = vst [vmem:[%s417 + $0x84] sm:$0xf] %v1849
      %1851 = vst.msk [vmem:[%s417 + $0x88] sm:$0xf] %vm1771, %v1648
      %v1852 = vld [vmem:[%s417 + $0x8c] sm:$0x1]
      %v1853 = vsel %vm1774, %v1649, %v1852
      %1854 = vst [vmem:[%s417 + $0x8c] sm:$0x1] %v1853
      %v1855 = vld [vmem:[%s417 + $0x90] sm:$0xf]
      %v1856 = vsel %vm1767, %v1656, %v1855
      %1857 = vst [vmem:[%s417 + $0x90] sm:$0xf] %v1856
      %1858 = vst.msk [vmem:[%s417 + $0x94] sm:$0xf] %vm1771, %v1665
      %v1859 = vld [vmem:[%s417 + $0x98] sm:$0x1]
      %v1860 = vsel %vm1774, %v1666, %v1859
      %1861 = vst [vmem:[%s417 + $0x98] sm:$0x1] %v1860
      %v1862 = vld [vmem:[%s417 + $0x9c] sm:$0xf]
      %v1863 = vsel %vm1767, %v1673, %v1862
      %1864 = vst [vmem:[%s417 + $0x9c] sm:$0xf] %v1863
      %1865 = vst.msk [vmem:[%s417 + $0xa0] sm:$0xf] %vm1771, %v1682
      %v1866 = vld [vmem:[%s417 + $0xa4] sm:$0x1]
      %v1867 = vsel %vm1774, %v1683, %v1866
      %1868 = vst [vmem:[%s417 + $0xa4] sm:$0x1] %v1867
      %v1869 = vld [vmem:[%s417 + $0xa8] sm:$0xf]
      %v1870 = vsel %vm1767, %v1690, %v1869
      %1871 = vst [vmem:[%s417 + $0xa8] sm:$0xf] %v1870
      %1872 = vst.msk [vmem:[%s417 + $0xac] sm:$0xf] %vm1771, %v1699
      %v1873 = vld [vmem:[%s417 + $0xb0] sm:$0x1]
      %v1874 = vsel %vm1774, %v1700, %v1873
      %1875 = vst [vmem:[%s417 + $0xb0] sm:$0x1] %v1874
      %v1876 = vld [vmem:[%s417 + $0xb4] sm:$0xf]
      %v1877 = vsel %vm1767, %v1707, %v1876
      %1878 = vst [vmem:[%s417 + $0xb4] sm:$0xf] %v1877
      %1879 = vst.msk [vmem:[%s417 + $0xb8] sm:$0xf] %vm1771, %v1716
      %v1880 = vld [vmem:[%s417 + $0xbc] sm:$0x1]
      %v1881 = vsel %vm1774, %v1717, %v1880
      %1882 = vst [vmem:[%s417 + $0xbc] sm:$0x1] %v1881
      %v1883 = vpack.c.bf16 %v1225, %v1222
      %v1884 = vpack.c.bf16 %v1233, %v1230
      %v1885 = vpack.c.bf16 %v1241, %v1238
      %v1886 = vpack.c.bf16 %v1249, %v1246
      %v1887 = vpack.c.bf16 %v1257, %v1254
      %v1888 = vpack.c.bf16 %v1265, %v1262
      %v1889 = vpack.c.bf16 %v1273, %v1270
      %v1890 = vpack.c.bf16 %v1281, %v1278
      %v1891 = vpack.c.bf16 %v1289, %v1286
      %v1892 = vpack.c.bf16 %v1297, %v1294
      %v1893 = vpack.c.bf16 %v1305, %v1302
      %v1894 = vpack.c.bf16 %v1313, %v1310
      %v1895 = vpack.c.bf16 %v1321, %v1318
      %v1896 = vpack.c.bf16 %v1329, %v1326
      %v1897 = vpack.c.bf16 %v1337, %v1334
      %v1898 = vpack.c.bf16 %v1345, %v1342
      %v1915 = vunpack.c.l.b16 %v1883
      %v1916 = vunpack.c.h.b16 %v1883
      %v1917 = vunpack.c.l.b16 %v1884
      %v1918 = vunpack.c.h.b16 %v1884
      %v1919 = vunpack.c.l.b16 %v1885
      %v1920 = vunpack.c.h.b16 %v1885
      %v1921 = vunpack.c.l.b16 %v1886
      %v1922 = vunpack.c.h.b16 %v1886
      %v1923 = vunpack.c.l.b16 %v1887
      %v1924 = vunpack.c.h.b16 %v1887
      %v1925 = vunpack.c.l.b16 %v1888
      %v1926 = vunpack.c.h.b16 %v1888
      %v1927 = vunpack.c.l.b16 %v1889
      %v1928 = vunpack.c.h.b16 %v1889
      %v1929 = vunpack.c.l.b16 %v1890
      %v1930 = vunpack.c.h.b16 %v1890
      %v1931 = vunpack.c.l.b16 %v1891
      %v1932 = vunpack.c.h.b16 %v1891
      %v1933 = vunpack.c.l.b16 %v1892
      %v1934 = vunpack.c.h.b16 %v1892
      %v1935 = vunpack.c.l.b16 %v1893
      %v1936 = vunpack.c.h.b16 %v1893
      %v1937 = vunpack.c.l.b16 %v1894
      %v1938 = vunpack.c.h.b16 %v1894
      %v1939 = vunpack.c.l.b16 %v1895
      %v1940 = vunpack.c.h.b16 %v1895
      %v1941 = vunpack.c.l.b16 %v1896
      %v1942 = vunpack.c.h.b16 %v1896
      %v1943 = vunpack.c.l.b16 %v1897
      %v1944 = vunpack.c.h.b16 %v1897
      %v1945 = vunpack.c.l.b16 %v1898
      %v1946 = vunpack.c.h.b16 %v1898
      %v1947 = vpack.c.b16 %v1915, %v1915
      %v1948 = vpack.c.b16 %v1916, %v1916
      %v1949 = vpack.c.b16 %v1917, %v1917
      %v1950 = vpack.c.b16 %v1918, %v1918
      %v1951 = vpack.c.b16 %v1919, %v1919
      %v1952 = vpack.c.b16 %v1920, %v1920
      %v1953 = vpack.c.b16 %v1921, %v1921
      %v1954 = vpack.c.b16 %v1922, %v1922
      %v1955 = vpack.c.b16 %v1923, %v1923
      %v1956 = vpack.c.b16 %v1924, %v1924
      %v1957 = vpack.c.b16 %v1925, %v1925
      %v1958 = vpack.c.b16 %v1926, %v1926
      %v1959 = vpack.c.b16 %v1927, %v1927
      %v1960 = vpack.c.b16 %v1928, %v1928
      %v1961 = vpack.c.b16 %v1929, %v1929
      %v1962 = vpack.c.b16 %v1930, %v1930
      %v1963 = vpack.c.b16 %v1931, %v1931
      %v1964 = vpack.c.b16 %v1932, %v1932
      %v1965 = vpack.c.b16 %v1933, %v1933
      %v1966 = vpack.c.b16 %v1934, %v1934
      %v1967 = vpack.c.b16 %v1935, %v1935
      %v1968 = vpack.c.b16 %v1936, %v1936
      %v1969 = vpack.c.b16 %v1937, %v1937
      %v1970 = vpack.c.b16 %v1938, %v1938
      %v1971 = vpack.c.b16 %v1939, %v1939
      %v1972 = vpack.c.b16 %v1940, %v1940
      %v1973 = vpack.c.b16 %v1941, %v1941
      %v1974 = vpack.c.b16 %v1942, %v1942
      %v1975 = vpack.c.b16 %v1943, %v1943
      %v1976 = vpack.c.b16 %v1944, %v1944
      %v1977 = vpack.c.b16 %v1945, %v1945
      %v1978 = vpack.c.b16 %v1946, %v1946
      %v1980 = vshrl.u32 %v1947, 16
      %v1982 = vrot.slane %v1980, 7
      %v1983 = vshll.u32 %v1947, 16
      %v1985 = vor.u32 %v1982, %v1983
      %v1986 = vrot.slane %v1982, 4
      %v1988 = vshrl.u32 %v1948, 16
      %v1990 = vrot.slane %v1988, 7
      %v1991 = vshll.u32 %v1948, 16
      %v1993 = vor.u32 %v1990, %v1991
      %v1994 = vsel %vm1445, %v1986, %v1993
      %v1995 = vrot.slane %v1990, 4
      %v1997 = vshrl.u32 %v1949, 16
      %v1999 = vrot.slane %v1997, 7
      %v2000 = vshll.u32 %v1949, 16
      %v2002 = vor.u32 %v1999, %v2000
      %v2003 = vrot.slane %v1999, 4
      %v2005 = vshrl.u32 %v1950, 16
      %v2007 = vrot.slane %v2005, 7
      %v2008 = vshll.u32 %v1950, 16
      %v2010 = vor.u32 %v2007, %v2008
      %v2011 = vsel %vm1445, %v2003, %v2010
      %v2012 = vrot.slane %v2007, 4
      %v2014 = vshrl.u32 %v1951, 16
      %v2016 = vrot.slane %v2014, 7
      %v2017 = vshll.u32 %v1951, 16
      %v2019 = vor.u32 %v2016, %v2017
      %v2020 = vrot.slane %v2016, 4
      %v2022 = vshrl.u32 %v1952, 16
      %v2024 = vrot.slane %v2022, 7
      %v2025 = vshll.u32 %v1952, 16
      %v2027 = vor.u32 %v2024, %v2025
      %v2028 = vsel %vm1445, %v2020, %v2027
      %v2029 = vrot.slane %v2024, 4
      %v2031 = vshrl.u32 %v1953, 16
      %v2033 = vrot.slane %v2031, 7
      %v2034 = vshll.u32 %v1953, 16
      %v2036 = vor.u32 %v2033, %v2034
      %v2037 = vrot.slane %v2033, 4
      %v2039 = vshrl.u32 %v1954, 16
      %v2041 = vrot.slane %v2039, 7
      %v2042 = vshll.u32 %v1954, 16
      %v2044 = vor.u32 %v2041, %v2042
      %v2045 = vsel %vm1445, %v2037, %v2044
      %v2046 = vrot.slane %v2041, 4
      %v2048 = vshrl.u32 %v1955, 16
      %v2050 = vrot.slane %v2048, 7
      %v2051 = vshll.u32 %v1955, 16
      %v2053 = vor.u32 %v2050, %v2051
      %v2054 = vrot.slane %v2050, 4
      %v2056 = vshrl.u32 %v1956, 16
      %v2058 = vrot.slane %v2056, 7
      %v2059 = vshll.u32 %v1956, 16
      %v2061 = vor.u32 %v2058, %v2059
      %v2062 = vsel %vm1445, %v2054, %v2061
      %v2063 = vrot.slane %v2058, 4
      %v2065 = vshrl.u32 %v1957, 16
      %v2067 = vrot.slane %v2065, 7
      %v2068 = vshll.u32 %v1957, 16
      %v2070 = vor.u32 %v2067, %v2068
      %v2071 = vrot.slane %v2067, 4
      %v2073 = vshrl.u32 %v1958, 16
      %v2075 = vrot.slane %v2073, 7
      %v2076 = vshll.u32 %v1958, 16
      %v2078 = vor.u32 %v2075, %v2076
      %v2079 = vsel %vm1445, %v2071, %v2078
      %v2080 = vrot.slane %v2075, 4
      %v2082 = vshrl.u32 %v1959, 16
      %v2084 = vrot.slane %v2082, 7
      %v2085 = vshll.u32 %v1959, 16
      %v2087 = vor.u32 %v2084, %v2085
      %v2088 = vrot.slane %v2084, 4
      %v2090 = vshrl.u32 %v1960, 16
      %v2092 = vrot.slane %v2090, 7
      %v2093 = vshll.u32 %v1960, 16
      %v2095 = vor.u32 %v2092, %v2093
      %v2096 = vsel %vm1445, %v2088, %v2095
      %v2097 = vrot.slane %v2092, 4
      %v2099 = vshrl.u32 %v1961, 16
      %v2101 = vrot.slane %v2099, 7
      %v2102 = vshll.u32 %v1961, 16
      %v2104 = vor.u32 %v2101, %v2102
      %v2105 = vrot.slane %v2101, 4
      %v2107 = vshrl.u32 %v1962, 16
      %v2109 = vrot.slane %v2107, 7
      %v2110 = vshll.u32 %v1962, 16
      %v2112 = vor.u32 %v2109, %v2110
      %v2113 = vsel %vm1445, %v2105, %v2112
      %v2114 = vrot.slane %v2109, 4
      %v2116 = vshrl.u32 %v1963, 16
      %v2118 = vrot.slane %v2116, 7
      %v2119 = vshll.u32 %v1963, 16
      %v2121 = vor.u32 %v2118, %v2119
      %v2122 = vrot.slane %v2118, 4
      %v2124 = vshrl.u32 %v1964, 16
      %v2126 = vrot.slane %v2124, 7
      %v2127 = vshll.u32 %v1964, 16
      %v2129 = vor.u32 %v2126, %v2127
      %v2130 = vsel %vm1445, %v2122, %v2129
      %v2131 = vrot.slane %v2126, 4
      %v2133 = vshrl.u32 %v1965, 16
      %v2135 = vrot.slane %v2133, 7
      %v2136 = vshll.u32 %v1965, 16
      %v2138 = vor.u32 %v2135, %v2136
      %v2139 = vrot.slane %v2135, 4
      %v2141 = vshrl.u32 %v1966, 16
      %v2143 = vrot.slane %v2141, 7
      %v2144 = vshll.u32 %v1966, 16
      %v2146 = vor.u32 %v2143, %v2144
      %v2147 = vsel %vm1445, %v2139, %v2146
      %v2148 = vrot.slane %v2143, 4
      %v2150 = vshrl.u32 %v1967, 16
      %v2152 = vrot.slane %v2150, 7
      %v2153 = vshll.u32 %v1967, 16
      %v2155 = vor.u32 %v2152, %v2153
      %v2156 = vrot.slane %v2152, 4
      %v2158 = vshrl.u32 %v1968, 16
      %v2160 = vrot.slane %v2158, 7
      %v2161 = vshll.u32 %v1968, 16
      %v2163 = vor.u32 %v2160, %v2161
      %v2164 = vsel %vm1445, %v2156, %v2163
      %v2165 = vrot.slane %v2160, 4
      %v2167 = vshrl.u32 %v1969, 16
      %v2169 = vrot.slane %v2167, 7
      %v2170 = vshll.u32 %v1969, 16
      %v2172 = vor.u32 %v2169, %v2170
      %v2173 = vrot.slane %v2169, 4
      %v2175 = vshrl.u32 %v1970, 16
      %v2177 = vrot.slane %v2175, 7
      %v2178 = vshll.u32 %v1970, 16
      %v2180 = vor.u32 %v2177, %v2178
      %v2181 = vsel %vm1445, %v2173, %v2180
      %v2182 = vrot.slane %v2177, 4
      %v2184 = vshrl.u32 %v1971, 16
      %v2186 = vrot.slane %v2184, 7
      %v2187 = vshll.u32 %v1971, 16
      %v2189 = vor.u32 %v2186, %v2187
      %v2190 = vrot.slane %v2186, 4
      %v2192 = vshrl.u32 %v1972, 16
      %v2194 = vrot.slane %v2192, 7
      %v2195 = vshll.u32 %v1972, 16
      %v2197 = vor.u32 %v2194, %v2195
      %v2198 = vsel %vm1445, %v2190, %v2197
      %v2199 = vrot.slane %v2194, 4
      %v2201 = vshrl.u32 %v1973, 16
      %v2203 = vrot.slane %v2201, 7
      %v2204 = vshll.u32 %v1973, 16
      %v2206 = vor.u32 %v2203, %v2204
      %v2207 = vrot.slane %v2203, 4
      %v2209 = vshrl.u32 %v1974, 16
      %v2211 = vrot.slane %v2209, 7
      %v2212 = vshll.u32 %v1974, 16
      %v2214 = vor.u32 %v2211, %v2212
      %v2215 = vsel %vm1445, %v2207, %v2214
      %v2216 = vrot.slane %v2211, 4
      %v2218 = vshrl.u32 %v1975, 16
      %v2220 = vrot.slane %v2218, 7
      %v2221 = vshll.u32 %v1975, 16
      %v2223 = vor.u32 %v2220, %v2221
      %v2224 = vrot.slane %v2220, 4
      %v2226 = vshrl.u32 %v1976, 16
      %v2228 = vrot.slane %v2226, 7
      %v2229 = vshll.u32 %v1976, 16
      %v2231 = vor.u32 %v2228, %v2229
      %v2232 = vsel %vm1445, %v2224, %v2231
      %v2233 = vrot.slane %v2228, 4
      %v2235 = vshrl.u32 %v1977, 16
      %v2237 = vrot.slane %v2235, 7
      %v2238 = vshll.u32 %v1977, 16
      %v2240 = vor.u32 %v2237, %v2238
      %v2241 = vrot.slane %v2237, 4
      %v2243 = vshrl.u32 %v1978, 16
      %v2245 = vrot.slane %v2243, 7
      %v2246 = vshll.u32 %v1978, 16
      %v2248 = vor.u32 %v2245, %v2246
      %v2249 = vsel %vm1445, %v2241, %v2248
      %v2250 = vrot.slane %v2245, 4
      %2251 = vrot.lane.b32.xlu0 %v1985, 8
      %v2252 = vpop.permute.xlu0 %2251
      %2253 = vrot.lane.b32.xlu0 %v1994, 8
      %v2254 = vpop.permute.xlu0 %2253
      %2255 = vrot.lane.b32.xlu0 %v1995, 8
      %v2256 = vpop.permute.xlu0 %2255
      %2257 = vrot.lane.b32.xlu0 %v2002, 8
      %v2258 = vpop.permute.xlu0 %2257
      %2259 = vrot.lane.b32.xlu0 %v2011, 8
      %v2260 = vpop.permute.xlu0 %2259
      %2261 = vrot.lane.b32.xlu0 %v2012, 8
      %v2262 = vpop.permute.xlu0 %2261
      %2263 = vrot.lane.b32.xlu0 %v2019, 8
      %v2264 = vpop.permute.xlu0 %2263
      %2265 = vrot.lane.b32.xlu0 %v2028, 8
      %v2266 = vpop.permute.xlu0 %2265
      %2267 = vrot.lane.b32.xlu0 %v2029, 8
      %v2268 = vpop.permute.xlu0 %2267
      %2269 = vrot.lane.b32.xlu0 %v2036, 8
      %v2270 = vpop.permute.xlu0 %2269
      %2271 = vrot.lane.b32.xlu0 %v2045, 8
      %v2272 = vpop.permute.xlu0 %2271
      %2273 = vrot.lane.b32.xlu0 %v2046, 8
      %v2274 = vpop.permute.xlu0 %2273
      %2275 = vrot.lane.b32.xlu0 %v2053, 8
      %v2276 = vpop.permute.xlu0 %2275
      %2277 = vrot.lane.b32.xlu0 %v2062, 8
      %v2278 = vpop.permute.xlu0 %2277
      %2279 = vrot.lane.b32.xlu0 %v2063, 8
      %v2280 = vpop.permute.xlu0 %2279
      %2281 = vrot.lane.b32.xlu0 %v2070, 8
      %v2282 = vpop.permute.xlu0 %2281
      %2283 = vrot.lane.b32.xlu0 %v2079, 8
      %v2284 = vpop.permute.xlu0 %2283
      %2285 = vrot.lane.b32.xlu0 %v2080, 8
      %v2286 = vpop.permute.xlu0 %2285
      %2287 = vrot.lane.b32.xlu0 %v2087, 8
      %v2288 = vpop.permute.xlu0 %2287
      %2289 = vrot.lane.b32.xlu0 %v2096, 8
      %v2290 = vpop.permute.xlu0 %2289
      %2291 = vrot.lane.b32.xlu0 %v2097, 8
      %v2292 = vpop.permute.xlu0 %2291
      %2293 = vrot.lane.b32.xlu0 %v2104, 8
      %v2294 = vpop.permute.xlu0 %2293
      %2295 = vrot.lane.b32.xlu0 %v2113, 8
      %v2296 = vpop.permute.xlu0 %2295
      %2297 = vrot.lane.b32.xlu0 %v2114, 8
      %v2298 = vpop.permute.xlu0 %2297
      %2299 = vrot.lane.b32.xlu0 %v2121, 8
      %v2300 = vpop.permute.xlu0 %2299
      %2301 = vrot.lane.b32.xlu0 %v2130, 8
      %v2302 = vpop.permute.xlu0 %2301
      %2303 = vrot.lane.b32.xlu0 %v2131, 8
      %v2304 = vpop.permute.xlu0 %2303
      %2305 = vrot.lane.b32.xlu0 %v2138, 8
      %v2306 = vpop.permute.xlu0 %2305
      %2307 = vrot.lane.b32.xlu0 %v2147, 8
      %v2308 = vpop.permute.xlu0 %2307
      %2309 = vrot.lane.b32.xlu0 %v2148, 8
      %v2310 = vpop.permute.xlu0 %2309
      %2311 = vrot.lane.b32.xlu0 %v2155, 8
      %v2312 = vpop.permute.xlu0 %2311
      %2313 = vrot.lane.b32.xlu0 %v2164, 8
      %v2314 = vpop.permute.xlu0 %2313
      %2315 = vrot.lane.b32.xlu0 %v2165, 8
      %v2316 = vpop.permute.xlu0 %2315
      %2317 = vrot.lane.b32.xlu0 %v2172, 8
      %v2318 = vpop.permute.xlu0 %2317
      %2319 = vrot.lane.b32.xlu0 %v2181, 8
      %v2320 = vpop.permute.xlu0 %2319
      %2321 = vrot.lane.b32.xlu0 %v2182, 8
      %v2322 = vpop.permute.xlu0 %2321
      %2323 = vrot.lane.b32.xlu0 %v2189, 8
      %v2324 = vpop.permute.xlu0 %2323
      %2325 = vrot.lane.b32.xlu0 %v2198, 8
      %v2326 = vpop.permute.xlu0 %2325
      %2327 = vrot.lane.b32.xlu0 %v2199, 8
      %v2328 = vpop.permute.xlu0 %2327
      %2329 = vrot.lane.b32.xlu0 %v2206, 8
      %v2330 = vpop.permute.xlu0 %2329
      %2331 = vrot.lane.b32.xlu0 %v2215, 8
      %v2332 = vpop.permute.xlu0 %2331
      %2333 = vrot.lane.b32.xlu0 %v2216, 8
      %v2334 = vpop.permute.xlu0 %2333
      %2335 = vrot.lane.b32.xlu0 %v2223, 8
      %v2336 = vpop.permute.xlu0 %2335
      %2337 = vrot.lane.b32.xlu0 %v2232, 8
      %v2338 = vpop.permute.xlu0 %2337
      %2339 = vrot.lane.b32.xlu0 %v2233, 8
      %v2340 = vpop.permute.xlu0 %2339
      %2341 = vrot.lane.b32.xlu0 %v2240, 8
      %v2342 = vpop.permute.xlu0 %2341
      %2343 = vrot.lane.b32.xlu0 %v2249, 8
      %v2344 = vpop.permute.xlu0 %2343
      %2345 = vrot.lane.b32.xlu0 %v2250, 8
      %v2346 = vpop.permute.xlu0 %2345
      %vm2395 = vcmask 191552
      %vm2396 = vmand %vm2395, %vm469
      %v2397 = vld [vmem:[%s417] sm:$0xf]
      %v2398 = vsel %vm2396, %v2252, %v2397
      %2399 = vst [vmem:[%s417] sm:$0xf] %v2398
      %vm2400 = vcmask 191552
      %2401 = vst.msk [vmem:[%s417 + $0x4] sm:$0xf] %vm2400, %v2254
      %vm2402 = vcmask 188480
      %vm2403 = vmand %vm2402, %vm419
      %v2404 = vld [vmem:[%s417 + $0x8] sm:$0x1]
      %v2405 = vsel %vm2403, %v2256, %v2404
      %2406 = vst [vmem:[%s417 + $0x8] sm:$0x1] %v2405
      %v2407 = vld [vmem:[%s417 + $0xc] sm:$0xf]
      %v2408 = vsel %vm2396, %v2258, %v2407
      %2409 = vst [vmem:[%s417 + $0xc] sm:$0xf] %v2408
      %2410 = vst.msk [vmem:[%s417 + $0x10] sm:$0xf] %vm2400, %v2260
      %v2411 = vld [vmem:[%s417 + $0x14] sm:$0x1]
      %v2412 = vsel %vm2403, %v2262, %v2411
      %2413 = vst [vmem:[%s417 + $0x14] sm:$0x1] %v2412
      %v2414 = vld [vmem:[%s417 + $0x18] sm:$0xf]
      %v2415 = vsel %vm2396, %v2264, %v2414
      %2416 = vst [vmem:[%s417 + $0x18] sm:$0xf] %v2415
      %2417 = vst.msk [vmem:[%s417 + $0x1c] sm:$0xf] %vm2400, %v2266
      %v2418 = vld [vmem:[%s417 + $0x20] sm:$0x1]
      %v2419 = vsel %vm2403, %v2268, %v2418
      %2420 = vst [vmem:[%s417 + $0x20] sm:$0x1] %v2419
      %v2421 = vld [vmem:[%s417 + $0x24] sm:$0xf]
      %v2422 = vsel %vm2396, %v2270, %v2421
      %2423 = vst [vmem:[%s417 + $0x24] sm:$0xf] %v2422
      %2424 = vst.msk [vmem:[%s417 + $0x28] sm:$0xf] %vm2400, %v2272
      %v2425 = vld [vmem:[%s417 + $0x2c] sm:$0x1]
      %v2426 = vsel %vm2403, %v2274, %v2425
      %2427 = vst [vmem:[%s417 + $0x2c] sm:$0x1] %v2426
      %v2428 = vld [vmem:[%s417 + $0x30] sm:$0xf]
      %v2429 = vsel %vm2396, %v2276, %v2428
      %2430 = vst [vmem:[%s417 + $0x30] sm:$0xf] %v2429
      %2431 = vst.msk [vmem:[%s417 + $0x34] sm:$0xf] %vm2400, %v2278
      %v2432 = vld [vmem:[%s417 + $0x38] sm:$0x1]
      %v2433 = vsel %vm2403, %v2280, %v2432
      %2434 = vst [vmem:[%s417 + $0x38] sm:$0x1] %v2433
      %v2435 = vld [vmem:[%s417 + $0x3c] sm:$0xf]
      %v2436 = vsel %vm2396, %v2282, %v2435
      %2437 = vst [vmem:[%s417 + $0x3c] sm:$0xf] %v2436
      %2438 = vst.msk [vmem:[%s417 + $0x40] sm:$0xf] %vm2400, %v2284
      %v2439 = vld [vmem:[%s417 + $0x44] sm:$0x1]
      %v2440 = vsel %vm2403, %v2286, %v2439
      %2441 = vst [vmem:[%s417 + $0x44] sm:$0x1] %v2440
      %v2442 = vld [vmem:[%s417 + $0x48] sm:$0xf]
      %v2443 = vsel %vm2396, %v2288, %v2442
      %2444 = vst [vmem:[%s417 + $0x48] sm:$0xf] %v2443
      %2445 = vst.msk [vmem:[%s417 + $0x4c] sm:$0xf] %vm2400, %v2290
      %v2446 = vld [vmem:[%s417 + $0x50] sm:$0x1]
      %v2447 = vsel %vm2403, %v2292, %v2446
      %2448 = vst [vmem:[%s417 + $0x50] sm:$0x1] %v2447
      %v2449 = vld [vmem:[%s417 + $0x54] sm:$0xf]
      %v2450 = vsel %vm2396, %v2294, %v2449
      %2451 = vst [vmem:[%s417 + $0x54] sm:$0xf] %v2450
      %2452 = vst.msk [vmem:[%s417 + $0x58] sm:$0xf] %vm2400, %v2296
      %v2453 = vld [vmem:[%s417 + $0x5c] sm:$0x1]
      %v2454 = vsel %vm2403, %v2298, %v2453
      %2455 = vst [vmem:[%s417 + $0x5c] sm:$0x1] %v2454
      %v2456 = vld [vmem:[%s417 + $0x60] sm:$0xf]
      %v2457 = vsel %vm2396, %v2300, %v2456
      %2458 = vst [vmem:[%s417 + $0x60] sm:$0xf] %v2457
      %2459 = vst.msk [vmem:[%s417 + $0x64] sm:$0xf] %vm2400, %v2302
      %v2460 = vld [vmem:[%s417 + $0x68] sm:$0x1]
      %v2461 = vsel %vm2403, %v2304, %v2460
      %2462 = vst [vmem:[%s417 + $0x68] sm:$0x1] %v2461
      %v2463 = vld [vmem:[%s417 + $0x6c] sm:$0xf]
      %v2464 = vsel %vm2396, %v2306, %v2463
      %2465 = vst [vmem:[%s417 + $0x6c] sm:$0xf] %v2464
      %2466 = vst.msk [vmem:[%s417 + $0x70] sm:$0xf] %vm2400, %v2308
      %v2467 = vld [vmem:[%s417 + $0x74] sm:$0x1]
      %v2468 = vsel %vm2403, %v2310, %v2467
      %2469 = vst [vmem:[%s417 + $0x74] sm:$0x1] %v2468
      %v2470 = vld [vmem:[%s417 + $0x78] sm:$0xf]
      %v2471 = vsel %vm2396, %v2312, %v2470
      %2472 = vst [vmem:[%s417 + $0x78] sm:$0xf] %v2471
      %2473 = vst.msk [vmem:[%s417 + $0x7c] sm:$0xf] %vm2400, %v2314
      %v2474 = vld [vmem:[%s417 + $0x80] sm:$0x1]
      %v2475 = vsel %vm2403, %v2316, %v2474
      %2476 = vst [vmem:[%s417 + $0x80] sm:$0x1] %v2475
      %v2477 = vld [vmem:[%s417 + $0x84] sm:$0xf]
      %v2478 = vsel %vm2396, %v2318, %v2477
      %2479 = vst [vmem:[%s417 + $0x84] sm:$0xf] %v2478
      %2480 = vst.msk [vmem:[%s417 + $0x88] sm:$0xf] %vm2400, %v2320
      %v2481 = vld [vmem:[%s417 + $0x8c] sm:$0x1]
      %v2482 = vsel %vm2403, %v2322, %v2481
      %2483 = vst [vmem:[%s417 + $0x8c] sm:$0x1] %v2482
      %v2484 = vld [vmem:[%s417 + $0x90] sm:$0xf]
      %v2485 = vsel %vm2396, %v2324, %v2484
      %2486 = vst [vmem:[%s417 + $0x90] sm:$0xf] %v2485
      %2487 = vst.msk [vmem:[%s417 + $0x94] sm:$0xf] %vm2400, %v2326
      %v2488 = vld [vmem:[%s417 + $0x98] sm:$0x1]
      %v2489 = vsel %vm2403, %v2328, %v2488
      %2490 = vst [vmem:[%s417 + $0x98] sm:$0x1] %v2489
      %v2491 = vld [vmem:[%s417 + $0x9c] sm:$0xf]
      %v2492 = vsel %vm2396, %v2330, %v2491
      %2493 = vst [vmem:[%s417 + $0x9c] sm:$0xf] %v2492
      %2494 = vst.msk [vmem:[%s417 + $0xa0] sm:$0xf] %vm2400, %v2332
      %v2495 = vld [vmem:[%s417 + $0xa4] sm:$0x1]
      %v2496 = vsel %vm2403, %v2334, %v2495
      %2497 = vst [vmem:[%s417 + $0xa4] sm:$0x1] %v2496
      %v2498 = vld [vmem:[%s417 + $0xa8] sm:$0xf]
      %v2499 = vsel %vm2396, %v2336, %v2498
      %2500 = vst [vmem:[%s417 + $0xa8] sm:$0xf] %v2499
      %2501 = vst.msk [vmem:[%s417 + $0xac] sm:$0xf] %vm2400, %v2338
      %v2502 = vld [vmem:[%s417 + $0xb0] sm:$0x1]
      %v2503 = vsel %vm2403, %v2340, %v2502
      %2504 = vst [vmem:[%s417 + $0xb0] sm:$0x1] %v2503
      %v2505 = vld [vmem:[%s417 + $0xb4] sm:$0xf]
      %v2506 = vsel %vm2396, %v2342, %v2505
      %2507 = vst [vmem:[%s417 + $0xb4] sm:$0xf] %v2506
      %2508 = vst.msk [vmem:[%s417 + $0xb8] sm:$0xf] %vm2400, %v2344
      %v2509 = vld [vmem:[%s417 + $0xbc] sm:$0x1]
      %v2510 = vsel %vm2403, %v2346, %v2509
      %2511 = vst [vmem:[%s417 + $0xbc] sm:$0x1] %v2510
      %v2512 = vld [vmem:[#allocation2] sm:$0xf]
      %v2513 = vld [vmem:[#allocation2 + $0x4] sm:$0xf]
      %v2514 = vld [vmem:[#allocation2 + $0xc] sm:$0xf]
      %v2515 = vld [vmem:[#allocation2 + $0x10] sm:$0xf]
      %v2516 = vld [vmem:[#allocation2 + $0x18] sm:$0xf]
      %v2517 = vld [vmem:[#allocation2 + $0x1c] sm:$0xf]
      %v2518 = vld [vmem:[#allocation2 + $0x24] sm:$0xf]
      %v2519 = vld [vmem:[#allocation2 + $0x28] sm:$0xf]
      %v2520 = vld [vmem:[#allocation2 + $0x30] sm:$0xf]
      %v2521 = vld [vmem:[#allocation2 + $0x34] sm:$0xf]
      %v2522 = vld [vmem:[#allocation2 + $0x3c] sm:$0xf]
      %v2523 = vld [vmem:[#allocation2 + $0x40] sm:$0xf]
      %v2524 = vld [vmem:[#allocation2 + $0x48] sm:$0xf]
      %v2525 = vld [vmem:[#allocation2 + $0x4c] sm:$0xf]
      %v2526 = vld [vmem:[#allocation2 + $0x54] sm:$0xf]
      %v2527 = vld [vmem:[#allocation2 + $0x58] sm:$0xf]
      %v2528 = vld [vmem:[#allocation2 + $0x60] sm:$0xf]
      %v2529 = vld [vmem:[#allocation2 + $0x64] sm:$0xf]
      %v2530 = vld [vmem:[#allocation2 + $0x6c] sm:$0xf]
      %v2531 = vld [vmem:[#allocation2 + $0x70] sm:$0xf]
      %v2532 = vld [vmem:[#allocation2 + $0x78] sm:$0xf]
      %v2533 = vld [vmem:[#allocation2 + $0x7c] sm:$0xf]
      %v2534 = vld [vmem:[#allocation2 + $0x84] sm:$0xf]
      %v2535 = vld [vmem:[#allocation2 + $0x88] sm:$0xf]
      %v2536 = vld [vmem:[#allocation2 + $0x90] sm:$0xf]
      %v2537 = vld [vmem:[#allocation2 + $0x94] sm:$0xf]
      %v2538 = vld [vmem:[#allocation2 + $0x9c] sm:$0xf]
      %v2539 = vld [vmem:[#allocation2 + $0xa0] sm:$0xf]
      %v2540 = vld [vmem:[#allocation2 + $0xa8] sm:$0xf]
      %v2541 = vld [vmem:[#allocation2 + $0xac] sm:$0xf]
      %v2542 = vld [vmem:[#allocation2 + $0xb4] sm:$0xf]
      %v2543 = vld [vmem:[#allocation2 + $0xb8] sm:$0xf]
      %v2544 = vld [vmem:[%s5] sm:$0xf]
      %v2545 = vld [vmem:[%s5 + $0x4] sm:$0xf]
      %v2546 = vld [vmem:[%s5 + $0x8] sm:$0xf]
      %v2547 = vld [vmem:[#allocation2 + $0x8] sm:$0x1]
      %v2548 = vld [vmem:[#allocation2 + $0x14] sm:$0x1]
      %v2549 = vld [vmem:[#allocation2 + $0x20] sm:$0x1]
      %v2550 = vld [vmem:[#allocation2 + $0x2c] sm:$0x1]
      %v2551 = vld [vmem:[#allocation2 + $0x38] sm:$0x1]
      %v2552 = vld [vmem:[#allocation2 + $0x44] sm:$0x1]
      %v2553 = vld [vmem:[#allocation2 + $0x50] sm:$0x1]
      %v2554 = vld [vmem:[#allocation2 + $0x5c] sm:$0x1]
      %v2555 = vld [vmem:[#allocation2 + $0x68] sm:$0x1]
      %v2556 = vld [vmem:[#allocation2 + $0x74] sm:$0x1]
      %v2557 = vld [vmem:[#allocation2 + $0x80] sm:$0x1]
      %v2558 = vld [vmem:[#allocation2 + $0x8c] sm:$0x1]
      %v2559 = vld [vmem:[#allocation2 + $0x98] sm:$0x1]
      %v2560 = vld [vmem:[#allocation2 + $0xa4] sm:$0x1]
      %v2561 = vld [vmem:[#allocation2 + $0xb0] sm:$0x1]
      %v2562 = vld [vmem:[#allocation2 + $0xbc] sm:$0x1]
      %vm2563 = vsmask.f32 3328
      %vm2564 = vsmask.f32 7440
      %vm2565 = vmor %vm2563, %vm2564
      %v2567 = vshrl.u32 %v2512, 16
      %v2569 = vrot.slane %v2567, 4
      %v2570 = vshll.u32 %v2512, 16
      %v2572 = vrot.slane %v2570, 5
      %v2573 = vor.u32 %v2569, %v2572
      %v2574 = vrot.slane %v2573, 4
      %v2576 = vshll.u32 %v2513, 16
      %v2578 = vrot.slane %v2576, 5
      %v2579 = vsel %vm2565, %v2574, %v2578
      %v2580 = vshrl.u32 %v2513, 16
      %v2582 = vrot.slane %v2580, 4
      %v2583 = vor.u32 %v2582, %v2578
      %v2584 = vrot.slane %v2583, 4
      %v2586 = vshll.u32 %v2547, 16
      %v2588 = vrot.slane %v2586, 5
      %v2589 = vsel %vm2565, %v2584, %v2588
      %v2591 = vshrl.u32 %v2514, 16
      %v2593 = vrot.slane %v2591, 4
      %v2594 = vshll.u32 %v2514, 16
      %v2596 = vrot.slane %v2594, 5
      %v2597 = vor.u32 %v2593, %v2596
      %v2598 = vrot.slane %v2597, 4
      %v2600 = vshll.u32 %v2515, 16
      %v2602 = vrot.slane %v2600, 5
      %v2603 = vsel %vm2565, %v2598, %v2602
      %v2604 = vshrl.u32 %v2515, 16
      %v2606 = vrot.slane %v2604, 4
      %v2607 = vor.u32 %v2606, %v2602
      %v2608 = vrot.slane %v2607, 4
      %v2610 = vshll.u32 %v2548, 16
      %v2612 = vrot.slane %v2610, 5
      %v2613 = vsel %vm2565, %v2608, %v2612
      %v2615 = vshrl.u32 %v2516, 16
      %v2617 = vrot.slane %v2615, 4
      %v2618 = vshll.u32 %v2516, 16
      %v2620 = vrot.slane %v2618, 5
      %v2621 = vor.u32 %v2617, %v2620
      %v2622 = vrot.slane %v2621, 4
      %v2624 = vshll.u32 %v2517, 16
      %v2626 = vrot.slane %v2624, 5
      %v2627 = vsel %vm2565, %v2622, %v2626
      %v2628 = vshrl.u32 %v2517, 16
      %v2630 = vrot.slane %v2628, 4
      %v2631 = vor.u32 %v2630, %v2626
      %v2632 = vrot.slane %v2631, 4
      %v2634 = vshll.u32 %v2549, 16
      %v2636 = vrot.slane %v2634, 5
      %v2637 = vsel %vm2565, %v2632, %v2636
      %v2639 = vshrl.u32 %v2518, 16
      %v2641 = vrot.slane %v2639, 4
      %v2642 = vshll.u32 %v2518, 16
      %v2644 = vrot.slane %v2642, 5
      %v2645 = vor.u32 %v2641, %v2644
      %v2646 = vrot.slane %v2645, 4
      %v2648 = vshll.u32 %v2519, 16
      %v2650 = vrot.slane %v2648, 5
      %v2651 = vsel %vm2565, %v2646, %v2650
      %v2652 = vshrl.u32 %v2519, 16
      %v2654 = vrot.slane %v2652, 4
      %v2655 = vor.u32 %v2654, %v2650
      %v2656 = vrot.slane %v2655, 4
      %v2658 = vshll.u32 %v2550, 16
      %v2660 = vrot.slane %v2658, 5
      %v2661 = vsel %vm2565, %v2656, %v2660
      %v2663 = vshrl.u32 %v2520, 16
      %v2665 = vrot.slane %v2663, 4
      %v2666 = vshll.u32 %v2520, 16
      %v2668 = vrot.slane %v2666, 5
      %v2669 = vor.u32 %v2665, %v2668
      %v2670 = vrot.slane %v2669, 4
      %v2672 = vshll.u32 %v2521, 16
      %v2674 = vrot.slane %v2672, 5
      %v2675 = vsel %vm2565, %v2670, %v2674
      %v2676 = vshrl.u32 %v2521, 16
      %v2678 = vrot.slane %v2676, 4
      %v2679 = vor.u32 %v2678, %v2674
      %v2680 = vrot.slane %v2679, 4
      %v2682 = vshll.u32 %v2551, 16
      %v2684 = vrot.slane %v2682, 5
      %v2685 = vsel %vm2565, %v2680, %v2684
      %v2687 = vshrl.u32 %v2522, 16
      %v2689 = vrot.slane %v2687, 4
      %v2690 = vshll.u32 %v2522, 16
      %v2692 = vrot.slane %v2690, 5
      %v2693 = vor.u32 %v2689, %v2692
      %v2694 = vrot.slane %v2693, 4
      %v2696 = vshll.u32 %v2523, 16
      %v2698 = vrot.slane %v2696, 5
      %v2699 = vsel %vm2565, %v2694, %v2698
      %v2700 = vshrl.u32 %v2523, 16
      %v2702 = vrot.slane %v2700, 4
      %v2703 = vor.u32 %v2702, %v2698
      %v2704 = vrot.slane %v2703, 4
      %v2706 = vshll.u32 %v2552, 16
      %v2708 = vrot.slane %v2706, 5
      %v2709 = vsel %vm2565, %v2704, %v2708
      %v2711 = vshrl.u32 %v2524, 16
      %v2713 = vrot.slane %v2711, 4
      %v2714 = vshll.u32 %v2524, 16
      %v2716 = vrot.slane %v2714, 5
      %v2717 = vor.u32 %v2713, %v2716
      %v2718 = vrot.slane %v2717, 4
      %v2720 = vshll.u32 %v2525, 16
      %v2722 = vrot.slane %v2720, 5
      %v2723 = vsel %vm2565, %v2718, %v2722
      %v2724 = vshrl.u32 %v2525, 16
      %v2726 = vrot.slane %v2724, 4
      %v2727 = vor.u32 %v2726, %v2722
      %v2728 = vrot.slane %v2727, 4
      %v2730 = vshll.u32 %v2553, 16
      %v2732 = vrot.slane %v2730, 5
      %v2733 = vsel %vm2565, %v2728, %v2732
      %v2735 = vshrl.u32 %v2526, 16
      %v2737 = vrot.slane %v2735, 4
      %v2738 = vshll.u32 %v2526, 16
      %v2740 = vrot.slane %v2738, 5
      %v2741 = vor.u32 %v2737, %v2740
      %v2742 = vrot.slane %v2741, 4
      %v2744 = vshll.u32 %v2527, 16
      %v2746 = vrot.slane %v2744, 5
      %v2747 = vsel %vm2565, %v2742, %v2746
      %v2748 = vshrl.u32 %v2527, 16
      %v2750 = vrot.slane %v2748, 4
      %v2751 = vor.u32 %v2750, %v2746
      %v2752 = vrot.slane %v2751, 4
      %v2754 = vshll.u32 %v2554, 16
      %v2756 = vrot.slane %v2754, 5
      %v2757 = vsel %vm2565, %v2752, %v2756
      %v2759 = vshrl.u32 %v2528, 16
      %v2761 = vrot.slane %v2759, 4
      %v2762 = vshll.u32 %v2528, 16
      %v2764 = vrot.slane %v2762, 5
      %v2765 = vor.u32 %v2761, %v2764
      %v2766 = vrot.slane %v2765, 4
      %v2768 = vshll.u32 %v2529, 16
      %v2770 = vrot.slane %v2768, 5
      %v2771 = vsel %vm2565, %v2766, %v2770
      %v2772 = vshrl.u32 %v2529, 16
      %v2774 = vrot.slane %v2772, 4
      %v2775 = vor.u32 %v2774, %v2770
      %v2776 = vrot.slane %v2775, 4
      %v2778 = vshll.u32 %v2555, 16
      %v2780 = vrot.slane %v2778, 5
      %v2781 = vsel %vm2565, %v2776, %v2780
      %v2783 = vshrl.u32 %v2530, 16
      %v2785 = vrot.slane %v2783, 4
      %v2786 = vshll.u32 %v2530, 16
      %v2788 = vrot.slane %v2786, 5
      %v2789 = vor.u32 %v2785, %v2788
      %v2790 = vrot.slane %v2789, 4
      %v2792 = vshll.u32 %v2531, 16
      %v2794 = vrot.slane %v2792, 5
      %v2795 = vsel %vm2565, %v2790, %v2794
      %v2796 = vshrl.u32 %v2531, 16
      %v2798 = vrot.slane %v2796, 4
      %v2799 = vor.u32 %v2798, %v2794
      %v2800 = vrot.slane %v2799, 4
      %v2802 = vshll.u32 %v2556, 16
      %v2804 = vrot.slane %v2802, 5
      %v2805 = vsel %vm2565, %v2800, %v2804
      %v2807 = vshrl.u32 %v2532, 16
      %v2809 = vrot.slane %v2807, 4
      %v2810 = vshll.u32 %v2532, 16
      %v2812 = vrot.slane %v2810, 5
      %v2813 = vor.u32 %v2809, %v2812
      %v2814 = vrot.slane %v2813, 4
      %v2816 = vshll.u32 %v2533, 16
      %v2818 = vrot.slane %v2816, 5
      %v2819 = vsel %vm2565, %v2814, %v2818
      %v2820 = vshrl.u32 %v2533, 16
      %v2822 = vrot.slane %v2820, 4
      %v2823 = vor.u32 %v2822, %v2818
      %v2824 = vrot.slane %v2823, 4
      %v2826 = vshll.u32 %v2557, 16
      %v2828 = vrot.slane %v2826, 5
      %v2829 = vsel %vm2565, %v2824, %v2828
      %v2831 = vshrl.u32 %v2534, 16
      %v2833 = vrot.slane %v2831, 4
      %v2834 = vshll.u32 %v2534, 16
      %v2836 = vrot.slane %v2834, 5
      %v2837 = vor.u32 %v2833, %v2836
      %v2838 = vrot.slane %v2837, 4
      %v2840 = vshll.u32 %v2535, 16
      %v2842 = vrot.slane %v2840, 5
      %v2843 = vsel %vm2565, %v2838, %v2842
      %v2844 = vshrl.u32 %v2535, 16
      %v2846 = vrot.slane %v2844, 4
      %v2847 = vor.u32 %v2846, %v2842
      %v2848 = vrot.slane %v2847, 4
      %v2850 = vshll.u32 %v2558, 16
      %v2852 = vrot.slane %v2850, 5
      %v2853 = vsel %vm2565, %v2848, %v2852
      %v2855 = vshrl.u32 %v2536, 16
      %v2857 = vrot.slane %v2855, 4
      %v2858 = vshll.u32 %v2536, 16
      %v2860 = vrot.slane %v2858, 5
      %v2861 = vor.u32 %v2857, %v2860
      %v2862 = vrot.slane %v2861, 4
      %v2864 = vshll.u32 %v2537, 16
      %v2866 = vrot.slane %v2864, 5
      %v2867 = vsel %vm2565, %v2862, %v2866
      %v2868 = vshrl.u32 %v2537, 16
      %v2870 = vrot.slane %v2868, 4
      %v2871 = vor.u32 %v2870, %v2866
      %v2872 = vrot.slane %v2871, 4
      %v2874 = vshll.u32 %v2559, 16
      %v2876 = vrot.slane %v2874, 5
      %v2877 = vsel %vm2565, %v2872, %v2876
      %v2879 = vshrl.u32 %v2538, 16
      %v2881 = vrot.slane %v2879, 4
      %v2882 = vshll.u32 %v2538, 16
      %v2884 = vrot.slane %v2882, 5
      %v2885 = vor.u32 %v2881, %v2884
      %v2886 = vrot.slane %v2885, 4
      %v2888 = vshll.u32 %v2539, 16
      %v2890 = vrot.slane %v2888, 5
      %v2891 = vsel %vm2565, %v2886, %v2890
      %v2892 = vshrl.u32 %v2539, 16
      %v2894 = vrot.slane %v2892, 4
      %v2895 = vor.u32 %v2894, %v2890
      %v2896 = vrot.slane %v2895, 4
      %v2898 = vshll.u32 %v2560, 16
      %v2900 = vrot.slane %v2898, 5
      %v2901 = vsel %vm2565, %v2896, %v2900
      %v2903 = vshrl.u32 %v2540, 16
      %v2905 = vrot.slane %v2903, 4
      %v2906 = vshll.u32 %v2540, 16
      %v2908 = vrot.slane %v2906, 5
      %v2909 = vor.u32 %v2905, %v2908
      %v2910 = vrot.slane %v2909, 4
      %v2912 = vshll.u32 %v2541, 16
      %v2914 = vrot.slane %v2912, 5
      %v2915 = vsel %vm2565, %v2910, %v2914
      %v2916 = vshrl.u32 %v2541, 16
      %v2918 = vrot.slane %v2916, 4
      %v2919 = vor.u32 %v2918, %v2914
      %v2920 = vrot.slane %v2919, 4
      %v2922 = vshll.u32 %v2561, 16
      %v2924 = vrot.slane %v2922, 5
      %v2925 = vsel %vm2565, %v2920, %v2924
      %v2927 = vshrl.u32 %v2542, 16
      %v2929 = vrot.slane %v2927, 4
      %v2930 = vshll.u32 %v2542, 16
      %v2932 = vrot.slane %v2930, 5
      %v2933 = vor.u32 %v2929, %v2932
      %v2934 = vrot.slane %v2933, 4
      %v2936 = vshll.u32 %v2543, 16
      %v2938 = vrot.slane %v2936, 5
      %v2939 = vsel %vm2565, %v2934, %v2938
      %v2940 = vshrl.u32 %v2543, 16
      %v2942 = vrot.slane %v2940, 4
      %v2943 = vor.u32 %v2942, %v2938
      %v2944 = vrot.slane %v2943, 4
      %v2946 = vshll.u32 %v2562, 16
      %v2948 = vrot.slane %v2946, 5
      %v2949 = vsel %vm2565, %v2944, %v2948
      %s2950 = scalar_lea.vmem %s5, 12
      %v2951 = vld [vmem:[%s2950] sm:$0xf]
      %v2952 = vld [vmem:[%s2950 + $0x4] sm:$0xf]
      %v2953 = vld [vmem:[%s2950 + $0x8] sm:$0xf]
      %v2954 = vunpack.c.l.b16 %v2579
      %v2955 = vunpack.c.l.b16 %v2589
      %v2956 = vunpack.c.l.b16 %v2603
      %v2957 = vunpack.c.l.b16 %v2613
      %v2958 = vunpack.c.l.b16 %v2627
      %v2959 = vunpack.c.l.b16 %v2637
      %v2960 = vunpack.c.l.b16 %v2651
      %v2961 = vunpack.c.l.b16 %v2661
      %v2962 = vunpack.c.l.b16 %v2675
      %v2963 = vunpack.c.l.b16 %v2685
      %v2964 = vunpack.c.l.b16 %v2699
      %v2965 = vunpack.c.l.b16 %v2709
      %v2966 = vunpack.c.l.b16 %v2723
      %v2967 = vunpack.c.l.b16 %v2733
      %v2968 = vunpack.c.l.b16 %v2747
      %v2969 = vunpack.c.l.b16 %v2757
      %v2970 = vunpack.c.l.b16 %v2771
      %v2971 = vunpack.c.l.b16 %v2781
      %v2972 = vunpack.c.l.b16 %v2795
      %v2973 = vunpack.c.l.b16 %v2805
      %v2974 = vunpack.c.l.b16 %v2819
      %v2975 = vunpack.c.l.b16 %v2829
      %v2976 = vunpack.c.l.b16 %v2843
      %v2977 = vunpack.c.l.b16 %v2853
      %v2978 = vunpack.c.l.b16 %v2867
      %v2979 = vunpack.c.l.b16 %v2877
      %v2980 = vunpack.c.l.b16 %v2891
      %v2981 = vunpack.c.l.b16 %v2901
      %v2982 = vunpack.c.l.b16 %v2915
      %v2983 = vunpack.c.l.b16 %v2925
      %v2984 = vunpack.c.l.b16 %v2939
      %v2985 = vunpack.c.l.b16 %v2949
      %v2986 = vpack.c.b16 %v2955, %v2954
      %v2987 = vpack.c.b16 %v2957, %v2956
      %v2988 = vpack.c.b16 %v2959, %v2958
      %v2989 = vpack.c.b16 %v2961, %v2960
      %v2990 = vpack.c.b16 %v2963, %v2962
      %v2991 = vpack.c.b16 %v2965, %v2964
      %v2992 = vpack.c.b16 %v2967, %v2966
      %v2993 = vpack.c.b16 %v2969, %v2968
      %v2994 = vpack.c.b16 %v2971, %v2970
      %v2995 = vpack.c.b16 %v2973, %v2972
      %v2996 = vpack.c.b16 %v2975, %v2974
      %v2997 = vpack.c.b16 %v2977, %v2976
      %v2998 = vpack.c.b16 %v2979, %v2978
      %v2999 = vpack.c.b16 %v2981, %v2980
      %v3000 = vpack.c.b16 %v2983, %v2982
      %v3001 = vpack.c.b16 %v2985, %v2984
      %v3005 = vunpack.c.l.b16 %v2951
      %v3006 = vunpack.c.l.b16 %v2952
      %v3007 = vunpack.c.l.b16 %v2953
      %v3008 = vpack.c.b16 %v3006, %v3005
      %v3009 = vpack.c.b16 %v3007, %v3007
      %vm3011 = vcmask 195584
      %v3013 = vsel %vm3011, %v2986, 0
      %v3016 = vsel %vm3011, %v2987, 0
      %v3019 = vsel %vm3011, %v2988, 0
      %v3022 = vsel %vm3011, %v2989, 0
      %v3025 = vsel %vm3011, %v2990, 0
      %v3028 = vsel %vm3011, %v2991, 0
      %v3031 = vsel %vm3011, %v2992, 0
      %v3034 = vsel %vm3011, %v2993, 0
      %v3037 = vsel %vm3011, %v2994, 0
      %v3040 = vsel %vm3011, %v2995, 0
      %v3043 = vsel %vm3011, %v2996, 0
      %v3046 = vsel %vm3011, %v2997, 0
      %v3049 = vsel %vm3011, %v2998, 0
      %v3052 = vsel %vm3011, %v2999, 0
      %v3055 = vsel %vm3011, %v3000, 0
      %v3058 = vsel %vm3011, %v3001, 0
      %vm3060 = vcmask 1043456
      %v3062 = vsel %vm3060, %v3009, 0
      %3064 = vmatprep.subr.bf16.mxu0 0
      %3065 = vmatpush1.bf16.msra.mxu0 0
      %3066 = vmatprep.subr.bf16.mxu0 0
      %3067 = vmatpush1.bf16.msra.mxu0 0
      %3068 = vmatprep.subr.bf16.mxu0 0
      %3069 = vmatpush1.bf16.msra.mxu0 0
      %3070 = vmatprep.subr.bf16.mxu0 0
      %3071 = vmatpush1.bf16.msra.mxu0 0
      %3072 = vmatprep.subr.bf16.mxu0 0
      %3073 = vmatpush1.bf16.msra.mxu0 0
      %3074 = vmatprep.subr.bf16.mxu0 0
      %3075 = vmatpush1.bf16.msra.mxu0 0
      %3076 = vmatprep.subr.bf16.mxu0 0
      %3077 = vmatpush1.bf16.msra.mxu0 %v3062
      %3078 = vmatprep.subr.bf16.mxu0 0
      %3079 = vmatpush1.bf16.msra.mxu0 %v3008
      %3080 = vmatprep.subr.bf16.mxu0 0
      %3081 = vmatpush2.bf16.msra.mxu0 0
      %3082 = vmatprep.subr.bf16.mxu0 0
      %3083 = vmatpush2.bf16.msra.mxu0 0
      %3084 = vmatprep.subr.bf16.mxu0 0
      %3085 = vmatpush2.bf16.msra.mxu0 0
      %3086 = vmatprep.subr.bf16.mxu0 0
      %3087 = vmatpush2.bf16.msra.mxu0 0
      %3088 = vmatprep.subr.bf16.mxu0 0
      %3089 = vmatpush2.bf16.msra.mxu0 0
      %3090 = vmatprep.subr.bf16.mxu0 0
      %3091 = vmatpush2.bf16.msra.mxu0 0
      %3092 = vmatprep.subr.bf16.mxu0 0
      %3093 = vmatpush2.bf16.msra.mxu0 0
      %3094 = vmatprep.subr.bf16.mxu0 0
      %3095 = vmatpush2.bf16.msra.mxu0 0
      %3096 = vmatprep.mubr.bf16.mxu0 0
      %3097 = vmatmul.mubr.bf16.gmra.mxu0 %v3013
      %v3098 = vpop.f32.mrf.mxu0
      %v3099 = vadd.f32 0.0, %v3098
      %v3100 = vpop.f32.mrf.mxu0
      %v3101 = vpop.f32.mrf.mxu0
      %v3102 = vadd.f32 0.0, %v3101
      %v3103 = vpop.f32.mrf.mxu0
      %3104 = vmatprep.mubr.bf16.mxu0 0
      %3105 = vmatmul.mubr.bf16.gmra.mxu0 %v3016
      %v3106 = vpop.f32.mrf.mxu0
      %v3107 = vadd.f32 0.0, %v3106
      %v3108 = vpop.f32.mrf.mxu0
      %v3109 = vpop.f32.mrf.mxu0
      %v3110 = vadd.f32 0.0, %v3109
      %v3111 = vpop.f32.mrf.mxu0
      %3112 = vmatprep.mubr.bf16.mxu0 0
      %3113 = vmatmul.mubr.bf16.gmra.mxu0 %v3019
      %v3114 = vpop.f32.mrf.mxu0
      %v3115 = vadd.f32 0.0, %v3114
      %v3116 = vpop.f32.mrf.mxu0
      %v3117 = vpop.f32.mrf.mxu0
      %v3118 = vadd.f32 0.0, %v3117
      %v3119 = vpop.f32.mrf.mxu0
      %3120 = vmatprep.mubr.bf16.mxu0 0
      %3121 = vmatmul.mubr.bf16.gmra.mxu0 %v3022
      %v3122 = vpop.f32.mrf.mxu0
      %v3123 = vadd.f32 0.0, %v3122
      %v3124 = vpop.f32.mrf.mxu0
      %v3125 = vpop.f32.mrf.mxu0
      %v3126 = vadd.f32 0.0, %v3125
      %v3127 = vpop.f32.mrf.mxu0
      %3128 = vmatprep.mubr.bf16.mxu0 0
      %3129 = vmatmul.mubr.bf16.gmra.mxu0 %v3025
      %v3130 = vpop.f32.mrf.mxu0
      %v3131 = vadd.f32 0.0, %v3130
      %v3132 = vpop.f32.mrf.mxu0
      %v3133 = vpop.f32.mrf.mxu0
      %v3134 = vadd.f32 0.0, %v3133
      %v3135 = vpop.f32.mrf.mxu0
      %3136 = vmatprep.mubr.bf16.mxu0 0
      %3137 = vmatmul.mubr.bf16.gmra.mxu0 %v3028
      %v3138 = vpop.f32.mrf.mxu0
      %v3139 = vadd.f32 0.0, %v3138
      %v3140 = vpop.f32.mrf.mxu0
      %v3141 = vpop.f32.mrf.mxu0
      %v3142 = vadd.f32 0.0, %v3141
      %v3143 = vpop.f32.mrf.mxu0
      %3144 = vmatprep.mubr.bf16.mxu0 0
      %3145 = vmatmul.mubr.bf16.gmra.mxu0 %v3031
      %v3146 = vpop.f32.mrf.mxu0
      %v3147 = vadd.f32 0.0, %v3146
      %v3148 = vpop.f32.mrf.mxu0
      %v3149 = vpop.f32.mrf.mxu0
      %v3150 = vadd.f32 0.0, %v3149
      %v3151 = vpop.f32.mrf.mxu0
      %3152 = vmatprep.mubr.bf16.mxu0 0
      %3153 = vmatmul.mubr.bf16.gmra.mxu0 %v3034
      %v3154 = vpop.f32.mrf.mxu0
      %v3155 = vadd.f32 0.0, %v3154
      %v3156 = vpop.f32.mrf.mxu0
      %v3157 = vpop.f32.mrf.mxu0
      %v3158 = vadd.f32 0.0, %v3157
      %v3159 = vpop.f32.mrf.mxu0
      %3160 = vmatprep.mubr.bf16.mxu0 0
      %3161 = vmatmul.mubr.bf16.gmra.mxu0 %v3037
      %v3162 = vpop.f32.mrf.mxu0
      %v3163 = vadd.f32 0.0, %v3162
      %v3164 = vpop.f32.mrf.mxu0
      %v3165 = vpop.f32.mrf.mxu0
      %v3166 = vadd.f32 0.0, %v3165
      %v3167 = vpop.f32.mrf.mxu0
      %3168 = vmatprep.mubr.bf16.mxu0 0
      %3169 = vmatmul.mubr.bf16.gmra.mxu0 %v3040
      %v3170 = vpop.f32.mrf.mxu0
      %v3171 = vadd.f32 0.0, %v3170
      %v3172 = vpop.f32.mrf.mxu0
      %v3173 = vpop.f32.mrf.mxu0
      %v3174 = vadd.f32 0.0, %v3173
      %v3175 = vpop.f32.mrf.mxu0
      %3176 = vmatprep.mubr.bf16.mxu0 0
      %3177 = vmatmul.mubr.bf16.gmra.mxu0 %v3043
      %v3178 = vpop.f32.mrf.mxu0
      %v3179 = vadd.f32 0.0, %v3178
      %v3180 = vpop.f32.mrf.mxu0
      %v3181 = vpop.f32.mrf.mxu0
      %v3182 = vadd.f32 0.0, %v3181
      %v3183 = vpop.f32.mrf.mxu0
      %3184 = vmatprep.mubr.bf16.mxu0 0
      %3185 = vmatmul.mubr.bf16.gmra.mxu0 %v3046
      %v3186 = vpop.f32.mrf.mxu0
      %v3187 = vadd.f32 0.0, %v3186
      %v3188 = vpop.f32.mrf.mxu0
      %v3189 = vpop.f32.mrf.mxu0
      %v3190 = vadd.f32 0.0, %v3189
      %v3191 = vpop.f32.mrf.mxu0
      %3192 = vmatprep.mubr.bf16.mxu0 0
      %3193 = vmatmul.mubr.bf16.gmra.mxu0 %v3049
      %v3194 = vpop.f32.mrf.mxu0
      %v3195 = vadd.f32 0.0, %v3194
      %v3196 = vpop.f32.mrf.mxu0
      %v3197 = vpop.f32.mrf.mxu0
      %v3198 = vadd.f32 0.0, %v3197
      %v3199 = vpop.f32.mrf.mxu0
      %3200 = vmatprep.mubr.bf16.mxu0 0
      %3201 = vmatmul.mubr.bf16.gmra.mxu0 %v3052
      %v3202 = vpop.f32.mrf.mxu0
      %v3203 = vadd.f32 0.0, %v3202
      %v3204 = vpop.f32.mrf.mxu0
      %v3205 = vpop.f32.mrf.mxu0
      %v3206 = vadd.f32 0.0, %v3205
      %v3207 = vpop.f32.mrf.mxu0
      %3208 = vmatprep.mubr.bf16.mxu0 0
      %3209 = vmatmul.mubr.bf16.gmra.mxu0 %v3055
      %v3210 = vpop.f32.mrf.mxu0
      %v3211 = vadd.f32 0.0, %v3210
      %v3212 = vpop.f32.mrf.mxu0
      %v3213 = vpop.f32.mrf.mxu0
      %v3214 = vadd.f32 0.0, %v3213
      %v3215 = vpop.f32.mrf.mxu0
      %3216 = vmatprep.mubr.bf16.mxu0 0
      %3217 = vmatmul.mubr.bf16.gmra.mxu0 %v3058
      %v3218 = vpop.f32.mrf.mxu0
      %v3219 = vadd.f32 0.0, %v3218
      %v3220 = vpop.f32.mrf.mxu0
      %v3221 = vpop.f32.mrf.mxu0
      %v3222 = vadd.f32 0.0, %v3221
      %v3223 = vpop.f32.mrf.mxu0
      %3224 = vdwg.mxu0
      %v3257 = vunpack.c.l.b16 %v2512
      %v3258 = vunpack.c.l.b16 %v2513
      %v3259 = vunpack.c.l.b16 %v2514
      %v3260 = vunpack.c.l.b16 %v2515
      %v3261 = vunpack.c.l.b16 %v2516
      %v3262 = vunpack.c.l.b16 %v2517
      %v3263 = vunpack.c.l.b16 %v2518
      %v3264 = vunpack.c.l.b16 %v2519
      %v3265 = vunpack.c.l.b16 %v2520
      %v3266 = vunpack.c.l.b16 %v2521
      %v3267 = vunpack.c.l.b16 %v2522
      %v3268 = vunpack.c.l.b16 %v2523
      %v3269 = vunpack.c.l.b16 %v2524
      %v3270 = vunpack.c.l.b16 %v2525
      %v3271 = vunpack.c.l.b16 %v2526
      %v3272 = vunpack.c.l.b16 %v2527
      %v3273 = vunpack.c.l.b16 %v2528
      %v3274 = vunpack.c.l.b16 %v2529
      %v3275 = vunpack.c.l.b16 %v2530
      %v3276 = vunpack.c.l.b16 %v2531
      %v3277 = vunpack.c.l.b16 %v2532
      %v3278 = vunpack.c.l.b16 %v2533
      %v3279 = vunpack.c.l.b16 %v2534
      %v3280 = vunpack.c.l.b16 %v2535
      %v3281 = vunpack.c.l.b16 %v2536
      %v3282 = vunpack.c.l.b16 %v2537
      %v3283 = vunpack.c.l.b16 %v2538
      %v3284 = vunpack.c.l.b16 %v2539
      %v3285 = vunpack.c.l.b16 %v2540
      %v3286 = vunpack.c.l.b16 %v2541
      %v3287 = vunpack.c.l.b16 %v2542
      %v3288 = vunpack.c.l.b16 %v2543
      %v3289 = vpack.c.b16 %v3258, %v3257
      %v3290 = vpack.c.b16 %v3260, %v3259
      %v3291 = vpack.c.b16 %v3262, %v3261
      %v3292 = vpack.c.b16 %v3264, %v3263
      %v3293 = vpack.c.b16 %v3266, %v3265
      %v3294 = vpack.c.b16 %v3268, %v3267
      %v3295 = vpack.c.b16 %v3270, %v3269
      %v3296 = vpack.c.b16 %v3272, %v3271
      %v3297 = vpack.c.b16 %v3274, %v3273
      %v3298 = vpack.c.b16 %v3276, %v3275
      %v3299 = vpack.c.b16 %v3278, %v3277
      %v3300 = vpack.c.b16 %v3280, %v3279
      %v3301 = vpack.c.b16 %v3282, %v3281
      %v3302 = vpack.c.b16 %v3284, %v3283
      %v3303 = vpack.c.b16 %v3286, %v3285
      %v3304 = vpack.c.b16 %v3288, %v3287
      %v3308 = vunpack.c.l.b16 %v2544
      %v3309 = vunpack.c.l.b16 %v2545
      %v3310 = vunpack.c.l.b16 %v2546
      %v3311 = vpack.c.b16 %v3309, %v3308
      %v3312 = vpack.c.b16 %v3310, %v3310
      %v3315 = vsel %vm3011, %v3289, 0
      %v3318 = vsel %vm3011, %v3290, 0
      %v3321 = vsel %vm3011, %v3291, 0
      %v3324 = vsel %vm3011, %v3292, 0
      %v3327 = vsel %vm3011, %v3293, 0
      %v3330 = vsel %vm3011, %v3294, 0
      %v3333 = vsel %vm3011, %v3295, 0
      %v3336 = vsel %vm3011, %v3296, 0
      %v3339 = vsel %vm3011, %v3297, 0
      %v3342 = vsel %vm3011, %v3298, 0
      %v3345 = vsel %vm3011, %v3299, 0
      %v3348 = vsel %vm3011, %v3300, 0
      %v3351 = vsel %vm3011, %v3301, 0
      %v3354 = vsel %vm3011, %v3302, 0
      %v3357 = vsel %vm3011, %v3303, 0
      %v3360 = vsel %vm3011, %v3304, 0
      %v3363 = vsel %vm3060, %v3312, 0
      %3365 = vmatprep.subr.bf16.mxu0 0
      %3366 = vmatpush1.bf16.msra.mxu0 0
      %3367 = vmatprep.subr.bf16.mxu0 0
      %3368 = vmatpush1.bf16.msra.mxu0 0
      %3369 = vmatprep.subr.bf16.mxu0 0
      %3370 = vmatpush1.bf16.msra.mxu0 0
      %3371 = vmatprep.subr.bf16.mxu0 0
      %3372 = vmatpush1.bf16.msra.mxu0 0
      %3373 = vmatprep.subr.bf16.mxu0 0
      %3374 = vmatpush1.bf16.msra.mxu0 0
      %3375 = vmatprep.subr.bf16.mxu0 0
      %3376 = vmatpush1.bf16.msra.mxu0 0
      %3377 = vmatprep.subr.bf16.mxu0 0
      %3378 = vmatpush1.bf16.msra.mxu0 %v3363
      %3379 = vmatprep.subr.bf16.mxu0 0
      %3380 = vmatpush1.bf16.msra.mxu0 %v3311
      %3381 = vmatprep.subr.bf16.mxu0 0
      %3382 = vmatpush2.bf16.msra.mxu0 0
      %3383 = vmatprep.subr.bf16.mxu0 0
      %3384 = vmatpush2.bf16.msra.mxu0 0
      %3385 = vmatprep.subr.bf16.mxu0 0
      %3386 = vmatpush2.bf16.msra.mxu0 0
      %3387 = vmatprep.subr.bf16.mxu0 0
      %3388 = vmatpush2.bf16.msra.mxu0 0
      %3389 = vmatprep.subr.bf16.mxu0 0
      %3390 = vmatpush2.bf16.msra.mxu0 0
      %3391 = vmatprep.subr.bf16.mxu0 0
      %3392 = vmatpush2.bf16.msra.mxu0 0
      %3393 = vmatprep.subr.bf16.mxu0 0
      %3394 = vmatpush2.bf16.msra.mxu0 0
      %3395 = vmatprep.subr.bf16.mxu0 0
      %3396 = vmatpush2.bf16.msra.mxu0 0
      %3397 = vmatprep.mubr.bf16.mxu0 0
      %3398 = vmatmul.mubr.bf16.gmra.mxu0 %v3315
      %v3399 = vpop.f32.mrf.mxu0
      %v3400 = vadd.f32 %v3099, %v3399
      %v3401 = vpop.f32.mrf.mxu0
      %v3402 = vpop.f32.mrf.mxu0
      %v3403 = vadd.f32 %v3102, %v3402
      %v3404 = vpop.f32.mrf.mxu0
      %3405 = vmatprep.mubr.bf16.mxu0 0
      %3406 = vmatmul.mubr.bf16.gmra.mxu0 %v3318
      %v3407 = vpop.f32.mrf.mxu0
      %v3408 = vadd.f32 %v3107, %v3407
      %v3409 = vpop.f32.mrf.mxu0
      %v3410 = vpop.f32.mrf.mxu0
      %v3411 = vadd.f32 %v3110, %v3410
      %v3412 = vpop.f32.mrf.mxu0
      %3413 = vmatprep.mubr.bf16.mxu0 0
      %3414 = vmatmul.mubr.bf16.gmra.mxu0 %v3321
      %v3415 = vpop.f32.mrf.mxu0
      %v3416 = vadd.f32 %v3115, %v3415
      %v3417 = vpop.f32.mrf.mxu0
      %v3418 = vpop.f32.mrf.mxu0
      %v3419 = vadd.f32 %v3118, %v3418
      %v3420 = vpop.f32.mrf.mxu0
      %3421 = vmatprep.mubr.bf16.mxu0 0
      %3422 = vmatmul.mubr.bf16.gmra.mxu0 %v3324
      %v3423 = vpop.f32.mrf.mxu0
      %v3424 = vadd.f32 %v3123, %v3423
      %v3425 = vpop.f32.mrf.mxu0
      %v3426 = vpop.f32.mrf.mxu0
      %v3427 = vadd.f32 %v3126, %v3426
      %v3428 = vpop.f32.mrf.mxu0
      %3429 = vmatprep.mubr.bf16.mxu0 0
      %3430 = vmatmul.mubr.bf16.gmra.mxu0 %v3327
      %v3431 = vpop.f32.mrf.mxu0
      %v3432 = vadd.f32 %v3131, %v3431
      %v3433 = vpop.f32.mrf.mxu0
      %v3434 = vpop.f32.mrf.mxu0
      %v3435 = vadd.f32 %v3134, %v3434
      %v3436 = vpop.f32.mrf.mxu0
      %3437 = vmatprep.mubr.bf16.mxu0 0
      %3438 = vmatmul.mubr.bf16.gmra.mxu0 %v3330
      %v3439 = vpop.f32.mrf.mxu0
      %v3440 = vadd.f32 %v3139, %v3439
      %v3441 = vpop.f32.mrf.mxu0
      %v3442 = vpop.f32.mrf.mxu0
      %v3443 = vadd.f32 %v3142, %v3442
      %v3444 = vpop.f32.mrf.mxu0
      %3445 = vmatprep.mubr.bf16.mxu0 0
      %3446 = vmatmul.mubr.bf16.gmra.mxu0 %v3333
      %v3447 = vpop.f32.mrf.mxu0
      %v3448 = vadd.f32 %v3147, %v3447
      %v3449 = vpop.f32.mrf.mxu0
      %v3450 = vpop.f32.mrf.mxu0
      %v3451 = vadd.f32 %v3150, %v3450
      %v3452 = vpop.f32.mrf.mxu0
      %3453 = vmatprep.mubr.bf16.mxu0 0
      %3454 = vmatmul.mubr.bf16.gmra.mxu0 %v3336
      %v3455 = vpop.f32.mrf.mxu0
      %v3456 = vadd.f32 %v3155, %v3455
      %v3457 = vpop.f32.mrf.mxu0
      %v3458 = vpop.f32.mrf.mxu0
      %v3459 = vadd.f32 %v3158, %v3458
      %v3460 = vpop.f32.mrf.mxu0
      %3461 = vmatprep.mubr.bf16.mxu0 0
      %3462 = vmatmul.mubr.bf16.gmra.mxu0 %v3339
      %v3463 = vpop.f32.mrf.mxu0
      %v3464 = vadd.f32 %v3163, %v3463
      %v3465 = vpop.f32.mrf.mxu0
      %v3466 = vpop.f32.mrf.mxu0
      %v3467 = vadd.f32 %v3166, %v3466
      %v3468 = vpop.f32.mrf.mxu0
      %3469 = vmatprep.mubr.bf16.mxu0 0
      %3470 = vmatmul.mubr.bf16.gmra.mxu0 %v3342
      %v3471 = vpop.f32.mrf.mxu0
      %v3472 = vadd.f32 %v3171, %v3471
      %v3473 = vpop.f32.mrf.mxu0
      %v3474 = vpop.f32.mrf.mxu0
      %v3475 = vadd.f32 %v3174, %v3474
      %v3476 = vpop.f32.mrf.mxu0
      %3477 = vmatprep.mubr.bf16.mxu0 0
      %3478 = vmatmul.mubr.bf16.gmra.mxu0 %v3345
      %v3479 = vpop.f32.mrf.mxu0
      %v3480 = vadd.f32 %v3179, %v3479
      %v3481 = vpop.f32.mrf.mxu0
      %v3482 = vpop.f32.mrf.mxu0
      %v3483 = vadd.f32 %v3182, %v3482
      %v3484 = vpop.f32.mrf.mxu0
      %3485 = vmatprep.mubr.bf16.mxu0 0
      %3486 = vmatmul.mubr.bf16.gmra.mxu0 %v3348
      %v3487 = vpop.f32.mrf.mxu0
      %v3488 = vadd.f32 %v3187, %v3487
      %v3489 = vpop.f32.mrf.mxu0
      %v3490 = vpop.f32.mrf.mxu0
      %v3491 = vadd.f32 %v3190, %v3490
      %v3492 = vpop.f32.mrf.mxu0
      %3493 = vmatprep.mubr.bf16.mxu0 0
      %3494 = vmatmul.mubr.bf16.gmra.mxu0 %v3351
      %v3495 = vpop.f32.mrf.mxu0
      %v3496 = vadd.f32 %v3195, %v3495
      %v3497 = vpop.f32.mrf.mxu0
      %v3498 = vpop.f32.mrf.mxu0
      %v3499 = vadd.f32 %v3198, %v3498
      %v3500 = vpop.f32.mrf.mxu0
      %3501 = vmatprep.mubr.bf16.mxu0 0
      %3502 = vmatmul.mubr.bf16.gmra.mxu0 %v3354
      %v3503 = vpop.f32.mrf.mxu0
      %v3504 = vadd.f32 %v3203, %v3503
      %v3505 = vpop.f32.mrf.mxu0
      %v3506 = vpop.f32.mrf.mxu0
      %v3507 = vadd.f32 %v3206, %v3506
      %v3508 = vpop.f32.mrf.mxu0
      %3509 = vmatprep.mubr.bf16.mxu0 0
      %3510 = vmatmul.mubr.bf16.gmra.mxu0 %v3357
      %v3511 = vpop.f32.mrf.mxu0
      %v3512 = vadd.f32 %v3211, %v3511
      %v3513 = vpop.f32.mrf.mxu0
      %v3514 = vpop.f32.mrf.mxu0
      %v3515 = vadd.f32 %v3214, %v3514
      %v3516 = vpop.f32.mrf.mxu0
      %3517 = vmatprep.mubr.bf16.mxu0 0
      %3518 = vmatmul.mubr.bf16.gmra.mxu0 %v3360
      %v3519 = vpop.f32.mrf.mxu0
      %v3520 = vadd.f32 %v3219, %v3519
      %v3521 = vpop.f32.mrf.mxu0
      %v3522 = vpop.f32.mrf.mxu0
      %v3523 = vadd.f32 %v3222, %v3522
      %v3524 = vpop.f32.mrf.mxu0
      %3525 = vdwg.mxu0
      %v3526 = vld [vmem:[#allocation2] sm:$0xe]
      %v3527 = vld [vmem:[#allocation2 + $0xc] sm:$0xe]
      %v3528 = vld [vmem:[#allocation2 + $0x18] sm:$0xe]
      %v3529 = vld [vmem:[#allocation2 + $0x24] sm:$0xe]
      %v3530 = vld [vmem:[#allocation2 + $0x30] sm:$0xe]
      %v3531 = vld [vmem:[#allocation2 + $0x3c] sm:$0xe]
      %v3532 = vld [vmem:[#allocation2 + $0x48] sm:$0xe]
      %v3533 = vld [vmem:[#allocation2 + $0x54] sm:$0xe]
      %v3534 = vld [vmem:[#allocation2 + $0x60] sm:$0xe]
      %v3535 = vld [vmem:[#allocation2 + $0x6c] sm:$0xe]
      %v3536 = vld [vmem:[#allocation2 + $0x78] sm:$0xe]
      %v3537 = vld [vmem:[#allocation2 + $0x84] sm:$0xe]
      %v3538 = vld [vmem:[#allocation2 + $0x90] sm:$0xe]
      %v3539 = vld [vmem:[#allocation2 + $0x9c] sm:$0xe]
      %v3540 = vld [vmem:[#allocation2 + $0xa8] sm:$0xe]
      %v3541 = vld [vmem:[#allocation2 + $0xb4] sm:$0xe]
      %vm3574 = vcmask 1042432
      %vm3575 = vcmask 1046532
      %vm3576 = vmor %vm3574, %vm3575
      %v3577 = vrot.slane %v3526, 5
      %v3578 = vrot.slane %v3577, 4
      %v3579 = vrot.slane %v2513, 5
      %v3580 = vsel %vm3576, %v3578, %v3579
      %v3581 = vrot.slane %v3579, 4
      %v3582 = vrot.slane %v2547, 5
      %v3583 = vsel %vm3576, %v3581, %v3582
      %v3584 = vrot.slane %v3527, 5
      %v3585 = vrot.slane %v3584, 4
      %v3586 = vrot.slane %v2515, 5
      %v3587 = vsel %vm3576, %v3585, %v3586
      %v3588 = vrot.slane %v3586, 4
      %v3589 = vrot.slane %v2548, 5
      %v3590 = vsel %vm3576, %v3588, %v3589
      %v3591 = vrot.slane %v3528, 5
      %v3592 = vrot.slane %v3591, 4
      %v3593 = vrot.slane %v2517, 5
      %v3594 = vsel %vm3576, %v3592, %v3593
      %v3595 = vrot.slane %v3593, 4
      %v3596 = vrot.slane %v2549, 5
      %v3597 = vsel %vm3576, %v3595, %v3596
      %v3598 = vrot.slane %v3529, 5
      %v3599 = vrot.slane %v3598, 4
      %v3600 = vrot.slane %v2519, 5
      %v3601 = vsel %vm3576, %v3599, %v3600
      %v3602 = vrot.slane %v3600, 4
      %v3603 = vrot.slane %v2550, 5
      %v3604 = vsel %vm3576, %v3602, %v3603
      %v3605 = vrot.slane %v3530, 5
      %v3606 = vrot.slane %v3605, 4
      %v3607 = vrot.slane %v2521, 5
      %v3608 = vsel %vm3576, %v3606, %v3607
      %v3609 = vrot.slane %v3607, 4
      %v3610 = vrot.slane %v2551, 5
      %v3611 = vsel %vm3576, %v3609, %v3610
      %v3612 = vrot.slane %v3531, 5
      %v3613 = vrot.slane %v3612, 4
      %v3614 = vrot.slane %v2523, 5
      %v3615 = vsel %vm3576, %v3613, %v3614
      %v3616 = vrot.slane %v3614, 4
      %v3617 = vrot.slane %v2552, 5
      %v3618 = vsel %vm3576, %v3616, %v3617
      %v3619 = vrot.slane %v3532, 5
      %v3620 = vrot.slane %v3619, 4
      %v3621 = vrot.slane %v2525, 5
      %v3622 = vsel %vm3576, %v3620, %v3621
      %v3623 = vrot.slane %v3621, 4
      %v3624 = vrot.slane %v2553, 5
      %v3625 = vsel %vm3576, %v3623, %v3624
      %v3626 = vrot.slane %v3533, 5
      %v3627 = vrot.slane %v3626, 4
      %v3628 = vrot.slane %v2527, 5
      %v3629 = vsel %vm3576, %v3627, %v3628
      %v3630 = vrot.slane %v3628, 4
      %v3631 = vrot.slane %v2554, 5
      %v3632 = vsel %vm3576, %v3630, %v3631
      %v3633 = vrot.slane %v3534, 5
      %v3634 = vrot.slane %v3633, 4
      %v3635 = vrot.slane %v2529, 5
      %v3636 = vsel %vm3576, %v3634, %v3635
      %v3637 = vrot.slane %v3635, 4
      %v3638 = vrot.slane %v2555, 5
      %v3639 = vsel %vm3576, %v3637, %v3638
      %v3640 = vrot.slane %v3535, 5
      %v3641 = vrot.slane %v3640, 4
      %v3642 = vrot.slane %v2531, 5
      %v3643 = vsel %vm3576, %v3641, %v3642
      %v3644 = vrot.slane %v3642, 4
      %v3645 = vrot.slane %v2556, 5
      %v3646 = vsel %vm3576, %v3644, %v3645
      %v3647 = vrot.slane %v3536, 5
      %v3648 = vrot.slane %v3647, 4
      %v3649 = vrot.slane %v2533, 5
      %v3650 = vsel %vm3576, %v3648, %v3649
      %v3651 = vrot.slane %v3649, 4
      %v3652 = vrot.slane %v2557, 5
      %v3653 = vsel %vm3576, %v3651, %v3652
      %v3654 = vrot.slane %v3537, 5
      %v3655 = vrot.slane %v3654, 4
      %v3656 = vrot.slane %v2535, 5
      %v3657 = vsel %vm3576, %v3655, %v3656
      %v3658 = vrot.slane %v3656, 4
      %v3659 = vrot.slane %v2558, 5
      %v3660 = vsel %vm3576, %v3658, %v3659
      %v3661 = vrot.slane %v3538, 5
      %v3662 = vrot.slane %v3661, 4
      %v3663 = vrot.slane %v2537, 5
      %v3664 = vsel %vm3576, %v3662, %v3663
      %v3665 = vrot.slane %v3663, 4
      %v3666 = vrot.slane %v2559, 5
      %v3667 = vsel %vm3576, %v3665, %v3666
      %v3668 = vrot.slane %v3539, 5
      %v3669 = vrot.slane %v3668, 4
      %v3670 = vrot.slane %v2539, 5
      %v3671 = vsel %vm3576, %v3669, %v3670
      %v3672 = vrot.slane %v3670, 4
      %v3673 = vrot.slane %v2560, 5
      %v3674 = vsel %vm3576, %v3672, %v3673
      %v3675 = vrot.slane %v3540, 5
      %v3676 = vrot.slane %v3675, 4
      %v3677 = vrot.slane %v2541, 5
      %v3678 = vsel %vm3576, %v3676, %v3677
      %v3679 = vrot.slane %v3677, 4
      %v3680 = vrot.slane %v2561, 5
      %v3681 = vsel %vm3576, %v3679, %v3680
      %v3682 = vrot.slane %v3541, 5
      %v3683 = vrot.slane %v3682, 4
      %v3684 = vrot.slane %v2543, 5
      %v3685 = vsel %vm3576, %v3683, %v3684
      %v3686 = vrot.slane %v3684, 4
      %v3687 = vrot.slane %v2562, 5
      %v3688 = vsel %vm3576, %v3686, %v3687
      %s3689 = scalar_lea.vmem %s5, 24
      %v3690 = vld [vmem:[%s3689] sm:$0xf]
      %v3691 = vld [vmem:[%s3689 + $0x4] sm:$0xf]
      %v3692 = vld [vmem:[%s3689 + $0x8] sm:$0xf]
      %v3693 = vunpack.c.l.b16 %v3580
      %v3694 = vunpack.c.l.b16 %v3583
      %v3695 = vunpack.c.l.b16 %v3587
      %v3696 = vunpack.c.l.b16 %v3590
      %v3697 = vunpack.c.l.b16 %v3594
      %v3698 = vunpack.c.l.b16 %v3597
      %v3699 = vunpack.c.l.b16 %v3601
      %v3700 = vunpack.c.l.b16 %v3604
      %v3701 = vunpack.c.l.b16 %v3608
      %v3702 = vunpack.c.l.b16 %v3611
      %v3703 = vunpack.c.l.b16 %v3615
      %v3704 = vunpack.c.l.b16 %v3618
      %v3705 = vunpack.c.l.b16 %v3622
      %v3706 = vunpack.c.l.b16 %v3625
      %v3707 = vunpack.c.l.b16 %v3629
      %v3708 = vunpack.c.l.b16 %v3632
      %v3709 = vunpack.c.l.b16 %v3636
      %v3710 = vunpack.c.l.b16 %v3639
      %v3711 = vunpack.c.l.b16 %v3643
      %v3712 = vunpack.c.l.b16 %v3646
      %v3713 = vunpack.c.l.b16 %v3650
      %v3714 = vunpack.c.l.b16 %v3653
      %v3715 = vunpack.c.l.b16 %v3657
      %v3716 = vunpack.c.l.b16 %v3660
      %v3717 = vunpack.c.l.b16 %v3664
      %v3718 = vunpack.c.l.b16 %v3667
      %v3719 = vunpack.c.l.b16 %v3671
      %v3720 = vunpack.c.l.b16 %v3674
      %v3721 = vunpack.c.l.b16 %v3678
      %v3722 = vunpack.c.l.b16 %v3681
      %v3723 = vunpack.c.l.b16 %v3685
      %v3724 = vunpack.c.l.b16 %v3688
      %v3725 = vpack.c.b16 %v3694, %v3693
      %v3726 = vpack.c.b16 %v3696, %v3695
      %v3727 = vpack.c.b16 %v3698, %v3697
      %v3728 = vpack.c.b16 %v3700, %v3699
      %v3729 = vpack.c.b16 %v3702, %v3701
      %v3730 = vpack.c.b16 %v3704, %v3703
      %v3731 = vpack.c.b16 %v3706, %v3705
      %v3732 = vpack.c.b16 %v3708, %v3707
      %v3733 = vpack.c.b16 %v3710, %v3709
      %v3734 = vpack.c.b16 %v3712, %v3711
      %v3735 = vpack.c.b16 %v3714, %v3713
      %v3736 = vpack.c.b16 %v3716, %v3715
      %v3737 = vpack.c.b16 %v3718, %v3717
      %v3738 = vpack.c.b16 %v3720, %v3719
      %v3739 = vpack.c.b16 %v3722, %v3721
      %v3740 = vpack.c.b16 %v3724, %v3723
      %v3744 = vunpack.c.l.b16 %v3690
      %v3745 = vunpack.c.l.b16 %v3691
      %v3746 = vunpack.c.l.b16 %v3692
      %v3747 = vpack.c.b16 %v3745, %v3744
      %v3748 = vpack.c.b16 %v3746, %v3746
      %v3751 = vsel %vm3011, %v3725, 0
      %v3754 = vsel %vm3011, %v3726, 0
      %v3757 = vsel %vm3011, %v3727, 0
      %v3760 = vsel %vm3011, %v3728, 0
      %v3763 = vsel %vm3011, %v3729, 0
      %v3766 = vsel %vm3011, %v3730, 0
      %v3769 = vsel %vm3011, %v3731, 0
      %v3772 = vsel %vm3011, %v3732, 0
      %v3775 = vsel %vm3011, %v3733, 0
      %v3778 = vsel %vm3011, %v3734, 0
      %v3781 = vsel %vm3011, %v3735, 0
      %v3784 = vsel %vm3011, %v3736, 0
      %v3787 = vsel %vm3011, %v3737, 0
      %v3790 = vsel %vm3011, %v3738, 0
      %v3793 = vsel %vm3011, %v3739, 0
      %v3796 = vsel %vm3011, %v3740, 0
      %v3799 = vsel %vm3060, %v3748, 0
      %3801 = vmatprep.subr.bf16.mxu0 0
      %3802 = vmatpush1.bf16.msra.mxu0 0
      %3803 = vmatprep.subr.bf16.mxu0 0
      %3804 = vmatpush1.bf16.msra.mxu0 0
      %3805 = vmatprep.subr.bf16.mxu0 0
      %3806 = vmatpush1.bf16.msra.mxu0 0
      %3807 = vmatprep.subr.bf16.mxu0 0
      %3808 = vmatpush1.bf16.msra.mxu0 0
      %3809 = vmatprep.subr.bf16.mxu0 0
      %3810 = vmatpush1.bf16.msra.mxu0 0
      %3811 = vmatprep.subr.bf16.mxu0 0
      %3812 = vmatpush1.bf16.msra.mxu0 0
      %3813 = vmatprep.subr.bf16.mxu0 0
      %3814 = vmatpush1.bf16.msra.mxu0 %v3799
      %3815 = vmatprep.subr.bf16.mxu0 0
      %3816 = vmatpush1.bf16.msra.mxu0 %v3747
      %3817 = vmatprep.subr.bf16.mxu0 0
      %3818 = vmatpush2.bf16.msra.mxu0 0
      %3819 = vmatprep.subr.bf16.mxu0 0
      %3820 = vmatpush2.bf16.msra.mxu0 0
      %3821 = vmatprep.subr.bf16.mxu0 0
      %3822 = vmatpush2.bf16.msra.mxu0 0
      %3823 = vmatprep.subr.bf16.mxu0 0
      %3824 = vmatpush2.bf16.msra.mxu0 0
      %3825 = vmatprep.subr.bf16.mxu0 0
      %3826 = vmatpush2.bf16.msra.mxu0 0
      %3827 = vmatprep.subr.bf16.mxu0 0
      %3828 = vmatpush2.bf16.msra.mxu0 0
      %3829 = vmatprep.subr.bf16.mxu0 0
      %3830 = vmatpush2.bf16.msra.mxu0 0
      %3831 = vmatprep.subr.bf16.mxu0 0
      %3832 = vmatpush2.bf16.msra.mxu0 0
      %3833 = vmatprep.mubr.bf16.mxu0 0
      %3834 = vmatmul.mubr.bf16.gmra.mxu0 %v3751
      %v3835 = vpop.f32.mrf.mxu0
      %v3836 = vadd.f32 0.0, %v3835
      %v3837 = vpop.f32.mrf.mxu0
      %v3838 = vpop.f32.mrf.mxu0
      %v3839 = vadd.f32 0.0, %v3838
      %v3840 = vpop.f32.mrf.mxu0
      %3841 = vmatprep.mubr.bf16.mxu0 0
      %3842 = vmatmul.mubr.bf16.gmra.mxu0 %v3754
      %v3843 = vpop.f32.mrf.mxu0
      %v3844 = vadd.f32 0.0, %v3843
      %v3845 = vpop.f32.mrf.mxu0
      %v3846 = vpop.f32.mrf.mxu0
      %v3847 = vadd.f32 0.0, %v3846
      %v3848 = vpop.f32.mrf.mxu0
      %3849 = vmatprep.mubr.bf16.mxu0 0
      %3850 = vmatmul.mubr.bf16.gmra.mxu0 %v3757
      %v3851 = vpop.f32.mrf.mxu0
      %v3852 = vadd.f32 0.0, %v3851
      %v3853 = vpop.f32.mrf.mxu0
      %v3854 = vpop.f32.mrf.mxu0
      %v3855 = vadd.f32 0.0, %v3854
      %v3856 = vpop.f32.mrf.mxu0
      %3857 = vmatprep.mubr.bf16.mxu0 0
      %3858 = vmatmul.mubr.bf16.gmra.mxu0 %v3760
      %v3859 = vpop.f32.mrf.mxu0
      %v3860 = vadd.f32 0.0, %v3859
      %v3861 = vpop.f32.mrf.mxu0
      %v3862 = vpop.f32.mrf.mxu0
      %v3863 = vadd.f32 0.0, %v3862
      %v3864 = vpop.f32.mrf.mxu0
      %3865 = vmatprep.mubr.bf16.mxu0 0
      %3866 = vmatmul.mubr.bf16.gmra.mxu0 %v3763
      %v3867 = vpop.f32.mrf.mxu0
      %v3868 = vadd.f32 0.0, %v3867
      %v3869 = vpop.f32.mrf.mxu0
      %v3870 = vpop.f32.mrf.mxu0
      %v3871 = vadd.f32 0.0, %v3870
      %v3872 = vpop.f32.mrf.mxu0
      %3873 = vmatprep.mubr.bf16.mxu0 0
      %3874 = vmatmul.mubr.bf16.gmra.mxu0 %v3766
      %v3875 = vpop.f32.mrf.mxu0
      %v3876 = vadd.f32 0.0, %v3875
      %v3877 = vpop.f32.mrf.mxu0
      %v3878 = vpop.f32.mrf.mxu0
      %v3879 = vadd.f32 0.0, %v3878
      %v3880 = vpop.f32.mrf.mxu0
      %3881 = vmatprep.mubr.bf16.mxu0 0
      %3882 = vmatmul.mubr.bf16.gmra.mxu0 %v3769
      %v3883 = vpop.f32.mrf.mxu0
      %v3884 = vadd.f32 0.0, %v3883
      %v3885 = vpop.f32.mrf.mxu0
      %v3886 = vpop.f32.mrf.mxu0
      %v3887 = vadd.f32 0.0, %v3886
      %v3888 = vpop.f32.mrf.mxu0
      %3889 = vmatprep.mubr.bf16.mxu0 0
      %3890 = vmatmul.mubr.bf16.gmra.mxu0 %v3772
      %v3891 = vpop.f32.mrf.mxu0
      %v3892 = vadd.f32 0.0, %v3891
      %v3893 = vpop.f32.mrf.mxu0
      %v3894 = vpop.f32.mrf.mxu0
      %v3895 = vadd.f32 0.0, %v3894
      %v3896 = vpop.f32.mrf.mxu0
      %3897 = vmatprep.mubr.bf16.mxu0 0
      %3898 = vmatmul.mubr.bf16.gmra.mxu0 %v3775
      %v3899 = vpop.f32.mrf.mxu0
      %v3900 = vadd.f32 0.0, %v3899
      %v3901 = vpop.f32.mrf.mxu0
      %v3902 = vpop.f32.mrf.mxu0
      %v3903 = vadd.f32 0.0, %v3902
      %v3904 = vpop.f32.mrf.mxu0
      %3905 = vmatprep.mubr.bf16.mxu0 0
      %3906 = vmatmul.mubr.bf16.gmra.mxu0 %v3778
      %v3907 = vpop.f32.mrf.mxu0
      %v3908 = vadd.f32 0.0, %v3907
      %v3909 = vpop.f32.mrf.mxu0
      %v3910 = vpop.f32.mrf.mxu0
      %v3911 = vadd.f32 0.0, %v3910
      %v3912 = vpop.f32.mrf.mxu0
      %3913 = vmatprep.mubr.bf16.mxu0 0
      %3914 = vmatmul.mubr.bf16.gmra.mxu0 %v3781
      %v3915 = vpop.f32.mrf.mxu0
      %v3916 = vadd.f32 0.0, %v3915
      %v3917 = vpop.f32.mrf.mxu0
      %v3918 = vpop.f32.mrf.mxu0
      %v3919 = vadd.f32 0.0, %v3918
      %v3920 = vpop.f32.mrf.mxu0
      %3921 = vmatprep.mubr.bf16.mxu0 0
      %3922 = vmatmul.mubr.bf16.gmra.mxu0 %v3784
      %v3923 = vpop.f32.mrf.mxu0
      %v3924 = vadd.f32 0.0, %v3923
      %v3925 = vpop.f32.mrf.mxu0
      %v3926 = vpop.f32.mrf.mxu0
      %v3927 = vadd.f32 0.0, %v3926
      %v3928 = vpop.f32.mrf.mxu0
      %3929 = vmatprep.mubr.bf16.mxu0 0
      %3930 = vmatmul.mubr.bf16.gmra.mxu0 %v3787
      %v3931 = vpop.f32.mrf.mxu0
      %v3932 = vadd.f32 0.0, %v3931
      %v3933 = vpop.f32.mrf.mxu0
      %v3934 = vpop.f32.mrf.mxu0
      %v3935 = vadd.f32 0.0, %v3934
      %v3936 = vpop.f32.mrf.mxu0
      %3937 = vmatprep.mubr.bf16.mxu0 0
      %3938 = vmatmul.mubr.bf16.gmra.mxu0 %v3790
      %v3939 = vpop.f32.mrf.mxu0
      %v3940 = vadd.f32 0.0, %v3939
      %v3941 = vpop.f32.mrf.mxu0
      %v3942 = vpop.f32.mrf.mxu0
      %v3943 = vadd.f32 0.0, %v3942
      %v3944 = vpop.f32.mrf.mxu0
      %3945 = vmatprep.mubr.bf16.mxu0 0
      %3946 = vmatmul.mubr.bf16.gmra.mxu0 %v3793
      %v3947 = vpop.f32.mrf.mxu0
      %v3948 = vadd.f32 0.0, %v3947
      %v3949 = vpop.f32.mrf.mxu0
      %v3950 = vpop.f32.mrf.mxu0
      %v3951 = vadd.f32 0.0, %v3950
      %v3952 = vpop.f32.mrf.mxu0
      %3953 = vmatprep.mubr.bf16.mxu0 0
      %3954 = vmatmul.mubr.bf16.gmra.mxu0 %v3796
      %v3955 = vpop.f32.mrf.mxu0
      %v3956 = vadd.f32 0.0, %v3955
      %v3957 = vpop.f32.mrf.mxu0
      %v3958 = vpop.f32.mrf.mxu0
      %v3959 = vadd.f32 0.0, %v3958
      %v3960 = vpop.f32.mrf.mxu0
      %3961 = vdwg.mxu0
      %v3962 = vadd.f32 %v3400, %v3836
      %v3963 = vadd.f32 %v3403, %v3839
      %v3964 = vadd.f32 %v3408, %v3844
      %v3965 = vadd.f32 %v3411, %v3847
      %v3966 = vadd.f32 %v3416, %v3852
      %v3967 = vadd.f32 %v3419, %v3855
      %v3968 = vadd.f32 %v3424, %v3860
      %v3969 = vadd.f32 %v3427, %v3863
      %v3970 = vadd.f32 %v3432, %v3868
      %v3971 = vadd.f32 %v3435, %v3871
      %v3972 = vadd.f32 %v3440, %v3876
      %v3973 = vadd.f32 %v3443, %v3879
      %v3974 = vadd.f32 %v3448, %v3884
      %v3975 = vadd.f32 %v3451, %v3887
      %v3976 = vadd.f32 %v3456, %v3892
      %v3977 = vadd.f32 %v3459, %v3895
      %v3978 = vadd.f32 %v3464, %v3900
      %v3979 = vadd.f32 %v3467, %v3903
      %v3980 = vadd.f32 %v3472, %v3908
      %v3981 = vadd.f32 %v3475, %v3911
      %v3982 = vadd.f32 %v3480, %v3916
      %v3983 = vadd.f32 %v3483, %v3919
      %v3984 = vadd.f32 %v3488, %v3924
      %v3985 = vadd.f32 %v3491, %v3927
      %v3986 = vadd.f32 %v3496, %v3932
      %v3987 = vadd.f32 %v3499, %v3935
      %v3988 = vadd.f32 %v3504, %v3940
      %v3989 = vadd.f32 %v3507, %v3943
      %v3990 = vadd.f32 %v3512, %v3948
      %v3991 = vadd.f32 %v3515, %v3951
      %v3992 = vadd.f32 %v3520, %v3956
      %v3993 = vadd.f32 %v3523, %v3959
      %v3994 = vld [vmem:[%s417] sm:$0xf]
      %v3995 = vld [vmem:[%s417 + $0x4] sm:$0xf]
      %v3996 = vld [vmem:[%s417 + $0xc] sm:$0xf]
      %v3997 = vld [vmem:[%s417 + $0x10] sm:$0xf]
      %v3998 = vld [vmem:[%s417 + $0x18] sm:$0xf]
      %v3999 = vld [vmem:[%s417 + $0x1c] sm:$0xf]
      %v4000 = vld [vmem:[%s417 + $0x24] sm:$0xf]
      %v4001 = vld [vmem:[%s417 + $0x28] sm:$0xf]
      %v4002 = vld [vmem:[%s417 + $0x30] sm:$0xf]
      %v4003 = vld [vmem:[%s417 + $0x34] sm:$0xf]
      %v4004 = vld [vmem:[%s417 + $0x3c] sm:$0xf]
      %v4005 = vld [vmem:[%s417 + $0x40] sm:$0xf]
      %v4006 = vld [vmem:[%s417 + $0x48] sm:$0xf]
      %v4007 = vld [vmem:[%s417 + $0x4c] sm:$0xf]
      %v4008 = vld [vmem:[%s417 + $0x54] sm:$0xf]
      %v4009 = vld [vmem:[%s417 + $0x58] sm:$0xf]
      %v4010 = vld [vmem:[%s417 + $0x60] sm:$0xf]
      %v4011 = vld [vmem:[%s417 + $0x64] sm:$0xf]
      %v4012 = vld [vmem:[%s417 + $0x6c] sm:$0xf]
      %v4013 = vld [vmem:[%s417 + $0x70] sm:$0xf]
      %v4014 = vld [vmem:[%s417 + $0x78] sm:$0xf]
      %v4015 = vld [vmem:[%s417 + $0x7c] sm:$0xf]
      %v4016 = vld [vmem:[%s417 + $0x84] sm:$0xf]
      %v4017 = vld [vmem:[%s417 + $0x88] sm:$0xf]
      %v4018 = vld [vmem:[%s417 + $0x90] sm:$0xf]
      %v4019 = vld [vmem:[%s417 + $0x94] sm:$0xf]
      %v4020 = vld [vmem:[%s417 + $0x9c] sm:$0xf]
      %v4021 = vld [vmem:[%s417 + $0xa0] sm:$0xf]
      %v4022 = vld [vmem:[%s417 + $0xa8] sm:$0xf]
      %v4023 = vld [vmem:[%s417 + $0xac] sm:$0xf]
      %v4024 = vld [vmem:[%s417 + $0xb4] sm:$0xf]
      %v4025 = vld [vmem:[%s417 + $0xb8] sm:$0xf]
      %s4026 = scalar_lea.vmem %s5, 36
      %v4027 = vld [vmem:[%s4026] sm:$0xf]
      %v4028 = vld [vmem:[%s4026 + $0x4] sm:$0xf]
      %v4029 = vld [vmem:[%s4026 + $0x8] sm:$0xf]
      %v4062 = vunpack.c.l.b16 %v3994
      %v4063 = vunpack.c.l.b16 %v3995
      %v4064 = vunpack.c.l.b16 %v3996
      %v4065 = vunpack.c.l.b16 %v3997
      %v4066 = vunpack.c.l.b16 %v3998
      %v4067 = vunpack.c.l.b16 %v3999
      %v4068 = vunpack.c.l.b16 %v4000
      %v4069 = vunpack.c.l.b16 %v4001
      %v4070 = vunpack.c.l.b16 %v4002
      %v4071 = vunpack.c.l.b16 %v4003
      %v4072 = vunpack.c.l.b16 %v4004
      %v4073 = vunpack.c.l.b16 %v4005
      %v4074 = vunpack.c.l.b16 %v4006
      %v4075 = vunpack.c.l.b16 %v4007
      %v4076 = vunpack.c.l.b16 %v4008
      %v4077 = vunpack.c.l.b16 %v4009
      %v4078 = vunpack.c.l.b16 %v4010
      %v4079 = vunpack.c.l.b16 %v4011
      %v4080 = vunpack.c.l.b16 %v4012
      %v4081 = vunpack.c.l.b16 %v4013
      %v4082 = vunpack.c.l.b16 %v4014
      %v4083 = vunpack.c.l.b16 %v4015
      %v4084 = vunpack.c.l.b16 %v4016
      %v4085 = vunpack.c.l.b16 %v4017
      %v4086 = vunpack.c.l.b16 %v4018
      %v4087 = vunpack.c.l.b16 %v4019
      %v4088 = vunpack.c.l.b16 %v4020
      %v4089 = vunpack.c.l.b16 %v4021
      %v4090 = vunpack.c.l.b16 %v4022
      %v4091 = vunpack.c.l.b16 %v4023
      %v4092 = vunpack.c.l.b16 %v4024
      %v4093 = vunpack.c.l.b16 %v4025
      %v4094 = vpack.c.b16 %v4063, %v4062
      %v4095 = vpack.c.b16 %v4065, %v4064
      %v4096 = vpack.c.b16 %v4067, %v4066
      %v4097 = vpack.c.b16 %v4069, %v4068
      %v4098 = vpack.c.b16 %v4071, %v4070
      %v4099 = vpack.c.b16 %v4073, %v4072
      %v4100 = vpack.c.b16 %v4075, %v4074
      %v4101 = vpack.c.b16 %v4077, %v4076
      %v4102 = vpack.c.b16 %v4079, %v4078
      %v4103 = vpack.c.b16 %v4081, %v4080
      %v4104 = vpack.c.b16 %v4083, %v4082
      %v4105 = vpack.c.b16 %v4085, %v4084
      %v4106 = vpack.c.b16 %v4087, %v4086
      %v4107 = vpack.c.b16 %v4089, %v4088
      %v4108 = vpack.c.b16 %v4091, %v4090
      %v4109 = vpack.c.b16 %v4093, %v4092
      %v4113 = vunpack.c.l.b16 %v4027
      %v4114 = vunpack.c.l.b16 %v4028
      %v4115 = vunpack.c.l.b16 %v4029
      %v4116 = vpack.c.b16 %v4114, %v4113
      %v4117 = vpack.c.b16 %v4115, %v4115
      %v4120 = vsel %vm3011, %v4094, 0
      %v4123 = vsel %vm3011, %v4095, 0
      %v4126 = vsel %vm3011, %v4096, 0
      %v4129 = vsel %vm3011, %v4097, 0
      %v4132 = vsel %vm3011, %v4098, 0
      %v4135 = vsel %vm3011, %v4099, 0
      %v4138 = vsel %vm3011, %v4100, 0
      %v4141 = vsel %vm3011, %v4101, 0
      %v4144 = vsel %vm3011, %v4102, 0
      %v4147 = vsel %vm3011, %v4103, 0
      %v4150 = vsel %vm3011, %v4104, 0
      %v4153 = vsel %vm3011, %v4105, 0
      %v4156 = vsel %vm3011, %v4106, 0
      %v4159 = vsel %vm3011, %v4107, 0
      %v4162 = vsel %vm3011, %v4108, 0
      %v4165 = vsel %vm3011, %v4109, 0
      %v4168 = vsel %vm3060, %v4117, 0
      %4170 = vmatprep.subr.bf16.mxu0 0
      %4171 = vmatpush1.bf16.msra.mxu0 0
      %4172 = vmatprep.subr.bf16.mxu0 0
      %4173 = vmatpush1.bf16.msra.mxu0 0
      %4174 = vmatprep.subr.bf16.mxu0 0
      %4175 = vmatpush1.bf16.msra.mxu0 0
      %4176 = vmatprep.subr.bf16.mxu0 0
      %4177 = vmatpush1.bf16.msra.mxu0 0
      %4178 = vmatprep.subr.bf16.mxu0 0
      %4179 = vmatpush1.bf16.msra.mxu0 0
      %4180 = vmatprep.subr.bf16.mxu0 0
      %4181 = vmatpush1.bf16.msra.mxu0 0
      %4182 = vmatprep.subr.bf16.mxu0 0
      %4183 = vmatpush1.bf16.msra.mxu0 %v4168
      %4184 = vmatprep.subr.bf16.mxu0 0
      %4185 = vmatpush1.bf16.msra.mxu0 %v4116
      %4186 = vmatprep.subr.bf16.mxu0 0
      %4187 = vmatpush2.bf16.msra.mxu0 0
      %4188 = vmatprep.subr.bf16.mxu0 0
      %4189 = vmatpush2.bf16.msra.mxu0 0
      %4190 = vmatprep.subr.bf16.mxu0 0
      %4191 = vmatpush2.bf16.msra.mxu0 0
      %4192 = vmatprep.subr.bf16.mxu0 0
      %4193 = vmatpush2.bf16.msra.mxu0 0
      %4194 = vmatprep.subr.bf16.mxu0 0
      %4195 = vmatpush2.bf16.msra.mxu0 0
      %4196 = vmatprep.subr.bf16.mxu0 0
      %4197 = vmatpush2.bf16.msra.mxu0 0
      %4198 = vmatprep.subr.bf16.mxu0 0
      %4199 = vmatpush2.bf16.msra.mxu0 0
      %4200 = vmatprep.subr.bf16.mxu0 0
      %4201 = vmatpush2.bf16.msra.mxu0 0
      %4202 = vmatprep.mubr.bf16.mxu0 0
      %4203 = vmatmul.mubr.bf16.gmra.mxu0 %v4120
      %v4204 = vpop.f32.mrf.mxu0
      %v4205 = vadd.f32 0.0, %v4204
      %v4206 = vpop.f32.mrf.mxu0
      %v4207 = vpop.f32.mrf.mxu0
      %v4208 = vadd.f32 0.0, %v4207
      %v4209 = vpop.f32.mrf.mxu0
      %4210 = vmatprep.mubr.bf16.mxu0 0
      %4211 = vmatmul.mubr.bf16.gmra.mxu0 %v4123
      %v4212 = vpop.f32.mrf.mxu0
      %v4213 = vadd.f32 0.0, %v4212
      %v4214 = vpop.f32.mrf.mxu0
      %v4215 = vpop.f32.mrf.mxu0
      %v4216 = vadd.f32 0.0, %v4215
      %v4217 = vpop.f32.mrf.mxu0
      %4218 = vmatprep.mubr.bf16.mxu0 0
      %4219 = vmatmul.mubr.bf16.gmra.mxu0 %v4126
      %v4220 = vpop.f32.mrf.mxu0
      %v4221 = vadd.f32 0.0, %v4220
      %v4222 = vpop.f32.mrf.mxu0
      %v4223 = vpop.f32.mrf.mxu0
      %v4224 = vadd.f32 0.0, %v4223
      %v4225 = vpop.f32.mrf.mxu0
      %4226 = vmatprep.mubr.bf16.mxu0 0
      %4227 = vmatmul.mubr.bf16.gmra.mxu0 %v4129
      %v4228 = vpop.f32.mrf.mxu0
      %v4229 = vadd.f32 0.0, %v4228
      %v4230 = vpop.f32.mrf.mxu0
      %v4231 = vpop.f32.mrf.mxu0
      %v4232 = vadd.f32 0.0, %v4231
      %v4233 = vpop.f32.mrf.mxu0
      %4234 = vmatprep.mubr.bf16.mxu0 0
      %4235 = vmatmul.mubr.bf16.gmra.mxu0 %v4132
      %v4236 = vpop.f32.mrf.mxu0
      %v4237 = vadd.f32 0.0, %v4236
      %v4238 = vpop.f32.mrf.mxu0
      %v4239 = vpop.f32.mrf.mxu0
      %v4240 = vadd.f32 0.0, %v4239
      %v4241 = vpop.f32.mrf.mxu0
      %4242 = vmatprep.mubr.bf16.mxu0 0
      %4243 = vmatmul.mubr.bf16.gmra.mxu0 %v4135
      %v4244 = vpop.f32.mrf.mxu0
      %v4245 = vadd.f32 0.0, %v4244
      %v4246 = vpop.f32.mrf.mxu0
      %v4247 = vpop.f32.mrf.mxu0
      %v4248 = vadd.f32 0.0, %v4247
      %v4249 = vpop.f32.mrf.mxu0
      %4250 = vmatprep.mubr.bf16.mxu0 0
      %4251 = vmatmul.mubr.bf16.gmra.mxu0 %v4138
      %v4252 = vpop.f32.mrf.mxu0
      %v4253 = vadd.f32 0.0, %v4252
      %v4254 = vpop.f32.mrf.mxu0
      %v4255 = vpop.f32.mrf.mxu0
      %v4256 = vadd.f32 0.0, %v4255
      %v4257 = vpop.f32.mrf.mxu0
      %4258 = vmatprep.mubr.bf16.mxu0 0
      %4259 = vmatmul.mubr.bf16.gmra.mxu0 %v4141
      %v4260 = vpop.f32.mrf.mxu0
      %v4261 = vadd.f32 0.0, %v4260
      %v4262 = vpop.f32.mrf.mxu0
      %v4263 = vpop.f32.mrf.mxu0
      %v4264 = vadd.f32 0.0, %v4263
      %v4265 = vpop.f32.mrf.mxu0
      %4266 = vmatprep.mubr.bf16.mxu0 0
      %4267 = vmatmul.mubr.bf16.gmra.mxu0 %v4144
      %v4268 = vpop.f32.mrf.mxu0
      %v4269 = vadd.f32 0.0, %v4268
      %v4270 = vpop.f32.mrf.mxu0
      %v4271 = vpop.f32.mrf.mxu0
      %v4272 = vadd.f32 0.0, %v4271
      %v4273 = vpop.f32.mrf.mxu0
      %4274 = vmatprep.mubr.bf16.mxu0 0
      %4275 = vmatmul.mubr.bf16.gmra.mxu0 %v4147
      %v4276 = vpop.f32.mrf.mxu0
      %v4277 = vadd.f32 0.0, %v4276
      %v4278 = vpop.f32.mrf.mxu0
      %v4279 = vpop.f32.mrf.mxu0
      %v4280 = vadd.f32 0.0, %v4279
      %v4281 = vpop.f32.mrf.mxu0
      %4282 = vmatprep.mubr.bf16.mxu0 0
      %4283 = vmatmul.mubr.bf16.gmra.mxu0 %v4150
      %v4284 = vpop.f32.mrf.mxu0
      %v4285 = vadd.f32 0.0, %v4284
      %v4286 = vpop.f32.mrf.mxu0
      %v4287 = vpop.f32.mrf.mxu0
      %v4288 = vadd.f32 0.0, %v4287
      %v4289 = vpop.f32.mrf.mxu0
      %4290 = vmatprep.mubr.bf16.mxu0 0
      %4291 = vmatmul.mubr.bf16.gmra.mxu0 %v4153
      %v4292 = vpop.f32.mrf.mxu0
      %v4293 = vadd.f32 0.0, %v4292
      %v4294 = vpop.f32.mrf.mxu0
      %v4295 = vpop.f32.mrf.mxu0
      %v4296 = vadd.f32 0.0, %v4295
      %v4297 = vpop.f32.mrf.mxu0
      %4298 = vmatprep.mubr.bf16.mxu0 0
      %4299 = vmatmul.mubr.bf16.gmra.mxu0 %v4156
      %v4300 = vpop.f32.mrf.mxu0
      %v4301 = vadd.f32 0.0, %v4300
      %v4302 = vpop.f32.mrf.mxu0
      %v4303 = vpop.f32.mrf.mxu0
      %v4304 = vadd.f32 0.0, %v4303
      %v4305 = vpop.f32.mrf.mxu0
      %4306 = vmatprep.mubr.bf16.mxu0 0
      %4307 = vmatmul.mubr.bf16.gmra.mxu0 %v4159
      %v4308 = vpop.f32.mrf.mxu0
      %v4309 = vadd.f32 0.0, %v4308
      %v4310 = vpop.f32.mrf.mxu0
      %v4311 = vpop.f32.mrf.mxu0
      %v4312 = vadd.f32 0.0, %v4311
      %v4313 = vpop.f32.mrf.mxu0
      %4314 = vmatprep.mubr.bf16.mxu0 0
      %4315 = vmatmul.mubr.bf16.gmra.mxu0 %v4162
      %v4316 = vpop.f32.mrf.mxu0
      %v4317 = vadd.f32 0.0, %v4316
      %v4318 = vpop.f32.mrf.mxu0
      %v4319 = vpop.f32.mrf.mxu0
      %v4320 = vadd.f32 0.0, %v4319
      %v4321 = vpop.f32.mrf.mxu0
      %4322 = vmatprep.mubr.bf16.mxu0 0
      %4323 = vmatmul.mubr.bf16.gmra.mxu0 %v4165
      %v4324 = vpop.f32.mrf.mxu0
      %v4325 = vadd.f32 0.0, %v4324
      %v4326 = vpop.f32.mrf.mxu0
      %v4327 = vpop.f32.mrf.mxu0
      %v4328 = vadd.f32 0.0, %v4327
      %v4329 = vpop.f32.mrf.mxu0
      %4330 = vdwg.mxu0
      %v4331 = vadd.f32 %v3962, %v4205
      %v4332 = vadd.f32 %v3963, %v4208
      %v4333 = vadd.f32 %v3964, %v4213
      %v4334 = vadd.f32 %v3965, %v4216
      %v4335 = vadd.f32 %v3966, %v4221
      %v4336 = vadd.f32 %v3967, %v4224
      %v4337 = vadd.f32 %v3968, %v4229
      %v4338 = vadd.f32 %v3969, %v4232
      %v4339 = vadd.f32 %v3970, %v4237
      %v4340 = vadd.f32 %v3971, %v4240
      %v4341 = vadd.f32 %v3972, %v4245
      %v4342 = vadd.f32 %v3973, %v4248
      %v4343 = vadd.f32 %v3974, %v4253
      %v4344 = vadd.f32 %v3975, %v4256
      %v4345 = vadd.f32 %v3976, %v4261
      %v4346 = vadd.f32 %v3977, %v4264
      %v4347 = vadd.f32 %v3978, %v4269
      %v4348 = vadd.f32 %v3979, %v4272
      %v4349 = vadd.f32 %v3980, %v4277
      %v4350 = vadd.f32 %v3981, %v4280
      %v4351 = vadd.f32 %v3982, %v4285
      %v4352 = vadd.f32 %v3983, %v4288
      %v4353 = vadd.f32 %v3984, %v4293
      %v4354 = vadd.f32 %v3985, %v4296
      %v4355 = vadd.f32 %v3986, %v4301
      %v4356 = vadd.f32 %v3987, %v4304
      %v4357 = vadd.f32 %v3988, %v4309
      %v4358 = vadd.f32 %v3989, %v4312
      %v4359 = vadd.f32 %v3990, %v4317
      %v4360 = vadd.f32 %v3991, %v4320
      %v4361 = vadd.f32 %v3992, %v4325
      %v4362 = vadd.f32 %v3993, %v4328
      %v4363 = vld [vmem:[%s417] sm:$0xf]
      %v4364 = vld [vmem:[%s417 + $0x4] sm:$0xf]
      %v4365 = vld [vmem:[%s417 + $0x8] sm:$0x1]
      %v4366 = vld [vmem:[%s417 + $0xc] sm:$0xf]
      %v4367 = vld [vmem:[%s417 + $0x10] sm:$0xf]
      %v4368 = vld [vmem:[%s417 + $0x14] sm:$0x1]
      %v4369 = vld [vmem:[%s417 + $0x18] sm:$0xf]
      %v4370 = vld [vmem:[%s417 + $0x1c] sm:$0xf]
      %v4371 = vld [vmem:[%s417 + $0x20] sm:$0x1]
      %v4372 = vld [vmem:[%s417 + $0x24] sm:$0xf]
      %v4373 = vld [vmem:[%s417 + $0x28] sm:$0xf]
      %v4374 = vld [vmem:[%s417 + $0x2c] sm:$0x1]
      %v4375 = vld [vmem:[%s417 + $0x30] sm:$0xf]
      %v4376 = vld [vmem:[%s417 + $0x34] sm:$0xf]
      %v4377 = vld [vmem:[%s417 + $0x38] sm:$0x1]
      %v4378 = vld [vmem:[%s417 + $0x3c] sm:$0xf]
      %v4379 = vld [vmem:[%s417 + $0x40] sm:$0xf]
      %v4380 = vld [vmem:[%s417 + $0x44] sm:$0x1]
      %v4381 = vld [vmem:[%s417 + $0x48] sm:$0xf]
      %v4382 = vld [vmem:[%s417 + $0x4c] sm:$0xf]
      %v4383 = vld [vmem:[%s417 + $0x50] sm:$0x1]
      %v4384 = vld [vmem:[%s417 + $0x54] sm:$0xf]
      %v4385 = vld [vmem:[%s417 + $0x58] sm:$0xf]
      %v4386 = vld [vmem:[%s417 + $0x5c] sm:$0x1]
      %v4387 = vld [vmem:[%s417 + $0x60] sm:$0xf]
      %v4388 = vld [vmem:[%s417 + $0x64] sm:$0xf]
      %v4389 = vld [vmem:[%s417 + $0x68] sm:$0x1]
      %v4390 = vld [vmem:[%s417 + $0x6c] sm:$0xf]
      %v4391 = vld [vmem:[%s417 + $0x70] sm:$0xf]
      %v4392 = vld [vmem:[%s417 + $0x74] sm:$0x1]
      %v4393 = vld [vmem:[%s417 + $0x78] sm:$0xf]
      %v4394 = vld [vmem:[%s417 + $0x7c] sm:$0xf]
      %v4395 = vld [vmem:[%s417 + $0x80] sm:$0x1]
      %v4396 = vld [vmem:[%s417 + $0x84] sm:$0xf]
      %v4397 = vld [vmem:[%s417 + $0x88] sm:$0xf]
      %v4398 = vld [vmem:[%s417 + $0x8c] sm:$0x1]
      %v4399 = vld [vmem:[%s417 + $0x90] sm:$0xf]
      %v4400 = vld [vmem:[%s417 + $0x94] sm:$0xf]
      %v4401 = vld [vmem:[%s417 + $0x98] sm:$0x1]
      %v4402 = vld [vmem:[%s417 + $0x9c] sm:$0xf]
      %v4403 = vld [vmem:[%s417 + $0xa0] sm:$0xf]
      %v4404 = vld [vmem:[%s417 + $0xa4] sm:$0x1]
      %v4405 = vld [vmem:[%s417 + $0xa8] sm:$0xf]
      %v4406 = vld [vmem:[%s417 + $0xac] sm:$0xf]
      %v4407 = vld [vmem:[%s417 + $0xb0] sm:$0x1]
      %v4408 = vld [vmem:[%s417 + $0xb4] sm:$0xf]
      %v4409 = vld [vmem:[%s417 + $0xb8] sm:$0xf]
      %v4410 = vld [vmem:[%s417 + $0xbc] sm:$0x1]
      %v4412 = vshrl.u32 %v4363, 16
      %v4414 = vrot.slane %v4412, 4
      %v4415 = vshll.u32 %v4363, 16
      %v4417 = vrot.slane %v4415, 5
      %v4418 = vor.u32 %v4414, %v4417
      %v4419 = vrot.slane %v4418, 4
      %v4421 = vshll.u32 %v4364, 16
      %v4423 = vrot.slane %v4421, 5
      %v4424 = vsel %vm2565, %v4419, %v4423
      %v4425 = vshrl.u32 %v4364, 16
      %v4427 = vrot.slane %v4425, 4
      %v4428 = vor.u32 %v4427, %v4423
      %v4429 = vrot.slane %v4428, 4
      %v4431 = vshll.u32 %v4365, 16
      %v4433 = vrot.slane %v4431, 5
      %v4434 = vsel %vm2565, %v4429, %v4433
      %v4436 = vshrl.u32 %v4366, 16
      %v4438 = vrot.slane %v4436, 4
      %v4439 = vshll.u32 %v4366, 16
      %v4441 = vrot.slane %v4439, 5
      %v4442 = vor.u32 %v4438, %v4441
      %v4443 = vrot.slane %v4442, 4
      %v4445 = vshll.u32 %v4367, 16
      %v4447 = vrot.slane %v4445, 5
      %v4448 = vsel %vm2565, %v4443, %v4447
      %v4449 = vshrl.u32 %v4367, 16
      %v4451 = vrot.slane %v4449, 4
      %v4452 = vor.u32 %v4451, %v4447
      %v4453 = vrot.slane %v4452, 4
      %v4455 = vshll.u32 %v4368, 16
      %v4457 = vrot.slane %v4455, 5
      %v4458 = vsel %vm2565, %v4453, %v4457
      %v4460 = vshrl.u32 %v4369, 16
      %v4462 = vrot.slane %v4460, 4
      %v4463 = vshll.u32 %v4369, 16
      %v4465 = vrot.slane %v4463, 5
      %v4466 = vor.u32 %v4462, %v4465
      %v4467 = vrot.slane %v4466, 4
      %v4469 = vshll.u32 %v4370, 16
      %v4471 = vrot.slane %v4469, 5
      %v4472 = vsel %vm2565, %v4467, %v4471
      %v4473 = vshrl.u32 %v4370, 16
      %v4475 = vrot.slane %v4473, 4
      %v4476 = vor.u32 %v4475, %v4471
      %v4477 = vrot.slane %v4476, 4
      %v4479 = vshll.u32 %v4371, 16
      %v4481 = vrot.slane %v4479, 5
      %v4482 = vsel %vm2565, %v4477, %v4481
      %v4484 = vshrl.u32 %v4372, 16
      %v4486 = vrot.slane %v4484, 4
      %v4487 = vshll.u32 %v4372, 16
      %v4489 = vrot.slane %v4487, 5
      %v4490 = vor.u32 %v4486, %v4489
      %v4491 = vrot.slane %v4490, 4
      %v4493 = vshll.u32 %v4373, 16
      %v4495 = vrot.slane %v4493, 5
      %v4496 = vsel %vm2565, %v4491, %v4495
      %v4497 = vshrl.u32 %v4373, 16
      %v4499 = vrot.slane %v4497, 4
      %v4500 = vor.u32 %v4499, %v4495
      %v4501 = vrot.slane %v4500, 4
      %v4503 = vshll.u32 %v4374, 16
      %v4505 = vrot.slane %v4503, 5
      %v4506 = vsel %vm2565, %v4501, %v4505
      %v4508 = vshrl.u32 %v4375, 16
      %v4510 = vrot.slane %v4508, 4
      %v4511 = vshll.u32 %v4375, 16
      %v4513 = vrot.slane %v4511, 5
      %v4514 = vor.u32 %v4510, %v4513
      %v4515 = vrot.slane %v4514, 4
      %v4517 = vshll.u32 %v4376, 16
      %v4519 = vrot.slane %v4517, 5
      %v4520 = vsel %vm2565, %v4515, %v4519
      %v4521 = vshrl.u32 %v4376, 16
      %v4523 = vrot.slane %v4521, 4
      %v4524 = vor.u32 %v4523, %v4519
      %v4525 = vrot.slane %v4524, 4
      %v4527 = vshll.u32 %v4377, 16
      %v4529 = vrot.slane %v4527, 5
      %v4530 = vsel %vm2565, %v4525, %v4529
      %v4532 = vshrl.u32 %v4378, 16
      %v4534 = vrot.slane %v4532, 4
      %v4535 = vshll.u32 %v4378, 16
      %v4537 = vrot.slane %v4535, 5
      %v4538 = vor.u32 %v4534, %v4537
      %v4539 = vrot.slane %v4538, 4
      %v4541 = vshll.u32 %v4379, 16
      %v4543 = vrot.slane %v4541, 5
      %v4544 = vsel %vm2565, %v4539, %v4543
      %v4545 = vshrl.u32 %v4379, 16
      %v4547 = vrot.slane %v4545, 4
      %v4548 = vor.u32 %v4547, %v4543
      %v4549 = vrot.slane %v4548, 4
      %v4551 = vshll.u32 %v4380, 16
      %v4553 = vrot.slane %v4551, 5
      %v4554 = vsel %vm2565, %v4549, %v4553
      %v4556 = vshrl.u32 %v4381, 16
      %v4558 = vrot.slane %v4556, 4
      %v4559 = vshll.u32 %v4381, 16
      %v4561 = vrot.slane %v4559, 5
      %v4562 = vor.u32 %v4558, %v4561
      %v4563 = vrot.slane %v4562, 4
      %v4565 = vshll.u32 %v4382, 16
      %v4567 = vrot.slane %v4565, 5
      %v4568 = vsel %vm2565, %v4563, %v4567
      %v4569 = vshrl.u32 %v4382, 16
      %v4571 = vrot.slane %v4569, 4
      %v4572 = vor.u32 %v4571, %v4567
      %v4573 = vrot.slane %v4572, 4
      %v4575 = vshll.u32 %v4383, 16
      %v4577 = vrot.slane %v4575, 5
      %v4578 = vsel %vm2565, %v4573, %v4577
      %v4580 = vshrl.u32 %v4384, 16
      %v4582 = vrot.slane %v4580, 4
      %v4583 = vshll.u32 %v4384, 16
      %v4585 = vrot.slane %v4583, 5
      %v4586 = vor.u32 %v4582, %v4585
      %v4587 = vrot.slane %v4586, 4
      %v4589 = vshll.u32 %v4385, 16
      %v4591 = vrot.slane %v4589, 5
      %v4592 = vsel %vm2565, %v4587, %v4591
      %v4593 = vshrl.u32 %v4385, 16
      %v4595 = vrot.slane %v4593, 4
      %v4596 = vor.u32 %v4595, %v4591
      %v4597 = vrot.slane %v4596, 4
      %v4599 = vshll.u32 %v4386, 16
      %v4601 = vrot.slane %v4599, 5
      %v4602 = vsel %vm2565, %v4597, %v4601
      %v4604 = vshrl.u32 %v4387, 16
      %v4606 = vrot.slane %v4604, 4
      %v4607 = vshll.u32 %v4387, 16
      %v4609 = vrot.slane %v4607, 5
      %v4610 = vor.u32 %v4606, %v4609
      %v4611 = vrot.slane %v4610, 4
      %v4613 = vshll.u32 %v4388, 16
      %v4615 = vrot.slane %v4613, 5
      %v4616 = vsel %vm2565, %v4611, %v4615
      %v4617 = vshrl.u32 %v4388, 16
      %v4619 = vrot.slane %v4617, 4
      %v4620 = vor.u32 %v4619, %v4615
      %v4621 = vrot.slane %v4620, 4
      %v4623 = vshll.u32 %v4389, 16
      %v4625 = vrot.slane %v4623, 5
      %v4626 = vsel %vm2565, %v4621, %v4625
      %v4628 = vshrl.u32 %v4390, 16
      %v4630 = vrot.slane %v4628, 4
      %v4631 = vshll.u32 %v4390, 16
      %v4633 = vrot.slane %v4631, 5
      %v4634 = vor.u32 %v4630, %v4633
      %v4635 = vrot.slane %v4634, 4
      %v4637 = vshll.u32 %v4391, 16
      %v4639 = vrot.slane %v4637, 5
      %v4640 = vsel %vm2565, %v4635, %v4639
      %v4641 = vshrl.u32 %v4391, 16
      %v4643 = vrot.slane %v4641, 4
      %v4644 = vor.u32 %v4643, %v4639
      %v4645 = vrot.slane %v4644, 4
      %v4647 = vshll.u32 %v4392, 16
      %v4649 = vrot.slane %v4647, 5
      %v4650 = vsel %vm2565, %v4645, %v4649
      %v4652 = vshrl.u32 %v4393, 16
      %v4654 = vrot.slane %v4652, 4
      %v4655 = vshll.u32 %v4393, 16
      %v4657 = vrot.slane %v4655, 5
      %v4658 = vor.u32 %v4654, %v4657
      %v4659 = vrot.slane %v4658, 4
      %v4661 = vshll.u32 %v4394, 16
      %v4663 = vrot.slane %v4661, 5
      %v4664 = vsel %vm2565, %v4659, %v4663
      %v4665 = vshrl.u32 %v4394, 16
      %v4667 = vrot.slane %v4665, 4
      %v4668 = vor.u32 %v4667, %v4663
      %v4669 = vrot.slane %v4668, 4
      %v4671 = vshll.u32 %v4395, 16
      %v4673 = vrot.slane %v4671, 5
      %v4674 = vsel %vm2565, %v4669, %v4673
      %v4676 = vshrl.u32 %v4396, 16
      %v4678 = vrot.slane %v4676, 4
      %v4679 = vshll.u32 %v4396, 16
      %v4681 = vrot.slane %v4679, 5
      %v4682 = vor.u32 %v4678, %v4681
      %v4683 = vrot.slane %v4682, 4
      %v4685 = vshll.u32 %v4397, 16
      %v4687 = vrot.slane %v4685, 5
      %v4688 = vsel %vm2565, %v4683, %v4687
      %v4689 = vshrl.u32 %v4397, 16
      %v4691 = vrot.slane %v4689, 4
      %v4692 = vor.u32 %v4691, %v4687
      %v4693 = vrot.slane %v4692, 4
      %v4695 = vshll.u32 %v4398, 16
      %v4697 = vrot.slane %v4695, 5
      %v4698 = vsel %vm2565, %v4693, %v4697
      %v4700 = vshrl.u32 %v4399, 16
      %v4702 = vrot.slane %v4700, 4
      %v4703 = vshll.u32 %v4399, 16
      %v4705 = vrot.slane %v4703, 5
      %v4706 = vor.u32 %v4702, %v4705
      %v4707 = vrot.slane %v4706, 4
      %v4709 = vshll.u32 %v4400, 16
      %v4711 = vrot.slane %v4709, 5
      %v4712 = vsel %vm2565, %v4707, %v4711
      %v4713 = vshrl.u32 %v4400, 16
      %v4715 = vrot.slane %v4713, 4
      %v4716 = vor.u32 %v4715, %v4711
      %v4717 = vrot.slane %v4716, 4
      %v4719 = vshll.u32 %v4401, 16
      %v4721 = vrot.slane %v4719, 5
      %v4722 = vsel %vm2565, %v4717, %v4721
      %v4724 = vshrl.u32 %v4402, 16
      %v4726 = vrot.slane %v4724, 4
      %v4727 = vshll.u32 %v4402, 16
      %v4729 = vrot.slane %v4727, 5
      %v4730 = vor.u32 %v4726, %v4729
      %v4731 = vrot.slane %v4730, 4
      %v4733 = vshll.u32 %v4403, 16
      %v4735 = vrot.slane %v4733, 5
      %v4736 = vsel %vm2565, %v4731, %v4735
      %v4737 = vshrl.u32 %v4403, 16
      %v4739 = vrot.slane %v4737, 4
      %v4740 = vor.u32 %v4739, %v4735
      %v4741 = vrot.slane %v4740, 4
      %v4743 = vshll.u32 %v4404, 16
      %v4745 = vrot.slane %v4743, 5
      %v4746 = vsel %vm2565, %v4741, %v4745
      %v4748 = vshrl.u32 %v4405, 16
      %v4750 = vrot.slane %v4748, 4
      %v4751 = vshll.u32 %v4405, 16
      %v4753 = vrot.slane %v4751, 5
      %v4754 = vor.u32 %v4750, %v4753
      %v4755 = vrot.slane %v4754, 4
      %v4757 = vshll.u32 %v4406, 16
      %v4759 = vrot.slane %v4757, 5
      %v4760 = vsel %vm2565, %v4755, %v4759
      %v4761 = vshrl.u32 %v4406, 16
      %v4763 = vrot.slane %v4761, 4
      %v4764 = vor.u32 %v4763, %v4759
      %v4765 = vrot.slane %v4764, 4
      %v4767 = vshll.u32 %v4407, 16
      %v4769 = vrot.slane %v4767, 5
      %v4770 = vsel %vm2565, %v4765, %v4769
      %v4772 = vshrl.u32 %v4408, 16
      %v4774 = vrot.slane %v4772, 4
      %v4775 = vshll.u32 %v4408, 16
      %v4777 = vrot.slane %v4775, 5
      %v4778 = vor.u32 %v4774, %v4777
      %v4779 = vrot.slane %v4778, 4
      %v4781 = vshll.u32 %v4409, 16
      %v4783 = vrot.slane %v4781, 5
      %v4784 = vsel %vm2565, %v4779, %v4783
      %v4785 = vshrl.u32 %v4409, 16
      %v4787 = vrot.slane %v4785, 4
      %v4788 = vor.u32 %v4787, %v4783
      %v4789 = vrot.slane %v4788, 4
      %v4791 = vshll.u32 %v4410, 16
      %v4793 = vrot.slane %v4791, 5
      %v4794 = vsel %vm2565, %v4789, %v4793
      %s4795 = scalar_lea.vmem %s5, 48
      %v4796 = vld [vmem:[%s4795] sm:$0xf]
      %v4797 = vld [vmem:[%s4795 + $0x4] sm:$0xf]
      %v4798 = vld [vmem:[%s4795 + $0x8] sm:$0xf]
      %v4799 = vunpack.c.l.b16 %v4424
      %v4800 = vunpack.c.l.b16 %v4434
      %v4801 = vunpack.c.l.b16 %v4448
      %v4802 = vunpack.c.l.b16 %v4458
      %v4803 = vunpack.c.l.b16 %v4472
      %v4804 = vunpack.c.l.b16 %v4482
      %v4805 = vunpack.c.l.b16 %v4496
      %v4806 = vunpack.c.l.b16 %v4506
      %v4807 = vunpack.c.l.b16 %v4520
      %v4808 = vunpack.c.l.b16 %v4530
      %v4809 = vunpack.c.l.b16 %v4544
      %v4810 = vunpack.c.l.b16 %v4554
      %v4811 = vunpack.c.l.b16 %v4568
      %v4812 = vunpack.c.l.b16 %v4578
      %v4813 = vunpack.c.l.b16 %v4592
      %v4814 = vunpack.c.l.b16 %v4602
      %v4815 = vunpack.c.l.b16 %v4616
      %v4816 = vunpack.c.l.b16 %v4626
      %v4817 = vunpack.c.l.b16 %v4640
      %v4818 = vunpack.c.l.b16 %v4650
      %v4819 = vunpack.c.l.b16 %v4664
      %v4820 = vunpack.c.l.b16 %v4674
      %v4821 = vunpack.c.l.b16 %v4688
      %v4822 = vunpack.c.l.b16 %v4698
      %v4823 = vunpack.c.l.b16 %v4712
      %v4824 = vunpack.c.l.b16 %v4722
      %v4825 = vunpack.c.l.b16 %v4736
      %v4826 = vunpack.c.l.b16 %v4746
      %v4827 = vunpack.c.l.b16 %v4760
      %v4828 = vunpack.c.l.b16 %v4770
      %v4829 = vunpack.c.l.b16 %v4784
      %v4830 = vunpack.c.l.b16 %v4794
      %v4831 = vpack.c.b16 %v4800, %v4799
      %v4832 = vpack.c.b16 %v4802, %v4801
      %v4833 = vpack.c.b16 %v4804, %v4803
      %v4834 = vpack.c.b16 %v4806, %v4805
      %v4835 = vpack.c.b16 %v4808, %v4807
      %v4836 = vpack.c.b16 %v4810, %v4809
      %v4837 = vpack.c.b16 %v4812, %v4811
      %v4838 = vpack.c.b16 %v4814, %v4813
      %v4839 = vpack.c.b16 %v4816, %v4815
      %v4840 = vpack.c.b16 %v4818, %v4817
      %v4841 = vpack.c.b16 %v4820, %v4819
      %v4842 = vpack.c.b16 %v4822, %v4821
      %v4843 = vpack.c.b16 %v4824, %v4823
      %v4844 = vpack.c.b16 %v4826, %v4825
      %v4845 = vpack.c.b16 %v4828, %v4827
      %v4846 = vpack.c.b16 %v4830, %v4829
      %v4850 = vunpack.c.l.b16 %v4796
      %v4851 = vunpack.c.l.b16 %v4797
      %v4852 = vunpack.c.l.b16 %v4798
      %v4853 = vpack.c.b16 %v4851, %v4850
      %v4854 = vpack.c.b16 %v4852, %v4852
      %v4857 = vsel %vm3011, %v4831, 0
      %v4860 = vsel %vm3011, %v4832, 0
      %v4863 = vsel %vm3011, %v4833, 0
      %v4866 = vsel %vm3011, %v4834, 0
      %v4869 = vsel %vm3011, %v4835, 0
      %v4872 = vsel %vm3011, %v4836, 0
      %v4875 = vsel %vm3011, %v4837, 0
      %v4878 = vsel %vm3011, %v4838, 0
      %v4881 = vsel %vm3011, %v4839, 0
      %v4884 = vsel %vm3011, %v4840, 0
      %v4887 = vsel %vm3011, %v4841, 0
      %v4890 = vsel %vm3011, %v4842, 0
      %v4893 = vsel %vm3011, %v4843, 0
      %v4896 = vsel %vm3011, %v4844, 0
      %v4899 = vsel %vm3011, %v4845, 0
      %v4902 = vsel %vm3011, %v4846, 0
      %v4905 = vsel %vm3060, %v4854, 0
      %4907 = vmatprep.subr.bf16.mxu0 0
      %4908 = vmatpush1.bf16.msra.mxu0 0
      %4909 = vmatprep.subr.bf16.mxu0 0
      %4910 = vmatpush1.bf16.msra.mxu0 0
      %4911 = vmatprep.subr.bf16.mxu0 0
      %4912 = vmatpush1.bf16.msra.mxu0 0
      %4913 = vmatprep.subr.bf16.mxu0 0
      %4914 = vmatpush1.bf16.msra.mxu0 0
      %4915 = vmatprep.subr.bf16.mxu0 0
      %4916 = vmatpush1.bf16.msra.mxu0 0
      %4917 = vmatprep.subr.bf16.mxu0 0
      %4918 = vmatpush1.bf16.msra.mxu0 0
      %4919 = vmatprep.subr.bf16.mxu0 0
      %4920 = vmatpush1.bf16.msra.mxu0 %v4905
      %4921 = vmatprep.subr.bf16.mxu0 0
      %4922 = vmatpush1.bf16.msra.mxu0 %v4853
      %4923 = vmatprep.subr.bf16.mxu0 0
      %4924 = vmatpush2.bf16.msra.mxu0 0
      %4925 = vmatprep.subr.bf16.mxu0 0
      %4926 = vmatpush2.bf16.msra.mxu0 0
      %4927 = vmatprep.subr.bf16.mxu0 0
      %4928 = vmatpush2.bf16.msra.mxu0 0
      %4929 = vmatprep.subr.bf16.mxu0 0
      %4930 = vmatpush2.bf16.msra.mxu0 0
      %4931 = vmatprep.subr.bf16.mxu0 0
      %4932 = vmatpush2.bf16.msra.mxu0 0
      %4933 = vmatprep.subr.bf16.mxu0 0
      %4934 = vmatpush2.bf16.msra.mxu0 0
      %4935 = vmatprep.subr.bf16.mxu0 0
      %4936 = vmatpush2.bf16.msra.mxu0 0
      %4937 = vmatprep.subr.bf16.mxu0 0
      %4938 = vmatpush2.bf16.msra.mxu0 0
      %4939 = vmatprep.mubr.bf16.mxu0 0
      %4940 = vmatmul.mubr.bf16.gmra.mxu0 %v4857
      %v4941 = vpop.f32.mrf.mxu0
      %v4942 = vadd.f32 0.0, %v4941
      %v4943 = vpop.f32.mrf.mxu0
      %v4944 = vpop.f32.mrf.mxu0
      %v4945 = vadd.f32 0.0, %v4944
      %v4946 = vpop.f32.mrf.mxu0
      %4947 = vmatprep.mubr.bf16.mxu0 0
      %4948 = vmatmul.mubr.bf16.gmra.mxu0 %v4860
      %v4949 = vpop.f32.mrf.mxu0
      %v4950 = vadd.f32 0.0, %v4949
      %v4951 = vpop.f32.mrf.mxu0
      %v4952 = vpop.f32.mrf.mxu0
      %v4953 = vadd.f32 0.0, %v4952
      %v4954 = vpop.f32.mrf.mxu0
      %4955 = vmatprep.mubr.bf16.mxu0 0
      %4956 = vmatmul.mubr.bf16.gmra.mxu0 %v4863
      %v4957 = vpop.f32.mrf.mxu0
      %v4958 = vadd.f32 0.0, %v4957
      %v4959 = vpop.f32.mrf.mxu0
      %v4960 = vpop.f32.mrf.mxu0
      %v4961 = vadd.f32 0.0, %v4960
      %v4962 = vpop.f32.mrf.mxu0
      %4963 = vmatprep.mubr.bf16.mxu0 0
      %4964 = vmatmul.mubr.bf16.gmra.mxu0 %v4866
      %v4965 = vpop.f32.mrf.mxu0
      %v4966 = vadd.f32 0.0, %v4965
      %v4967 = vpop.f32.mrf.mxu0
      %v4968 = vpop.f32.mrf.mxu0
      %v4969 = vadd.f32 0.0, %v4968
      %v4970 = vpop.f32.mrf.mxu0
      %4971 = vmatprep.mubr.bf16.mxu0 0
      %4972 = vmatmul.mubr.bf16.gmra.mxu0 %v4869
      %v4973 = vpop.f32.mrf.mxu0
      %v4974 = vadd.f32 0.0, %v4973
      %v4975 = vpop.f32.mrf.mxu0
      %v4976 = vpop.f32.mrf.mxu0
      %v4977 = vadd.f32 0.0, %v4976
      %v4978 = vpop.f32.mrf.mxu0
      %4979 = vmatprep.mubr.bf16.mxu0 0
      %4980 = vmatmul.mubr.bf16.gmra.mxu0 %v4872
      %v4981 = vpop.f32.mrf.mxu0
      %v4982 = vadd.f32 0.0, %v4981
      %v4983 = vpop.f32.mrf.mxu0
      %v4984 = vpop.f32.mrf.mxu0
      %v4985 = vadd.f32 0.0, %v4984
      %v4986 = vpop.f32.mrf.mxu0
      %4987 = vmatprep.mubr.bf16.mxu0 0
      %4988 = vmatmul.mubr.bf16.gmra.mxu0 %v4875
      %v4989 = vpop.f32.mrf.mxu0
      %v4990 = vadd.f32 0.0, %v4989
      %v4991 = vpop.f32.mrf.mxu0
      %v4992 = vpop.f32.mrf.mxu0
      %v4993 = vadd.f32 0.0, %v4992
      %v4994 = vpop.f32.mrf.mxu0
      %4995 = vmatprep.mubr.bf16.mxu0 0
      %4996 = vmatmul.mubr.bf16.gmra.mxu0 %v4878
      %v4997 = vpop.f32.mrf.mxu0
      %v4998 = vadd.f32 0.0, %v4997
      %v4999 = vpop.f32.mrf.mxu0
      %v5000 = vpop.f32.mrf.mxu0
      %v5001 = vadd.f32 0.0, %v5000
      %v5002 = vpop.f32.mrf.mxu0
      %5003 = vmatprep.mubr.bf16.mxu0 0
      %5004 = vmatmul.mubr.bf16.gmra.mxu0 %v4881
      %v5005 = vpop.f32.mrf.mxu0
      %v5006 = vadd.f32 0.0, %v5005
      %v5007 = vpop.f32.mrf.mxu0
      %v5008 = vpop.f32.mrf.mxu0
      %v5009 = vadd.f32 0.0, %v5008
      %v5010 = vpop.f32.mrf.mxu0
      %5011 = vmatprep.mubr.bf16.mxu0 0
      %5012 = vmatmul.mubr.bf16.gmra.mxu0 %v4884
      %v5013 = vpop.f32.mrf.mxu0
      %v5014 = vadd.f32 0.0, %v5013
      %v5015 = vpop.f32.mrf.mxu0
      %v5016 = vpop.f32.mrf.mxu0
      %v5017 = vadd.f32 0.0, %v5016
      %v5018 = vpop.f32.mrf.mxu0
      %5019 = vmatprep.mubr.bf16.mxu0 0
      %5020 = vmatmul.mubr.bf16.gmra.mxu0 %v4887
      %v5021 = vpop.f32.mrf.mxu0
      %v5022 = vadd.f32 0.0, %v5021
      %v5023 = vpop.f32.mrf.mxu0
      %v5024 = vpop.f32.mrf.mxu0
      %v5025 = vadd.f32 0.0, %v5024
      %v5026 = vpop.f32.mrf.mxu0
      %5027 = vmatprep.mubr.bf16.mxu0 0
      %5028 = vmatmul.mubr.bf16.gmra.mxu0 %v4890
      %v5029 = vpop.f32.mrf.mxu0
      %v5030 = vadd.f32 0.0, %v5029
      %v5031 = vpop.f32.mrf.mxu0
      %v5032 = vpop.f32.mrf.mxu0
      %v5033 = vadd.f32 0.0, %v5032
      %v5034 = vpop.f32.mrf.mxu0
      %5035 = vmatprep.mubr.bf16.mxu0 0
      %5036 = vmatmul.mubr.bf16.gmra.mxu0 %v4893
      %v5037 = vpop.f32.mrf.mxu0
      %v5038 = vadd.f32 0.0, %v5037
      %v5039 = vpop.f32.mrf.mxu0
      %v5040 = vpop.f32.mrf.mxu0
      %v5041 = vadd.f32 0.0, %v5040
      %v5042 = vpop.f32.mrf.mxu0
      %5043 = vmatprep.mubr.bf16.mxu0 0
      %5044 = vmatmul.mubr.bf16.gmra.mxu0 %v4896
      %v5045 = vpop.f32.mrf.mxu0
      %v5046 = vadd.f32 0.0, %v5045
      %v5047 = vpop.f32.mrf.mxu0
      %v5048 = vpop.f32.mrf.mxu0
      %v5049 = vadd.f32 0.0, %v5048
      %v5050 = vpop.f32.mrf.mxu0
      %5051 = vmatprep.mubr.bf16.mxu0 0
      %5052 = vmatmul.mubr.bf16.gmra.mxu0 %v4899
      %v5053 = vpop.f32.mrf.mxu0
      %v5054 = vadd.f32 0.0, %v5053
      %v5055 = vpop.f32.mrf.mxu0
      %v5056 = vpop.f32.mrf.mxu0
      %v5057 = vadd.f32 0.0, %v5056
      %v5058 = vpop.f32.mrf.mxu0
      %5059 = vmatprep.mubr.bf16.mxu0 0
      %5060 = vmatmul.mubr.bf16.gmra.mxu0 %v4902
      %v5061 = vpop.f32.mrf.mxu0
      %v5062 = vadd.f32 0.0, %v5061
      %v5063 = vpop.f32.mrf.mxu0
      %v5064 = vpop.f32.mrf.mxu0
      %v5065 = vadd.f32 0.0, %v5064
      %v5066 = vpop.f32.mrf.mxu0
      %5067 = vdwg.mxu0
      %v5068 = vadd.f32 %v4331, %v4942
      %v5069 = vadd.f32 %v4332, %v4945
      %v5070 = vadd.f32 %v4333, %v4950
      %v5071 = vadd.f32 %v4334, %v4953
      %v5072 = vadd.f32 %v4335, %v4958
      %v5073 = vadd.f32 %v4336, %v4961
      %v5074 = vadd.f32 %v4337, %v4966
      %v5075 = vadd.f32 %v4338, %v4969
      %v5076 = vadd.f32 %v4339, %v4974
      %v5077 = vadd.f32 %v4340, %v4977
      %v5078 = vadd.f32 %v4341, %v4982
      %v5079 = vadd.f32 %v4342, %v4985
      %v5080 = vadd.f32 %v4343, %v4990
      %v5081 = vadd.f32 %v4344, %v4993
      %v5082 = vadd.f32 %v4345, %v4998
      %v5083 = vadd.f32 %v4346, %v5001
      %v5084 = vadd.f32 %v4347, %v5006
      %v5085 = vadd.f32 %v4348, %v5009
      %v5086 = vadd.f32 %v4349, %v5014
      %v5087 = vadd.f32 %v4350, %v5017
      %v5088 = vadd.f32 %v4351, %v5022
      %v5089 = vadd.f32 %v4352, %v5025
      %v5090 = vadd.f32 %v4353, %v5030
      %v5091 = vadd.f32 %v4354, %v5033
      %v5092 = vadd.f32 %v4355, %v5038
      %v5093 = vadd.f32 %v4356, %v5041
      %v5094 = vadd.f32 %v4357, %v5046
      %v5095 = vadd.f32 %v4358, %v5049
      %v5096 = vadd.f32 %v4359, %v5054
      %v5097 = vadd.f32 %v4360, %v5057
      %v5098 = vadd.f32 %v4361, %v5062
      %v5099 = vadd.f32 %v4362, %v5065
      %v5100 = vld [vmem:[%s417] sm:$0xe]
      %v5101 = vld [vmem:[%s417 + $0xc] sm:$0xe]
      %v5102 = vld [vmem:[%s417 + $0x18] sm:$0xe]
      %v5103 = vld [vmem:[%s417 + $0x24] sm:$0xe]
      %v5104 = vld [vmem:[%s417 + $0x30] sm:$0xe]
      %v5105 = vld [vmem:[%s417 + $0x3c] sm:$0xe]
      %v5106 = vld [vmem:[%s417 + $0x48] sm:$0xe]
      %v5107 = vld [vmem:[%s417 + $0x54] sm:$0xe]
      %v5108 = vld [vmem:[%s417 + $0x60] sm:$0xe]
      %v5109 = vld [vmem:[%s417 + $0x6c] sm:$0xe]
      %v5110 = vld [vmem:[%s417 + $0x78] sm:$0xe]
      %v5111 = vld [vmem:[%s417 + $0x84] sm:$0xe]
      %v5112 = vld [vmem:[%s417 + $0x90] sm:$0xe]
      %v5113 = vld [vmem:[%s417 + $0x9c] sm:$0xe]
      %v5114 = vld [vmem:[%s417 + $0xa8] sm:$0xe]
      %v5115 = vld [vmem:[%s417 + $0xb4] sm:$0xe]
      %v5164 = vrot.slane %v5100, 5
      %v5165 = vrot.slane %v5164, 4
      %v5166 = vrot.slane %v4364, 5
      %v5167 = vsel %vm3576, %v5165, %v5166
      %v5168 = vrot.slane %v5166, 4
      %v5169 = vrot.slane %v4365, 5
      %v5170 = vsel %vm3576, %v5168, %v5169
      %v5171 = vrot.slane %v5101, 5
      %v5172 = vrot.slane %v5171, 4
      %v5173 = vrot.slane %v4367, 5
      %v5174 = vsel %vm3576, %v5172, %v5173
      %v5175 = vrot.slane %v5173, 4
      %v5176 = vrot.slane %v4368, 5
      %v5177 = vsel %vm3576, %v5175, %v5176
      %v5178 = vrot.slane %v5102, 5
      %v5179 = vrot.slane %v5178, 4
      %v5180 = vrot.slane %v4370, 5
      %v5181 = vsel %vm3576, %v5179, %v5180
      %v5182 = vrot.slane %v5180, 4
      %v5183 = vrot.slane %v4371, 5
      %v5184 = vsel %vm3576, %v5182, %v5183
      %v5185 = vrot.slane %v5103, 5
      %v5186 = vrot.slane %v5185, 4
      %v5187 = vrot.slane %v4373, 5
      %v5188 = vsel %vm3576, %v5186, %v5187
      %v5189 = vrot.slane %v5187, 4
      %v5190 = vrot.slane %v4374, 5
      %v5191 = vsel %vm3576, %v5189, %v5190
      %v5192 = vrot.slane %v5104, 5
      %v5193 = vrot.slane %v5192, 4
      %v5194 = vrot.slane %v4376, 5
      %v5195 = vsel %vm3576, %v5193, %v5194
      %v5196 = vrot.slane %v5194, 4
      %v5197 = vrot.slane %v4377, 5
      %v5198 = vsel %vm3576, %v5196, %v5197
      %v5199 = vrot.slane %v5105, 5
      %v5200 = vrot.slane %v5199, 4
      %v5201 = vrot.slane %v4379, 5
      %v5202 = vsel %vm3576, %v5200, %v5201
      %v5203 = vrot.slane %v5201, 4
      %v5204 = vrot.slane %v4380, 5
      %v5205 = vsel %vm3576, %v5203, %v5204
      %v5206 = vrot.slane %v5106, 5
      %v5207 = vrot.slane %v5206, 4
      %v5208 = vrot.slane %v4382, 5
      %v5209 = vsel %vm3576, %v5207, %v5208
      %v5210 = vrot.slane %v5208, 4
      %v5211 = vrot.slane %v4383, 5
      %v5212 = vsel %vm3576, %v5210, %v5211
      %v5213 = vrot.slane %v5107, 5
      %v5214 = vrot.slane %v5213, 4
      %v5215 = vrot.slane %v4385, 5
      %v5216 = vsel %vm3576, %v5214, %v5215
      %v5217 = vrot.slane %v5215, 4
      %v5218 = vrot.slane %v4386, 5
      %v5219 = vsel %vm3576, %v5217, %v5218
      %v5220 = vrot.slane %v5108, 5
      %v5221 = vrot.slane %v5220, 4
      %v5222 = vrot.slane %v4388, 5
      %v5223 = vsel %vm3576, %v5221, %v5222
      %v5224 = vrot.slane %v5222, 4
      %v5225 = vrot.slane %v4389, 5
      %v5226 = vsel %vm3576, %v5224, %v5225
      %v5227 = vrot.slane %v5109, 5
      %v5228 = vrot.slane %v5227, 4
      %v5229 = vrot.slane %v4391, 5
      %v5230 = vsel %vm3576, %v5228, %v5229
      %v5231 = vrot.slane %v5229, 4
      %v5232 = vrot.slane %v4392, 5
      %v5233 = vsel %vm3576, %v5231, %v5232
      %v5234 = vrot.slane %v5110, 5
      %v5235 = vrot.slane %v5234, 4
      %v5236 = vrot.slane %v4394, 5
      %v5237 = vsel %vm3576, %v5235, %v5236
      %v5238 = vrot.slane %v5236, 4
      %v5239 = vrot.slane %v4395, 5
      %v5240 = vsel %vm3576, %v5238, %v5239
      %v5241 = vrot.slane %v5111, 5
      %v5242 = vrot.slane %v5241, 4
      %v5243 = vrot.slane %v4397, 5
      %v5244 = vsel %vm3576, %v5242, %v5243
      %v5245 = vrot.slane %v5243, 4
      %v5246 = vrot.slane %v4398, 5
      %v5247 = vsel %vm3576, %v5245, %v5246
      %v5248 = vrot.slane %v5112, 5
      %v5249 = vrot.slane %v5248, 4
      %v5250 = vrot.slane %v4400, 5
      %v5251 = vsel %vm3576, %v5249, %v5250
      %v5252 = vrot.slane %v5250, 4
      %v5253 = vrot.slane %v4401, 5
      %v5254 = vsel %vm3576, %v5252, %v5253
      %v5255 = vrot.slane %v5113, 5
      %v5256 = vrot.slane %v5255, 4
      %v5257 = vrot.slane %v4403, 5
      %v5258 = vsel %vm3576, %v5256, %v5257
      %v5259 = vrot.slane %v5257, 4
      %v5260 = vrot.slane %v4404, 5
      %v5261 = vsel %vm3576, %v5259, %v5260
      %v5262 = vrot.slane %v5114, 5
      %v5263 = vrot.slane %v5262, 4
      %v5264 = vrot.slane %v4406, 5
      %v5265 = vsel %vm3576, %v5263, %v5264
      %v5266 = vrot.slane %v5264, 4
      %v5267 = vrot.slane %v4407, 5
      %v5268 = vsel %vm3576, %v5266, %v5267
      %v5269 = vrot.slane %v5115, 5
      %v5270 = vrot.slane %v5269, 4
      %v5271 = vrot.slane %v4409, 5
      %v5272 = vsel %vm3576, %v5270, %v5271
      %v5273 = vrot.slane %v5271, 4
      %v5274 = vrot.slane %v4410, 5
      %v5275 = vsel %vm3576, %v5273, %v5274
      %s5276 = scalar_lea.vmem %s5, 60
      %v5277 = vld [vmem:[%s5276] sm:$0xf]
      %v5278 = vld [vmem:[%s5276 + $0x4] sm:$0xf]
      %v5279 = vld [vmem:[%s5276 + $0x8] sm:$0xf]
      %v5280 = vunpack.c.l.b16 %v5167
      %v5281 = vunpack.c.l.b16 %v5170
      %v5282 = vunpack.c.l.b16 %v5174
      %v5283 = vunpack.c.l.b16 %v5177
      %v5284 = vunpack.c.l.b16 %v5181
      %v5285 = vunpack.c.l.b16 %v5184
      %v5286 = vunpack.c.l.b16 %v5188
      %v5287 = vunpack.c.l.b16 %v5191
      %v5288 = vunpack.c.l.b16 %v5195
      %v5289 = vunpack.c.l.b16 %v5198
      %v5290 = vunpack.c.l.b16 %v5202
      %v5291 = vunpack.c.l.b16 %v5205
      %v5292 = vunpack.c.l.b16 %v5209
      %v5293 = vunpack.c.l.b16 %v5212
      %v5294 = vunpack.c.l.b16 %v5216
      %v5295 = vunpack.c.l.b16 %v5219
      %v5296 = vunpack.c.l.b16 %v5223
      %v5297 = vunpack.c.l.b16 %v5226
      %v5298 = vunpack.c.l.b16 %v5230
      %v5299 = vunpack.c.l.b16 %v5233
      %v5300 = vunpack.c.l.b16 %v5237
      %v5301 = vunpack.c.l.b16 %v5240
      %v5302 = vunpack.c.l.b16 %v5244
      %v5303 = vunpack.c.l.b16 %v5247
      %v5304 = vunpack.c.l.b16 %v5251
      %v5305 = vunpack.c.l.b16 %v5254
      %v5306 = vunpack.c.l.b16 %v5258
      %v5307 = vunpack.c.l.b16 %v5261
      %v5308 = vunpack.c.l.b16 %v5265
      %v5309 = vunpack.c.l.b16 %v5268
      %v5310 = vunpack.c.l.b16 %v5272
      %v5311 = vunpack.c.l.b16 %v5275
      %v5312 = vpack.c.b16 %v5281, %v5280
      %v5313 = vpack.c.b16 %v5283, %v5282
      %v5314 = vpack.c.b16 %v5285, %v5284
      %v5315 = vpack.c.b16 %v5287, %v5286
      %v5316 = vpack.c.b16 %v5289, %v5288
      %v5317 = vpack.c.b16 %v5291, %v5290
      %v5318 = vpack.c.b16 %v5293, %v5292
      %v5319 = vpack.c.b16 %v5295, %v5294
      %v5320 = vpack.c.b16 %v5297, %v5296
      %v5321 = vpack.c.b16 %v5299, %v5298
      %v5322 = vpack.c.b16 %v5301, %v5300
      %v5323 = vpack.c.b16 %v5303, %v5302
      %v5324 = vpack.c.b16 %v5305, %v5304
      %v5325 = vpack.c.b16 %v5307, %v5306
      %v5326 = vpack.c.b16 %v5309, %v5308
      %v5327 = vpack.c.b16 %v5311, %v5310
      %v5331 = vunpack.c.l.b16 %v5277
      %v5332 = vunpack.c.l.b16 %v5278
      %v5333 = vunpack.c.l.b16 %v5279
      %v5334 = vpack.c.b16 %v5332, %v5331
      %v5335 = vpack.c.b16 %v5333, %v5333
      %v5338 = vsel %vm3011, %v5312, 0
      %v5341 = vsel %vm3011, %v5313, 0
      %v5344 = vsel %vm3011, %v5314, 0
      %v5347 = vsel %vm3011, %v5315, 0
      %v5350 = vsel %vm3011, %v5316, 0
      %v5353 = vsel %vm3011, %v5317, 0
      %v5356 = vsel %vm3011, %v5318, 0
      %v5359 = vsel %vm3011, %v5319, 0
      %v5362 = vsel %vm3011, %v5320, 0
      %v5365 = vsel %vm3011, %v5321, 0
      %v5368 = vsel %vm3011, %v5322, 0
      %v5371 = vsel %vm3011, %v5323, 0
      %v5374 = vsel %vm3011, %v5324, 0
      %v5377 = vsel %vm3011, %v5325, 0
      %v5380 = vsel %vm3011, %v5326, 0
      %v5383 = vsel %vm3011, %v5327, 0
      %v5386 = vsel %vm3060, %v5335, 0
      %5388 = vmatprep.subr.bf16.mxu0 0
      %5389 = vmatpush1.bf16.msra.mxu0 0
      %5390 = vmatprep.subr.bf16.mxu0 0
      %5391 = vmatpush1.bf16.msra.mxu0 0
      %5392 = vmatprep.subr.bf16.mxu0 0
      %5393 = vmatpush1.bf16.msra.mxu0 0
      %5394 = vmatprep.subr.bf16.mxu0 0
      %5395 = vmatpush1.bf16.msra.mxu0 0
      %5396 = vmatprep.subr.bf16.mxu0 0
      %5397 = vmatpush1.bf16.msra.mxu0 0
      %5398 = vmatprep.subr.bf16.mxu0 0
      %5399 = vmatpush1.bf16.msra.mxu0 0
      %5400 = vmatprep.subr.bf16.mxu0 0
      %5401 = vmatpush1.bf16.msra.mxu0 %v5386
      %5402 = vmatprep.subr.bf16.mxu0 0
      %5403 = vmatpush1.bf16.msra.mxu0 %v5334
      %5404 = vmatprep.subr.bf16.mxu0 0
      %5405 = vmatpush2.bf16.msra.mxu0 0
      %5406 = vmatprep.subr.bf16.mxu0 0
      %5407 = vmatpush2.bf16.msra.mxu0 0
      %5408 = vmatprep.subr.bf16.mxu0 0
      %5409 = vmatpush2.bf16.msra.mxu0 0
      %5410 = vmatprep.subr.bf16.mxu0 0
      %5411 = vmatpush2.bf16.msra.mxu0 0
      %5412 = vmatprep.subr.bf16.mxu0 0
      %5413 = vmatpush2.bf16.msra.mxu0 0
      %5414 = vmatprep.subr.bf16.mxu0 0
      %5415 = vmatpush2.bf16.msra.mxu0 0
      %5416 = vmatprep.subr.bf16.mxu0 0
      %5417 = vmatpush2.bf16.msra.mxu0 0
      %5418 = vmatprep.subr.bf16.mxu0 0
      %5419 = vmatpush2.bf16.msra.mxu0 0
      %5420 = vmatprep.mubr.bf16.mxu0 0
      %5421 = vmatmul.mubr.bf16.gmra.mxu0 %v5338
      %v5422 = vpop.f32.mrf.mxu0
      %v5423 = vadd.f32 0.0, %v5422
      %v5424 = vpop.f32.mrf.mxu0
      %v5425 = vpop.f32.mrf.mxu0
      %v5426 = vadd.f32 0.0, %v5425
      %v5427 = vpop.f32.mrf.mxu0
      %5428 = vmatprep.mubr.bf16.mxu0 0
      %5429 = vmatmul.mubr.bf16.gmra.mxu0 %v5341
      %v5430 = vpop.f32.mrf.mxu0
      %v5431 = vadd.f32 0.0, %v5430
      %v5432 = vpop.f32.mrf.mxu0
      %v5433 = vpop.f32.mrf.mxu0
      %v5434 = vadd.f32 0.0, %v5433
      %v5435 = vpop.f32.mrf.mxu0
      %5436 = vmatprep.mubr.bf16.mxu0 0
      %5437 = vmatmul.mubr.bf16.gmra.mxu0 %v5344
      %v5438 = vpop.f32.mrf.mxu0
      %v5439 = vadd.f32 0.0, %v5438
      %v5440 = vpop.f32.mrf.mxu0
      %v5441 = vpop.f32.mrf.mxu0
      %v5442 = vadd.f32 0.0, %v5441
      %v5443 = vpop.f32.mrf.mxu0
      %5444 = vmatprep.mubr.bf16.mxu0 0
      %5445 = vmatmul.mubr.bf16.gmra.mxu0 %v5347
      %v5446 = vpop.f32.mrf.mxu0
      %v5447 = vadd.f32 0.0, %v5446
      %v5448 = vpop.f32.mrf.mxu0
      %v5449 = vpop.f32.mrf.mxu0
      %v5450 = vadd.f32 0.0, %v5449
      %v5451 = vpop.f32.mrf.mxu0
      %5452 = vmatprep.mubr.bf16.mxu0 0
      %5453 = vmatmul.mubr.bf16.gmra.mxu0 %v5350
      %v5454 = vpop.f32.mrf.mxu0
      %v5455 = vadd.f32 0.0, %v5454
      %v5456 = vpop.f32.mrf.mxu0
      %v5457 = vpop.f32.mrf.mxu0
      %v5458 = vadd.f32 0.0, %v5457
      %v5459 = vpop.f32.mrf.mxu0
      %5460 = vmatprep.mubr.bf16.mxu0 0
      %5461 = vmatmul.mubr.bf16.gmra.mxu0 %v5353
      %v5462 = vpop.f32.mrf.mxu0
      %v5463 = vadd.f32 0.0, %v5462
      %v5464 = vpop.f32.mrf.mxu0
      %v5465 = vpop.f32.mrf.mxu0
      %v5466 = vadd.f32 0.0, %v5465
      %v5467 = vpop.f32.mrf.mxu0
      %5468 = vmatprep.mubr.bf16.mxu0 0
      %5469 = vmatmul.mubr.bf16.gmra.mxu0 %v5356
      %v5470 = vpop.f32.mrf.mxu0
      %v5471 = vadd.f32 0.0, %v5470
      %v5472 = vpop.f32.mrf.mxu0
      %v5473 = vpop.f32.mrf.mxu0
      %v5474 = vadd.f32 0.0, %v5473
      %v5475 = vpop.f32.mrf.mxu0
      %5476 = vmatprep.mubr.bf16.mxu0 0
      %5477 = vmatmul.mubr.bf16.gmra.mxu0 %v5359
      %v5478 = vpop.f32.mrf.mxu0
      %v5479 = vadd.f32 0.0, %v5478
      %v5480 = vpop.f32.mrf.mxu0
      %v5481 = vpop.f32.mrf.mxu0
      %v5482 = vadd.f32 0.0, %v5481
      %v5483 = vpop.f32.mrf.mxu0
      %5484 = vmatprep.mubr.bf16.mxu0 0
      %5485 = vmatmul.mubr.bf16.gmra.mxu0 %v5362
      %v5486 = vpop.f32.mrf.mxu0
      %v5487 = vadd.f32 0.0, %v5486
      %v5488 = vpop.f32.mrf.mxu0
      %v5489 = vpop.f32.mrf.mxu0
      %v5490 = vadd.f32 0.0, %v5489
      %v5491 = vpop.f32.mrf.mxu0
      %5492 = vmatprep.mubr.bf16.mxu0 0
      %5493 = vmatmul.mubr.bf16.gmra.mxu0 %v5365
      %v5494 = vpop.f32.mrf.mxu0
      %v5495 = vadd.f32 0.0, %v5494
      %v5496 = vpop.f32.mrf.mxu0
      %v5497 = vpop.f32.mrf.mxu0
      %v5498 = vadd.f32 0.0, %v5497
      %v5499 = vpop.f32.mrf.mxu0
      %5500 = vmatprep.mubr.bf16.mxu0 0
      %5501 = vmatmul.mubr.bf16.gmra.mxu0 %v5368
      %v5502 = vpop.f32.mrf.mxu0
      %v5503 = vadd.f32 0.0, %v5502
      %v5504 = vpop.f32.mrf.mxu0
      %v5505 = vpop.f32.mrf.mxu0
      %v5506 = vadd.f32 0.0, %v5505
      %v5507 = vpop.f32.mrf.mxu0
      %5508 = vmatprep.mubr.bf16.mxu0 0
      %5509 = vmatmul.mubr.bf16.gmra.mxu0 %v5371
      %v5510 = vpop.f32.mrf.mxu0
      %v5511 = vadd.f32 0.0, %v5510
      %v5512 = vpop.f32.mrf.mxu0
      %v5513 = vpop.f32.mrf.mxu0
      %v5514 = vadd.f32 0.0, %v5513
      %v5515 = vpop.f32.mrf.mxu0
      %5516 = vmatprep.mubr.bf16.mxu0 0
      %5517 = vmatmul.mubr.bf16.gmra.mxu0 %v5374
      %v5518 = vpop.f32.mrf.mxu0
      %v5519 = vadd.f32 0.0, %v5518
      %v5520 = vpop.f32.mrf.mxu0
      %v5521 = vpop.f32.mrf.mxu0
      %v5522 = vadd.f32 0.0, %v5521
      %v5523 = vpop.f32.mrf.mxu0
      %5524 = vmatprep.mubr.bf16.mxu0 0
      %5525 = vmatmul.mubr.bf16.gmra.mxu0 %v5377
      %v5526 = vpop.f32.mrf.mxu0
      %v5527 = vadd.f32 0.0, %v5526
      %v5528 = vpop.f32.mrf.mxu0
      %v5529 = vpop.f32.mrf.mxu0
      %v5530 = vadd.f32 0.0, %v5529
      %v5531 = vpop.f32.mrf.mxu0
      %5532 = vmatprep.mubr.bf16.mxu0 0
      %5533 = vmatmul.mubr.bf16.gmra.mxu0 %v5380
      %v5534 = vpop.f32.mrf.mxu0
      %v5535 = vadd.f32 0.0, %v5534
      %v5536 = vpop.f32.mrf.mxu0
      %v5537 = vpop.f32.mrf.mxu0
      %v5538 = vadd.f32 0.0, %v5537
      %v5539 = vpop.f32.mrf.mxu0
      %5540 = vmatprep.mubr.bf16.mxu0 0
      %5541 = vmatmul.mubr.bf16.gmra.mxu0 %v5383
      %v5542 = vpop.f32.mrf.mxu0
      %v5543 = vadd.f32 0.0, %v5542
      %v5544 = vpop.f32.mrf.mxu0
      %v5545 = vpop.f32.mrf.mxu0
      %v5546 = vadd.f32 0.0, %v5545
      %v5547 = vpop.f32.mrf.mxu0
      %5548 = vdwg.mxu0
      %v5549 = vadd.f32 %v5068, %v5423
      %v5550 = vadd.f32 %v5069, %v5426
      %v5551 = vadd.f32 %v5070, %v5431
      %v5552 = vadd.f32 %v5071, %v5434
      %v5553 = vadd.f32 %v5072, %v5439
      %v5554 = vadd.f32 %v5073, %v5442
      %v5555 = vadd.f32 %v5074, %v5447
      %v5556 = vadd.f32 %v5075, %v5450
      %v5557 = vadd.f32 %v5076, %v5455
      %v5558 = vadd.f32 %v5077, %v5458
      %v5559 = vadd.f32 %v5078, %v5463
      %v5560 = vadd.f32 %v5079, %v5466
      %v5561 = vadd.f32 %v5080, %v5471
      %v5562 = vadd.f32 %v5081, %v5474
      %v5563 = vadd.f32 %v5082, %v5479
      %v5564 = vadd.f32 %v5083, %v5482
      %v5565 = vadd.f32 %v5084, %v5487
      %v5566 = vadd.f32 %v5085, %v5490
      %v5567 = vadd.f32 %v5086, %v5495
      %v5568 = vadd.f32 %v5087, %v5498
      %v5569 = vadd.f32 %v5088, %v5503
      %v5570 = vadd.f32 %v5089, %v5506
      %v5571 = vadd.f32 %v5090, %v5511
      %v5572 = vadd.f32 %v5091, %v5514
      %v5573 = vadd.f32 %v5092, %v5519
      %v5574 = vadd.f32 %v5093, %v5522
      %v5575 = vadd.f32 %v5094, %v5527
      %v5576 = vadd.f32 %v5095, %v5530
      %v5577 = vadd.f32 %v5096, %v5535
      %v5578 = vadd.f32 %v5097, %v5538
      %v5579 = vadd.f32 %v5098, %v5543
      %v5580 = vadd.f32 %v5099, %v5546
      %s5581 = scalar_lea.vmem [#allocation2], 24
      %v5582 = vld [vmem:[%s5581] sm:$0xf]
      %v5583 = vld [vmem:[%s5581 + $0x4] sm:$0xf]
      %v5584 = vld [vmem:[%s5581 + $0xc] sm:$0xf]
      %v5585 = vld [vmem:[%s5581 + $0x10] sm:$0xf]
      %v5586 = vld [vmem:[%s5581 + $0x18] sm:$0xf]
      %v5587 = vld [vmem:[%s5581 + $0x1c] sm:$0xf]
      %v5588 = vld [vmem:[%s5581 + $0x24] sm:$0xf]
      %v5589 = vld [vmem:[%s5581 + $0x28] sm:$0xf]
      %v5590 = vld [vmem:[%s5581 + $0x30] sm:$0xf]
      %v5591 = vld [vmem:[%s5581 + $0x34] sm:$0xf]
      %v5592 = vld [vmem:[%s5581 + $0x3c] sm:$0xf]
      %v5593 = vld [vmem:[%s5581 + $0x40] sm:$0xf]
      %v5594 = vld [vmem:[%s5581 + $0x48] sm:$0xf]
      %v5595 = vld [vmem:[%s5581 + $0x4c] sm:$0xf]
      %v5596 = vld [vmem:[%s5581 + $0x54] sm:$0xf]
      %v5597 = vld [vmem:[%s5581 + $0x58] sm:$0xf]
      %v5598 = vld [vmem:[%s5581 + $0x60] sm:$0xf]
      %v5599 = vld [vmem:[%s5581 + $0x64] sm:$0xf]
      %v5600 = vld [vmem:[%s5581 + $0x6c] sm:$0xf]
      %v5601 = vld [vmem:[%s5581 + $0x70] sm:$0xf]
      %v5602 = vld [vmem:[%s5581 + $0x78] sm:$0xf]
      %v5603 = vld [vmem:[%s5581 + $0x7c] sm:$0xf]
      %v5604 = vld [vmem:[%s5581 + $0x84] sm:$0xf]
      %v5605 = vld [vmem:[%s5581 + $0x88] sm:$0xf]
      %v5606 = vld [vmem:[%s5581 + $0x90] sm:$0xf]
      %v5607 = vld [vmem:[%s5581 + $0x94] sm:$0xf]
      %v5608 = vld [vmem:[%s5581 + $0x9c] sm:$0xf]
      %v5609 = vld [vmem:[%s5581 + $0xa0] sm:$0xf]
      %v5610 = vld [vmem:[%s5581 + $0xa8] sm:$0xf]
      %v5611 = vld [vmem:[%s5581 + $0xac] sm:$0xf]
      %v5612 = vld [vmem:[%s5581 + $0xb4] sm:$0xf]
      %v5613 = vld [vmem:[%s5581 + $0xb8] sm:$0xf]
      %s5614 = scalar_lea.vmem %s5, 72
      %v5615 = vld [vmem:[%s5614] sm:$0xf]
      %v5616 = vld [vmem:[%s5614 + $0x4] sm:$0xf]
      %v5617 = vld [vmem:[%s5614 + $0x8] sm:$0xf]
      %v5650 = vunpack.c.l.b16 %v5582
      %v5651 = vunpack.c.l.b16 %v5583
      %v5652 = vunpack.c.l.b16 %v5584
      %v5653 = vunpack.c.l.b16 %v5585
      %v5654 = vunpack.c.l.b16 %v5586
      %v5655 = vunpack.c.l.b16 %v5587
      %v5656 = vunpack.c.l.b16 %v5588
      %v5657 = vunpack.c.l.b16 %v5589
      %v5658 = vunpack.c.l.b16 %v5590
      %v5659 = vunpack.c.l.b16 %v5591
      %v5660 = vunpack.c.l.b16 %v5592
      %v5661 = vunpack.c.l.b16 %v5593
      %v5662 = vunpack.c.l.b16 %v5594
      %v5663 = vunpack.c.l.b16 %v5595
      %v5664 = vunpack.c.l.b16 %v5596
      %v5665 = vunpack.c.l.b16 %v5597
      %v5666 = vunpack.c.l.b16 %v5598
      %v5667 = vunpack.c.l.b16 %v5599
      %v5668 = vunpack.c.l.b16 %v5600
      %v5669 = vunpack.c.l.b16 %v5601
      %v5670 = vunpack.c.l.b16 %v5602
      %v5671 = vunpack.c.l.b16 %v5603
      %v5672 = vunpack.c.l.b16 %v5604
      %v5673 = vunpack.c.l.b16 %v5605
      %v5674 = vunpack.c.l.b16 %v5606
      %v5675 = vunpack.c.l.b16 %v5607
      %v5676 = vunpack.c.l.b16 %v5608
      %v5677 = vunpack.c.l.b16 %v5609
      %v5678 = vunpack.c.l.b16 %v5610
      %v5679 = vunpack.c.l.b16 %v5611
      %v5680 = vunpack.c.l.b16 %v5612
      %v5681 = vunpack.c.l.b16 %v5613
      %v5682 = vpack.c.b16 %v5651, %v5650
      %v5683 = vpack.c.b16 %v5653, %v5652
      %v5684 = vpack.c.b16 %v5655, %v5654
      %v5685 = vpack.c.b16 %v5657, %v5656
      %v5686 = vpack.c.b16 %v5659, %v5658
      %v5687 = vpack.c.b16 %v5661, %v5660
      %v5688 = vpack.c.b16 %v5663, %v5662
      %v5689 = vpack.c.b16 %v5665, %v5664
      %v5690 = vpack.c.b16 %v5667, %v5666
      %v5691 = vpack.c.b16 %v5669, %v5668
      %v5692 = vpack.c.b16 %v5671, %v5670
      %v5693 = vpack.c.b16 %v5673, %v5672
      %v5694 = vpack.c.b16 %v5675, %v5674
      %v5695 = vpack.c.b16 %v5677, %v5676
      %v5696 = vpack.c.b16 %v5679, %v5678
      %v5697 = vpack.c.b16 %v5681, %v5680
      %v5701 = vunpack.c.l.b16 %v5615
      %v5702 = vunpack.c.l.b16 %v5616
      %v5703 = vunpack.c.l.b16 %v5617
      %v5704 = vpack.c.b16 %v5702, %v5701
      %v5705 = vpack.c.b16 %v5703, %v5703
      %v5708 = vsel %vm3011, %v5682, 0
      %v5711 = vsel %vm3011, %v5683, 0
      %v5714 = vsel %vm3011, %v5684, 0
      %v5717 = vsel %vm3011, %v5685, 0
      %v5720 = vsel %vm3011, %v5686, 0
      %v5723 = vsel %vm3011, %v5687, 0
      %v5726 = vsel %vm3011, %v5688, 0
      %v5729 = vsel %vm3011, %v5689, 0
      %v5732 = vsel %vm3011, %v5690, 0
      %v5735 = vsel %vm3011, %v5691, 0
      %v5738 = vsel %vm3011, %v5692, 0
      %v5741 = vsel %vm3011, %v5693, 0
      %v5744 = vsel %vm3011, %v5694, 0
      %v5747 = vsel %vm3011, %v5695, 0
      %v5750 = vsel %vm3011, %v5696, 0
      %v5753 = vsel %vm3011, %v5697, 0
      %v5756 = vsel %vm3060, %v5705, 0
      %5758 = vmatprep.subr.bf16.mxu0 0
      %5759 = vmatpush1.bf16.msra.mxu0 0
      %5760 = vmatprep.subr.bf16.mxu0 0
      %5761 = vmatpush1.bf16.msra.mxu0 0
      %5762 = vmatprep.subr.bf16.mxu0 0
      %5763 = vmatpush1.bf16.msra.mxu0 0
      %5764 = vmatprep.subr.bf16.mxu0 0
      %5765 = vmatpush1.bf16.msra.mxu0 0
      %5766 = vmatprep.subr.bf16.mxu0 0
      %5767 = vmatpush1.bf16.msra.mxu0 0
      %5768 = vmatprep.subr.bf16.mxu0 0
      %5769 = vmatpush1.bf16.msra.mxu0 0
      %5770 = vmatprep.subr.bf16.mxu0 0
      %5771 = vmatpush1.bf16.msra.mxu0 %v5756
      %5772 = vmatprep.subr.bf16.mxu0 0
      %5773 = vmatpush1.bf16.msra.mxu0 %v5704
      %5774 = vmatprep.subr.bf16.mxu0 0
      %5775 = vmatpush2.bf16.msra.mxu0 0
      %5776 = vmatprep.subr.bf16.mxu0 0
      %5777 = vmatpush2.bf16.msra.mxu0 0
      %5778 = vmatprep.subr.bf16.mxu0 0
      %5779 = vmatpush2.bf16.msra.mxu0 0
      %5780 = vmatprep.subr.bf16.mxu0 0
      %5781 = vmatpush2.bf16.msra.mxu0 0
      %5782 = vmatprep.subr.bf16.mxu0 0
      %5783 = vmatpush2.bf16.msra.mxu0 0
      %5784 = vmatprep.subr.bf16.mxu0 0
      %5785 = vmatpush2.bf16.msra.mxu0 0
      %5786 = vmatprep.subr.bf16.mxu0 0
      %5787 = vmatpush2.bf16.msra.mxu0 0
      %5788 = vmatprep.subr.bf16.mxu0 0
      %5789 = vmatpush2.bf16.msra.mxu0 0
      %5790 = vmatprep.mubr.bf16.mxu0 0
      %5791 = vmatmul.mubr.bf16.gmra.mxu0 %v5708
      %v5792 = vpop.f32.mrf.mxu0
      %v5793 = vadd.f32 0.0, %v5792
      %v5794 = vpop.f32.mrf.mxu0
      %v5795 = vpop.f32.mrf.mxu0
      %v5796 = vadd.f32 0.0, %v5795
      %v5797 = vpop.f32.mrf.mxu0
      %5798 = vmatprep.mubr.bf16.mxu0 0
      %5799 = vmatmul.mubr.bf16.gmra.mxu0 %v5711
      %v5800 = vpop.f32.mrf.mxu0
      %v5801 = vadd.f32 0.0, %v5800
      %v5802 = vpop.f32.mrf.mxu0
      %v5803 = vpop.f32.mrf.mxu0
      %v5804 = vadd.f32 0.0, %v5803
      %v5805 = vpop.f32.mrf.mxu0
      %5806 = vmatprep.mubr.bf16.mxu0 0
      %5807 = vmatmul.mubr.bf16.gmra.mxu0 %v5714
      %v5808 = vpop.f32.mrf.mxu0
      %v5809 = vadd.f32 0.0, %v5808
      %v5810 = vpop.f32.mrf.mxu0
      %v5811 = vpop.f32.mrf.mxu0
      %v5812 = vadd.f32 0.0, %v5811
      %v5813 = vpop.f32.mrf.mxu0
      %5814 = vmatprep.mubr.bf16.mxu0 0
      %5815 = vmatmul.mubr.bf16.gmra.mxu0 %v5717
      %v5816 = vpop.f32.mrf.mxu0
      %v5817 = vadd.f32 0.0, %v5816
      %v5818 = vpop.f32.mrf.mxu0
      %v5819 = vpop.f32.mrf.mxu0
      %v5820 = vadd.f32 0.0, %v5819
      %v5821 = vpop.f32.mrf.mxu0
      %5822 = vmatprep.mubr.bf16.mxu0 0
      %5823 = vmatmul.mubr.bf16.gmra.mxu0 %v5720
      %v5824 = vpop.f32.mrf.mxu0
      %v5825 = vadd.f32 0.0, %v5824
      %v5826 = vpop.f32.mrf.mxu0
      %v5827 = vpop.f32.mrf.mxu0
      %v5828 = vadd.f32 0.0, %v5827
      %v5829 = vpop.f32.mrf.mxu0
      %5830 = vmatprep.mubr.bf16.mxu0 0
      %5831 = vmatmul.mubr.bf16.gmra.mxu0 %v5723
      %v5832 = vpop.f32.mrf.mxu0
      %v5833 = vadd.f32 0.0, %v5832
      %v5834 = vpop.f32.mrf.mxu0
      %v5835 = vpop.f32.mrf.mxu0
      %v5836 = vadd.f32 0.0, %v5835
      %v5837 = vpop.f32.mrf.mxu0
      %5838 = vmatprep.mubr.bf16.mxu0 0
      %5839 = vmatmul.mubr.bf16.gmra.mxu0 %v5726
      %v5840 = vpop.f32.mrf.mxu0
      %v5841 = vadd.f32 0.0, %v5840
      %v5842 = vpop.f32.mrf.mxu0
      %v5843 = vpop.f32.mrf.mxu0
      %v5844 = vadd.f32 0.0, %v5843
      %v5845 = vpop.f32.mrf.mxu0
      %5846 = vmatprep.mubr.bf16.mxu0 0
      %5847 = vmatmul.mubr.bf16.gmra.mxu0 %v5729
      %v5848 = vpop.f32.mrf.mxu0
      %v5849 = vadd.f32 0.0, %v5848
      %v5850 = vpop.f32.mrf.mxu0
      %v5851 = vpop.f32.mrf.mxu0
      %v5852 = vadd.f32 0.0, %v5851
      %v5853 = vpop.f32.mrf.mxu0
      %5854 = vmatprep.mubr.bf16.mxu0 0
      %5855 = vmatmul.mubr.bf16.gmra.mxu0 %v5732
      %v5856 = vpop.f32.mrf.mxu0
      %v5857 = vadd.f32 0.0, %v5856
      %v5858 = vpop.f32.mrf.mxu0
      %v5859 = vpop.f32.mrf.mxu0
      %v5860 = vadd.f32 0.0, %v5859
      %v5861 = vpop.f32.mrf.mxu0
      %5862 = vmatprep.mubr.bf16.mxu0 0
      %5863 = vmatmul.mubr.bf16.gmra.mxu0 %v5735
      %v5864 = vpop.f32.mrf.mxu0
      %v5865 = vadd.f32 0.0, %v5864
      %v5866 = vpop.f32.mrf.mxu0
      %v5867 = vpop.f32.mrf.mxu0
      %v5868 = vadd.f32 0.0, %v5867
      %v5869 = vpop.f32.mrf.mxu0
      %5870 = vmatprep.mubr.bf16.mxu0 0
      %5871 = vmatmul.mubr.bf16.gmra.mxu0 %v5738
      %v5872 = vpop.f32.mrf.mxu0
      %v5873 = vadd.f32 0.0, %v5872
      %v5874 = vpop.f32.mrf.mxu0
      %v5875 = vpop.f32.mrf.mxu0
      %v5876 = vadd.f32 0.0, %v5875
      %v5877 = vpop.f32.mrf.mxu0
      %5878 = vmatprep.mubr.bf16.mxu0 0
      %5879 = vmatmul.mubr.bf16.gmra.mxu0 %v5741
      %v5880 = vpop.f32.mrf.mxu0
      %v5881 = vadd.f32 0.0, %v5880
      %v5882 = vpop.f32.mrf.mxu0
      %v5883 = vpop.f32.mrf.mxu0
      %v5884 = vadd.f32 0.0, %v5883
      %v5885 = vpop.f32.mrf.mxu0
      %5886 = vmatprep.mubr.bf16.mxu0 0
      %5887 = vmatmul.mubr.bf16.gmra.mxu0 %v5744
      %v5888 = vpop.f32.mrf.mxu0
      %v5889 = vadd.f32 0.0, %v5888
      %v5890 = vpop.f32.mrf.mxu0
      %v5891 = vpop.f32.mrf.mxu0
      %v5892 = vadd.f32 0.0, %v5891
      %v5893 = vpop.f32.mrf.mxu0
      %5894 = vmatprep.mubr.bf16.mxu0 0
      %5895 = vmatmul.mubr.bf16.gmra.mxu0 %v5747
      %v5896 = vpop.f32.mrf.mxu0
      %v5897 = vadd.f32 0.0, %v5896
      %v5898 = vpop.f32.mrf.mxu0
      %v5899 = vpop.f32.mrf.mxu0
      %v5900 = vadd.f32 0.0, %v5899
      %v5901 = vpop.f32.mrf.mxu0
      %5902 = vmatprep.mubr.bf16.mxu0 0
      %5903 = vmatmul.mubr.bf16.gmra.mxu0 %v5750
      %v5904 = vpop.f32.mrf.mxu0
      %v5905 = vadd.f32 0.0, %v5904
      %v5906 = vpop.f32.mrf.mxu0
      %v5907 = vpop.f32.mrf.mxu0
      %v5908 = vadd.f32 0.0, %v5907
      %v5909 = vpop.f32.mrf.mxu0
      %5910 = vmatprep.mubr.bf16.mxu0 0
      %5911 = vmatmul.mubr.bf16.gmra.mxu0 %v5753
      %v5912 = vpop.f32.mrf.mxu0
      %v5913 = vadd.f32 0.0, %v5912
      %v5914 = vpop.f32.mrf.mxu0
      %v5915 = vpop.f32.mrf.mxu0
      %v5916 = vadd.f32 0.0, %v5915
      %v5917 = vpop.f32.mrf.mxu0
      %5918 = vdwg.mxu0
      %v5919 = vadd.f32 %v5549, %v5793
      %v5920 = vadd.f32 %v5550, %v5796
      %v5921 = vadd.f32 %v5551, %v5801
      %v5922 = vadd.f32 %v5552, %v5804
      %v5923 = vadd.f32 %v5553, %v5809
      %v5924 = vadd.f32 %v5554, %v5812
      %v5925 = vadd.f32 %v5555, %v5817
      %v5926 = vadd.f32 %v5556, %v5820
      %v5927 = vadd.f32 %v5557, %v5825
      %v5928 = vadd.f32 %v5558, %v5828
      %v5929 = vadd.f32 %v5559, %v5833
      %v5930 = vadd.f32 %v5560, %v5836
      %v5931 = vadd.f32 %v5561, %v5841
      %v5932 = vadd.f32 %v5562, %v5844
      %v5933 = vadd.f32 %v5563, %v5849
      %v5934 = vadd.f32 %v5564, %v5852
      %v5935 = vadd.f32 %v5565, %v5857
      %v5936 = vadd.f32 %v5566, %v5860
      %v5937 = vadd.f32 %v5567, %v5865
      %v5938 = vadd.f32 %v5568, %v5868
      %v5939 = vadd.f32 %v5569, %v5873
      %v5940 = vadd.f32 %v5570, %v5876
      %v5941 = vadd.f32 %v5571, %v5881
      %v5942 = vadd.f32 %v5572, %v5884
      %v5943 = vadd.f32 %v5573, %v5889
      %v5944 = vadd.f32 %v5574, %v5892
      %v5945 = vadd.f32 %v5575, %v5897
      %v5946 = vadd.f32 %v5576, %v5900
      %v5947 = vadd.f32 %v5577, %v5905
      %v5948 = vadd.f32 %v5578, %v5908
      %v5949 = vadd.f32 %v5579, %v5913
      %v5950 = vadd.f32 %v5580, %v5916
      %v5951 = vld [vmem:[%s5581] sm:$0xf]
      %v5952 = vld [vmem:[%s5581 + $0x4] sm:$0xf]
      %v5953 = vld [vmem:[%s5581 + $0x8] sm:$0x1]
      %v5954 = vld [vmem:[%s5581 + $0xc] sm:$0xf]
      %v5955 = vld [vmem:[%s5581 + $0x10] sm:$0xf]
      %v5956 = vld [vmem:[%s5581 + $0x14] sm:$0x1]
      %v5957 = vld [vmem:[%s5581 + $0x18] sm:$0xf]
      %v5958 = vld [vmem:[%s5581 + $0x1c] sm:$0xf]
      %v5959 = vld [vmem:[%s5581 + $0x20] sm:$0x1]
      %v5960 = vld [vmem:[%s5581 + $0x24] sm:$0xf]
      %v5961 = vld [vmem:[%s5581 + $0x28] sm:$0xf]
      %v5962 = vld [vmem:[%s5581 + $0x2c] sm:$0x1]
      %v5963 = vld [vmem:[%s5581 + $0x30] sm:$0xf]
      %v5964 = vld [vmem:[%s5581 + $0x34] sm:$0xf]
      %v5965 = vld [vmem:[%s5581 + $0x38] sm:$0x1]
      %v5966 = vld [vmem:[%s5581 + $0x3c] sm:$0xf]
      %v5967 = vld [vmem:[%s5581 + $0x40] sm:$0xf]
      %v5968 = vld [vmem:[%s5581 + $0x44] sm:$0x1]
      %v5969 = vld [vmem:[%s5581 + $0x48] sm:$0xf]
      %v5970 = vld [vmem:[%s5581 + $0x4c] sm:$0xf]
      %v5971 = vld [vmem:[%s5581 + $0x50] sm:$0x1]
      %v5972 = vld [vmem:[%s5581 + $0x54] sm:$0xf]
      %v5973 = vld [vmem:[%s5581 + $0x58] sm:$0xf]
      %v5974 = vld [vmem:[%s5581 + $0x5c] sm:$0x1]
      %v5975 = vld [vmem:[%s5581 + $0x60] sm:$0xf]
      %v5976 = vld [vmem:[%s5581 + $0x64] sm:$0xf]
      %v5977 = vld [vmem:[%s5581 + $0x68] sm:$0x1]
      %v5978 = vld [vmem:[%s5581 + $0x6c] sm:$0xf]
      %v5979 = vld [vmem:[%s5581 + $0x70] sm:$0xf]
      %v5980 = vld [vmem:[%s5581 + $0x74] sm:$0x1]
      %v5981 = vld [vmem:[%s5581 + $0x78] sm:$0xf]
      %v5982 = vld [vmem:[%s5581 + $0x7c] sm:$0xf]
      %v5983 = vld [vmem:[%s5581 + $0x80] sm:$0x1]
      %v5984 = vld [vmem:[%s5581 + $0x84] sm:$0xf]
      %v5985 = vld [vmem:[%s5581 + $0x88] sm:$0xf]
      %v5986 = vld [vmem:[%s5581 + $0x8c] sm:$0x1]
      %v5987 = vld [vmem:[%s5581 + $0x90] sm:$0xf]
      %v5988 = vld [vmem:[%s5581 + $0x94] sm:$0xf]
      %v5989 = vld [vmem:[%s5581 + $0x98] sm:$0x1]
      %v5990 = vld [vmem:[%s5581 + $0x9c] sm:$0xf]
      %v5991 = vld [vmem:[%s5581 + $0xa0] sm:$0xf]
      %v5992 = vld [vmem:[%s5581 + $0xa4] sm:$0x1]
      %v5993 = vld [vmem:[%s5581 + $0xa8] sm:$0xf]
      %v5994 = vld [vmem:[%s5581 + $0xac] sm:$0xf]
      %v5995 = vld [vmem:[%s5581 + $0xb0] sm:$0x1]
      %v5996 = vld [vmem:[%s5581 + $0xb4] sm:$0xf]
      %v5997 = vld [vmem:[%s5581 + $0xb8] sm:$0xf]
      %v5998 = vld [vmem:[%s5581 + $0xbc] sm:$0x1]
      %v6000 = vshrl.u32 %v5951, 16
      %v6002 = vrot.slane %v6000, 4
      %v6003 = vshll.u32 %v5951, 16
      %v6005 = vrot.slane %v6003, 5
      %v6006 = vor.u32 %v6002, %v6005
      %v6007 = vrot.slane %v6006, 4
      %v6009 = vshll.u32 %v5952, 16
      %v6011 = vrot.slane %v6009, 5
      %v6012 = vsel %vm2565, %v6007, %v6011
      %v6013 = vshrl.u32 %v5952, 16
      %v6015 = vrot.slane %v6013, 4
      %v6016 = vor.u32 %v6015, %v6011
      %v6017 = vrot.slane %v6016, 4
      %v6019 = vshll.u32 %v5953, 16
      %v6021 = vrot.slane %v6019, 5
      %v6022 = vsel %vm2565, %v6017, %v6021
      %v6024 = vshrl.u32 %v5954, 16
      %v6026 = vrot.slane %v6024, 4
      %v6027 = vshll.u32 %v5954, 16
      %v6029 = vrot.slane %v6027, 5
      %v6030 = vor.u32 %v6026, %v6029
      %v6031 = vrot.slane %v6030, 4
      %v6033 = vshll.u32 %v5955, 16
      %v6035 = vrot.slane %v6033, 5
      %v6036 = vsel %vm2565, %v6031, %v6035
      %v6037 = vshrl.u32 %v5955, 16
      %v6039 = vrot.slane %v6037, 4
      %v6040 = vor.u32 %v6039, %v6035
      %v6041 = vrot.slane %v6040, 4
      %v6043 = vshll.u32 %v5956, 16
      %v6045 = vrot.slane %v6043, 5
      %v6046 = vsel %vm2565, %v6041, %v6045
      %v6048 = vshrl.u32 %v5957, 16
      %v6050 = vrot.slane %v6048, 4
      %v6051 = vshll.u32 %v5957, 16
      %v6053 = vrot.slane %v6051, 5
      %v6054 = vor.u32 %v6050, %v6053
      %v6055 = vrot.slane %v6054, 4
      %v6057 = vshll.u32 %v5958, 16
      %v6059 = vrot.slane %v6057, 5
      %v6060 = vsel %vm2565, %v6055, %v6059
      %v6061 = vshrl.u32 %v5958, 16
      %v6063 = vrot.slane %v6061, 4
      %v6064 = vor.u32 %v6063, %v6059
      %v6065 = vrot.slane %v6064, 4
      %v6067 = vshll.u32 %v5959, 16
      %v6069 = vrot.slane %v6067, 5
      %v6070 = vsel %vm2565, %v6065, %v6069
      %v6072 = vshrl.u32 %v5960, 16
      %v6074 = vrot.slane %v6072, 4
      %v6075 = vshll.u32 %v5960, 16
      %v6077 = vrot.slane %v6075, 5
      %v6078 = vor.u32 %v6074, %v6077
      %v6079 = vrot.slane %v6078, 4
      %v6081 = vshll.u32 %v5961, 16
      %v6083 = vrot.slane %v6081, 5
      %v6084 = vsel %vm2565, %v6079, %v6083
      %v6085 = vshrl.u32 %v5961, 16
      %v6087 = vrot.slane %v6085, 4
      %v6088 = vor.u32 %v6087, %v6083
      %v6089 = vrot.slane %v6088, 4
      %v6091 = vshll.u32 %v5962, 16
      %v6093 = vrot.slane %v6091, 5
      %v6094 = vsel %vm2565, %v6089, %v6093
      %v6096 = vshrl.u32 %v5963, 16
      %v6098 = vrot.slane %v6096, 4
      %v6099 = vshll.u32 %v5963, 16
      %v6101 = vrot.slane %v6099, 5
      %v6102 = vor.u32 %v6098, %v6101
      %v6103 = vrot.slane %v6102, 4
      %v6105 = vshll.u32 %v5964, 16
      %v6107 = vrot.slane %v6105, 5
      %v6108 = vsel %vm2565, %v6103, %v6107
      %v6109 = vshrl.u32 %v5964, 16
      %v6111 = vrot.slane %v6109, 4
      %v6112 = vor.u32 %v6111, %v6107
      %v6113 = vrot.slane %v6112, 4
      %v6115 = vshll.u32 %v5965, 16
      %v6117 = vrot.slane %v6115, 5
      %v6118 = vsel %vm2565, %v6113, %v6117
      %v6120 = vshrl.u32 %v5966, 16
      %v6122 = vrot.slane %v6120, 4
      %v6123 = vshll.u32 %v5966, 16
      %v6125 = vrot.slane %v6123, 5
      %v6126 = vor.u32 %v6122, %v6125
      %v6127 = vrot.slane %v6126, 4
      %v6129 = vshll.u32 %v5967, 16
      %v6131 = vrot.slane %v6129, 5
      %v6132 = vsel %vm2565, %v6127, %v6131
      %v6133 = vshrl.u32 %v5967, 16
      %v6135 = vrot.slane %v6133, 4
      %v6136 = vor.u32 %v6135, %v6131
      %v6137 = vrot.slane %v6136, 4
      %v6139 = vshll.u32 %v5968, 16
      %v6141 = vrot.slane %v6139, 5
      %v6142 = vsel %vm2565, %v6137, %v6141
      %v6144 = vshrl.u32 %v5969, 16
      %v6146 = vrot.slane %v6144, 4
      %v6147 = vshll.u32 %v5969, 16
      %v6149 = vrot.slane %v6147, 5
      %v6150 = vor.u32 %v6146, %v6149
      %v6151 = vrot.slane %v6150, 4
      %v6153 = vshll.u32 %v5970, 16
      %v6155 = vrot.slane %v6153, 5
      %v6156 = vsel %vm2565, %v6151, %v6155
      %v6157 = vshrl.u32 %v5970, 16
      %v6159 = vrot.slane %v6157, 4
      %v6160 = vor.u32 %v6159, %v6155
      %v6161 = vrot.slane %v6160, 4
      %v6163 = vshll.u32 %v5971, 16
      %v6165 = vrot.slane %v6163, 5
      %v6166 = vsel %vm2565, %v6161, %v6165
      %v6168 = vshrl.u32 %v5972, 16
      %v6170 = vrot.slane %v6168, 4
      %v6171 = vshll.u32 %v5972, 16
      %v6173 = vrot.slane %v6171, 5
      %v6174 = vor.u32 %v6170, %v6173
      %v6175 = vrot.slane %v6174, 4
      %v6177 = vshll.u32 %v5973, 16
      %v6179 = vrot.slane %v6177, 5
      %v6180 = vsel %vm2565, %v6175, %v6179
      %v6181 = vshrl.u32 %v5973, 16
      %v6183 = vrot.slane %v6181, 4
      %v6184 = vor.u32 %v6183, %v6179
      %v6185 = vrot.slane %v6184, 4
      %v6187 = vshll.u32 %v5974, 16
      %v6189 = vrot.slane %v6187, 5
      %v6190 = vsel %vm2565, %v6185, %v6189
      %v6192 = vshrl.u32 %v5975, 16
      %v6194 = vrot.slane %v6192, 4
      %v6195 = vshll.u32 %v5975, 16
      %v6197 = vrot.slane %v6195, 5
      %v6198 = vor.u32 %v6194, %v6197
      %v6199 = vrot.slane %v6198, 4
      %v6201 = vshll.u32 %v5976, 16
      %v6203 = vrot.slane %v6201, 5
      %v6204 = vsel %vm2565, %v6199, %v6203
      %v6205 = vshrl.u32 %v5976, 16
      %v6207 = vrot.slane %v6205, 4
      %v6208 = vor.u32 %v6207, %v6203
      %v6209 = vrot.slane %v6208, 4
      %v6211 = vshll.u32 %v5977, 16
      %v6213 = vrot.slane %v6211, 5
      %v6214 = vsel %vm2565, %v6209, %v6213
      %v6216 = vshrl.u32 %v5978, 16
      %v6218 = vrot.slane %v6216, 4
      %v6219 = vshll.u32 %v5978, 16
      %v6221 = vrot.slane %v6219, 5
      %v6222 = vor.u32 %v6218, %v6221
      %v6223 = vrot.slane %v6222, 4
      %v6225 = vshll.u32 %v5979, 16
      %v6227 = vrot.slane %v6225, 5
      %v6228 = vsel %vm2565, %v6223, %v6227
      %v6229 = vshrl.u32 %v5979, 16
      %v6231 = vrot.slane %v6229, 4
      %v6232 = vor.u32 %v6231, %v6227
      %v6233 = vrot.slane %v6232, 4
      %v6235 = vshll.u32 %v5980, 16
      %v6237 = vrot.slane %v6235, 5
      %v6238 = vsel %vm2565, %v6233, %v6237
      %v6240 = vshrl.u32 %v5981, 16
      %v6242 = vrot.slane %v6240, 4
      %v6243 = vshll.u32 %v5981, 16
      %v6245 = vrot.slane %v6243, 5
      %v6246 = vor.u32 %v6242, %v6245
      %v6247 = vrot.slane %v6246, 4
      %v6249 = vshll.u32 %v5982, 16
      %v6251 = vrot.slane %v6249, 5
      %v6252 = vsel %vm2565, %v6247, %v6251
      %v6253 = vshrl.u32 %v5982, 16
      %v6255 = vrot.slane %v6253, 4
      %v6256 = vor.u32 %v6255, %v6251
      %v6257 = vrot.slane %v6256, 4
      %v6259 = vshll.u32 %v5983, 16
      %v6261 = vrot.slane %v6259, 5
      %v6262 = vsel %vm2565, %v6257, %v6261
      %v6264 = vshrl.u32 %v5984, 16
      %v6266 = vrot.slane %v6264, 4
      %v6267 = vshll.u32 %v5984, 16
      %v6269 = vrot.slane %v6267, 5
      %v6270 = vor.u32 %v6266, %v6269
      %v6271 = vrot.slane %v6270, 4
      %v6273 = vshll.u32 %v5985, 16
      %v6275 = vrot.slane %v6273, 5
      %v6276 = vsel %vm2565, %v6271, %v6275
      %v6277 = vshrl.u32 %v5985, 16
      %v6279 = vrot.slane %v6277, 4
      %v6280 = vor.u32 %v6279, %v6275
      %v6281 = vrot.slane %v6280, 4
      %v6283 = vshll.u32 %v5986, 16
      %v6285 = vrot.slane %v6283, 5
      %v6286 = vsel %vm2565, %v6281, %v6285
      %v6288 = vshrl.u32 %v5987, 16
      %v6290 = vrot.slane %v6288, 4
      %v6291 = vshll.u32 %v5987, 16
      %v6293 = vrot.slane %v6291, 5
      %v6294 = vor.u32 %v6290, %v6293
      %v6295 = vrot.slane %v6294, 4
      %v6297 = vshll.u32 %v5988, 16
      %v6299 = vrot.slane %v6297, 5
      %v6300 = vsel %vm2565, %v6295, %v6299
      %v6301 = vshrl.u32 %v5988, 16
      %v6303 = vrot.slane %v6301, 4
      %v6304 = vor.u32 %v6303, %v6299
      %v6305 = vrot.slane %v6304, 4
      %v6307 = vshll.u32 %v5989, 16
      %v6309 = vrot.slane %v6307, 5
      %v6310 = vsel %vm2565, %v6305, %v6309
      %v6312 = vshrl.u32 %v5990, 16
      %v6314 = vrot.slane %v6312, 4
      %v6315 = vshll.u32 %v5990, 16
      %v6317 = vrot.slane %v6315, 5
      %v6318 = vor.u32 %v6314, %v6317
      %v6319 = vrot.slane %v6318, 4
      %v6321 = vshll.u32 %v5991, 16
      %v6323 = vrot.slane %v6321, 5
      %v6324 = vsel %vm2565, %v6319, %v6323
      %v6325 = vshrl.u32 %v5991, 16
      %v6327 = vrot.slane %v6325, 4
      %v6328 = vor.u32 %v6327, %v6323
      %v6329 = vrot.slane %v6328, 4
      %v6331 = vshll.u32 %v5992, 16
      %v6333 = vrot.slane %v6331, 5
      %v6334 = vsel %vm2565, %v6329, %v6333
      %v6336 = vshrl.u32 %v5993, 16
      %v6338 = vrot.slane %v6336, 4
      %v6339 = vshll.u32 %v5993, 16
      %v6341 = vrot.slane %v6339, 5
      %v6342 = vor.u32 %v6338, %v6341
      %v6343 = vrot.slane %v6342, 4
      %v6345 = vshll.u32 %v5994, 16
      %v6347 = vrot.slane %v6345, 5
      %v6348 = vsel %vm2565, %v6343, %v6347
      %v6349 = vshrl.u32 %v5994, 16
      %v6351 = vrot.slane %v6349, 4
      %v6352 = vor.u32 %v6351, %v6347
      %v6353 = vrot.slane %v6352, 4
      %v6355 = vshll.u32 %v5995, 16
      %v6357 = vrot.slane %v6355, 5
      %v6358 = vsel %vm2565, %v6353, %v6357
      %v6360 = vshrl.u32 %v5996, 16
      %v6362 = vrot.slane %v6360, 4
      %v6363 = vshll.u32 %v5996, 16
      %v6365 = vrot.slane %v6363, 5
      %v6366 = vor.u32 %v6362, %v6365
      %v6367 = vrot.slane %v6366, 4
      %v6369 = vshll.u32 %v5997, 16
      %v6371 = vrot.slane %v6369, 5
      %v6372 = vsel %vm2565, %v6367, %v6371
      %v6373 = vshrl.u32 %v5997, 16
      %v6375 = vrot.slane %v6373, 4
      %v6376 = vor.u32 %v6375, %v6371
      %v6377 = vrot.slane %v6376, 4
      %v6379 = vshll.u32 %v5998, 16
      %v6381 = vrot.slane %v6379, 5
      %v6382 = vsel %vm2565, %v6377, %v6381
      %s6383 = scalar_lea.vmem %s5, 84
      %v6384 = vld [vmem:[%s6383] sm:$0xf]
      %v6385 = vld [vmem:[%s6383 + $0x4] sm:$0xf]
      %v6386 = vld [vmem:[%s6383 + $0x8] sm:$0xf]
      %v6387 = vunpack.c.l.b16 %v6012
      %v6388 = vunpack.c.l.b16 %v6022
      %v6389 = vunpack.c.l.b16 %v6036
      %v6390 = vunpack.c.l.b16 %v6046
      %v6391 = vunpack.c.l.b16 %v6060
      %v6392 = vunpack.c.l.b16 %v6070
      %v6393 = vunpack.c.l.b16 %v6084
      %v6394 = vunpack.c.l.b16 %v6094
      %v6395 = vunpack.c.l.b16 %v6108
      %v6396 = vunpack.c.l.b16 %v6118
      %v6397 = vunpack.c.l.b16 %v6132
      %v6398 = vunpack.c.l.b16 %v6142
      %v6399 = vunpack.c.l.b16 %v6156
      %v6400 = vunpack.c.l.b16 %v6166
      %v6401 = vunpack.c.l.b16 %v6180
      %v6402 = vunpack.c.l.b16 %v6190
      %v6403 = vunpack.c.l.b16 %v6204
      %v6404 = vunpack.c.l.b16 %v6214
      %v6405 = vunpack.c.l.b16 %v6228
      %v6406 = vunpack.c.l.b16 %v6238
      %v6407 = vunpack.c.l.b16 %v6252
      %v6408 = vunpack.c.l.b16 %v6262
      %v6409 = vunpack.c.l.b16 %v6276
      %v6410 = vunpack.c.l.b16 %v6286
      %v6411 = vunpack.c.l.b16 %v6300
      %v6412 = vunpack.c.l.b16 %v6310
      %v6413 = vunpack.c.l.b16 %v6324
      %v6414 = vunpack.c.l.b16 %v6334
      %v6415 = vunpack.c.l.b16 %v6348
      %v6416 = vunpack.c.l.b16 %v6358
      %v6417 = vunpack.c.l.b16 %v6372
      %v6418 = vunpack.c.l.b16 %v6382
      %v6419 = vpack.c.b16 %v6388, %v6387
      %v6420 = vpack.c.b16 %v6390, %v6389
      %v6421 = vpack.c.b16 %v6392, %v6391
      %v6422 = vpack.c.b16 %v6394, %v6393
      %v6423 = vpack.c.b16 %v6396, %v6395
      %v6424 = vpack.c.b16 %v6398, %v6397
      %v6425 = vpack.c.b16 %v6400, %v6399
      %v6426 = vpack.c.b16 %v6402, %v6401
      %v6427 = vpack.c.b16 %v6404, %v6403
      %v6428 = vpack.c.b16 %v6406, %v6405
      %v6429 = vpack.c.b16 %v6408, %v6407
      %v6430 = vpack.c.b16 %v6410, %v6409
      %v6431 = vpack.c.b16 %v6412, %v6411
      %v6432 = vpack.c.b16 %v6414, %v6413
      %v6433 = vpack.c.b16 %v6416, %v6415
      %v6434 = vpack.c.b16 %v6418, %v6417
      %v6438 = vunpack.c.l.b16 %v6384
      %v6439 = vunpack.c.l.b16 %v6385
      %v6440 = vunpack.c.l.b16 %v6386
      %v6441 = vpack.c.b16 %v6439, %v6438
      %v6442 = vpack.c.b16 %v6440, %v6440
      %v6445 = vsel %vm3011, %v6419, 0
      %v6448 = vsel %vm3011, %v6420, 0
      %v6451 = vsel %vm3011, %v6421, 0
      %v6454 = vsel %vm3011, %v6422, 0
      %v6457 = vsel %vm3011, %v6423, 0
      %v6460 = vsel %vm3011, %v6424, 0
      %v6463 = vsel %vm3011, %v6425, 0
      %v6466 = vsel %vm3011, %v6426, 0
      %v6469 = vsel %vm3011, %v6427, 0
      %v6472 = vsel %vm3011, %v6428, 0
      %v6475 = vsel %vm3011, %v6429, 0
      %v6478 = vsel %vm3011, %v6430, 0
      %v6481 = vsel %vm3011, %v6431, 0
      %v6484 = vsel %vm3011, %v6432, 0
      %v6487 = vsel %vm3011, %v6433, 0
      %v6490 = vsel %vm3011, %v6434, 0
      %v6493 = vsel %vm3060, %v6442, 0
      %6495 = vmatprep.subr.bf16.mxu0 0
      %6496 = vmatpush1.bf16.msra.mxu0 0
      %6497 = vmatprep.subr.bf16.mxu0 0
      %6498 = vmatpush1.bf16.msra.mxu0 0
      %6499 = vmatprep.subr.bf16.mxu0 0
      %6500 = vmatpush1.bf16.msra.mxu0 0
      %6501 = vmatprep.subr.bf16.mxu0 0
      %6502 = vmatpush1.bf16.msra.mxu0 0
      %6503 = vmatprep.subr.bf16.mxu0 0
      %6504 = vmatpush1.bf16.msra.mxu0 0
      %6505 = vmatprep.subr.bf16.mxu0 0
      %6506 = vmatpush1.bf16.msra.mxu0 0
      %6507 = vmatprep.subr.bf16.mxu0 0
      %6508 = vmatpush1.bf16.msra.mxu0 %v6493
      %6509 = vmatprep.subr.bf16.mxu0 0
      %6510 = vmatpush1.bf16.msra.mxu0 %v6441
      %6511 = vmatprep.subr.bf16.mxu0 0
      %6512 = vmatpush2.bf16.msra.mxu0 0
      %6513 = vmatprep.subr.bf16.mxu0 0
      %6514 = vmatpush2.bf16.msra.mxu0 0
      %6515 = vmatprep.subr.bf16.mxu0 0
      %6516 = vmatpush2.bf16.msra.mxu0 0
      %6517 = vmatprep.subr.bf16.mxu0 0
      %6518 = vmatpush2.bf16.msra.mxu0 0
      %6519 = vmatprep.subr.bf16.mxu0 0
      %6520 = vmatpush2.bf16.msra.mxu0 0
      %6521 = vmatprep.subr.bf16.mxu0 0
      %6522 = vmatpush2.bf16.msra.mxu0 0
      %6523 = vmatprep.subr.bf16.mxu0 0
      %6524 = vmatpush2.bf16.msra.mxu0 0
      %6525 = vmatprep.subr.bf16.mxu0 0
      %6526 = vmatpush2.bf16.msra.mxu0 0
      %6527 = vmatprep.mubr.bf16.mxu0 0
      %6528 = vmatmul.mubr.bf16.gmra.mxu0 %v6445
      %v6529 = vpop.f32.mrf.mxu0
      %v6530 = vadd.f32 0.0, %v6529
      %v6531 = vpop.f32.mrf.mxu0
      %v6532 = vpop.f32.mrf.mxu0
      %v6533 = vadd.f32 0.0, %v6532
      %v6534 = vpop.f32.mrf.mxu0
      %6535 = vmatprep.mubr.bf16.mxu0 0
      %6536 = vmatmul.mubr.bf16.gmra.mxu0 %v6448
      %v6537 = vpop.f32.mrf.mxu0
      %v6538 = vadd.f32 0.0, %v6537
      %v6539 = vpop.f32.mrf.mxu0
      %v6540 = vpop.f32.mrf.mxu0
      %v6541 = vadd.f32 0.0, %v6540
      %v6542 = vpop.f32.mrf.mxu0
      %6543 = vmatprep.mubr.bf16.mxu0 0
      %6544 = vmatmul.mubr.bf16.gmra.mxu0 %v6451
      %v6545 = vpop.f32.mrf.mxu0
      %v6546 = vadd.f32 0.0, %v6545
      %v6547 = vpop.f32.mrf.mxu0
      %v6548 = vpop.f32.mrf.mxu0
      %v6549 = vadd.f32 0.0, %v6548
      %v6550 = vpop.f32.mrf.mxu0
      %6551 = vmatprep.mubr.bf16.mxu0 0
      %6552 = vmatmul.mubr.bf16.gmra.mxu0 %v6454
      %v6553 = vpop.f32.mrf.mxu0
      %v6554 = vadd.f32 0.0, %v6553
      %v6555 = vpop.f32.mrf.mxu0
      %v6556 = vpop.f32.mrf.mxu0
      %v6557 = vadd.f32 0.0, %v6556
      %v6558 = vpop.f32.mrf.mxu0
      %6559 = vmatprep.mubr.bf16.mxu0 0
      %6560 = vmatmul.mubr.bf16.gmra.mxu0 %v6457
      %v6561 = vpop.f32.mrf.mxu0
      %v6562 = vadd.f32 0.0, %v6561
      %v6563 = vpop.f32.mrf.mxu0
      %v6564 = vpop.f32.mrf.mxu0
      %v6565 = vadd.f32 0.0, %v6564
      %v6566 = vpop.f32.mrf.mxu0
      %6567 = vmatprep.mubr.bf16.mxu0 0
      %6568 = vmatmul.mubr.bf16.gmra.mxu0 %v6460
      %v6569 = vpop.f32.mrf.mxu0
      %v6570 = vadd.f32 0.0, %v6569
      %v6571 = vpop.f32.mrf.mxu0
      %v6572 = vpop.f32.mrf.mxu0
      %v6573 = vadd.f32 0.0, %v6572
      %v6574 = vpop.f32.mrf.mxu0
      %6575 = vmatprep.mubr.bf16.mxu0 0
      %6576 = vmatmul.mubr.bf16.gmra.mxu0 %v6463
      %v6577 = vpop.f32.mrf.mxu0
      %v6578 = vadd.f32 0.0, %v6577
      %v6579 = vpop.f32.mrf.mxu0
      %v6580 = vpop.f32.mrf.mxu0
      %v6581 = vadd.f32 0.0, %v6580
      %v6582 = vpop.f32.mrf.mxu0
      %6583 = vmatprep.mubr.bf16.mxu0 0
      %6584 = vmatmul.mubr.bf16.gmra.mxu0 %v6466
      %v6585 = vpop.f32.mrf.mxu0
      %v6586 = vadd.f32 0.0, %v6585
      %v6587 = vpop.f32.mrf.mxu0
      %v6588 = vpop.f32.mrf.mxu0
      %v6589 = vadd.f32 0.0, %v6588
      %v6590 = vpop.f32.mrf.mxu0
      %6591 = vmatprep.mubr.bf16.mxu0 0
      %6592 = vmatmul.mubr.bf16.gmra.mxu0 %v6469
      %v6593 = vpop.f32.mrf.mxu0
      %v6594 = vadd.f32 0.0, %v6593
      %v6595 = vpop.f32.mrf.mxu0
      %v6596 = vpop.f32.mrf.mxu0
      %v6597 = vadd.f32 0.0, %v6596
      %v6598 = vpop.f32.mrf.mxu0
      %6599 = vmatprep.mubr.bf16.mxu0 0
      %6600 = vmatmul.mubr.bf16.gmra.mxu0 %v6472
      %v6601 = vpop.f32.mrf.mxu0
      %v6602 = vadd.f32 0.0, %v6601
      %v6603 = vpop.f32.mrf.mxu0
      %v6604 = vpop.f32.mrf.mxu0
      %v6605 = vadd.f32 0.0, %v6604
      %v6606 = vpop.f32.mrf.mxu0
      %6607 = vmatprep.mubr.bf16.mxu0 0
      %6608 = vmatmul.mubr.bf16.gmra.mxu0 %v6475
      %v6609 = vpop.f32.mrf.mxu0
      %v6610 = vadd.f32 0.0, %v6609
      %v6611 = vpop.f32.mrf.mxu0
      %v6612 = vpop.f32.mrf.mxu0
      %v6613 = vadd.f32 0.0, %v6612
      %v6614 = vpop.f32.mrf.mxu0
      %6615 = vmatprep.mubr.bf16.mxu0 0
      %6616 = vmatmul.mubr.bf16.gmra.mxu0 %v6478
      %v6617 = vpop.f32.mrf.mxu0
      %v6618 = vadd.f32 0.0, %v6617
      %v6619 = vpop.f32.mrf.mxu0
      %v6620 = vpop.f32.mrf.mxu0
      %v6621 = vadd.f32 0.0, %v6620
      %v6622 = vpop.f32.mrf.mxu0
      %6623 = vmatprep.mubr.bf16.mxu0 0
      %6624 = vmatmul.mubr.bf16.gmra.mxu0 %v6481
      %v6625 = vpop.f32.mrf.mxu0
      %v6626 = vadd.f32 0.0, %v6625
      %v6627 = vpop.f32.mrf.mxu0
      %v6628 = vpop.f32.mrf.mxu0
      %v6629 = vadd.f32 0.0, %v6628
      %v6630 = vpop.f32.mrf.mxu0
      %6631 = vmatprep.mubr.bf16.mxu0 0
      %6632 = vmatmul.mubr.bf16.gmra.mxu0 %v6484
      %v6633 = vpop.f32.mrf.mxu0
      %v6634 = vadd.f32 0.0, %v6633
      %v6635 = vpop.f32.mrf.mxu0
      %v6636 = vpop.f32.mrf.mxu0
      %v6637 = vadd.f32 0.0, %v6636
      %v6638 = vpop.f32.mrf.mxu0
      %6639 = vmatprep.mubr.bf16.mxu0 0
      %6640 = vmatmul.mubr.bf16.gmra.mxu0 %v6487
      %v6641 = vpop.f32.mrf.mxu0
      %v6642 = vadd.f32 0.0, %v6641
      %v6643 = vpop.f32.mrf.mxu0
      %v6644 = vpop.f32.mrf.mxu0
      %v6645 = vadd.f32 0.0, %v6644
      %v6646 = vpop.f32.mrf.mxu0
      %6647 = vmatprep.mubr.bf16.mxu0 0
      %6648 = vmatmul.mubr.bf16.gmra.mxu0 %v6490
      %v6649 = vpop.f32.mrf.mxu0
      %v6650 = vadd.f32 0.0, %v6649
      %v6651 = vpop.f32.mrf.mxu0
      %v6652 = vpop.f32.mrf.mxu0
      %v6653 = vadd.f32 0.0, %v6652
      %v6654 = vpop.f32.mrf.mxu0
      %6655 = vdwg.mxu0
      %v6656 = vadd.f32 %v5919, %v6530
      %v6657 = vadd.f32 %v5920, %v6533
      %v6658 = vadd.f32 %v5921, %v6538
      %v6659 = vadd.f32 %v5922, %v6541
      %v6660 = vadd.f32 %v5923, %v6546
      %v6661 = vadd.f32 %v5924, %v6549
      %v6662 = vadd.f32 %v5925, %v6554
      %v6663 = vadd.f32 %v5926, %v6557
      %v6664 = vadd.f32 %v5927, %v6562
      %v6665 = vadd.f32 %v5928, %v6565
      %v6666 = vadd.f32 %v5929, %v6570
      %v6667 = vadd.f32 %v5930, %v6573
      %v6668 = vadd.f32 %v5931, %v6578
      %v6669 = vadd.f32 %v5932, %v6581
      %v6670 = vadd.f32 %v5933, %v6586
      %v6671 = vadd.f32 %v5934, %v6589
      %v6672 = vadd.f32 %v5935, %v6594
      %v6673 = vadd.f32 %v5936, %v6597
      %v6674 = vadd.f32 %v5937, %v6602
      %v6675 = vadd.f32 %v5938, %v6605
      %v6676 = vadd.f32 %v5939, %v6610
      %v6677 = vadd.f32 %v5940, %v6613
      %v6678 = vadd.f32 %v5941, %v6618
      %v6679 = vadd.f32 %v5942, %v6621
      %v6680 = vadd.f32 %v5943, %v6626
      %v6681 = vadd.f32 %v5944, %v6629
      %v6682 = vadd.f32 %v5945, %v6634
      %v6683 = vadd.f32 %v5946, %v6637
      %v6684 = vadd.f32 %v5947, %v6642
      %v6685 = vadd.f32 %v5948, %v6645
      %v6686 = vadd.f32 %v5949, %v6650
      %v6687 = vadd.f32 %v5950, %v6653
      %v6688 = vld [vmem:[%s5581] sm:$0xe]
      %v6689 = vld [vmem:[%s5581 + $0xc] sm:$0xe]
      %v6690 = vld [vmem:[%s5581 + $0x18] sm:$0xe]
      %v6691 = vld [vmem:[%s5581 + $0x24] sm:$0xe]
      %v6692 = vld [vmem:[%s5581 + $0x30] sm:$0xe]
      %v6693 = vld [vmem:[%s5581 + $0x3c] sm:$0xe]
      %v6694 = vld [vmem:[%s5581 + $0x48] sm:$0xe]
      %v6695 = vld [vmem:[%s5581 + $0x54] sm:$0xe]
      %v6696 = vld [vmem:[%s5581 + $0x60] sm:$0xe]
      %v6697 = vld [vmem:[%s5581 + $0x6c] sm:$0xe]
      %v6698 = vld [vmem:[%s5581 + $0x78] sm:$0xe]
      %v6699 = vld [vmem:[%s5581 + $0x84] sm:$0xe]
      %v6700 = vld [vmem:[%s5581 + $0x90] sm:$0xe]
      %v6701 = vld [vmem:[%s5581 + $0x9c] sm:$0xe]
      %v6702 = vld [vmem:[%s5581 + $0xa8] sm:$0xe]
      %v6703 = vld [vmem:[%s5581 + $0xb4] sm:$0xe]
      %v6752 = vrot.slane %v6688, 5
      %v6753 = vrot.slane %v6752, 4
      %v6754 = vrot.slane %v5952, 5
      %v6755 = vsel %vm3576, %v6753, %v6754
      %v6756 = vrot.slane %v6754, 4
      %v6757 = vrot.slane %v5953, 5
      %v6758 = vsel %vm3576, %v6756, %v6757
      %v6759 = vrot.slane %v6689, 5
      %v6760 = vrot.slane %v6759, 4
      %v6761 = vrot.slane %v5955, 5
      %v6762 = vsel %vm3576, %v6760, %v6761
      %v6763 = vrot.slane %v6761, 4
      %v6764 = vrot.slane %v5956, 5
      %v6765 = vsel %vm3576, %v6763, %v6764
      %v6766 = vrot.slane %v6690, 5
      %v6767 = vrot.slane %v6766, 4
      %v6768 = vrot.slane %v5958, 5
      %v6769 = vsel %vm3576, %v6767, %v6768
      %v6770 = vrot.slane %v6768, 4
      %v6771 = vrot.slane %v5959, 5
      %v6772 = vsel %vm3576, %v6770, %v6771
      %v6773 = vrot.slane %v6691, 5
      %v6774 = vrot.slane %v6773, 4
      %v6775 = vrot.slane %v5961, 5
      %v6776 = vsel %vm3576, %v6774, %v6775
      %v6777 = vrot.slane %v6775, 4
      %v6778 = vrot.slane %v5962, 5
      %v6779 = vsel %vm3576, %v6777, %v6778
      %v6780 = vrot.slane %v6692, 5
      %v6781 = vrot.slane %v6780, 4
      %v6782 = vrot.slane %v5964, 5
      %v6783 = vsel %vm3576, %v6781, %v6782
      %v6784 = vrot.slane %v6782, 4
      %v6785 = vrot.slane %v5965, 5
      %v6786 = vsel %vm3576, %v6784, %v6785
      %v6787 = vrot.slane %v6693, 5
      %v6788 = vrot.slane %v6787, 4
      %v6789 = vrot.slane %v5967, 5
      %v6790 = vsel %vm3576, %v6788, %v6789
      %v6791 = vrot.slane %v6789, 4
      %v6792 = vrot.slane %v5968, 5
      %v6793 = vsel %vm3576, %v6791, %v6792
      %v6794 = vrot.slane %v6694, 5
      %v6795 = vrot.slane %v6794, 4
      %v6796 = vrot.slane %v5970, 5
      %v6797 = vsel %vm3576, %v6795, %v6796
      %v6798 = vrot.slane %v6796, 4
      %v6799 = vrot.slane %v5971, 5
      %v6800 = vsel %vm3576, %v6798, %v6799
      %v6801 = vrot.slane %v6695, 5
      %v6802 = vrot.slane %v6801, 4
      %v6803 = vrot.slane %v5973, 5
      %v6804 = vsel %vm3576, %v6802, %v6803
      %v6805 = vrot.slane %v6803, 4
      %v6806 = vrot.slane %v5974, 5
      %v6807 = vsel %vm3576, %v6805, %v6806
      %v6808 = vrot.slane %v6696, 5
      %v6809 = vrot.slane %v6808, 4
      %v6810 = vrot.slane %v5976, 5
      %v6811 = vsel %vm3576, %v6809, %v6810
      %v6812 = vrot.slane %v6810, 4
      %v6813 = vrot.slane %v5977, 5
      %v6814 = vsel %vm3576, %v6812, %v6813
      %v6815 = vrot.slane %v6697, 5
      %v6816 = vrot.slane %v6815, 4
      %v6817 = vrot.slane %v5979, 5
      %v6818 = vsel %vm3576, %v6816, %v6817
      %v6819 = vrot.slane %v6817, 4
      %v6820 = vrot.slane %v5980, 5
      %v6821 = vsel %vm3576, %v6819, %v6820
      %v6822 = vrot.slane %v6698, 5
      %v6823 = vrot.slane %v6822, 4
      %v6824 = vrot.slane %v5982, 5
      %v6825 = vsel %vm3576, %v6823, %v6824
      %v6826 = vrot.slane %v6824, 4
      %v6827 = vrot.slane %v5983, 5
      %v6828 = vsel %vm3576, %v6826, %v6827
      %v6829 = vrot.slane %v6699, 5
      %v6830 = vrot.slane %v6829, 4
      %v6831 = vrot.slane %v5985, 5
      %v6832 = vsel %vm3576, %v6830, %v6831
      %v6833 = vrot.slane %v6831, 4
      %v6834 = vrot.slane %v5986, 5
      %v6835 = vsel %vm3576, %v6833, %v6834
      %v6836 = vrot.slane %v6700, 5
      %v6837 = vrot.slane %v6836, 4
      %v6838 = vrot.slane %v5988, 5
      %v6839 = vsel %vm3576, %v6837, %v6838
      %v6840 = vrot.slane %v6838, 4
      %v6841 = vrot.slane %v5989, 5
      %v6842 = vsel %vm3576, %v6840, %v6841
      %v6843 = vrot.slane %v6701, 5
      %v6844 = vrot.slane %v6843, 4
      %v6845 = vrot.slane %v5991, 5
      %v6846 = vsel %vm3576, %v6844, %v6845
      %v6847 = vrot.slane %v6845, 4
      %v6848 = vrot.slane %v5992, 5
      %v6849 = vsel %vm3576, %v6847, %v6848
      %v6850 = vrot.slane %v6702, 5
      %v6851 = vrot.slane %v6850, 4
      %v6852 = vrot.slane %v5994, 5
      %v6853 = vsel %vm3576, %v6851, %v6852
      %v6854 = vrot.slane %v6852, 4
      %v6855 = vrot.slane %v5995, 5
      %v6856 = vsel %vm3576, %v6854, %v6855
      %v6857 = vrot.slane %v6703, 5
      %v6858 = vrot.slane %v6857, 4
      %v6859 = vrot.slane %v5997, 5
      %v6860 = vsel %vm3576, %v6858, %v6859
      %v6861 = vrot.slane %v6859, 4
      %v6862 = vrot.slane %v5998, 5
      %v6863 = vsel %vm3576, %v6861, %v6862
      %s6864 = scalar_lea.vmem %s5, 96
      %v6865 = vld [vmem:[%s6864] sm:$0xf]
      %v6866 = vld [vmem:[%s6864 + $0x4] sm:$0xf]
      %v6867 = vld [vmem:[%s6864 + $0x8] sm:$0xf]
      %v6868 = vunpack.c.l.b16 %v6755
      %v6869 = vunpack.c.l.b16 %v6758
      %v6870 = vunpack.c.l.b16 %v6762
      %v6871 = vunpack.c.l.b16 %v6765
      %v6872 = vunpack.c.l.b16 %v6769
      %v6873 = vunpack.c.l.b16 %v6772
      %v6874 = vunpack.c.l.b16 %v6776
      %v6875 = vunpack.c.l.b16 %v6779
      %v6876 = vunpack.c.l.b16 %v6783
      %v6877 = vunpack.c.l.b16 %v6786
      %v6878 = vunpack.c.l.b16 %v6790
      %v6879 = vunpack.c.l.b16 %v6793
      %v6880 = vunpack.c.l.b16 %v6797
      %v6881 = vunpack.c.l.b16 %v6800
      %v6882 = vunpack.c.l.b16 %v6804
      %v6883 = vunpack.c.l.b16 %v6807
      %v6884 = vunpack.c.l.b16 %v6811
      %v6885 = vunpack.c.l.b16 %v6814
      %v6886 = vunpack.c.l.b16 %v6818
      %v6887 = vunpack.c.l.b16 %v6821
      %v6888 = vunpack.c.l.b16 %v6825
      %v6889 = vunpack.c.l.b16 %v6828
      %v6890 = vunpack.c.l.b16 %v6832
      %v6891 = vunpack.c.l.b16 %v6835
      %v6892 = vunpack.c.l.b16 %v6839
      %v6893 = vunpack.c.l.b16 %v6842
      %v6894 = vunpack.c.l.b16 %v6846
      %v6895 = vunpack.c.l.b16 %v6849
      %v6896 = vunpack.c.l.b16 %v6853
      %v6897 = vunpack.c.l.b16 %v6856
      %v6898 = vunpack.c.l.b16 %v6860
      %v6899 = vunpack.c.l.b16 %v6863
      %v6900 = vpack.c.b16 %v6869, %v6868
      %v6901 = vpack.c.b16 %v6871, %v6870
      %v6902 = vpack.c.b16 %v6873, %v6872
      %v6903 = vpack.c.b16 %v6875, %v6874
      %v6904 = vpack.c.b16 %v6877, %v6876
      %v6905 = vpack.c.b16 %v6879, %v6878
      %v6906 = vpack.c.b16 %v6881, %v6880
      %v6907 = vpack.c.b16 %v6883, %v6882
      %v6908 = vpack.c.b16 %v6885, %v6884
      %v6909 = vpack.c.b16 %v6887, %v6886
      %v6910 = vpack.c.b16 %v6889, %v6888
      %v6911 = vpack.c.b16 %v6891, %v6890
      %v6912 = vpack.c.b16 %v6893, %v6892
      %v6913 = vpack.c.b16 %v6895, %v6894
      %v6914 = vpack.c.b16 %v6897, %v6896
      %v6915 = vpack.c.b16 %v6899, %v6898
      %v6919 = vunpack.c.l.b16 %v6865
      %v6920 = vunpack.c.l.b16 %v6866
      %v6921 = vunpack.c.l.b16 %v6867
      %v6922 = vpack.c.b16 %v6920, %v6919
      %v6923 = vpack.c.b16 %v6921, %v6921
      %v6926 = vsel %vm3011, %v6900, 0
      %v6929 = vsel %vm3011, %v6901, 0
      %v6932 = vsel %vm3011, %v6902, 0
      %v6935 = vsel %vm3011, %v6903, 0
      %v6938 = vsel %vm3011, %v6904, 0
      %v6941 = vsel %vm3011, %v6905, 0
      %v6944 = vsel %vm3011, %v6906, 0
      %v6947 = vsel %vm3011, %v6907, 0
      %v6950 = vsel %vm3011, %v6908, 0
      %v6953 = vsel %vm3011, %v6909, 0
      %v6956 = vsel %vm3011, %v6910, 0
      %v6959 = vsel %vm3011, %v6911, 0
      %v6962 = vsel %vm3011, %v6912, 0
      %v6965 = vsel %vm3011, %v6913, 0
      %v6968 = vsel %vm3011, %v6914, 0
      %v6971 = vsel %vm3011, %v6915, 0
      %v6974 = vsel %vm3060, %v6923, 0
      %6976 = vmatprep.subr.bf16.mxu0 0
      %6977 = vmatpush1.bf16.msra.mxu0 0
      %6978 = vmatprep.subr.bf16.mxu0 0
      %6979 = vmatpush1.bf16.msra.mxu0 0
      %6980 = vmatprep.subr.bf16.mxu0 0
      %6981 = vmatpush1.bf16.msra.mxu0 0
      %6982 = vmatprep.subr.bf16.mxu0 0
      %6983 = vmatpush1.bf16.msra.mxu0 0
      %6984 = vmatprep.subr.bf16.mxu0 0
      %6985 = vmatpush1.bf16.msra.mxu0 0
      %6986 = vmatprep.subr.bf16.mxu0 0
      %6987 = vmatpush1.bf16.msra.mxu0 0
      %6988 = vmatprep.subr.bf16.mxu0 0
      %6989 = vmatpush1.bf16.msra.mxu0 %v6974
      %6990 = vmatprep.subr.bf16.mxu0 0
      %6991 = vmatpush1.bf16.msra.mxu0 %v6922
      %6992 = vmatprep.subr.bf16.mxu0 0
      %6993 = vmatpush2.bf16.msra.mxu0 0
      %6994 = vmatprep.subr.bf16.mxu0 0
      %6995 = vmatpush2.bf16.msra.mxu0 0
      %6996 = vmatprep.subr.bf16.mxu0 0
      %6997 = vmatpush2.bf16.msra.mxu0 0
      %6998 = vmatprep.subr.bf16.mxu0 0
      %6999 = vmatpush2.bf16.msra.mxu0 0
      %7000 = vmatprep.subr.bf16.mxu0 0
      %7001 = vmatpush2.bf16.msra.mxu0 0
      %7002 = vmatprep.subr.bf16.mxu0 0
      %7003 = vmatpush2.bf16.msra.mxu0 0
      %7004 = vmatprep.subr.bf16.mxu0 0
      %7005 = vmatpush2.bf16.msra.mxu0 0
      %7006 = vmatprep.subr.bf16.mxu0 0
      %7007 = vmatpush2.bf16.msra.mxu0 0
      %7008 = vmatprep.mubr.bf16.mxu0 0
      %7009 = vmatmul.mubr.bf16.gmra.mxu0 %v6926
      %v7010 = vpop.f32.mrf.mxu0
      %v7011 = vadd.f32 0.0, %v7010
      %v7012 = vpop.f32.mrf.mxu0
      %v7013 = vpop.f32.mrf.mxu0
      %v7014 = vadd.f32 0.0, %v7013
      %v7015 = vpop.f32.mrf.mxu0
      %7016 = vmatprep.mubr.bf16.mxu0 0
      %7017 = vmatmul.mubr.bf16.gmra.mxu0 %v6929
      %v7018 = vpop.f32.mrf.mxu0
      %v7019 = vadd.f32 0.0, %v7018
      %v7020 = vpop.f32.mrf.mxu0
      %v7021 = vpop.f32.mrf.mxu0
      %v7022 = vadd.f32 0.0, %v7021
      %v7023 = vpop.f32.mrf.mxu0
      %7024 = vmatprep.mubr.bf16.mxu0 0
      %7025 = vmatmul.mubr.bf16.gmra.mxu0 %v6932
      %v7026 = vpop.f32.mrf.mxu0
      %v7027 = vadd.f32 0.0, %v7026
      %v7028 = vpop.f32.mrf.mxu0
      %v7029 = vpop.f32.mrf.mxu0
      %v7030 = vadd.f32 0.0, %v7029
      %v7031 = vpop.f32.mrf.mxu0
      %7032 = vmatprep.mubr.bf16.mxu0 0
      %7033 = vmatmul.mubr.bf16.gmra.mxu0 %v6935
      %v7034 = vpop.f32.mrf.mxu0
      %v7035 = vadd.f32 0.0, %v7034
      %v7036 = vpop.f32.mrf.mxu0
      %v7037 = vpop.f32.mrf.mxu0
      %v7038 = vadd.f32 0.0, %v7037
      %v7039 = vpop.f32.mrf.mxu0
      %7040 = vmatprep.mubr.bf16.mxu0 0
      %7041 = vmatmul.mubr.bf16.gmra.mxu0 %v6938
      %v7042 = vpop.f32.mrf.mxu0
      %v7043 = vadd.f32 0.0, %v7042
      %v7044 = vpop.f32.mrf.mxu0
      %v7045 = vpop.f32.mrf.mxu0
      %v7046 = vadd.f32 0.0, %v7045
      %v7047 = vpop.f32.mrf.mxu0
      %7048 = vmatprep.mubr.bf16.mxu0 0
      %7049 = vmatmul.mubr.bf16.gmra.mxu0 %v6941
      %v7050 = vpop.f32.mrf.mxu0
      %v7051 = vadd.f32 0.0, %v7050
      %v7052 = vpop.f32.mrf.mxu0
      %v7053 = vpop.f32.mrf.mxu0
      %v7054 = vadd.f32 0.0, %v7053
      %v7055 = vpop.f32.mrf.mxu0
      %7056 = vmatprep.mubr.bf16.mxu0 0
      %7057 = vmatmul.mubr.bf16.gmra.mxu0 %v6944
      %v7058 = vpop.f32.mrf.mxu0
      %v7059 = vadd.f32 0.0, %v7058
      %v7060 = vpop.f32.mrf.mxu0
      %v7061 = vpop.f32.mrf.mxu0
      %v7062 = vadd.f32 0.0, %v7061
      %v7063 = vpop.f32.mrf.mxu0
      %7064 = vmatprep.mubr.bf16.mxu0 0
      %7065 = vmatmul.mubr.bf16.gmra.mxu0 %v6947
      %v7066 = vpop.f32.mrf.mxu0
      %v7067 = vadd.f32 0.0, %v7066
      %v7068 = vpop.f32.mrf.mxu0
      %v7069 = vpop.f32.mrf.mxu0
      %v7070 = vadd.f32 0.0, %v7069
      %v7071 = vpop.f32.mrf.mxu0
      %7072 = vmatprep.mubr.bf16.mxu0 0
      %7073 = vmatmul.mubr.bf16.gmra.mxu0 %v6950
      %v7074 = vpop.f32.mrf.mxu0
      %v7075 = vadd.f32 0.0, %v7074
      %v7076 = vpop.f32.mrf.mxu0
      %v7077 = vpop.f32.mrf.mxu0
      %v7078 = vadd.f32 0.0, %v7077
      %v7079 = vpop.f32.mrf.mxu0
      %7080 = vmatprep.mubr.bf16.mxu0 0
      %7081 = vmatmul.mubr.bf16.gmra.mxu0 %v6953
      %v7082 = vpop.f32.mrf.mxu0
      %v7083 = vadd.f32 0.0, %v7082
      %v7084 = vpop.f32.mrf.mxu0
      %v7085 = vpop.f32.mrf.mxu0
      %v7086 = vadd.f32 0.0, %v7085
      %v7087 = vpop.f32.mrf.mxu0
      %7088 = vmatprep.mubr.bf16.mxu0 0
      %7089 = vmatmul.mubr.bf16.gmra.mxu0 %v6956
      %v7090 = vpop.f32.mrf.mxu0
      %v7091 = vadd.f32 0.0, %v7090
      %v7092 = vpop.f32.mrf.mxu0
      %v7093 = vpop.f32.mrf.mxu0
      %v7094 = vadd.f32 0.0, %v7093
      %v7095 = vpop.f32.mrf.mxu0
      %7096 = vmatprep.mubr.bf16.mxu0 0
      %7097 = vmatmul.mubr.bf16.gmra.mxu0 %v6959
      %v7098 = vpop.f32.mrf.mxu0
      %v7099 = vadd.f32 0.0, %v7098
      %v7100 = vpop.f32.mrf.mxu0
      %v7101 = vpop.f32.mrf.mxu0
      %v7102 = vadd.f32 0.0, %v7101
      %v7103 = vpop.f32.mrf.mxu0
      %7104 = vmatprep.mubr.bf16.mxu0 0
      %7105 = vmatmul.mubr.bf16.gmra.mxu0 %v6962
      %v7106 = vpop.f32.mrf.mxu0
      %v7107 = vadd.f32 0.0, %v7106
      %v7108 = vpop.f32.mrf.mxu0
      %v7109 = vpop.f32.mrf.mxu0
      %v7110 = vadd.f32 0.0, %v7109
      %v7111 = vpop.f32.mrf.mxu0
      %7112 = vmatprep.mubr.bf16.mxu0 0
      %7113 = vmatmul.mubr.bf16.gmra.mxu0 %v6965
      %v7114 = vpop.f32.mrf.mxu0
      %v7115 = vadd.f32 0.0, %v7114
      %v7116 = vpop.f32.mrf.mxu0
      %v7117 = vpop.f32.mrf.mxu0
      %v7118 = vadd.f32 0.0, %v7117
      %v7119 = vpop.f32.mrf.mxu0
      %7120 = vmatprep.mubr.bf16.mxu0 0
      %7121 = vmatmul.mubr.bf16.gmra.mxu0 %v6968
      %v7122 = vpop.f32.mrf.mxu0
      %v7123 = vadd.f32 0.0, %v7122
      %v7124 = vpop.f32.mrf.mxu0
      %v7125 = vpop.f32.mrf.mxu0
      %v7126 = vadd.f32 0.0, %v7125
      %v7127 = vpop.f32.mrf.mxu0
      %7128 = vmatprep.mubr.bf16.mxu0 0
      %7129 = vmatmul.mubr.bf16.gmra.mxu0 %v6971
      %v7130 = vpop.f32.mrf.mxu0
      %v7131 = vadd.f32 0.0, %v7130
      %v7132 = vpop.f32.mrf.mxu0
      %v7133 = vpop.f32.mrf.mxu0
      %v7134 = vadd.f32 0.0, %v7133
      %v7135 = vpop.f32.mrf.mxu0
      %7136 = vdwg.mxu0
      %v7137 = vadd.f32 %v6656, %v7011
      %v7138 = vadd.f32 %v6657, %v7014
      %v7139 = vadd.f32 %v6658, %v7019
      %v7140 = vadd.f32 %v6659, %v7022
      %v7141 = vadd.f32 %v6660, %v7027
      %v7142 = vadd.f32 %v6661, %v7030
      %v7143 = vadd.f32 %v6662, %v7035
      %v7144 = vadd.f32 %v6663, %v7038
      %v7145 = vadd.f32 %v6664, %v7043
      %v7146 = vadd.f32 %v6665, %v7046
      %v7147 = vadd.f32 %v6666, %v7051
      %v7148 = vadd.f32 %v6667, %v7054
      %v7149 = vadd.f32 %v6668, %v7059
      %v7150 = vadd.f32 %v6669, %v7062
      %v7151 = vadd.f32 %v6670, %v7067
      %v7152 = vadd.f32 %v6671, %v7070
      %v7153 = vadd.f32 %v6672, %v7075
      %v7154 = vadd.f32 %v6673, %v7078
      %v7155 = vadd.f32 %v6674, %v7083
      %v7156 = vadd.f32 %v6675, %v7086
      %v7157 = vadd.f32 %v6676, %v7091
      %v7158 = vadd.f32 %v6677, %v7094
      %v7159 = vadd.f32 %v6678, %v7099
      %v7160 = vadd.f32 %v6679, %v7102
      %v7161 = vadd.f32 %v6680, %v7107
      %v7162 = vadd.f32 %v6681, %v7110
      %v7163 = vadd.f32 %v6682, %v7115
      %v7164 = vadd.f32 %v6683, %v7118
      %v7165 = vadd.f32 %v6684, %v7123
      %v7166 = vadd.f32 %v6685, %v7126
      %v7167 = vadd.f32 %v6686, %v7131
      %v7168 = vadd.f32 %v6687, %v7134
      %v7169 = vld [vmem:[%s6] sm:$0x1]
      %v7171 = vlaneseq
      %v7172 = vshrl.u32 %v7171, 7
      %v7173 = vsub.s32 0, %v7172
      %v7174 = vrot.slane %v7169, %v7173
      %v7176 = vadd.f32 %v7137, %v7174
      %v7177 = vadd.f32 %v7138, %v7174
      %v7178 = vadd.f32 %v7139, %v7174
      %v7179 = vadd.f32 %v7140, %v7174
      %v7180 = vadd.f32 %v7141, %v7174
      %v7181 = vadd.f32 %v7142, %v7174
      %v7182 = vadd.f32 %v7143, %v7174
      %v7183 = vadd.f32 %v7144, %v7174
      %v7184 = vadd.f32 %v7145, %v7174
      %v7185 = vadd.f32 %v7146, %v7174
      %v7186 = vadd.f32 %v7147, %v7174
      %v7187 = vadd.f32 %v7148, %v7174
      %v7188 = vadd.f32 %v7149, %v7174
      %v7189 = vadd.f32 %v7150, %v7174
      %v7190 = vadd.f32 %v7151, %v7174
      %v7191 = vadd.f32 %v7152, %v7174
      %v7192 = vadd.f32 %v7153, %v7174
      %v7193 = vadd.f32 %v7154, %v7174
      %v7194 = vadd.f32 %v7155, %v7174
      %v7195 = vadd.f32 %v7156, %v7174
      %v7196 = vadd.f32 %v7157, %v7174
      %v7197 = vadd.f32 %v7158, %v7174
      %v7198 = vadd.f32 %v7159, %v7174
      %v7199 = vadd.f32 %v7160, %v7174
      %v7200 = vadd.f32 %v7161, %v7174
      %v7201 = vadd.f32 %v7162, %v7174
      %v7202 = vadd.f32 %v7163, %v7174
      %v7203 = vadd.f32 %v7164, %v7174
      %v7204 = vadd.f32 %v7165, %v7174
      %v7205 = vadd.f32 %v7166, %v7174
      %v7206 = vadd.f32 %v7167, %v7174
      %v7207 = vadd.f32 %v7168, %v7174
      %v7208 = vmax.f32 %v7176, 0.0
      %v7209 = vmax.f32 %v7177, 0.0
      %v7210 = vmax.f32 %v7178, 0.0
      %v7211 = vmax.f32 %v7179, 0.0
      %v7212 = vmax.f32 %v7180, 0.0
      %v7213 = vmax.f32 %v7181, 0.0
      %v7214 = vmax.f32 %v7182, 0.0
      %v7215 = vmax.f32 %v7183, 0.0
      %v7216 = vmax.f32 %v7184, 0.0
      %v7217 = vmax.f32 %v7185, 0.0
      %v7218 = vmax.f32 %v7186, 0.0
      %v7219 = vmax.f32 %v7187, 0.0
      %v7220 = vmax.f32 %v7188, 0.0
      %v7221 = vmax.f32 %v7189, 0.0
      %v7222 = vmax.f32 %v7190, 0.0
      %v7223 = vmax.f32 %v7191, 0.0
      %v7224 = vmax.f32 %v7192, 0.0
      %v7225 = vmax.f32 %v7193, 0.0
      %v7226 = vmax.f32 %v7194, 0.0
      %v7227 = vmax.f32 %v7195, 0.0
      %v7228 = vmax.f32 %v7196, 0.0
      %v7229 = vmax.f32 %v7197, 0.0
      %v7230 = vmax.f32 %v7198, 0.0
      %v7231 = vmax.f32 %v7199, 0.0
      %v7232 = vmax.f32 %v7200, 0.0
      %v7233 = vmax.f32 %v7201, 0.0
      %v7234 = vmax.f32 %v7202, 0.0
      %v7235 = vmax.f32 %v7203, 0.0
      %v7236 = vmax.f32 %v7204, 0.0
      %v7237 = vmax.f32 %v7205, 0.0
      %v7238 = vmax.f32 %v7206, 0.0
      %v7239 = vmax.f32 %v7207, 0.0
      %v7240 = vpack.c.bf16 %v7209, %v7208
      %v7241 = vpack.c.bf16 %v7211, %v7210
      %v7242 = vpack.c.bf16 %v7213, %v7212
      %v7243 = vpack.c.bf16 %v7215, %v7214
      %v7244 = vpack.c.bf16 %v7217, %v7216
      %v7245 = vpack.c.bf16 %v7219, %v7218
      %v7246 = vpack.c.bf16 %v7221, %v7220
      %v7247 = vpack.c.bf16 %v7223, %v7222
      %v7248 = vpack.c.bf16 %v7225, %v7224
      %v7249 = vpack.c.bf16 %v7227, %v7226
      %v7250 = vpack.c.bf16 %v7229, %v7228
      %v7251 = vpack.c.bf16 %v7231, %v7230
      %v7252 = vpack.c.bf16 %v7233, %v7232
      %v7253 = vpack.c.bf16 %v7235, %v7234
      %v7254 = vpack.c.bf16 %v7237, %v7236
      %v7255 = vpack.c.bf16 %v7239, %v7238
      %v7272 = vunpack.c.l.b16 %v7240
      %v7273 = vunpack.c.h.b16 %v7240
      %v7274 = vunpack.c.l.b16 %v7241
      %v7275 = vunpack.c.h.b16 %v7241
      %v7276 = vunpack.c.l.b16 %v7242
      %v7277 = vunpack.c.h.b16 %v7242
      %v7278 = vunpack.c.l.b16 %v7243
      %v7279 = vunpack.c.h.b16 %v7243
      %v7280 = vunpack.c.l.b16 %v7244
      %v7281 = vunpack.c.h.b16 %v7244
      %v7282 = vunpack.c.l.b16 %v7245
      %v7283 = vunpack.c.h.b16 %v7245
      %v7284 = vunpack.c.l.b16 %v7246
      %v7285 = vunpack.c.h.b16 %v7246
      %v7286 = vunpack.c.l.b16 %v7247
      %v7287 = vunpack.c.h.b16 %v7247
      %v7288 = vunpack.c.l.b16 %v7248
      %v7289 = vunpack.c.h.b16 %v7248
      %v7290 = vunpack.c.l.b16 %v7249
      %v7291 = vunpack.c.h.b16 %v7249
      %v7292 = vunpack.c.l.b16 %v7250
      %v7293 = vunpack.c.h.b16 %v7250
      %v7294 = vunpack.c.l.b16 %v7251
      %v7295 = vunpack.c.h.b16 %v7251
      %v7296 = vunpack.c.l.b16 %v7252
      %v7297 = vunpack.c.h.b16 %v7252
      %v7298 = vunpack.c.l.b16 %v7253
      %v7299 = vunpack.c.h.b16 %v7253
      %v7300 = vunpack.c.l.b16 %v7254
      %v7301 = vunpack.c.h.b16 %v7254
      %v7302 = vunpack.c.l.b16 %v7255
      %v7303 = vunpack.c.h.b16 %v7255
      %v7304 = vpack.c.b16 %v7272, %v7272
      %v7305 = vpack.c.b16 %v7273, %v7273
      %v7306 = vpack.c.b16 %v7274, %v7274
      %v7307 = vpack.c.b16 %v7275, %v7275
      %v7308 = vpack.c.b16 %v7276, %v7276
      %v7309 = vpack.c.b16 %v7277, %v7277
      %v7310 = vpack.c.b16 %v7278, %v7278
      %v7311 = vpack.c.b16 %v7279, %v7279
      %v7312 = vpack.c.b16 %v7280, %v7280
      %v7313 = vpack.c.b16 %v7281, %v7281
      %v7314 = vpack.c.b16 %v7282, %v7282
      %v7315 = vpack.c.b16 %v7283, %v7283
      %v7316 = vpack.c.b16 %v7284, %v7284
      %v7317 = vpack.c.b16 %v7285, %v7285
      %v7318 = vpack.c.b16 %v7286, %v7286
      %v7319 = vpack.c.b16 %v7287, %v7287
      %v7320 = vpack.c.b16 %v7288, %v7288
      %v7321 = vpack.c.b16 %v7289, %v7289
      %v7322 = vpack.c.b16 %v7290, %v7290
      %v7323 = vpack.c.b16 %v7291, %v7291
      %v7324 = vpack.c.b16 %v7292, %v7292
      %v7325 = vpack.c.b16 %v7293, %v7293
      %v7326 = vpack.c.b16 %v7294, %v7294
      %v7327 = vpack.c.b16 %v7295, %v7295
      %v7328 = vpack.c.b16 %v7296, %v7296
      %v7329 = vpack.c.b16 %v7297, %v7297
      %v7330 = vpack.c.b16 %v7298, %v7298
      %v7331 = vpack.c.b16 %v7299, %v7299
      %v7332 = vpack.c.b16 %v7300, %v7300
      %v7333 = vpack.c.b16 %v7301, %v7301
      %v7334 = vpack.c.b16 %v7302, %v7302
      %v7335 = vpack.c.b16 %v7303, %v7303
      %v7337 = vshrl.u32 %v7304, 16
      %v7339 = vrot.slane %v7337, 7
      %v7340 = vshll.u32 %v7304, 16
      %v7342 = vor.u32 %v7339, %v7340
      %v7343 = vrot.slane %v7339, 4
      %v7345 = vshrl.u32 %v7305, 16
      %v7347 = vrot.slane %v7345, 7
      %v7348 = vshll.u32 %v7305, 16
      %v7350 = vor.u32 %v7347, %v7348
      %v7351 = vsel %vm1445, %v7343, %v7350
      %v7352 = vrot.slane %v7347, 4
      %v7354 = vshrl.u32 %v7306, 16
      %v7356 = vrot.slane %v7354, 7
      %v7357 = vshll.u32 %v7306, 16
      %v7359 = vor.u32 %v7356, %v7357
      %v7360 = vrot.slane %v7356, 4
      %v7362 = vshrl.u32 %v7307, 16
      %v7364 = vrot.slane %v7362, 7
      %v7365 = vshll.u32 %v7307, 16
      %v7367 = vor.u32 %v7364, %v7365
      %v7368 = vsel %vm1445, %v7360, %v7367
      %v7369 = vrot.slane %v7364, 4
      %v7371 = vshrl.u32 %v7308, 16
      %v7373 = vrot.slane %v7371, 7
      %v7374 = vshll.u32 %v7308, 16
      %v7376 = vor.u32 %v7373, %v7374
      %v7377 = vrot.slane %v7373, 4
      %v7379 = vshrl.u32 %v7309, 16
      %v7381 = vrot.slane %v7379, 7
      %v7382 = vshll.u32 %v7309, 16
      %v7384 = vor.u32 %v7381, %v7382
      %v7385 = vsel %vm1445, %v7377, %v7384
      %v7386 = vrot.slane %v7381, 4
      %v7388 = vshrl.u32 %v7310, 16
      %v7390 = vrot.slane %v7388, 7
      %v7391 = vshll.u32 %v7310, 16
      %v7393 = vor.u32 %v7390, %v7391
      %v7394 = vrot.slane %v7390, 4
      %v7396 = vshrl.u32 %v7311, 16
      %v7398 = vrot.slane %v7396, 7
      %v7399 = vshll.u32 %v7311, 16
      %v7401 = vor.u32 %v7398, %v7399
      %v7402 = vsel %vm1445, %v7394, %v7401
      %v7403 = vrot.slane %v7398, 4
      %v7405 = vshrl.u32 %v7312, 16
      %v7407 = vrot.slane %v7405, 7
      %v7408 = vshll.u32 %v7312, 16
      %v7410 = vor.u32 %v7407, %v7408
      %v7411 = vrot.slane %v7407, 4
      %v7413 = vshrl.u32 %v7313, 16
      %v7415 = vrot.slane %v7413, 7
      %v7416 = vshll.u32 %v7313, 16
      %v7418 = vor.u32 %v7415, %v7416
      %v7419 = vsel %vm1445, %v7411, %v7418
      %v7420 = vrot.slane %v7415, 4
      %v7422 = vshrl.u32 %v7314, 16
      %v7424 = vrot.slane %v7422, 7
      %v7425 = vshll.u32 %v7314, 16
      %v7427 = vor.u32 %v7424, %v7425
      %v7428 = vrot.slane %v7424, 4
      %v7430 = vshrl.u32 %v7315, 16
      %v7432 = vrot.slane %v7430, 7
      %v7433 = vshll.u32 %v7315, 16
      %v7435 = vor.u32 %v7432, %v7433
      %v7436 = vsel %vm1445, %v7428, %v7435
      %v7437 = vrot.slane %v7432, 4
      %v7439 = vshrl.u32 %v7316, 16
      %v7441 = vrot.slane %v7439, 7
      %v7442 = vshll.u32 %v7316, 16
      %v7444 = vor.u32 %v7441, %v7442
      %v7445 = vrot.slane %v7441, 4
      %v7447 = vshrl.u32 %v7317, 16
      %v7449 = vrot.slane %v7447, 7
      %v7450 = vshll.u32 %v7317, 16
      %v7452 = vor.u32 %v7449, %v7450
      %v7453 = vsel %vm1445, %v7445, %v7452
      %v7454 = vrot.slane %v7449, 4
      %v7456 = vshrl.u32 %v7318, 16
      %v7458 = vrot.slane %v7456, 7
      %v7459 = vshll.u32 %v7318, 16
      %v7461 = vor.u32 %v7458, %v7459
      %v7462 = vrot.slane %v7458, 4
      %v7464 = vshrl.u32 %v7319, 16
      %v7466 = vrot.slane %v7464, 7
      %v7467 = vshll.u32 %v7319, 16
      %v7469 = vor.u32 %v7466, %v7467
      %v7470 = vsel %vm1445, %v7462, %v7469
      %v7471 = vrot.slane %v7466, 4
      %v7473 = vshrl.u32 %v7320, 16
      %v7475 = vrot.slane %v7473, 7
      %v7476 = vshll.u32 %v7320, 16
      %v7478 = vor.u32 %v7475, %v7476
      %v7479 = vrot.slane %v7475, 4
      %v7481 = vshrl.u32 %v7321, 16
      %v7483 = vrot.slane %v7481, 7
      %v7484 = vshll.u32 %v7321, 16
      %v7486 = vor.u32 %v7483, %v7484
      %v7487 = vsel %vm1445, %v7479, %v7486
      %v7488 = vrot.slane %v7483, 4
      %v7490 = vshrl.u32 %v7322, 16
      %v7492 = vrot.slane %v7490, 7
      %v7493 = vshll.u32 %v7322, 16
      %v7495 = vor.u32 %v7492, %v7493
      %v7496 = vrot.slane %v7492, 4
      %v7498 = vshrl.u32 %v7323, 16
      %v7500 = vrot.slane %v7498, 7
      %v7501 = vshll.u32 %v7323, 16
      %v7503 = vor.u32 %v7500, %v7501
      %v7504 = vsel %vm1445, %v7496, %v7503
      %v7505 = vrot.slane %v7500, 4
      %v7507 = vshrl.u32 %v7324, 16
      %v7509 = vrot.slane %v7507, 7
      %v7510 = vshll.u32 %v7324, 16
      %v7512 = vor.u32 %v7509, %v7510
      %v7513 = vrot.slane %v7509, 4
      %v7515 = vshrl.u32 %v7325, 16
      %v7517 = vrot.slane %v7515, 7
      %v7518 = vshll.u32 %v7325, 16
      %v7520 = vor.u32 %v7517, %v7518
      %v7521 = vsel %vm1445, %v7513, %v7520
      %v7522 = vrot.slane %v7517, 4
      %v7524 = vshrl.u32 %v7326, 16
      %v7526 = vrot.slane %v7524, 7
      %v7527 = vshll.u32 %v7326, 16
      %v7529 = vor.u32 %v7526, %v7527
      %v7530 = vrot.slane %v7526, 4
      %v7532 = vshrl.u32 %v7327, 16
      %v7534 = vrot.slane %v7532, 7
      %v7535 = vshll.u32 %v7327, 16
      %v7537 = vor.u32 %v7534, %v7535
      %v7538 = vsel %vm1445, %v7530, %v7537
      %v7539 = vrot.slane %v7534, 4
      %v7541 = vshrl.u32 %v7328, 16
      %v7543 = vrot.slane %v7541, 7
      %v7544 = vshll.u32 %v7328, 16
      %v7546 = vor.u32 %v7543, %v7544
      %v7547 = vrot.slane %v7543, 4
      %v7549 = vshrl.u32 %v7329, 16
      %v7551 = vrot.slane %v7549, 7
      %v7552 = vshll.u32 %v7329, 16
      %v7554 = vor.u32 %v7551, %v7552
      %v7555 = vsel %vm1445, %v7547, %v7554
      %v7556 = vrot.slane %v7551, 4
      %v7558 = vshrl.u32 %v7330, 16
      %v7560 = vrot.slane %v7558, 7
      %v7561 = vshll.u32 %v7330, 16
      %v7563 = vor.u32 %v7560, %v7561
      %v7564 = vrot.slane %v7560, 4
      %v7566 = vshrl.u32 %v7331, 16
      %v7568 = vrot.slane %v7566, 7
      %v7569 = vshll.u32 %v7331, 16
      %v7571 = vor.u32 %v7568, %v7569
      %v7572 = vsel %vm1445, %v7564, %v7571
      %v7573 = vrot.slane %v7568, 4
      %v7575 = vshrl.u32 %v7332, 16
      %v7577 = vrot.slane %v7575, 7
      %v7578 = vshll.u32 %v7332, 16
      %v7580 = vor.u32 %v7577, %v7578
      %v7581 = vrot.slane %v7577, 4
      %v7583 = vshrl.u32 %v7333, 16
      %v7585 = vrot.slane %v7583, 7
      %v7586 = vshll.u32 %v7333, 16
      %v7588 = vor.u32 %v7585, %v7586
      %v7589 = vsel %vm1445, %v7581, %v7588
      %v7590 = vrot.slane %v7585, 4
      %v7592 = vshrl.u32 %v7334, 16
      %v7594 = vrot.slane %v7592, 7
      %v7595 = vshll.u32 %v7334, 16
      %v7597 = vor.u32 %v7594, %v7595
      %v7598 = vrot.slane %v7594, 4
      %v7600 = vshrl.u32 %v7335, 16
      %v7602 = vrot.slane %v7600, 7
      %v7603 = vshll.u32 %v7335, 16
      %v7605 = vor.u32 %v7602, %v7603
      %v7606 = vsel %vm1445, %v7598, %v7605
      %v7607 = vrot.slane %v7602, 4
      %vm7656 = vcmask 257024
      %vm7657 = vmand %vm7656, %vm469
      %v7658 = vld [vmem:[%s528] sm:$0xf]
      %v7659 = vsel %vm7657, %v7342, %v7658
      %7660 = vst [vmem:[%s528] sm:$0xf] %v7659
      %7661 = vst.msk [vmem:[%s528 + $0x4] sm:$0xf] %vm519, %v7351
      %v7662 = vld [vmem:[%s528 + $0x8] sm:$0x1]
      %v7663 = vsel %vm530, %v7352, %v7662
      %7664 = vst [vmem:[%s528 + $0x8] sm:$0x1] %v7663
      %v7665 = vld [vmem:[%s528 + $0xc] sm:$0xf]
      %v7666 = vsel %vm7657, %v7359, %v7665
      %7667 = vst [vmem:[%s528 + $0xc] sm:$0xf] %v7666
      %7668 = vst.msk [vmem:[%s528 + $0x10] sm:$0xf] %vm519, %v7368
      %v7669 = vld [vmem:[%s528 + $0x14] sm:$0x1]
      %v7670 = vsel %vm530, %v7369, %v7669
      %7671 = vst [vmem:[%s528 + $0x14] sm:$0x1] %v7670
      %v7672 = vld [vmem:[%s528 + $0x18] sm:$0xf]
      %v7673 = vsel %vm7657, %v7376, %v7672
      %7674 = vst [vmem:[%s528 + $0x18] sm:$0xf] %v7673
      %7675 = vst.msk [vmem:[%s528 + $0x1c] sm:$0xf] %vm519, %v7385
      %v7676 = vld [vmem:[%s528 + $0x20] sm:$0x1]
      %v7677 = vsel %vm530, %v7386, %v7676
      %7678 = vst [vmem:[%s528 + $0x20] sm:$0x1] %v7677
      %v7679 = vld [vmem:[%s528 + $0x24] sm:$0xf]
      %v7680 = vsel %vm7657, %v7393, %v7679
      %7681 = vst [vmem:[%s528 + $0x24] sm:$0xf] %v7680
      %7682 = vst.msk [vmem:[%s528 + $0x28] sm:$0xf] %vm519, %v7402
      %v7683 = vld [vmem:[%s528 + $0x2c] sm:$0x1]
      %v7684 = vsel %vm530, %v7403, %v7683
      %7685 = vst [vmem:[%s528 + $0x2c] sm:$0x1] %v7684
      %v7686 = vld [vmem:[%s528 + $0x30] sm:$0xf]
      %v7687 = vsel %vm7657, %v7410, %v7686
      %7688 = vst [vmem:[%s528 + $0x30] sm:$0xf] %v7687
      %7689 = vst.msk [vmem:[%s528 + $0x34] sm:$0xf] %vm519, %v7419
      %v7690 = vld [vmem:[%s528 + $0x38] sm:$0x1]
      %v7691 = vsel %vm530, %v7420, %v7690
      %7692 = vst [vmem:[%s528 + $0x38] sm:$0x1] %v7691
      %v7693 = vld [vmem:[%s528 + $0x3c] sm:$0xf]
      %v7694 = vsel %vm7657, %v7427, %v7693
      %7695 = vst [vmem:[%s528 + $0x3c] sm:$0xf] %v7694
      %7696 = vst.msk [vmem:[%s528 + $0x40] sm:$0xf] %vm519, %v7436
      %v7697 = vld [vmem:[%s528 + $0x44] sm:$0x1]
      %v7698 = vsel %vm530, %v7437, %v7697
      %7699 = vst [vmem:[%s528 + $0x44] sm:$0x1] %v7698
      %v7700 = vld [vmem:[%s528 + $0x48] sm:$0xf]
      %v7701 = vsel %vm7657, %v7444, %v7700
      %7702 = vst [vmem:[%s528 + $0x48] sm:$0xf] %v7701
      %7703 = vst.msk [vmem:[%s528 + $0x4c] sm:$0xf] %vm519, %v7453
      %v7704 = vld [vmem:[%s528 + $0x50] sm:$0x1]
      %v7705 = vsel %vm530, %v7454, %v7704
      %7706 = vst [vmem:[%s528 + $0x50] sm:$0x1] %v7705
      %v7707 = vld [vmem:[%s528 + $0x54] sm:$0xf]
      %v7708 = vsel %vm7657, %v7461, %v7707
      %7709 = vst [vmem:[%s528 + $0x54] sm:$0xf] %v7708
      %7710 = vst.msk [vmem:[%s528 + $0x58] sm:$0xf] %vm519, %v7470
      %v7711 = vld [vmem:[%s528 + $0x5c] sm:$0x1]
      %v7712 = vsel %vm530, %v7471, %v7711
      %7713 = vst [vmem:[%s528 + $0x5c] sm:$0x1] %v7712
      %v7714 = vld [vmem:[%s528 + $0x60] sm:$0xf]
      %v7715 = vsel %vm7657, %v7478, %v7714
      %7716 = vst [vmem:[%s528 + $0x60] sm:$0xf] %v7715
      %7717 = vst.msk [vmem:[%s528 + $0x64] sm:$0xf] %vm519, %v7487
      %v7718 = vld [vmem:[%s528 + $0x68] sm:$0x1]
      %v7719 = vsel %vm530, %v7488, %v7718
      %7720 = vst [vmem:[%s528 + $0x68] sm:$0x1] %v7719
      %v7721 = vld [vmem:[%s528 + $0x6c] sm:$0xf]
      %v7722 = vsel %vm7657, %v7495, %v7721
      %7723 = vst [vmem:[%s528 + $0x6c] sm:$0xf] %v7722
      %7724 = vst.msk [vmem:[%s528 + $0x70] sm:$0xf] %vm519, %v7504
      %v7725 = vld [vmem:[%s528 + $0x74] sm:$0x1]
      %v7726 = vsel %vm530, %v7505, %v7725
      %7727 = vst [vmem:[%s528 + $0x74] sm:$0x1] %v7726
      %v7728 = vld [vmem:[%s528 + $0x78] sm:$0xf]
      %v7729 = vsel %vm7657, %v7512, %v7728
      %7730 = vst [vmem:[%s528 + $0x78] sm:$0xf] %v7729
      %7731 = vst.msk [vmem:[%s528 + $0x7c] sm:$0xf] %vm519, %v7521
      %v7732 = vld [vmem:[%s528 + $0x80] sm:$0x1]
      %v7733 = vsel %vm530, %v7522, %v7732
      %7734 = vst [vmem:[%s528 + $0x80] sm:$0x1] %v7733
      %v7735 = vld [vmem:[%s528 + $0x84] sm:$0xf]
      %v7736 = vsel %vm7657, %v7529, %v7735
      %7737 = vst [vmem:[%s528 + $0x84] sm:$0xf] %v7736
      %7738 = vst.msk [vmem:[%s528 + $0x88] sm:$0xf] %vm519, %v7538
      %v7739 = vld [vmem:[%s528 + $0x8c] sm:$0x1]
      %v7740 = vsel %vm530, %v7539, %v7739
      %7741 = vst [vmem:[%s528 + $0x8c] sm:$0x1] %v7740
      %v7742 = vld [vmem:[%s528 + $0x90] sm:$0xf]
      %v7743 = vsel %vm7657, %v7546, %v7742
      %7744 = vst [vmem:[%s528 + $0x90] sm:$0xf] %v7743
      %7745 = vst.msk [vmem:[%s528 + $0x94] sm:$0xf] %vm519, %v7555
      %v7746 = vld [vmem:[%s528 + $0x98] sm:$0x1]
      %v7747 = vsel %vm530, %v7556, %v7746
      %7748 = vst [vmem:[%s528 + $0x98] sm:$0x1] %v7747
      %v7749 = vld [vmem:[%s528 + $0x9c] sm:$0xf]
      %v7750 = vsel %vm7657, %v7563, %v7749
      %7751 = vst [vmem:[%s528 + $0x9c] sm:$0xf] %v7750
      %7752 = vst.msk [vmem:[%s528 + $0xa0] sm:$0xf] %vm519, %v7572
      %v7753 = vld [vmem:[%s528 + $0xa4] sm:$0x1]
      %v7754 = vsel %vm530, %v7573, %v7753
      %7755 = vst [vmem:[%s528 + $0xa4] sm:$0x1] %v7754
      %v7756 = vld [vmem:[%s528 + $0xa8] sm:$0xf]
      %v7757 = vsel %vm7657, %v7580, %v7756
      %7758 = vst [vmem:[%s528 + $0xa8] sm:$0xf] %v7757
      %7759 = vst.msk [vmem:[%s528 + $0xac] sm:$0xf] %vm519, %v7589
      %v7760 = vld [vmem:[%s528 + $0xb0] sm:$0x1]
      %v7761 = vsel %vm530, %v7590, %v7760
      %7762 = vst [vmem:[%s528 + $0xb0] sm:$0x1] %v7761
      %v7763 = vld [vmem:[%s528 + $0xb4] sm:$0xf]
      %v7764 = vsel %vm7657, %v7597, %v7763
      %7765 = vst [vmem:[%s528 + $0xb4] sm:$0xf] %v7764
      %7766 = vst.msk [vmem:[%s528 + $0xb8] sm:$0xf] %vm519, %v7606
      %v7767 = vld [vmem:[%s528 + $0xbc] sm:$0x1]
      %v7768 = vsel %vm530, %v7607, %v7767
      %7769 = vst [vmem:[%s528 + $0xbc] sm:$0x1] %v7768
      %v7770 = vld [vmem:[#allocation3] sm:$0xf]
      %v7771 = vld [vmem:[#allocation3 + $0x4] sm:$0xf]
      %v7772 = vld [vmem:[#allocation3 + $0xc] sm:$0xf]
      %v7773 = vld [vmem:[#allocation3 + $0x10] sm:$0xf]
      %v7774 = vld [vmem:[#allocation3 + $0x18] sm:$0xf]
      %v7775 = vld [vmem:[#allocation3 + $0x1c] sm:$0xf]
      %v7776 = vld [vmem:[#allocation3 + $0x24] sm:$0xf]
      %v7777 = vld [vmem:[#allocation3 + $0x28] sm:$0xf]
      %v7778 = vld [vmem:[#allocation3 + $0x30] sm:$0xf]
      %v7779 = vld [vmem:[#allocation3 + $0x34] sm:$0xf]
      %v7780 = vld [vmem:[#allocation3 + $0x3c] sm:$0xf]
      %v7781 = vld [vmem:[#allocation3 + $0x40] sm:$0xf]
      %v7782 = vld [vmem:[#allocation3 + $0x48] sm:$0xf]
      %v7783 = vld [vmem:[#allocation3 + $0x4c] sm:$0xf]
      %v7784 = vld [vmem:[#allocation3 + $0x54] sm:$0xf]
      %v7785 = vld [vmem:[#allocation3 + $0x58] sm:$0xf]
      %v7786 = vld [vmem:[#allocation3 + $0x60] sm:$0xf]
      %v7787 = vld [vmem:[#allocation3 + $0x64] sm:$0xf]
      %v7788 = vld [vmem:[#allocation3 + $0x6c] sm:$0xf]
      %v7789 = vld [vmem:[#allocation3 + $0x70] sm:$0xf]
      %v7790 = vld [vmem:[#allocation3 + $0x78] sm:$0xf]
      %v7791 = vld [vmem:[#allocation3 + $0x7c] sm:$0xf]
      %v7792 = vld [vmem:[#allocation3 + $0x84] sm:$0xf]
      %v7793 = vld [vmem:[#allocation3 + $0x88] sm:$0xf]
      %v7794 = vld [vmem:[#allocation3 + $0x90] sm:$0xf]
      %v7795 = vld [vmem:[#allocation3 + $0x94] sm:$0xf]
      %v7796 = vld [vmem:[#allocation3 + $0x9c] sm:$0xf]
      %v7797 = vld [vmem:[#allocation3 + $0xa0] sm:$0xf]
      %v7798 = vld [vmem:[#allocation3 + $0xa8] sm:$0xf]
      %v7799 = vld [vmem:[#allocation3 + $0xac] sm:$0xf]
      %v7800 = vld [vmem:[#allocation3 + $0xb4] sm:$0xf]
      %v7801 = vld [vmem:[#allocation3 + $0xb8] sm:$0xf]
      %v7802 = vld [vmem:[%s7] sm:$0xf]
      %v7803 = vld [vmem:[%s7 + $0x4] sm:$0xf]
      %v7804 = vld [vmem:[%s7 + $0x8] sm:$0xf]
      %v7805 = vld [vmem:[%s7 + $0xc] sm:$0xf]
      %v7806 = vld [vmem:[#allocation3 + $0x8] sm:$0x1]
      %v7807 = vld [vmem:[#allocation3 + $0x14] sm:$0x1]
      %v7808 = vld [vmem:[#allocation3 + $0x20] sm:$0x1]
      %v7809 = vld [vmem:[#allocation3 + $0x2c] sm:$0x1]
      %v7810 = vld [vmem:[#allocation3 + $0x38] sm:$0x1]
      %v7811 = vld [vmem:[#allocation3 + $0x44] sm:$0x1]
      %v7812 = vld [vmem:[#allocation3 + $0x50] sm:$0x1]
      %v7813 = vld [vmem:[#allocation3 + $0x5c] sm:$0x1]
      %v7814 = vld [vmem:[#allocation3 + $0x68] sm:$0x1]
      %v7815 = vld [vmem:[#allocation3 + $0x74] sm:$0x1]
      %v7816 = vld [vmem:[#allocation3 + $0x80] sm:$0x1]
      %v7817 = vld [vmem:[#allocation3 + $0x8c] sm:$0x1]
      %v7818 = vld [vmem:[#allocation3 + $0x98] sm:$0x1]
      %v7819 = vld [vmem:[#allocation3 + $0xa4] sm:$0x1]
      %v7820 = vld [vmem:[#allocation3 + $0xb0] sm:$0x1]
      %v7821 = vld [vmem:[#allocation3 + $0xbc] sm:$0x1]
      %v7823 = vshrl.u32 %v7770, 16
      %v7825 = vrot.slane %v7823, 4
      %v7826 = vshll.u32 %v7770, 16
      %v7828 = vrot.slane %v7826, 5
      %v7829 = vor.u32 %v7825, %v7828
      %v7830 = vrot.slane %v7829, 4
      %v7832 = vshll.u32 %v7771, 16
      %v7834 = vrot.slane %v7832, 5
      %v7835 = vsel %vm2565, %v7830, %v7834
      %v7836 = vshrl.u32 %v7771, 16
      %v7838 = vrot.slane %v7836, 4
      %v7839 = vor.u32 %v7838, %v7834
      %v7840 = vrot.slane %v7839, 4
      %v7842 = vshll.u32 %v7806, 16
      %v7844 = vrot.slane %v7842, 5
      %v7845 = vsel %vm2565, %v7840, %v7844
      %v7847 = vshrl.u32 %v7772, 16
      %v7849 = vrot.slane %v7847, 4
      %v7850 = vshll.u32 %v7772, 16
      %v7852 = vrot.slane %v7850, 5
      %v7853 = vor.u32 %v7849, %v7852
      %v7854 = vrot.slane %v7853, 4
      %v7856 = vshll.u32 %v7773, 16
      %v7858 = vrot.slane %v7856, 5
      %v7859 = vsel %vm2565, %v7854, %v7858
      %v7860 = vshrl.u32 %v7773, 16
      %v7862 = vrot.slane %v7860, 4
      %v7863 = vor.u32 %v7862, %v7858
      %v7864 = vrot.slane %v7863, 4
      %v7866 = vshll.u32 %v7807, 16
      %v7868 = vrot.slane %v7866, 5
      %v7869 = vsel %vm2565, %v7864, %v7868
      %v7871 = vshrl.u32 %v7774, 16
      %v7873 = vrot.slane %v7871, 4
      %v7874 = vshll.u32 %v7774, 16
      %v7876 = vrot.slane %v7874, 5
      %v7877 = vor.u32 %v7873, %v7876
      %v7878 = vrot.slane %v7877, 4
      %v7880 = vshll.u32 %v7775, 16
      %v7882 = vrot.slane %v7880, 5
      %v7883 = vsel %vm2565, %v7878, %v7882
      %v7884 = vshrl.u32 %v7775, 16
      %v7886 = vrot.slane %v7884, 4
      %v7887 = vor.u32 %v7886, %v7882
      %v7888 = vrot.slane %v7887, 4
      %v7890 = vshll.u32 %v7808, 16
      %v7892 = vrot.slane %v7890, 5
      %v7893 = vsel %vm2565, %v7888, %v7892
      %v7895 = vshrl.u32 %v7776, 16
      %v7897 = vrot.slane %v7895, 4
      %v7898 = vshll.u32 %v7776, 16
      %v7900 = vrot.slane %v7898, 5
      %v7901 = vor.u32 %v7897, %v7900
      %v7902 = vrot.slane %v7901, 4
      %v7904 = vshll.u32 %v7777, 16
      %v7906 = vrot.slane %v7904, 5
      %v7907 = vsel %vm2565, %v7902, %v7906
      %v7908 = vshrl.u32 %v7777, 16
      %v7910 = vrot.slane %v7908, 4
      %v7911 = vor.u32 %v7910, %v7906
      %v7912 = vrot.slane %v7911, 4
      %v7914 = vshll.u32 %v7809, 16
      %v7916 = vrot.slane %v7914, 5
      %v7917 = vsel %vm2565, %v7912, %v7916
      %v7919 = vshrl.u32 %v7778, 16
      %v7921 = vrot.slane %v7919, 4
      %v7922 = vshll.u32 %v7778, 16
      %v7924 = vrot.slane %v7922, 5
      %v7925 = vor.u32 %v7921, %v7924
      %v7926 = vrot.slane %v7925, 4
      %v7928 = vshll.u32 %v7779, 16
      %v7930 = vrot.slane %v7928, 5
      %v7931 = vsel %vm2565, %v7926, %v7930
      %v7932 = vshrl.u32 %v7779, 16
      %v7934 = vrot.slane %v7932, 4
      %v7935 = vor.u32 %v7934, %v7930
      %v7936 = vrot.slane %v7935, 4
      %v7938 = vshll.u32 %v7810, 16
      %v7940 = vrot.slane %v7938, 5
      %v7941 = vsel %vm2565, %v7936, %v7940
      %v7943 = vshrl.u32 %v7780, 16
      %v7945 = vrot.slane %v7943, 4
      %v7946 = vshll.u32 %v7780, 16
      %v7948 = vrot.slane %v7946, 5
      %v7949 = vor.u32 %v7945, %v7948
      %v7950 = vrot.slane %v7949, 4
      %v7952 = vshll.u32 %v7781, 16
      %v7954 = vrot.slane %v7952, 5
      %v7955 = vsel %vm2565, %v7950, %v7954
      %v7956 = vshrl.u32 %v7781, 16
      %v7958 = vrot.slane %v7956, 4
      %v7959 = vor.u32 %v7958, %v7954
      %v7960 = vrot.slane %v7959, 4
      %v7962 = vshll.u32 %v7811, 16
      %v7964 = vrot.slane %v7962, 5
      %v7965 = vsel %vm2565, %v7960, %v7964
      %v7967 = vshrl.u32 %v7782, 16
      %v7969 = vrot.slane %v7967, 4
      %v7970 = vshll.u32 %v7782, 16
      %v7972 = vrot.slane %v7970, 5
      %v7973 = vor.u32 %v7969, %v7972
      %v7974 = vrot.slane %v7973, 4
      %v7976 = vshll.u32 %v7783, 16
      %v7978 = vrot.slane %v7976, 5
      %v7979 = vsel %vm2565, %v7974, %v7978
      %v7980 = vshrl.u32 %v7783, 16
      %v7982 = vrot.slane %v7980, 4
      %v7983 = vor.u32 %v7982, %v7978
      %v7984 = vrot.slane %v7983, 4
      %v7986 = vshll.u32 %v7812, 16
      %v7988 = vrot.slane %v7986, 5
      %v7989 = vsel %vm2565, %v7984, %v7988
      %v7991 = vshrl.u32 %v7784, 16
      %v7993 = vrot.slane %v7991, 4
      %v7994 = vshll.u32 %v7784, 16
      %v7996 = vrot.slane %v7994, 5
      %v7997 = vor.u32 %v7993, %v7996
      %v7998 = vrot.slane %v7997, 4
      %v8000 = vshll.u32 %v7785, 16
      %v8002 = vrot.slane %v8000, 5
      %v8003 = vsel %vm2565, %v7998, %v8002
      %v8004 = vshrl.u32 %v7785, 16
      %v8006 = vrot.slane %v8004, 4
      %v8007 = vor.u32 %v8006, %v8002
      %v8008 = vrot.slane %v8007, 4
      %v8010 = vshll.u32 %v7813, 16
      %v8012 = vrot.slane %v8010, 5
      %v8013 = vsel %vm2565, %v8008, %v8012
      %v8015 = vshrl.u32 %v7786, 16
      %v8017 = vrot.slane %v8015, 4
      %v8018 = vshll.u32 %v7786, 16
      %v8020 = vrot.slane %v8018, 5
      %v8021 = vor.u32 %v8017, %v8020
      %v8022 = vrot.slane %v8021, 4
      %v8024 = vshll.u32 %v7787, 16
      %v8026 = vrot.slane %v8024, 5
      %v8027 = vsel %vm2565, %v8022, %v8026
      %v8028 = vshrl.u32 %v7787, 16
      %v8030 = vrot.slane %v8028, 4
      %v8031 = vor.u32 %v8030, %v8026
      %v8032 = vrot.slane %v8031, 4
      %v8034 = vshll.u32 %v7814, 16
      %v8036 = vrot.slane %v8034, 5
      %v8037 = vsel %vm2565, %v8032, %v8036
      %v8039 = vshrl.u32 %v7788, 16
      %v8041 = vrot.slane %v8039, 4
      %v8042 = vshll.u32 %v7788, 16
      %v8044 = vrot.slane %v8042, 5
      %v8045 = vor.u32 %v8041, %v8044
      %v8046 = vrot.slane %v8045, 4
      %v8048 = vshll.u32 %v7789, 16
      %v8050 = vrot.slane %v8048, 5
      %v8051 = vsel %vm2565, %v8046, %v8050
      %v8052 = vshrl.u32 %v7789, 16
      %v8054 = vrot.slane %v8052, 4
      %v8055 = vor.u32 %v8054, %v8050
      %v8056 = vrot.slane %v8055, 4
      %v8058 = vshll.u32 %v7815, 16
      %v8060 = vrot.slane %v8058, 5
      %v8061 = vsel %vm2565, %v8056, %v8060
      %v8063 = vshrl.u32 %v7790, 16
      %v8065 = vrot.slane %v8063, 4
      %v8066 = vshll.u32 %v7790, 16
      %v8068 = vrot.slane %v8066, 5
      %v8069 = vor.u32 %v8065, %v8068
      %v8070 = vrot.slane %v8069, 4
      %v8072 = vshll.u32 %v7791, 16
      %v8074 = vrot.slane %v8072, 5
      %v8075 = vsel %vm2565, %v8070, %v8074
      %v8076 = vshrl.u32 %v7791, 16
      %v8078 = vrot.slane %v8076, 4
      %v8079 = vor.u32 %v8078, %v8074
      %v8080 = vrot.slane %v8079, 4
      %v8082 = vshll.u32 %v7816, 16
      %v8084 = vrot.slane %v8082, 5
      %v8085 = vsel %vm2565, %v8080, %v8084
      %v8087 = vshrl.u32 %v7792, 16
      %v8089 = vrot.slane %v8087, 4
      %v8090 = vshll.u32 %v7792, 16
      %v8092 = vrot.slane %v8090, 5
      %v8093 = vor.u32 %v8089, %v8092
      %v8094 = vrot.slane %v8093, 4
      %v8096 = vshll.u32 %v7793, 16
      %v8098 = vrot.slane %v8096, 5
      %v8099 = vsel %vm2565, %v8094, %v8098
      %v8100 = vshrl.u32 %v7793, 16
      %v8102 = vrot.slane %v8100, 4
      %v8103 = vor.u32 %v8102, %v8098
      %v8104 = vrot.slane %v8103, 4
      %v8106 = vshll.u32 %v7817, 16
      %v8108 = vrot.slane %v8106, 5
      %v8109 = vsel %vm2565, %v8104, %v8108
      %v8111 = vshrl.u32 %v7794, 16
      %v8113 = vrot.slane %v8111, 4
      %v8114 = vshll.u32 %v7794, 16
      %v8116 = vrot.slane %v8114, 5
      %v8117 = vor.u32 %v8113, %v8116
      %v8118 = vrot.slane %v8117, 4
      %v8120 = vshll.u32 %v7795, 16
      %v8122 = vrot.slane %v8120, 5
      %v8123 = vsel %vm2565, %v8118, %v8122
      %v8124 = vshrl.u32 %v7795, 16
      %v8126 = vrot.slane %v8124, 4
      %v8127 = vor.u32 %v8126, %v8122
      %v8128 = vrot.slane %v8127, 4
      %v8130 = vshll.u32 %v7818, 16
      %v8132 = vrot.slane %v8130, 5
      %v8133 = vsel %vm2565, %v8128, %v8132
      %v8135 = vshrl.u32 %v7796, 16
      %v8137 = vrot.slane %v8135, 4
      %v8138 = vshll.u32 %v7796, 16
      %v8140 = vrot.slane %v8138, 5
      %v8141 = vor.u32 %v8137, %v8140
      %v8142 = vrot.slane %v8141, 4
      %v8144 = vshll.u32 %v7797, 16
      %v8146 = vrot.slane %v8144, 5
      %v8147 = vsel %vm2565, %v8142, %v8146
      %v8148 = vshrl.u32 %v7797, 16
      %v8150 = vrot.slane %v8148, 4
      %v8151 = vor.u32 %v8150, %v8146
      %v8152 = vrot.slane %v8151, 4
      %v8154 = vshll.u32 %v7819, 16
      %v8156 = vrot.slane %v8154, 5
      %v8157 = vsel %vm2565, %v8152, %v8156
      %v8159 = vshrl.u32 %v7798, 16
      %v8161 = vrot.slane %v8159, 4
      %v8162 = vshll.u32 %v7798, 16
      %v8164 = vrot.slane %v8162, 5
      %v8165 = vor.u32 %v8161, %v8164
      %v8166 = vrot.slane %v8165, 4
      %v8168 = vshll.u32 %v7799, 16
      %v8170 = vrot.slane %v8168, 5
      %v8171 = vsel %vm2565, %v8166, %v8170
      %v8172 = vshrl.u32 %v7799, 16
      %v8174 = vrot.slane %v8172, 4
      %v8175 = vor.u32 %v8174, %v8170
      %v8176 = vrot.slane %v8175, 4
      %v8178 = vshll.u32 %v7820, 16
      %v8180 = vrot.slane %v8178, 5
      %v8181 = vsel %vm2565, %v8176, %v8180
      %v8183 = vshrl.u32 %v7800, 16
      %v8185 = vrot.slane %v8183, 4
      %v8186 = vshll.u32 %v7800, 16
      %v8188 = vrot.slane %v8186, 5
      %v8189 = vor.u32 %v8185, %v8188
      %v8190 = vrot.slane %v8189, 4
      %v8192 = vshll.u32 %v7801, 16
      %v8194 = vrot.slane %v8192, 5
      %v8195 = vsel %vm2565, %v8190, %v8194
      %v8196 = vshrl.u32 %v7801, 16
      %v8198 = vrot.slane %v8196, 4
      %v8199 = vor.u32 %v8198, %v8194
      %v8200 = vrot.slane %v8199, 4
      %v8202 = vshll.u32 %v7821, 16
      %v8204 = vrot.slane %v8202, 5
      %v8205 = vsel %vm2565, %v8200, %v8204
      %s8206 = scalar_lea.vmem %s7, 16
      %v8207 = vld [vmem:[%s8206] sm:$0xf]
      %v8208 = vld [vmem:[%s8206 + $0x4] sm:$0xf]
      %v8209 = vld [vmem:[%s8206 + $0x8] sm:$0xf]
      %v8210 = vld [vmem:[%s8206 + $0xc] sm:$0xf]
      %v8211 = vunpack.c.l.b16 %v7835
      %v8212 = vunpack.c.l.b16 %v7845
      %v8213 = vunpack.c.l.b16 %v7859
      %v8214 = vunpack.c.l.b16 %v7869
      %v8215 = vunpack.c.l.b16 %v7883
      %v8216 = vunpack.c.l.b16 %v7893
      %v8217 = vunpack.c.l.b16 %v7907
      %v8218 = vunpack.c.l.b16 %v7917
      %v8219 = vunpack.c.l.b16 %v7931
      %v8220 = vunpack.c.l.b16 %v7941
      %v8221 = vunpack.c.l.b16 %v7955
      %v8222 = vunpack.c.l.b16 %v7965
      %v8223 = vunpack.c.l.b16 %v7979
      %v8224 = vunpack.c.l.b16 %v7989
      %v8225 = vunpack.c.l.b16 %v8003
      %v8226 = vunpack.c.l.b16 %v8013
      %v8227 = vunpack.c.l.b16 %v8027
      %v8228 = vunpack.c.l.b16 %v8037
      %v8229 = vunpack.c.l.b16 %v8051
      %v8230 = vunpack.c.l.b16 %v8061
      %v8231 = vunpack.c.l.b16 %v8075
      %v8232 = vunpack.c.l.b16 %v8085
      %v8233 = vunpack.c.l.b16 %v8099
      %v8234 = vunpack.c.l.b16 %v8109
      %v8235 = vunpack.c.l.b16 %v8123
      %v8236 = vunpack.c.l.b16 %v8133
      %v8237 = vunpack.c.l.b16 %v8147
      %v8238 = vunpack.c.l.b16 %v8157
      %v8239 = vunpack.c.l.b16 %v8171
      %v8240 = vunpack.c.l.b16 %v8181
      %v8241 = vunpack.c.l.b16 %v8195
      %v8242 = vunpack.c.l.b16 %v8205
      %v8243 = vpack.c.b16 %v8212, %v8211
      %v8244 = vpack.c.b16 %v8214, %v8213
      %v8245 = vpack.c.b16 %v8216, %v8215
      %v8246 = vpack.c.b16 %v8218, %v8217
      %v8247 = vpack.c.b16 %v8220, %v8219
      %v8248 = vpack.c.b16 %v8222, %v8221
      %v8249 = vpack.c.b16 %v8224, %v8223
      %v8250 = vpack.c.b16 %v8226, %v8225
      %v8251 = vpack.c.b16 %v8228, %v8227
      %v8252 = vpack.c.b16 %v8230, %v8229
      %v8253 = vpack.c.b16 %v8232, %v8231
      %v8254 = vpack.c.b16 %v8234, %v8233
      %v8255 = vpack.c.b16 %v8236, %v8235
      %v8256 = vpack.c.b16 %v8238, %v8237
      %v8257 = vpack.c.b16 %v8240, %v8239
      %v8258 = vpack.c.b16 %v8242, %v8241
      %v8263 = vunpack.c.l.b16 %v8207
      %v8264 = vunpack.c.l.b16 %v8208
      %v8265 = vunpack.c.l.b16 %v8209
      %v8266 = vunpack.c.l.b16 %v8210
      %v8267 = vpack.c.b16 %v8264, %v8263
      %v8268 = vpack.c.b16 %v8266, %v8265
      %vm8271 = vcmask 261120
      %v8273 = vsel %vm8271, %v8243, 0
      %v8276 = vsel %vm8271, %v8244, 0
      %v8279 = vsel %vm8271, %v8245, 0
      %v8282 = vsel %vm8271, %v8246, 0
      %v8285 = vsel %vm8271, %v8247, 0
      %v8288 = vsel %vm8271, %v8248, 0
      %v8291 = vsel %vm8271, %v8249, 0
      %v8294 = vsel %vm8271, %v8250, 0
      %v8297 = vsel %vm8271, %v8251, 0
      %v8300 = vsel %vm8271, %v8252, 0
      %v8303 = vsel %vm8271, %v8253, 0
      %v8306 = vsel %vm8271, %v8254, 0
      %v8309 = vsel %vm8271, %v8255, 0
      %v8312 = vsel %vm8271, %v8256, 0
      %v8315 = vsel %vm8271, %v8257, 0
      %v8318 = vsel %vm8271, %v8258, 0
      %8320 = vmatprep.subr.bf16.mxu0 0
      %8321 = vmatpush1.bf16.msra.mxu0 0
      %8322 = vmatprep.subr.bf16.mxu0 0
      %8323 = vmatpush1.bf16.msra.mxu0 0
      %8324 = vmatprep.subr.bf16.mxu0 0
      %8325 = vmatpush1.bf16.msra.mxu0 0
      %8326 = vmatprep.subr.bf16.mxu0 0
      %8327 = vmatpush1.bf16.msra.mxu0 0
      %8328 = vmatprep.subr.bf16.mxu0 0
      %8329 = vmatpush1.bf16.msra.mxu0 0
      %8330 = vmatprep.subr.bf16.mxu0 0
      %8331 = vmatpush1.bf16.msra.mxu0 0
      %8332 = vmatprep.subr.bf16.mxu0 0
      %8333 = vmatpush1.bf16.msra.mxu0 %v8268
      %8334 = vmatprep.subr.bf16.mxu0 0
      %8335 = vmatpush1.bf16.msra.mxu0 %v8267
      %8336 = vmatprep.subr.bf16.mxu0 0
      %8337 = vmatpush2.bf16.msra.mxu0 0
      %8338 = vmatprep.subr.bf16.mxu0 0
      %8339 = vmatpush2.bf16.msra.mxu0 0
      %8340 = vmatprep.subr.bf16.mxu0 0
      %8341 = vmatpush2.bf16.msra.mxu0 0
      %8342 = vmatprep.subr.bf16.mxu0 0
      %8343 = vmatpush2.bf16.msra.mxu0 0
      %8344 = vmatprep.subr.bf16.mxu0 0
      %8345 = vmatpush2.bf16.msra.mxu0 0
      %8346 = vmatprep.subr.bf16.mxu0 0
      %8347 = vmatpush2.bf16.msra.mxu0 0
      %8348 = vmatprep.subr.bf16.mxu0 0
      %8349 = vmatpush2.bf16.msra.mxu0 0
      %8350 = vmatprep.subr.bf16.mxu0 0
      %8351 = vmatpush2.bf16.msra.mxu0 0
      %8352 = vmatprep.mubr.bf16.mxu0 0
      %8353 = vmatmul.mubr.bf16.gmra.mxu0 %v8273
      %v8354 = vpop.f32.mrf.mxu0
      %v8355 = vadd.f32 0.0, %v8354
      %v8356 = vpop.f32.mrf.mxu0
      %v8357 = vpop.f32.mrf.mxu0
      %v8358 = vadd.f32 0.0, %v8357
      %v8359 = vpop.f32.mrf.mxu0
      %8360 = vmatprep.mubr.bf16.mxu0 0
      %8361 = vmatmul.mubr.bf16.gmra.mxu0 %v8276
      %v8362 = vpop.f32.mrf.mxu0
      %v8363 = vadd.f32 0.0, %v8362
      %v8364 = vpop.f32.mrf.mxu0
      %v8365 = vpop.f32.mrf.mxu0
      %v8366 = vadd.f32 0.0, %v8365
      %v8367 = vpop.f32.mrf.mxu0
      %8368 = vmatprep.mubr.bf16.mxu0 0
      %8369 = vmatmul.mubr.bf16.gmra.mxu0 %v8279
      %v8370 = vpop.f32.mrf.mxu0
      %v8371 = vadd.f32 0.0, %v8370
      %v8372 = vpop.f32.mrf.mxu0
      %v8373 = vpop.f32.mrf.mxu0
      %v8374 = vadd.f32 0.0, %v8373
      %v8375 = vpop.f32.mrf.mxu0
      %8376 = vmatprep.mubr.bf16.mxu0 0
      %8377 = vmatmul.mubr.bf16.gmra.mxu0 %v8282
      %v8378 = vpop.f32.mrf.mxu0
      %v8379 = vadd.f32 0.0, %v8378
      %v8380 = vpop.f32.mrf.mxu0
      %v8381 = vpop.f32.mrf.mxu0
      %v8382 = vadd.f32 0.0, %v8381
      %v8383 = vpop.f32.mrf.mxu0
      %8384 = vmatprep.mubr.bf16.mxu0 0
      %8385 = vmatmul.mubr.bf16.gmra.mxu0 %v8285
      %v8386 = vpop.f32.mrf.mxu0
      %v8387 = vadd.f32 0.0, %v8386
      %v8388 = vpop.f32.mrf.mxu0
      %v8389 = vpop.f32.mrf.mxu0
      %v8390 = vadd.f32 0.0, %v8389
      %v8391 = vpop.f32.mrf.mxu0
      %8392 = vmatprep.mubr.bf16.mxu0 0
      %8393 = vmatmul.mubr.bf16.gmra.mxu0 %v8288
      %v8394 = vpop.f32.mrf.mxu0
      %v8395 = vadd.f32 0.0, %v8394
      %v8396 = vpop.f32.mrf.mxu0
      %v8397 = vpop.f32.mrf.mxu0
      %v8398 = vadd.f32 0.0, %v8397
      %v8399 = vpop.f32.mrf.mxu0
      %8400 = vmatprep.mubr.bf16.mxu0 0
      %8401 = vmatmul.mubr.bf16.gmra.mxu0 %v8291
      %v8402 = vpop.f32.mrf.mxu0
      %v8403 = vadd.f32 0.0, %v8402
      %v8404 = vpop.f32.mrf.mxu0
      %v8405 = vpop.f32.mrf.mxu0
      %v8406 = vadd.f32 0.0, %v8405
      %v8407 = vpop.f32.mrf.mxu0
      %8408 = vmatprep.mubr.bf16.mxu0 0
      %8409 = vmatmul.mubr.bf16.gmra.mxu0 %v8294
      %v8410 = vpop.f32.mrf.mxu0
      %v8411 = vadd.f32 0.0, %v8410
      %v8412 = vpop.f32.mrf.mxu0
      %v8413 = vpop.f32.mrf.mxu0
      %v8414 = vadd.f32 0.0, %v8413
      %v8415 = vpop.f32.mrf.mxu0
      %8416 = vmatprep.mubr.bf16.mxu0 0
      %8417 = vmatmul.mubr.bf16.gmra.mxu0 %v8297
      %v8418 = vpop.f32.mrf.mxu0
      %v8419 = vadd.f32 0.0, %v8418
      %v8420 = vpop.f32.mrf.mxu0
      %v8421 = vpop.f32.mrf.mxu0
      %v8422 = vadd.f32 0.0, %v8421
      %v8423 = vpop.f32.mrf.mxu0
      %8424 = vmatprep.mubr.bf16.mxu0 0
      %8425 = vmatmul.mubr.bf16.gmra.mxu0 %v8300
      %v8426 = vpop.f32.mrf.mxu0
      %v8427 = vadd.f32 0.0, %v8426
      %v8428 = vpop.f32.mrf.mxu0
      %v8429 = vpop.f32.mrf.mxu0
      %v8430 = vadd.f32 0.0, %v8429
      %v8431 = vpop.f32.mrf.mxu0
      %8432 = vmatprep.mubr.bf16.mxu0 0
      %8433 = vmatmul.mubr.bf16.gmra.mxu0 %v8303
      %v8434 = vpop.f32.mrf.mxu0
      %v8435 = vadd.f32 0.0, %v8434
      %v8436 = vpop.f32.mrf.mxu0
      %v8437 = vpop.f32.mrf.mxu0
      %v8438 = vadd.f32 0.0, %v8437
      %v8439 = vpop.f32.mrf.mxu0
      %8440 = vmatprep.mubr.bf16.mxu0 0
      %8441 = vmatmul.mubr.bf16.gmra.mxu0 %v8306
      %v8442 = vpop.f32.mrf.mxu0
      %v8443 = vadd.f32 0.0, %v8442
      %v8444 = vpop.f32.mrf.mxu0
      %v8445 = vpop.f32.mrf.mxu0
      %v8446 = vadd.f32 0.0, %v8445
      %v8447 = vpop.f32.mrf.mxu0
      %8448 = vmatprep.mubr.bf16.mxu0 0
      %8449 = vmatmul.mubr.bf16.gmra.mxu0 %v8309
      %v8450 = vpop.f32.mrf.mxu0
      %v8451 = vadd.f32 0.0, %v8450
      %v8452 = vpop.f32.mrf.mxu0
      %v8453 = vpop.f32.mrf.mxu0
      %v8454 = vadd.f32 0.0, %v8453
      %v8455 = vpop.f32.mrf.mxu0
      %8456 = vmatprep.mubr.bf16.mxu0 0
      %8457 = vmatmul.mubr.bf16.gmra.mxu0 %v8312
      %v8458 = vpop.f32.mrf.mxu0
      %v8459 = vadd.f32 0.0, %v8458
      %v8460 = vpop.f32.mrf.mxu0
      %v8461 = vpop.f32.mrf.mxu0
      %v8462 = vadd.f32 0.0, %v8461
      %v8463 = vpop.f32.mrf.mxu0
      %8464 = vmatprep.mubr.bf16.mxu0 0
      %8465 = vmatmul.mubr.bf16.gmra.mxu0 %v8315
      %v8466 = vpop.f32.mrf.mxu0
      %v8467 = vadd.f32 0.0, %v8466
      %v8468 = vpop.f32.mrf.mxu0
      %v8469 = vpop.f32.mrf.mxu0
      %v8470 = vadd.f32 0.0, %v8469
      %v8471 = vpop.f32.mrf.mxu0
      %8472 = vmatprep.mubr.bf16.mxu0 0
      %8473 = vmatmul.mubr.bf16.gmra.mxu0 %v8318
      %v8474 = vpop.f32.mrf.mxu0
      %v8475 = vadd.f32 0.0, %v8474
      %v8476 = vpop.f32.mrf.mxu0
      %v8477 = vpop.f32.mrf.mxu0
      %v8478 = vadd.f32 0.0, %v8477
      %v8479 = vpop.f32.mrf.mxu0
      %8480 = vdwg.mxu0
      %v8513 = vunpack.c.l.b16 %v7770
      %v8514 = vunpack.c.l.b16 %v7771
      %v8515 = vunpack.c.l.b16 %v7772
      %v8516 = vunpack.c.l.b16 %v7773
      %v8517 = vunpack.c.l.b16 %v7774
      %v8518 = vunpack.c.l.b16 %v7775
      %v8519 = vunpack.c.l.b16 %v7776
      %v8520 = vunpack.c.l.b16 %v7777
      %v8521 = vunpack.c.l.b16 %v7778
      %v8522 = vunpack.c.l.b16 %v7779
      %v8523 = vunpack.c.l.b16 %v7780
      %v8524 = vunpack.c.l.b16 %v7781
      %v8525 = vunpack.c.l.b16 %v7782
      %v8526 = vunpack.c.l.b16 %v7783
      %v8527 = vunpack.c.l.b16 %v7784
      %v8528 = vunpack.c.l.b16 %v7785
      %v8529 = vunpack.c.l.b16 %v7786
      %v8530 = vunpack.c.l.b16 %v7787
      %v8531 = vunpack.c.l.b16 %v7788
      %v8532 = vunpack.c.l.b16 %v7789
      %v8533 = vunpack.c.l.b16 %v7790
      %v8534 = vunpack.c.l.b16 %v7791
      %v8535 = vunpack.c.l.b16 %v7792
      %v8536 = vunpack.c.l.b16 %v7793
      %v8537 = vunpack.c.l.b16 %v7794
      %v8538 = vunpack.c.l.b16 %v7795
      %v8539 = vunpack.c.l.b16 %v7796
      %v8540 = vunpack.c.l.b16 %v7797
      %v8541 = vunpack.c.l.b16 %v7798
      %v8542 = vunpack.c.l.b16 %v7799
      %v8543 = vunpack.c.l.b16 %v7800
      %v8544 = vunpack.c.l.b16 %v7801
      %v8545 = vpack.c.b16 %v8514, %v8513
      %v8546 = vpack.c.b16 %v8516, %v8515
      %v8547 = vpack.c.b16 %v8518, %v8517
      %v8548 = vpack.c.b16 %v8520, %v8519
      %v8549 = vpack.c.b16 %v8522, %v8521
      %v8550 = vpack.c.b16 %v8524, %v8523
      %v8551 = vpack.c.b16 %v8526, %v8525
      %v8552 = vpack.c.b16 %v8528, %v8527
      %v8553 = vpack.c.b16 %v8530, %v8529
      %v8554 = vpack.c.b16 %v8532, %v8531
      %v8555 = vpack.c.b16 %v8534, %v8533
      %v8556 = vpack.c.b16 %v8536, %v8535
      %v8557 = vpack.c.b16 %v8538, %v8537
      %v8558 = vpack.c.b16 %v8540, %v8539
      %v8559 = vpack.c.b16 %v8542, %v8541
      %v8560 = vpack.c.b16 %v8544, %v8543
      %v8565 = vunpack.c.l.b16 %v7802
      %v8566 = vunpack.c.l.b16 %v7803
      %v8567 = vunpack.c.l.b16 %v7804
      %v8568 = vunpack.c.l.b16 %v7805
      %v8569 = vpack.c.b16 %v8566, %v8565
      %v8570 = vpack.c.b16 %v8568, %v8567
      %v8574 = vsel %vm8271, %v8545, 0
      %v8577 = vsel %vm8271, %v8546, 0
      %v8580 = vsel %vm8271, %v8547, 0
      %v8583 = vsel %vm8271, %v8548, 0
      %v8586 = vsel %vm8271, %v8549, 0
      %v8589 = vsel %vm8271, %v8550, 0
      %v8592 = vsel %vm8271, %v8551, 0
      %v8595 = vsel %vm8271, %v8552, 0
      %v8598 = vsel %vm8271, %v8553, 0
      %v8601 = vsel %vm8271, %v8554, 0
      %v8604 = vsel %vm8271, %v8555, 0
      %v8607 = vsel %vm8271, %v8556, 0
      %v8610 = vsel %vm8271, %v8557, 0
      %v8613 = vsel %vm8271, %v8558, 0
      %v8616 = vsel %vm8271, %v8559, 0
      %v8619 = vsel %vm8271, %v8560, 0
      %8621 = vmatprep.subr.bf16.mxu0 0
      %8622 = vmatpush1.bf16.msra.mxu0 0
      %8623 = vmatprep.subr.bf16.mxu0 0
      %8624 = vmatpush1.bf16.msra.mxu0 0
      %8625 = vmatprep.subr.bf16.mxu0 0
      %8626 = vmatpush1.bf16.msra.mxu0 0
      %8627 = vmatprep.subr.bf16.mxu0 0
      %8628 = vmatpush1.bf16.msra.mxu0 0
      %8629 = vmatprep.subr.bf16.mxu0 0
      %8630 = vmatpush1.bf16.msra.mxu0 0
      %8631 = vmatprep.subr.bf16.mxu0 0
      %8632 = vmatpush1.bf16.msra.mxu0 0
      %8633 = vmatprep.subr.bf16.mxu0 0
      %8634 = vmatpush1.bf16.msra.mxu0 %v8570
      %8635 = vmatprep.subr.bf16.mxu0 0
      %8636 = vmatpush1.bf16.msra.mxu0 %v8569
      %8637 = vmatprep.subr.bf16.mxu0 0
      %8638 = vmatpush2.bf16.msra.mxu0 0
      %8639 = vmatprep.subr.bf16.mxu0 0
      %8640 = vmatpush2.bf16.msra.mxu0 0
      %8641 = vmatprep.subr.bf16.mxu0 0
      %8642 = vmatpush2.bf16.msra.mxu0 0
      %8643 = vmatprep.subr.bf16.mxu0 0
      %8644 = vmatpush2.bf16.msra.mxu0 0
      %8645 = vmatprep.subr.bf16.mxu0 0
      %8646 = vmatpush2.bf16.msra.mxu0 0
      %8647 = vmatprep.subr.bf16.mxu0 0
      %8648 = vmatpush2.bf16.msra.mxu0 0
      %8649 = vmatprep.subr.bf16.mxu0 0
      %8650 = vmatpush2.bf16.msra.mxu0 0
      %8651 = vmatprep.subr.bf16.mxu0 0
      %8652 = vmatpush2.bf16.msra.mxu0 0
      %8653 = vmatprep.mubr.bf16.mxu0 0
      %8654 = vmatmul.mubr.bf16.gmra.mxu0 %v8574
      %v8655 = vpop.f32.mrf.mxu0
      %v8656 = vadd.f32 %v8355, %v8655
      %v8657 = vpop.f32.mrf.mxu0
      %v8658 = vpop.f32.mrf.mxu0
      %v8659 = vadd.f32 %v8358, %v8658
      %v8660 = vpop.f32.mrf.mxu0
      %8661 = vmatprep.mubr.bf16.mxu0 0
      %8662 = vmatmul.mubr.bf16.gmra.mxu0 %v8577
      %v8663 = vpop.f32.mrf.mxu0
      %v8664 = vadd.f32 %v8363, %v8663
      %v8665 = vpop.f32.mrf.mxu0
      %v8666 = vpop.f32.mrf.mxu0
      %v8667 = vadd.f32 %v8366, %v8666
      %v8668 = vpop.f32.mrf.mxu0
      %8669 = vmatprep.mubr.bf16.mxu0 0
      %8670 = vmatmul.mubr.bf16.gmra.mxu0 %v8580
      %v8671 = vpop.f32.mrf.mxu0
      %v8672 = vadd.f32 %v8371, %v8671
      %v8673 = vpop.f32.mrf.mxu0
      %v8674 = vpop.f32.mrf.mxu0
      %v8675 = vadd.f32 %v8374, %v8674
      %v8676 = vpop.f32.mrf.mxu0
      %8677 = vmatprep.mubr.bf16.mxu0 0
      %8678 = vmatmul.mubr.bf16.gmra.mxu0 %v8583
      %v8679 = vpop.f32.mrf.mxu0
      %v8680 = vadd.f32 %v8379, %v8679
      %v8681 = vpop.f32.mrf.mxu0
      %v8682 = vpop.f32.mrf.mxu0
      %v8683 = vadd.f32 %v8382, %v8682
      %v8684 = vpop.f32.mrf.mxu0
      %8685 = vmatprep.mubr.bf16.mxu0 0
      %8686 = vmatmul.mubr.bf16.gmra.mxu0 %v8586
      %v8687 = vpop.f32.mrf.mxu0
      %v8688 = vadd.f32 %v8387, %v8687
      %v8689 = vpop.f32.mrf.mxu0
      %v8690 = vpop.f32.mrf.mxu0
      %v8691 = vadd.f32 %v8390, %v8690
      %v8692 = vpop.f32.mrf.mxu0
      %8693 = vmatprep.mubr.bf16.mxu0 0
      %8694 = vmatmul.mubr.bf16.gmra.mxu0 %v8589
      %v8695 = vpop.f32.mrf.mxu0
      %v8696 = vadd.f32 %v8395, %v8695
      %v8697 = vpop.f32.mrf.mxu0
      %v8698 = vpop.f32.mrf.mxu0
      %v8699 = vadd.f32 %v8398, %v8698
      %v8700 = vpop.f32.mrf.mxu0
      %8701 = vmatprep.mubr.bf16.mxu0 0
      %8702 = vmatmul.mubr.bf16.gmra.mxu0 %v8592
      %v8703 = vpop.f32.mrf.mxu0
      %v8704 = vadd.f32 %v8403, %v8703
      %v8705 = vpop.f32.mrf.mxu0
      %v8706 = vpop.f32.mrf.mxu0
      %v8707 = vadd.f32 %v8406, %v8706
      %v8708 = vpop.f32.mrf.mxu0
      %8709 = vmatprep.mubr.bf16.mxu0 0
      %8710 = vmatmul.mubr.bf16.gmra.mxu0 %v8595
      %v8711 = vpop.f32.mrf.mxu0
      %v8712 = vadd.f32 %v8411, %v8711
      %v8713 = vpop.f32.mrf.mxu0
      %v8714 = vpop.f32.mrf.mxu0
      %v8715 = vadd.f32 %v8414, %v8714
      %v8716 = vpop.f32.mrf.mxu0
      %8717 = vmatprep.mubr.bf16.mxu0 0
      %8718 = vmatmul.mubr.bf16.gmra.mxu0 %v8598
      %v8719 = vpop.f32.mrf.mxu0
      %v8720 = vadd.f32 %v8419, %v8719
      %v8721 = vpop.f32.mrf.mxu0
      %v8722 = vpop.f32.mrf.mxu0
      %v8723 = vadd.f32 %v8422, %v8722
      %v8724 = vpop.f32.mrf.mxu0
      %8725 = vmatprep.mubr.bf16.mxu0 0
      %8726 = vmatmul.mubr.bf16.gmra.mxu0 %v8601
      %v8727 = vpop.f32.mrf.mxu0
      %v8728 = vadd.f32 %v8427, %v8727
      %v8729 = vpop.f32.mrf.mxu0
      %v8730 = vpop.f32.mrf.mxu0
      %v8731 = vadd.f32 %v8430, %v8730
      %v8732 = vpop.f32.mrf.mxu0
      %8733 = vmatprep.mubr.bf16.mxu0 0
      %8734 = vmatmul.mubr.bf16.gmra.mxu0 %v8604
      %v8735 = vpop.f32.mrf.mxu0
      %v8736 = vadd.f32 %v8435, %v8735
      %v8737 = vpop.f32.mrf.mxu0
      %v8738 = vpop.f32.mrf.mxu0
      %v8739 = vadd.f32 %v8438, %v8738
      %v8740 = vpop.f32.mrf.mxu0
      %8741 = vmatprep.mubr.bf16.mxu0 0
      %8742 = vmatmul.mubr.bf16.gmra.mxu0 %v8607
      %v8743 = vpop.f32.mrf.mxu0
      %v8744 = vadd.f32 %v8443, %v8743
      %v8745 = vpop.f32.mrf.mxu0
      %v8746 = vpop.f32.mrf.mxu0
      %v8747 = vadd.f32 %v8446, %v8746
      %v8748 = vpop.f32.mrf.mxu0
      %8749 = vmatprep.mubr.bf16.mxu0 0
      %8750 = vmatmul.mubr.bf16.gmra.mxu0 %v8610
      %v8751 = vpop.f32.mrf.mxu0
      %v8752 = vadd.f32 %v8451, %v8751
      %v8753 = vpop.f32.mrf.mxu0
      %v8754 = vpop.f32.mrf.mxu0
      %v8755 = vadd.f32 %v8454, %v8754
      %v8756 = vpop.f32.mrf.mxu0
      %8757 = vmatprep.mubr.bf16.mxu0 0
      %8758 = vmatmul.mubr.bf16.gmra.mxu0 %v8613
      %v8759 = vpop.f32.mrf.mxu0
      %v8760 = vadd.f32 %v8459, %v8759
      %v8761 = vpop.f32.mrf.mxu0
      %v8762 = vpop.f32.mrf.mxu0
      %v8763 = vadd.f32 %v8462, %v8762
      %v8764 = vpop.f32.mrf.mxu0
      %8765 = vmatprep.mubr.bf16.mxu0 0
      %8766 = vmatmul.mubr.bf16.gmra.mxu0 %v8616
      %v8767 = vpop.f32.mrf.mxu0
      %v8768 = vadd.f32 %v8467, %v8767
      %v8769 = vpop.f32.mrf.mxu0
      %v8770 = vpop.f32.mrf.mxu0
      %v8771 = vadd.f32 %v8470, %v8770
      %v8772 = vpop.f32.mrf.mxu0
      %8773 = vmatprep.mubr.bf16.mxu0 0
      %8774 = vmatmul.mubr.bf16.gmra.mxu0 %v8619
      %v8775 = vpop.f32.mrf.mxu0
      %v8776 = vadd.f32 %v8475, %v8775
      %v8777 = vpop.f32.mrf.mxu0
      %v8778 = vpop.f32.mrf.mxu0
      %v8779 = vadd.f32 %v8478, %v8778
      %v8780 = vpop.f32.mrf.mxu0
      %8781 = vdwg.mxu0
      %v8782 = vld [vmem:[#allocation3] sm:$0xe]
      %v8783 = vld [vmem:[#allocation3 + $0xc] sm:$0xe]
      %v8784 = vld [vmem:[#allocation3 + $0x18] sm:$0xe]
      %v8785 = vld [vmem:[#allocation3 + $0x24] sm:$0xe]
      %v8786 = vld [vmem:[#allocation3 + $0x30] sm:$0xe]
      %v8787 = vld [vmem:[#allocation3 + $0x3c] sm:$0xe]
      %v8788 = vld [vmem:[#allocation3 + $0x48] sm:$0xe]
      %v8789 = vld [vmem:[#allocation3 + $0x54] sm:$0xe]
      %v8790 = vld [vmem:[#allocation3 + $0x60] sm:$0xe]
      %v8791 = vld [vmem:[#allocation3 + $0x6c] sm:$0xe]
      %v8792 = vld [vmem:[#allocation3 + $0x78] sm:$0xe]
      %v8793 = vld [vmem:[#allocation3 + $0x84] sm:$0xe]
      %v8794 = vld [vmem:[#allocation3 + $0x90] sm:$0xe]
      %v8795 = vld [vmem:[#allocation3 + $0x9c] sm:$0xe]
      %v8796 = vld [vmem:[#allocation3 + $0xa8] sm:$0xe]
      %v8797 = vld [vmem:[#allocation3 + $0xb4] sm:$0xe]
      %v8830 = vrot.slane %v8782, 5
      %v8831 = vrot.slane %v8830, 4
      %v8832 = vrot.slane %v7771, 5
      %v8833 = vsel %vm3576, %v8831, %v8832
      %v8834 = vrot.slane %v8832, 4
      %v8835 = vrot.slane %v7806, 5
      %v8836 = vsel %vm3576, %v8834, %v8835
      %v8837 = vrot.slane %v8783, 5
      %v8838 = vrot.slane %v8837, 4
      %v8839 = vrot.slane %v7773, 5
      %v8840 = vsel %vm3576, %v8838, %v8839
      %v8841 = vrot.slane %v8839, 4
      %v8842 = vrot.slane %v7807, 5
      %v8843 = vsel %vm3576, %v8841, %v8842
      %v8844 = vrot.slane %v8784, 5
      %v8845 = vrot.slane %v8844, 4
      %v8846 = vrot.slane %v7775, 5
      %v8847 = vsel %vm3576, %v8845, %v8846
      %v8848 = vrot.slane %v8846, 4
      %v8849 = vrot.slane %v7808, 5
      %v8850 = vsel %vm3576, %v8848, %v8849
      %v8851 = vrot.slane %v8785, 5
      %v8852 = vrot.slane %v8851, 4
      %v8853 = vrot.slane %v7777, 5
      %v8854 = vsel %vm3576, %v8852, %v8853
      %v8855 = vrot.slane %v8853, 4
      %v8856 = vrot.slane %v7809, 5
      %v8857 = vsel %vm3576, %v8855, %v8856
      %v8858 = vrot.slane %v8786, 5
      %v8859 = vrot.slane %v8858, 4
      %v8860 = vrot.slane %v7779, 5
      %v8861 = vsel %vm3576, %v8859, %v8860
      %v8862 = vrot.slane %v8860, 4
      %v8863 = vrot.slane %v7810, 5
      %v8864 = vsel %vm3576, %v8862, %v8863
      %v8865 = vrot.slane %v8787, 5
      %v8866 = vrot.slane %v8865, 4
      %v8867 = vrot.slane %v7781, 5
      %v8868 = vsel %vm3576, %v8866, %v8867
      %v8869 = vrot.slane %v8867, 4
      %v8870 = vrot.slane %v7811, 5
      %v8871 = vsel %vm3576, %v8869, %v8870
      %v8872 = vrot.slane %v8788, 5
      %v8873 = vrot.slane %v8872, 4
      %v8874 = vrot.slane %v7783, 5
      %v8875 = vsel %vm3576, %v8873, %v8874
      %v8876 = vrot.slane %v8874, 4
      %v8877 = vrot.slane %v7812, 5
      %v8878 = vsel %vm3576, %v8876, %v8877
      %v8879 = vrot.slane %v8789, 5
      %v8880 = vrot.slane %v8879, 4
      %v8881 = vrot.slane %v7785, 5
      %v8882 = vsel %vm3576, %v8880, %v8881
      %v8883 = vrot.slane %v8881, 4
      %v8884 = vrot.slane %v7813, 5
      %v8885 = vsel %vm3576, %v8883, %v8884
      %v8886 = vrot.slane %v8790, 5
      %v8887 = vrot.slane %v8886, 4
      %v8888 = vrot.slane %v7787, 5
      %v8889 = vsel %vm3576, %v8887, %v8888
      %v8890 = vrot.slane %v8888, 4
      %v8891 = vrot.slane %v7814, 5
      %v8892 = vsel %vm3576, %v8890, %v8891
      %v8893 = vrot.slane %v8791, 5
      %v8894 = vrot.slane %v8893, 4
      %v8895 = vrot.slane %v7789, 5
      %v8896 = vsel %vm3576, %v8894, %v8895
      %v8897 = vrot.slane %v8895, 4
      %v8898 = vrot.slane %v7815, 5
      %v8899 = vsel %vm3576, %v8897, %v8898
      %v8900 = vrot.slane %v8792, 5
      %v8901 = vrot.slane %v8900, 4
      %v8902 = vrot.slane %v7791, 5
      %v8903 = vsel %vm3576, %v8901, %v8902
      %v8904 = vrot.slane %v8902, 4
      %v8905 = vrot.slane %v7816, 5
      %v8906 = vsel %vm3576, %v8904, %v8905
      %v8907 = vrot.slane %v8793, 5
      %v8908 = vrot.slane %v8907, 4
      %v8909 = vrot.slane %v7793, 5
      %v8910 = vsel %vm3576, %v8908, %v8909
      %v8911 = vrot.slane %v8909, 4
      %v8912 = vrot.slane %v7817, 5
      %v8913 = vsel %vm3576, %v8911, %v8912
      %v8914 = vrot.slane %v8794, 5
      %v8915 = vrot.slane %v8914, 4
      %v8916 = vrot.slane %v7795, 5
      %v8917 = vsel %vm3576, %v8915, %v8916
      %v8918 = vrot.slane %v8916, 4
      %v8919 = vrot.slane %v7818, 5
      %v8920 = vsel %vm3576, %v8918, %v8919
      %v8921 = vrot.slane %v8795, 5
      %v8922 = vrot.slane %v8921, 4
      %v8923 = vrot.slane %v7797, 5
      %v8924 = vsel %vm3576, %v8922, %v8923
      %v8925 = vrot.slane %v8923, 4
      %v8926 = vrot.slane %v7819, 5
      %v8927 = vsel %vm3576, %v8925, %v8926
      %v8928 = vrot.slane %v8796, 5
      %v8929 = vrot.slane %v8928, 4
      %v8930 = vrot.slane %v7799, 5
      %v8931 = vsel %vm3576, %v8929, %v8930
      %v8932 = vrot.slane %v8930, 4
      %v8933 = vrot.slane %v7820, 5
      %v8934 = vsel %vm3576, %v8932, %v8933
      %v8935 = vrot.slane %v8797, 5
      %v8936 = vrot.slane %v8935, 4
      %v8937 = vrot.slane %v7801, 5
      %v8938 = vsel %vm3576, %v8936, %v8937
      %v8939 = vrot.slane %v8937, 4
      %v8940 = vrot.slane %v7821, 5
      %v8941 = vsel %vm3576, %v8939, %v8940
      %s8942 = scalar_lea.vmem %s7, 32
      %v8943 = vld [vmem:[%s8942] sm:$0xf]
      %v8944 = vld [vmem:[%s8942 + $0x4] sm:$0xf]
      %v8945 = vld [vmem:[%s8942 + $0x8] sm:$0xf]
      %v8946 = vld [vmem:[%s8942 + $0xc] sm:$0xf]
      %v8947 = vunpack.c.l.b16 %v8833
      %v8948 = vunpack.c.l.b16 %v8836
      %v8949 = vunpack.c.l.b16 %v8840
      %v8950 = vunpack.c.l.b16 %v8843
      %v8951 = vunpack.c.l.b16 %v8847
      %v8952 = vunpack.c.l.b16 %v8850
      %v8953 = vunpack.c.l.b16 %v8854
      %v8954 = vunpack.c.l.b16 %v8857
      %v8955 = vunpack.c.l.b16 %v8861
      %v8956 = vunpack.c.l.b16 %v8864
      %v8957 = vunpack.c.l.b16 %v8868
      %v8958 = vunpack.c.l.b16 %v8871
      %v8959 = vunpack.c.l.b16 %v8875
      %v8960 = vunpack.c.l.b16 %v8878
      %v8961 = vunpack.c.l.b16 %v8882
      %v8962 = vunpack.c.l.b16 %v8885
      %v8963 = vunpack.c.l.b16 %v8889
      %v8964 = vunpack.c.l.b16 %v8892
      %v8965 = vunpack.c.l.b16 %v8896
      %v8966 = vunpack.c.l.b16 %v8899
      %v8967 = vunpack.c.l.b16 %v8903
      %v8968 = vunpack.c.l.b16 %v8906
      %v8969 = vunpack.c.l.b16 %v8910
      %v8970 = vunpack.c.l.b16 %v8913
      %v8971 = vunpack.c.l.b16 %v8917
      %v8972 = vunpack.c.l.b16 %v8920
      %v8973 = vunpack.c.l.b16 %v8924
      %v8974 = vunpack.c.l.b16 %v8927
      %v8975 = vunpack.c.l.b16 %v8931
      %v8976 = vunpack.c.l.b16 %v8934
      %v8977 = vunpack.c.l.b16 %v8938
      %v8978 = vunpack.c.l.b16 %v8941
      %v8979 = vpack.c.b16 %v8948, %v8947
      %v8980 = vpack.c.b16 %v8950, %v8949
      %v8981 = vpack.c.b16 %v8952, %v8951
      %v8982 = vpack.c.b16 %v8954, %v8953
      %v8983 = vpack.c.b16 %v8956, %v8955
      %v8984 = vpack.c.b16 %v8958, %v8957
      %v8985 = vpack.c.b16 %v8960, %v8959
      %v8986 = vpack.c.b16 %v8962, %v8961
      %v8987 = vpack.c.b16 %v8964, %v8963
      %v8988 = vpack.c.b16 %v8966, %v8965
      %v8989 = vpack.c.b16 %v8968, %v8967
      %v8990 = vpack.c.b16 %v8970, %v8969
      %v8991 = vpack.c.b16 %v8972, %v8971
      %v8992 = vpack.c.b16 %v8974, %v8973
      %v8993 = vpack.c.b16 %v8976, %v8975
      %v8994 = vpack.c.b16 %v8978, %v8977
      %v8999 = vunpack.c.l.b16 %v8943
      %v9000 = vunpack.c.l.b16 %v8944
      %v9001 = vunpack.c.l.b16 %v8945
      %v9002 = vunpack.c.l.b16 %v8946
      %v9003 = vpack.c.b16 %v9000, %v8999
      %v9004 = vpack.c.b16 %v9002, %v9001
      %v9008 = vsel %vm8271, %v8979, 0
      %v9011 = vsel %vm8271, %v8980, 0
      %v9014 = vsel %vm8271, %v8981, 0
      %v9017 = vsel %vm8271, %v8982, 0
      %v9020 = vsel %vm8271, %v8983, 0
      %v9023 = vsel %vm8271, %v8984, 0
      %v9026 = vsel %vm8271, %v8985, 0
      %v9029 = vsel %vm8271, %v8986, 0
      %v9032 = vsel %vm8271, %v8987, 0
      %v9035 = vsel %vm8271, %v8988, 0
      %v9038 = vsel %vm8271, %v8989, 0
      %v9041 = vsel %vm8271, %v8990, 0
      %v9044 = vsel %vm8271, %v8991, 0
      %v9047 = vsel %vm8271, %v8992, 0
      %v9050 = vsel %vm8271, %v8993, 0
      %v9053 = vsel %vm8271, %v8994, 0
      %9055 = vmatprep.subr.bf16.mxu0 0
      %9056 = vmatpush1.bf16.msra.mxu0 0
      %9057 = vmatprep.subr.bf16.mxu0 0
      %9058 = vmatpush1.bf16.msra.mxu0 0
      %9059 = vmatprep.subr.bf16.mxu0 0
      %9060 = vmatpush1.bf16.msra.mxu0 0
      %9061 = vmatprep.subr.bf16.mxu0 0
      %9062 = vmatpush1.bf16.msra.mxu0 0
      %9063 = vmatprep.subr.bf16.mxu0 0
      %9064 = vmatpush1.bf16.msra.mxu0 0
      %9065 = vmatprep.subr.bf16.mxu0 0
      %9066 = vmatpush1.bf16.msra.mxu0 0
      %9067 = vmatprep.subr.bf16.mxu0 0
      %9068 = vmatpush1.bf16.msra.mxu0 %v9004
      %9069 = vmatprep.subr.bf16.mxu0 0
      %9070 = vmatpush1.bf16.msra.mxu0 %v9003
      %9071 = vmatprep.subr.bf16.mxu0 0
      %9072 = vmatpush2.bf16.msra.mxu0 0
      %9073 = vmatprep.subr.bf16.mxu0 0
      %9074 = vmatpush2.bf16.msra.mxu0 0
      %9075 = vmatprep.subr.bf16.mxu0 0
      %9076 = vmatpush2.bf16.msra.mxu0 0
      %9077 = vmatprep.subr.bf16.mxu0 0
      %9078 = vmatpush2.bf16.msra.mxu0 0
      %9079 = vmatprep.subr.bf16.mxu0 0
      %9080 = vmatpush2.bf16.msra.mxu0 0
      %9081 = vmatprep.subr.bf16.mxu0 0
      %9082 = vmatpush2.bf16.msra.mxu0 0
      %9083 = vmatprep.subr.bf16.mxu0 0
      %9084 = vmatpush2.bf16.msra.mxu0 0
      %9085 = vmatprep.subr.bf16.mxu0 0
      %9086 = vmatpush2.bf16.msra.mxu0 0
      %9087 = vmatprep.mubr.bf16.mxu0 0
      %9088 = vmatmul.mubr.bf16.gmra.mxu0 %v9008
      %v9089 = vpop.f32.mrf.mxu0
      %v9090 = vadd.f32 0.0, %v9089
      %v9091 = vpop.f32.mrf.mxu0
      %v9092 = vpop.f32.mrf.mxu0
      %v9093 = vadd.f32 0.0, %v9092
      %v9094 = vpop.f32.mrf.mxu0
      %9095 = vmatprep.mubr.bf16.mxu0 0
      %9096 = vmatmul.mubr.bf16.gmra.mxu0 %v9011
      %v9097 = vpop.f32.mrf.mxu0
      %v9098 = vadd.f32 0.0, %v9097
      %v9099 = vpop.f32.mrf.mxu0
      %v9100 = vpop.f32.mrf.mxu0
      %v9101 = vadd.f32 0.0, %v9100
      %v9102 = vpop.f32.mrf.mxu0
      %9103 = vmatprep.mubr.bf16.mxu0 0
      %9104 = vmatmul.mubr.bf16.gmra.mxu0 %v9014
      %v9105 = vpop.f32.mrf.mxu0
      %v9106 = vadd.f32 0.0, %v9105
      %v9107 = vpop.f32.mrf.mxu0
      %v9108 = vpop.f32.mrf.mxu0
      %v9109 = vadd.f32 0.0, %v9108
      %v9110 = vpop.f32.mrf.mxu0
      %9111 = vmatprep.mubr.bf16.mxu0 0
      %9112 = vmatmul.mubr.bf16.gmra.mxu0 %v9017
      %v9113 = vpop.f32.mrf.mxu0
      %v9114 = vadd.f32 0.0, %v9113
      %v9115 = vpop.f32.mrf.mxu0
      %v9116 = vpop.f32.mrf.mxu0
      %v9117 = vadd.f32 0.0, %v9116
      %v9118 = vpop.f32.mrf.mxu0
      %9119 = vmatprep.mubr.bf16.mxu0 0
      %9120 = vmatmul.mubr.bf16.gmra.mxu0 %v9020
      %v9121 = vpop.f32.mrf.mxu0
      %v9122 = vadd.f32 0.0, %v9121
      %v9123 = vpop.f32.mrf.mxu0
      %v9124 = vpop.f32.mrf.mxu0
      %v9125 = vadd.f32 0.0, %v9124
      %v9126 = vpop.f32.mrf.mxu0
      %9127 = vmatprep.mubr.bf16.mxu0 0
      %9128 = vmatmul.mubr.bf16.gmra.mxu0 %v9023
      %v9129 = vpop.f32.mrf.mxu0
      %v9130 = vadd.f32 0.0, %v9129
      %v9131 = vpop.f32.mrf.mxu0
      %v9132 = vpop.f32.mrf.mxu0
      %v9133 = vadd.f32 0.0, %v9132
      %v9134 = vpop.f32.mrf.mxu0
      %9135 = vmatprep.mubr.bf16.mxu0 0
      %9136 = vmatmul.mubr.bf16.gmra.mxu0 %v9026
      %v9137 = vpop.f32.mrf.mxu0
      %v9138 = vadd.f32 0.0, %v9137
      %v9139 = vpop.f32.mrf.mxu0
      %v9140 = vpop.f32.mrf.mxu0
      %v9141 = vadd.f32 0.0, %v9140
      %v9142 = vpop.f32.mrf.mxu0
      %9143 = vmatprep.mubr.bf16.mxu0 0
      %9144 = vmatmul.mubr.bf16.gmra.mxu0 %v9029
      %v9145 = vpop.f32.mrf.mxu0
      %v9146 = vadd.f32 0.0, %v9145
      %v9147 = vpop.f32.mrf.mxu0
      %v9148 = vpop.f32.mrf.mxu0
      %v9149 = vadd.f32 0.0, %v9148
      %v9150 = vpop.f32.mrf.mxu0
      %9151 = vmatprep.mubr.bf16.mxu0 0
      %9152 = vmatmul.mubr.bf16.gmra.mxu0 %v9032
      %v9153 = vpop.f32.mrf.mxu0
      %v9154 = vadd.f32 0.0, %v9153
      %v9155 = vpop.f32.mrf.mxu0
      %v9156 = vpop.f32.mrf.mxu0
      %v9157 = vadd.f32 0.0, %v9156
      %v9158 = vpop.f32.mrf.mxu0
      %9159 = vmatprep.mubr.bf16.mxu0 0
      %9160 = vmatmul.mubr.bf16.gmra.mxu0 %v9035
      %v9161 = vpop.f32.mrf.mxu0
      %v9162 = vadd.f32 0.0, %v9161
      %v9163 = vpop.f32.mrf.mxu0
      %v9164 = vpop.f32.mrf.mxu0
      %v9165 = vadd.f32 0.0, %v9164
      %v9166 = vpop.f32.mrf.mxu0
      %9167 = vmatprep.mubr.bf16.mxu0 0
      %9168 = vmatmul.mubr.bf16.gmra.mxu0 %v9038
      %v9169 = vpop.f32.mrf.mxu0
      %v9170 = vadd.f32 0.0, %v9169
      %v9171 = vpop.f32.mrf.mxu0
      %v9172 = vpop.f32.mrf.mxu0
      %v9173 = vadd.f32 0.0, %v9172
      %v9174 = vpop.f32.mrf.mxu0
      %9175 = vmatprep.mubr.bf16.mxu0 0
      %9176 = vmatmul.mubr.bf16.gmra.mxu0 %v9041
      %v9177 = vpop.f32.mrf.mxu0
      %v9178 = vadd.f32 0.0, %v9177
      %v9179 = vpop.f32.mrf.mxu0
      %v9180 = vpop.f32.mrf.mxu0
      %v9181 = vadd.f32 0.0, %v9180
      %v9182 = vpop.f32.mrf.mxu0
      %9183 = vmatprep.mubr.bf16.mxu0 0
      %9184 = vmatmul.mubr.bf16.gmra.mxu0 %v9044
      %v9185 = vpop.f32.mrf.mxu0
      %v9186 = vadd.f32 0.0, %v9185
      %v9187 = vpop.f32.mrf.mxu0
      %v9188 = vpop.f32.mrf.mxu0
      %v9189 = vadd.f32 0.0, %v9188
      %v9190 = vpop.f32.mrf.mxu0
      %9191 = vmatprep.mubr.bf16.mxu0 0
      %9192 = vmatmul.mubr.bf16.gmra.mxu0 %v9047
      %v9193 = vpop.f32.mrf.mxu0
      %v9194 = vadd.f32 0.0, %v9193
      %v9195 = vpop.f32.mrf.mxu0
      %v9196 = vpop.f32.mrf.mxu0
      %v9197 = vadd.f32 0.0, %v9196
      %v9198 = vpop.f32.mrf.mxu0
      %9199 = vmatprep.mubr.bf16.mxu0 0
      %9200 = vmatmul.mubr.bf16.gmra.mxu0 %v9050
      %v9201 = vpop.f32.mrf.mxu0
      %v9202 = vadd.f32 0.0, %v9201
      %v9203 = vpop.f32.mrf.mxu0
      %v9204 = vpop.f32.mrf.mxu0
      %v9205 = vadd.f32 0.0, %v9204
      %v9206 = vpop.f32.mrf.mxu0
      %9207 = vmatprep.mubr.bf16.mxu0 0
      %9208 = vmatmul.mubr.bf16.gmra.mxu0 %v9053
      %v9209 = vpop.f32.mrf.mxu0
      %v9210 = vadd.f32 0.0, %v9209
      %v9211 = vpop.f32.mrf.mxu0
      %v9212 = vpop.f32.mrf.mxu0
      %v9213 = vadd.f32 0.0, %v9212
      %v9214 = vpop.f32.mrf.mxu0
      %9215 = vdwg.mxu0
      %v9216 = vadd.f32 %v8656, %v9090
      %v9217 = vadd.f32 %v8659, %v9093
      %v9218 = vadd.f32 %v8664, %v9098
      %v9219 = vadd.f32 %v8667, %v9101
      %v9220 = vadd.f32 %v8672, %v9106
      %v9221 = vadd.f32 %v8675, %v9109
      %v9222 = vadd.f32 %v8680, %v9114
      %v9223 = vadd.f32 %v8683, %v9117
      %v9224 = vadd.f32 %v8688, %v9122
      %v9225 = vadd.f32 %v8691, %v9125
      %v9226 = vadd.f32 %v8696, %v9130
      %v9227 = vadd.f32 %v8699, %v9133
      %v9228 = vadd.f32 %v8704, %v9138
      %v9229 = vadd.f32 %v8707, %v9141
      %v9230 = vadd.f32 %v8712, %v9146
      %v9231 = vadd.f32 %v8715, %v9149
      %v9232 = vadd.f32 %v8720, %v9154
      %v9233 = vadd.f32 %v8723, %v9157
      %v9234 = vadd.f32 %v8728, %v9162
      %v9235 = vadd.f32 %v8731, %v9165
      %v9236 = vadd.f32 %v8736, %v9170
      %v9237 = vadd.f32 %v8739, %v9173
      %v9238 = vadd.f32 %v8744, %v9178
      %v9239 = vadd.f32 %v8747, %v9181
      %v9240 = vadd.f32 %v8752, %v9186
      %v9241 = vadd.f32 %v8755, %v9189
      %v9242 = vadd.f32 %v8760, %v9194
      %v9243 = vadd.f32 %v8763, %v9197
      %v9244 = vadd.f32 %v8768, %v9202
      %v9245 = vadd.f32 %v8771, %v9205
      %v9246 = vadd.f32 %v8776, %v9210
      %v9247 = vadd.f32 %v8779, %v9213
      %v9248 = vld [vmem:[%s528] sm:$0xf]
      %v9249 = vld [vmem:[%s528 + $0x4] sm:$0xf]
      %v9250 = vld [vmem:[%s528 + $0xc] sm:$0xf]
      %v9251 = vld [vmem:[%s528 + $0x10] sm:$0xf]
      %v9252 = vld [vmem:[%s528 + $0x18] sm:$0xf]
      %v9253 = vld [vmem:[%s528 + $0x1c] sm:$0xf]
      %v9254 = vld [vmem:[%s528 + $0x24] sm:$0xf]
      %v9255 = vld [vmem:[%s528 + $0x28] sm:$0xf]
      %v9256 = vld [vmem:[%s528 + $0x30] sm:$0xf]
      %v9257 = vld [vmem:[%s528 + $0x34] sm:$0xf]
      %v9258 = vld [vmem:[%s528 + $0x3c] sm:$0xf]
      %v9259 = vld [vmem:[%s528 + $0x40] sm:$0xf]
      %v9260 = vld [vmem:[%s528 + $0x48] sm:$0xf]
      %v9261 = vld [vmem:[%s528 + $0x4c] sm:$0xf]
      %v9262 = vld [vmem:[%s528 + $0x54] sm:$0xf]
      %v9263 = vld [vmem:[%s528 + $0x58] sm:$0xf]
      %v9264 = vld [vmem:[%s528 + $0x60] sm:$0xf]
      %v9265 = vld [vmem:[%s528 + $0x64] sm:$0xf]
      %v9266 = vld [vmem:[%s528 + $0x6c] sm:$0xf]
      %v9267 = vld [vmem:[%s528 + $0x70] sm:$0xf]
      %v9268 = vld [vmem:[%s528 + $0x78] sm:$0xf]
      %v9269 = vld [vmem:[%s528 + $0x7c] sm:$0xf]
      %v9270 = vld [vmem:[%s528 + $0x84] sm:$0xf]
      %v9271 = vld [vmem:[%s528 + $0x88] sm:$0xf]
      %v9272 = vld [vmem:[%s528 + $0x90] sm:$0xf]
      %v9273 = vld [vmem:[%s528 + $0x94] sm:$0xf]
      %v9274 = vld [vmem:[%s528 + $0x9c] sm:$0xf]
      %v9275 = vld [vmem:[%s528 + $0xa0] sm:$0xf]
      %v9276 = vld [vmem:[%s528 + $0xa8] sm:$0xf]
      %v9277 = vld [vmem:[%s528 + $0xac] sm:$0xf]
      %v9278 = vld [vmem:[%s528 + $0xb4] sm:$0xf]
      %v9279 = vld [vmem:[%s528 + $0xb8] sm:$0xf]
      %s9280 = scalar_lea.vmem %s7, 48
      %v9281 = vld [vmem:[%s9280] sm:$0xf]
      %v9282 = vld [vmem:[%s9280 + $0x4] sm:$0xf]
      %v9283 = vld [vmem:[%s9280 + $0x8] sm:$0xf]
      %v9284 = vld [vmem:[%s9280 + $0xc] sm:$0xf]
      %v9317 = vunpack.c.l.b16 %v9248
      %v9318 = vunpack.c.l.b16 %v9249
      %v9319 = vunpack.c.l.b16 %v9250
      %v9320 = vunpack.c.l.b16 %v9251
      %v9321 = vunpack.c.l.b16 %v9252
      %v9322 = vunpack.c.l.b16 %v9253
      %v9323 = vunpack.c.l.b16 %v9254
      %v9324 = vunpack.c.l.b16 %v9255
      %v9325 = vunpack.c.l.b16 %v9256
      %v9326 = vunpack.c.l.b16 %v9257
      %v9327 = vunpack.c.l.b16 %v9258
      %v9328 = vunpack.c.l.b16 %v9259
      %v9329 = vunpack.c.l.b16 %v9260
      %v9330 = vunpack.c.l.b16 %v9261
      %v9331 = vunpack.c.l.b16 %v9262
      %v9332 = vunpack.c.l.b16 %v9263
      %v9333 = vunpack.c.l.b16 %v9264
      %v9334 = vunpack.c.l.b16 %v9265
      %v9335 = vunpack.c.l.b16 %v9266
      %v9336 = vunpack.c.l.b16 %v9267
      %v9337 = vunpack.c.l.b16 %v9268
      %v9338 = vunpack.c.l.b16 %v9269
      %v9339 = vunpack.c.l.b16 %v9270
      %v9340 = vunpack.c.l.b16 %v9271
      %v9341 = vunpack.c.l.b16 %v9272
      %v9342 = vunpack.c.l.b16 %v9273
      %v9343 = vunpack.c.l.b16 %v9274
      %v9344 = vunpack.c.l.b16 %v9275
      %v9345 = vunpack.c.l.b16 %v9276
      %v9346 = vunpack.c.l.b16 %v9277
      %v9347 = vunpack.c.l.b16 %v9278
      %v9348 = vunpack.c.l.b16 %v9279
      %v9349 = vpack.c.b16 %v9318, %v9317
      %v9350 = vpack.c.b16 %v9320, %v9319
      %v9351 = vpack.c.b16 %v9322, %v9321
      %v9352 = vpack.c.b16 %v9324, %v9323
      %v9353 = vpack.c.b16 %v9326, %v9325
      %v9354 = vpack.c.b16 %v9328, %v9327
      %v9355 = vpack.c.b16 %v9330, %v9329
      %v9356 = vpack.c.b16 %v9332, %v9331
      %v9357 = vpack.c.b16 %v9334, %v9333
      %v9358 = vpack.c.b16 %v9336, %v9335
      %v9359 = vpack.c.b16 %v9338, %v9337
      %v9360 = vpack.c.b16 %v9340, %v9339
      %v9361 = vpack.c.b16 %v9342, %v9341
      %v9362 = vpack.c.b16 %v9344, %v9343
      %v9363 = vpack.c.b16 %v9346, %v9345
      %v9364 = vpack.c.b16 %v9348, %v9347
      %v9369 = vunpack.c.l.b16 %v9281
      %v9370 = vunpack.c.l.b16 %v9282
      %v9371 = vunpack.c.l.b16 %v9283
      %v9372 = vunpack.c.l.b16 %v9284
      %v9373 = vpack.c.b16 %v9370, %v9369
      %v9374 = vpack.c.b16 %v9372, %v9371
      %v9378 = vsel %vm8271, %v9349, 0
      %v9381 = vsel %vm8271, %v9350, 0
      %v9384 = vsel %vm8271, %v9351, 0
      %v9387 = vsel %vm8271, %v9352, 0
      %v9390 = vsel %vm8271, %v9353, 0
      %v9393 = vsel %vm8271, %v9354, 0
      %v9396 = vsel %vm8271, %v9355, 0
      %v9399 = vsel %vm8271, %v9356, 0
      %v9402 = vsel %vm8271, %v9357, 0
      %v9405 = vsel %vm8271, %v9358, 0
      %v9408 = vsel %vm8271, %v9359, 0
      %v9411 = vsel %vm8271, %v9360, 0
      %v9414 = vsel %vm8271, %v9361, 0
      %v9417 = vsel %vm8271, %v9362, 0
      %v9420 = vsel %vm8271, %v9363, 0
      %v9423 = vsel %vm8271, %v9364, 0
      %9425 = vmatprep.subr.bf16.mxu0 0
      %9426 = vmatpush1.bf16.msra.mxu0 0
      %9427 = vmatprep.subr.bf16.mxu0 0
      %9428 = vmatpush1.bf16.msra.mxu0 0
      %9429 = vmatprep.subr.bf16.mxu0 0
      %9430 = vmatpush1.bf16.msra.mxu0 0
      %9431 = vmatprep.subr.bf16.mxu0 0
      %9432 = vmatpush1.bf16.msra.mxu0 0
      %9433 = vmatprep.subr.bf16.mxu0 0
      %9434 = vmatpush1.bf16.msra.mxu0 0
      %9435 = vmatprep.subr.bf16.mxu0 0
      %9436 = vmatpush1.bf16.msra.mxu0 0
      %9437 = vmatprep.subr.bf16.mxu0 0
      %9438 = vmatpush1.bf16.msra.mxu0 %v9374
      %9439 = vmatprep.subr.bf16.mxu0 0
      %9440 = vmatpush1.bf16.msra.mxu0 %v9373
      %9441 = vmatprep.subr.bf16.mxu0 0
      %9442 = vmatpush2.bf16.msra.mxu0 0
      %9443 = vmatprep.subr.bf16.mxu0 0
      %9444 = vmatpush2.bf16.msra.mxu0 0
      %9445 = vmatprep.subr.bf16.mxu0 0
      %9446 = vmatpush2.bf16.msra.mxu0 0
      %9447 = vmatprep.subr.bf16.mxu0 0
      %9448 = vmatpush2.bf16.msra.mxu0 0
      %9449 = vmatprep.subr.bf16.mxu0 0
      %9450 = vmatpush2.bf16.msra.mxu0 0
      %9451 = vmatprep.subr.bf16.mxu0 0
      %9452 = vmatpush2.bf16.msra.mxu0 0
      %9453 = vmatprep.subr.bf16.mxu0 0
      %9454 = vmatpush2.bf16.msra.mxu0 0
      %9455 = vmatprep.subr.bf16.mxu0 0
      %9456 = vmatpush2.bf16.msra.mxu0 0
      %9457 = vmatprep.mubr.bf16.mxu0 0
      %9458 = vmatmul.mubr.bf16.gmra.mxu0 %v9378
      %v9459 = vpop.f32.mrf.mxu0
      %v9460 = vadd.f32 0.0, %v9459
      %v9461 = vpop.f32.mrf.mxu0
      %v9462 = vpop.f32.mrf.mxu0
      %v9463 = vadd.f32 0.0, %v9462
      %v9464 = vpop.f32.mrf.mxu0
      %9465 = vmatprep.mubr.bf16.mxu0 0
      %9466 = vmatmul.mubr.bf16.gmra.mxu0 %v9381
      %v9467 = vpop.f32.mrf.mxu0
      %v9468 = vadd.f32 0.0, %v9467
      %v9469 = vpop.f32.mrf.mxu0
      %v9470 = vpop.f32.mrf.mxu0
      %v9471 = vadd.f32 0.0, %v9470
      %v9472 = vpop.f32.mrf.mxu0
      %9473 = vmatprep.mubr.bf16.mxu0 0
      %9474 = vmatmul.mubr.bf16.gmra.mxu0 %v9384
      %v9475 = vpop.f32.mrf.mxu0
      %v9476 = vadd.f32 0.0, %v9475
      %v9477 = vpop.f32.mrf.mxu0
      %v9478 = vpop.f32.mrf.mxu0
      %v9479 = vadd.f32 0.0, %v9478
      %v9480 = vpop.f32.mrf.mxu0
      %9481 = vmatprep.mubr.bf16.mxu0 0
      %9482 = vmatmul.mubr.bf16.gmra.mxu0 %v9387
      %v9483 = vpop.f32.mrf.mxu0
      %v9484 = vadd.f32 0.0, %v9483
      %v9485 = vpop.f32.mrf.mxu0
      %v9486 = vpop.f32.mrf.mxu0
      %v9487 = vadd.f32 0.0, %v9486
      %v9488 = vpop.f32.mrf.mxu0
      %9489 = vmatprep.mubr.bf16.mxu0 0
      %9490 = vmatmul.mubr.bf16.gmra.mxu0 %v9390
      %v9491 = vpop.f32.mrf.mxu0
      %v9492 = vadd.f32 0.0, %v9491
      %v9493 = vpop.f32.mrf.mxu0
      %v9494 = vpop.f32.mrf.mxu0
      %v9495 = vadd.f32 0.0, %v9494
      %v9496 = vpop.f32.mrf.mxu0
      %9497 = vmatprep.mubr.bf16.mxu0 0
      %9498 = vmatmul.mubr.bf16.gmra.mxu0 %v9393
      %v9499 = vpop.f32.mrf.mxu0
      %v9500 = vadd.f32 0.0, %v9499
      %v9501 = vpop.f32.mrf.mxu0
      %v9502 = vpop.f32.mrf.mxu0
      %v9503 = vadd.f32 0.0, %v9502
      %v9504 = vpop.f32.mrf.mxu0
      %9505 = vmatprep.mubr.bf16.mxu0 0
      %9506 = vmatmul.mubr.bf16.gmra.mxu0 %v9396
      %v9507 = vpop.f32.mrf.mxu0
      %v9508 = vadd.f32 0.0, %v9507
      %v9509 = vpop.f32.mrf.mxu0
      %v9510 = vpop.f32.mrf.mxu0
      %v9511 = vadd.f32 0.0, %v9510
      %v9512 = vpop.f32.mrf.mxu0
      %9513 = vmatprep.mubr.bf16.mxu0 0
      %9514 = vmatmul.mubr.bf16.gmra.mxu0 %v9399
      %v9515 = vpop.f32.mrf.mxu0
      %v9516 = vadd.f32 0.0, %v9515
      %v9517 = vpop.f32.mrf.mxu0
      %v9518 = vpop.f32.mrf.mxu0
      %v9519 = vadd.f32 0.0, %v9518
      %v9520 = vpop.f32.mrf.mxu0
      %9521 = vmatprep.mubr.bf16.mxu0 0
      %9522 = vmatmul.mubr.bf16.gmra.mxu0 %v9402
      %v9523 = vpop.f32.mrf.mxu0
      %v9524 = vadd.f32 0.0, %v9523
      %v9525 = vpop.f32.mrf.mxu0
      %v9526 = vpop.f32.mrf.mxu0
      %v9527 = vadd.f32 0.0, %v9526
      %v9528 = vpop.f32.mrf.mxu0
      %9529 = vmatprep.mubr.bf16.mxu0 0
      %9530 = vmatmul.mubr.bf16.gmra.mxu0 %v9405
      %v9531 = vpop.f32.mrf.mxu0
      %v9532 = vadd.f32 0.0, %v9531
      %v9533 = vpop.f32.mrf.mxu0
      %v9534 = vpop.f32.mrf.mxu0
      %v9535 = vadd.f32 0.0, %v9534
      %v9536 = vpop.f32.mrf.mxu0
      %9537 = vmatprep.mubr.bf16.mxu0 0
      %9538 = vmatmul.mubr.bf16.gmra.mxu0 %v9408
      %v9539 = vpop.f32.mrf.mxu0
      %v9540 = vadd.f32 0.0, %v9539
      %v9541 = vpop.f32.mrf.mxu0
      %v9542 = vpop.f32.mrf.mxu0
      %v9543 = vadd.f32 0.0, %v9542
      %v9544 = vpop.f32.mrf.mxu0
      %9545 = vmatprep.mubr.bf16.mxu0 0
      %9546 = vmatmul.mubr.bf16.gmra.mxu0 %v9411
      %v9547 = vpop.f32.mrf.mxu0
      %v9548 = vadd.f32 0.0, %v9547
      %v9549 = vpop.f32.mrf.mxu0
      %v9550 = vpop.f32.mrf.mxu0
      %v9551 = vadd.f32 0.0, %v9550
      %v9552 = vpop.f32.mrf.mxu0
      %9553 = vmatprep.mubr.bf16.mxu0 0
      %9554 = vmatmul.mubr.bf16.gmra.mxu0 %v9414
      %v9555 = vpop.f32.mrf.mxu0
      %v9556 = vadd.f32 0.0, %v9555
      %v9557 = vpop.f32.mrf.mxu0
      %v9558 = vpop.f32.mrf.mxu0
      %v9559 = vadd.f32 0.0, %v9558
      %v9560 = vpop.f32.mrf.mxu0
      %9561 = vmatprep.mubr.bf16.mxu0 0
      %9562 = vmatmul.mubr.bf16.gmra.mxu0 %v9417
      %v9563 = vpop.f32.mrf.mxu0
      %v9564 = vadd.f32 0.0, %v9563
      %v9565 = vpop.f32.mrf.mxu0
      %v9566 = vpop.f32.mrf.mxu0
      %v9567 = vadd.f32 0.0, %v9566
      %v9568 = vpop.f32.mrf.mxu0
      %9569 = vmatprep.mubr.bf16.mxu0 0
      %9570 = vmatmul.mubr.bf16.gmra.mxu0 %v9420
      %v9571 = vpop.f32.mrf.mxu0
      %v9572 = vadd.f32 0.0, %v9571
      %v9573 = vpop.f32.mrf.mxu0
      %v9574 = vpop.f32.mrf.mxu0
      %v9575 = vadd.f32 0.0, %v9574
      %v9576 = vpop.f32.mrf.mxu0
      %9577 = vmatprep.mubr.bf16.mxu0 0
      %9578 = vmatmul.mubr.bf16.gmra.mxu0 %v9423
      %v9579 = vpop.f32.mrf.mxu0
      %v9580 = vadd.f32 0.0, %v9579
      %v9581 = vpop.f32.mrf.mxu0
      %v9582 = vpop.f32.mrf.mxu0
      %v9583 = vadd.f32 0.0, %v9582
      %v9584 = vpop.f32.mrf.mxu0
      %9585 = vdwg.mxu0
      %v9586 = vadd.f32 %v9216, %v9460
      %v9587 = vadd.f32 %v9217, %v9463
      %v9588 = vadd.f32 %v9218, %v9468
      %v9589 = vadd.f32 %v9219, %v9471
      %v9590 = vadd.f32 %v9220, %v9476
      %v9591 = vadd.f32 %v9221, %v9479
      %v9592 = vadd.f32 %v9222, %v9484
      %v9593 = vadd.f32 %v9223, %v9487
      %v9594 = vadd.f32 %v9224, %v9492
      %v9595 = vadd.f32 %v9225, %v9495
      %v9596 = vadd.f32 %v9226, %v9500
      %v9597 = vadd.f32 %v9227, %v9503
      %v9598 = vadd.f32 %v9228, %v9508
      %v9599 = vadd.f32 %v9229, %v9511
      %v9600 = vadd.f32 %v9230, %v9516
      %v9601 = vadd.f32 %v9231, %v9519
      %v9602 = vadd.f32 %v9232, %v9524
      %v9603 = vadd.f32 %v9233, %v9527
      %v9604 = vadd.f32 %v9234, %v9532
      %v9605 = vadd.f32 %v9235, %v9535
      %v9606 = vadd.f32 %v9236, %v9540
      %v9607 = vadd.f32 %v9237, %v9543
      %v9608 = vadd.f32 %v9238, %v9548
      %v9609 = vadd.f32 %v9239, %v9551
      %v9610 = vadd.f32 %v9240, %v9556
      %v9611 = vadd.f32 %v9241, %v9559
      %v9612 = vadd.f32 %v9242, %v9564
      %v9613 = vadd.f32 %v9243, %v9567
      %v9614 = vadd.f32 %v9244, %v9572
      %v9615 = vadd.f32 %v9245, %v9575
      %v9616 = vadd.f32 %v9246, %v9580
      %v9617 = vadd.f32 %v9247, %v9583
      %v9618 = vld [vmem:[%s528] sm:$0xf]
      %v9619 = vld [vmem:[%s528 + $0x4] sm:$0xf]
      %v9620 = vld [vmem:[%s528 + $0x8] sm:$0x1]
      %v9621 = vld [vmem:[%s528 + $0xc] sm:$0xf]
      %v9622 = vld [vmem:[%s528 + $0x10] sm:$0xf]
      %v9623 = vld [vmem:[%s528 + $0x14] sm:$0x1]
      %v9624 = vld [vmem:[%s528 + $0x18] sm:$0xf]
      %v9625 = vld [vmem:[%s528 + $0x1c] sm:$0xf]
      %v9626 = vld [vmem:[%s528 + $0x20] sm:$0x1]
      %v9627 = vld [vmem:[%s528 + $0x24] sm:$0xf]
      %v9628 = vld [vmem:[%s528 + $0x28] sm:$0xf]
      %v9629 = vld [vmem:[%s528 + $0x2c] sm:$0x1]
      %v9630 = vld [vmem:[%s528 + $0x30] sm:$0xf]
      %v9631 = vld [vmem:[%s528 + $0x34] sm:$0xf]
      %v9632 = vld [vmem:[%s528 + $0x38] sm:$0x1]
      %v9633 = vld [vmem:[%s528 + $0x3c] sm:$0xf]
      %v9634 = vld [vmem:[%s528 + $0x40] sm:$0xf]
      %v9635 = vld [vmem:[%s528 + $0x44] sm:$0x1]
      %v9636 = vld [vmem:[%s528 + $0x48] sm:$0xf]
      %v9637 = vld [vmem:[%s528 + $0x4c] sm:$0xf]
      %v9638 = vld [vmem:[%s528 + $0x50] sm:$0x1]
      %v9639 = vld [vmem:[%s528 + $0x54] sm:$0xf]
      %v9640 = vld [vmem:[%s528 + $0x58] sm:$0xf]
      %v9641 = vld [vmem:[%s528 + $0x5c] sm:$0x1]
      %v9642 = vld [vmem:[%s528 + $0x60] sm:$0xf]
      %v9643 = vld [vmem:[%s528 + $0x64] sm:$0xf]
      %v9644 = vld [vmem:[%s528 + $0x68] sm:$0x1]
      %v9645 = vld [vmem:[%s528 + $0x6c] sm:$0xf]
      %v9646 = vld [vmem:[%s528 + $0x70] sm:$0xf]
      %v9647 = vld [vmem:[%s528 + $0x74] sm:$0x1]
      %v9648 = vld [vmem:[%s528 + $0x78] sm:$0xf]
      %v9649 = vld [vmem:[%s528 + $0x7c] sm:$0xf]
      %v9650 = vld [vmem:[%s528 + $0x80] sm:$0x1]
      %v9651 = vld [vmem:[%s528 + $0x84] sm:$0xf]
      %v9652 = vld [vmem:[%s528 + $0x88] sm:$0xf]
      %v9653 = vld [vmem:[%s528 + $0x8c] sm:$0x1]
      %v9654 = vld [vmem:[%s528 + $0x90] sm:$0xf]
      %v9655 = vld [vmem:[%s528 + $0x94] sm:$0xf]
      %v9656 = vld [vmem:[%s528 + $0x98] sm:$0x1]
      %v9657 = vld [vmem:[%s528 + $0x9c] sm:$0xf]
      %v9658 = vld [vmem:[%s528 + $0xa0] sm:$0xf]
      %v9659 = vld [vmem:[%s528 + $0xa4] sm:$0x1]
      %v9660 = vld [vmem:[%s528 + $0xa8] sm:$0xf]
      %v9661 = vld [vmem:[%s528 + $0xac] sm:$0xf]
      %v9662 = vld [vmem:[%s528 + $0xb0] sm:$0x1]
      %v9663 = vld [vmem:[%s528 + $0xb4] sm:$0xf]
      %v9664 = vld [vmem:[%s528 + $0xb8] sm:$0xf]
      %v9665 = vld [vmem:[%s528 + $0xbc] sm:$0x1]
      %v9667 = vshrl.u32 %v9618, 16
      %v9669 = vrot.slane %v9667, 4
      %v9670 = vshll.u32 %v9618, 16
      %v9672 = vrot.slane %v9670, 5
      %v9673 = vor.u32 %v9669, %v9672
      %v9674 = vrot.slane %v9673, 4
      %v9676 = vshll.u32 %v9619, 16
      %v9678 = vrot.slane %v9676, 5
      %v9679 = vsel %vm2565, %v9674, %v9678
      %v9680 = vshrl.u32 %v9619, 16
      %v9682 = vrot.slane %v9680, 4
      %v9683 = vor.u32 %v9682, %v9678
      %v9684 = vrot.slane %v9683, 4
      %v9686 = vshll.u32 %v9620, 16
      %v9688 = vrot.slane %v9686, 5
      %v9689 = vsel %vm2565, %v9684, %v9688
      %v9691 = vshrl.u32 %v9621, 16
      %v9693 = vrot.slane %v9691, 4
      %v9694 = vshll.u32 %v9621, 16
      %v9696 = vrot.slane %v9694, 5
      %v9697 = vor.u32 %v9693, %v9696
      %v9698 = vrot.slane %v9697, 4
      %v9700 = vshll.u32 %v9622, 16
      %v9702 = vrot.slane %v9700, 5
      %v9703 = vsel %vm2565, %v9698, %v9702
      %v9704 = vshrl.u32 %v9622, 16
      %v9706 = vrot.slane %v9704, 4
      %v9707 = vor.u32 %v9706, %v9702
      %v9708 = vrot.slane %v9707, 4
      %v9710 = vshll.u32 %v9623, 16
      %v9712 = vrot.slane %v9710, 5
      %v9713 = vsel %vm2565, %v9708, %v9712
      %v9715 = vshrl.u32 %v9624, 16
      %v9717 = vrot.slane %v9715, 4
      %v9718 = vshll.u32 %v9624, 16
      %v9720 = vrot.slane %v9718, 5
      %v9721 = vor.u32 %v9717, %v9720
      %v9722 = vrot.slane %v9721, 4
      %v9724 = vshll.u32 %v9625, 16
      %v9726 = vrot.slane %v9724, 5
      %v9727 = vsel %vm2565, %v9722, %v9726
      %v9728 = vshrl.u32 %v9625, 16
      %v9730 = vrot.slane %v9728, 4
      %v9731 = vor.u32 %v9730, %v9726
      %v9732 = vrot.slane %v9731, 4
      %v9734 = vshll.u32 %v9626, 16
      %v9736 = vrot.slane %v9734, 5
      %v9737 = vsel %vm2565, %v9732, %v9736
      %v9739 = vshrl.u32 %v9627, 16
      %v9741 = vrot.slane %v9739, 4
      %v9742 = vshll.u32 %v9627, 16
      %v9744 = vrot.slane %v9742, 5
      %v9745 = vor.u32 %v9741, %v9744
      %v9746 = vrot.slane %v9745, 4
      %v9748 = vshll.u32 %v9628, 16
      %v9750 = vrot.slane %v9748, 5
      %v9751 = vsel %vm2565, %v9746, %v9750
      %v9752 = vshrl.u32 %v9628, 16
      %v9754 = vrot.slane %v9752, 4
      %v9755 = vor.u32 %v9754, %v9750
      %v9756 = vrot.slane %v9755, 4
      %v9758 = vshll.u32 %v9629, 16
      %v9760 = vrot.slane %v9758, 5
      %v9761 = vsel %vm2565, %v9756, %v9760
      %v9763 = vshrl.u32 %v9630, 16
      %v9765 = vrot.slane %v9763, 4
      %v9766 = vshll.u32 %v9630, 16
      %v9768 = vrot.slane %v9766, 5
      %v9769 = vor.u32 %v9765, %v9768
      %v9770 = vrot.slane %v9769, 4
      %v9772 = vshll.u32 %v9631, 16
      %v9774 = vrot.slane %v9772, 5
      %v9775 = vsel %vm2565, %v9770, %v9774
      %v9776 = vshrl.u32 %v9631, 16
      %v9778 = vrot.slane %v9776, 4
      %v9779 = vor.u32 %v9778, %v9774
      %v9780 = vrot.slane %v9779, 4
      %v9782 = vshll.u32 %v9632, 16
      %v9784 = vrot.slane %v9782, 5
      %v9785 = vsel %vm2565, %v9780, %v9784
      %v9787 = vshrl.u32 %v9633, 16
      %v9789 = vrot.slane %v9787, 4
      %v9790 = vshll.u32 %v9633, 16
      %v9792 = vrot.slane %v9790, 5
      %v9793 = vor.u32 %v9789, %v9792
      %v9794 = vrot.slane %v9793, 4
      %v9796 = vshll.u32 %v9634, 16
      %v9798 = vrot.slane %v9796, 5
      %v9799 = vsel %vm2565, %v9794, %v9798
      %v9800 = vshrl.u32 %v9634, 16
      %v9802 = vrot.slane %v9800, 4
      %v9803 = vor.u32 %v9802, %v9798
      %v9804 = vrot.slane %v9803, 4
      %v9806 = vshll.u32 %v9635, 16
      %v9808 = vrot.slane %v9806, 5
      %v9809 = vsel %vm2565, %v9804, %v9808
      %v9811 = vshrl.u32 %v9636, 16
      %v9813 = vrot.slane %v9811, 4
      %v9814 = vshll.u32 %v9636, 16
      %v9816 = vrot.slane %v9814, 5
      %v9817 = vor.u32 %v9813, %v9816
      %v9818 = vrot.slane %v9817, 4
      %v9820 = vshll.u32 %v9637, 16
      %v9822 = vrot.slane %v9820, 5
      %v9823 = vsel %vm2565, %v9818, %v9822
      %v9824 = vshrl.u32 %v9637, 16
      %v9826 = vrot.slane %v9824, 4
      %v9827 = vor.u32 %v9826, %v9822
      %v9828 = vrot.slane %v9827, 4
      %v9830 = vshll.u32 %v9638, 16
      %v9832 = vrot.slane %v9830, 5
      %v9833 = vsel %vm2565, %v9828, %v9832
      %v9835 = vshrl.u32 %v9639, 16
      %v9837 = vrot.slane %v9835, 4
      %v9838 = vshll.u32 %v9639, 16
      %v9840 = vrot.slane %v9838, 5
      %v9841 = vor.u32 %v9837, %v9840
      %v9842 = vrot.slane %v9841, 4
      %v9844 = vshll.u32 %v9640, 16
      %v9846 = vrot.slane %v9844, 5
      %v9847 = vsel %vm2565, %v9842, %v9846
      %v9848 = vshrl.u32 %v9640, 16
      %v9850 = vrot.slane %v9848, 4
      %v9851 = vor.u32 %v9850, %v9846
      %v9852 = vrot.slane %v9851, 4
      %v9854 = vshll.u32 %v9641, 16
      %v9856 = vrot.slane %v9854, 5
      %v9857 = vsel %vm2565, %v9852, %v9856
      %v9859 = vshrl.u32 %v9642, 16
      %v9861 = vrot.slane %v9859, 4
      %v9862 = vshll.u32 %v9642, 16
      %v9864 = vrot.slane %v9862, 5
      %v9865 = vor.u32 %v9861, %v9864
      %v9866 = vrot.slane %v9865, 4
      %v9868 = vshll.u32 %v9643, 16
      %v9870 = vrot.slane %v9868, 5
      %v9871 = vsel %vm2565, %v9866, %v9870
      %v9872 = vshrl.u32 %v9643, 16
      %v9874 = vrot.slane %v9872, 4
      %v9875 = vor.u32 %v9874, %v9870
      %v9876 = vrot.slane %v9875, 4
      %v9878 = vshll.u32 %v9644, 16
      %v9880 = vrot.slane %v9878, 5
      %v9881 = vsel %vm2565, %v9876, %v9880
      %v9883 = vshrl.u32 %v9645, 16
      %v9885 = vrot.slane %v9883, 4
      %v9886 = vshll.u32 %v9645, 16
      %v9888 = vrot.slane %v9886, 5
      %v9889 = vor.u32 %v9885, %v9888
      %v9890 = vrot.slane %v9889, 4
      %v9892 = vshll.u32 %v9646, 16
      %v9894 = vrot.slane %v9892, 5
      %v9895 = vsel %vm2565, %v9890, %v9894
      %v9896 = vshrl.u32 %v9646, 16
      %v9898 = vrot.slane %v9896, 4
      %v9899 = vor.u32 %v9898, %v9894
      %v9900 = vrot.slane %v9899, 4
      %v9902 = vshll.u32 %v9647, 16
      %v9904 = vrot.slane %v9902, 5
      %v9905 = vsel %vm2565, %v9900, %v9904
      %v9907 = vshrl.u32 %v9648, 16
      %v9909 = vrot.slane %v9907, 4
      %v9910 = vshll.u32 %v9648, 16
      %v9912 = vrot.slane %v9910, 5
      %v9913 = vor.u32 %v9909, %v9912
      %v9914 = vrot.slane %v9913, 4
      %v9916 = vshll.u32 %v9649, 16
      %v9918 = vrot.slane %v9916, 5
      %v9919 = vsel %vm2565, %v9914, %v9918
      %v9920 = vshrl.u32 %v9649, 16
      %v9922 = vrot.slane %v9920, 4
      %v9923 = vor.u32 %v9922, %v9918
      %v9924 = vrot.slane %v9923, 4
      %v9926 = vshll.u32 %v9650, 16
      %v9928 = vrot.slane %v9926, 5
      %v9929 = vsel %vm2565, %v9924, %v9928
      %v9931 = vshrl.u32 %v9651, 16
      %v9933 = vrot.slane %v9931, 4
      %v9934 = vshll.u32 %v9651, 16
      %v9936 = vrot.slane %v9934, 5
      %v9937 = vor.u32 %v9933, %v9936
      %v9938 = vrot.slane %v9937, 4
      %v9940 = vshll.u32 %v9652, 16
      %v9942 = vrot.slane %v9940, 5
      %v9943 = vsel %vm2565, %v9938, %v9942
      %v9944 = vshrl.u32 %v9652, 16
      %v9946 = vrot.slane %v9944, 4
      %v9947 = vor.u32 %v9946, %v9942
      %v9948 = vrot.slane %v9947, 4
      %v9950 = vshll.u32 %v9653, 16
      %v9952 = vrot.slane %v9950, 5
      %v9953 = vsel %vm2565, %v9948, %v9952
      %v9955 = vshrl.u32 %v9654, 16
      %v9957 = vrot.slane %v9955, 4
      %v9958 = vshll.u32 %v9654, 16
      %v9960 = vrot.slane %v9958, 5
      %v9961 = vor.u32 %v9957, %v9960
      %v9962 = vrot.slane %v9961, 4
      %v9964 = vshll.u32 %v9655, 16
      %v9966 = vrot.slane %v9964, 5
      %v9967 = vsel %vm2565, %v9962, %v9966
      %v9968 = vshrl.u32 %v9655, 16
      %v9970 = vrot.slane %v9968, 4
      %v9971 = vor.u32 %v9970, %v9966
      %v9972 = vrot.slane %v9971, 4
      %v9974 = vshll.u32 %v9656, 16
      %v9976 = vrot.slane %v9974, 5
      %v9977 = vsel %vm2565, %v9972, %v9976
      %v9979 = vshrl.u32 %v9657, 16
      %v9981 = vrot.slane %v9979, 4
      %v9982 = vshll.u32 %v9657, 16
      %v9984 = vrot.slane %v9982, 5
      %v9985 = vor.u32 %v9981, %v9984
      %v9986 = vrot.slane %v9985, 4
      %v9988 = vshll.u32 %v9658, 16
      %v9990 = vrot.slane %v9988, 5
      %v9991 = vsel %vm2565, %v9986, %v9990
      %v9992 = vshrl.u32 %v9658, 16
      %v9994 = vrot.slane %v9992, 4
      %v9995 = vor.u32 %v9994, %v9990
      %v9996 = vrot.slane %v9995, 4
      %v9998 = vshll.u32 %v9659, 16
      %v10000 = vrot.slane %v9998, 5
      %v10001 = vsel %vm2565, %v9996, %v10000
      %v10003 = vshrl.u32 %v9660, 16
      %v10005 = vrot.slane %v10003, 4
      %v10006 = vshll.u32 %v9660, 16
      %v10008 = vrot.slane %v10006, 5
      %v10009 = vor.u32 %v10005, %v10008
      %v10010 = vrot.slane %v10009, 4
      %v10012 = vshll.u32 %v9661, 16
      %v10014 = vrot.slane %v10012, 5
      %v10015 = vsel %vm2565, %v10010, %v10014
      %v10016 = vshrl.u32 %v9661, 16
      %v10018 = vrot.slane %v10016, 4
      %v10019 = vor.u32 %v10018, %v10014
      %v10020 = vrot.slane %v10019, 4
      %v10022 = vshll.u32 %v9662, 16
      %v10024 = vrot.slane %v10022, 5
      %v10025 = vsel %vm2565, %v10020, %v10024
      %v10027 = vshrl.u32 %v9663, 16
      %v10029 = vrot.slane %v10027, 4
      %v10030 = vshll.u32 %v9663, 16
      %v10032 = vrot.slane %v10030, 5
      %v10033 = vor.u32 %v10029, %v10032
      %v10034 = vrot.slane %v10033, 4
      %v10036 = vshll.u32 %v9664, 16
      %v10038 = vrot.slane %v10036, 5
      %v10039 = vsel %vm2565, %v10034, %v10038
      %v10040 = vshrl.u32 %v9664, 16
      %v10042 = vrot.slane %v10040, 4
      %v10043 = vor.u32 %v10042, %v10038
      %v10044 = vrot.slane %v10043, 4
      %v10046 = vshll.u32 %v9665, 16
      %v10048 = vrot.slane %v10046, 5
      %v10049 = vsel %vm2565, %v10044, %v10048
      %s10050 = scalar_lea.vmem %s7, 64
      %v10051 = vld [vmem:[%s10050] sm:$0xf]
      %v10052 = vld [vmem:[%s10050 + $0x4] sm:$0xf]
      %v10053 = vld [vmem:[%s10050 + $0x8] sm:$0xf]
      %v10054 = vld [vmem:[%s10050 + $0xc] sm:$0xf]
      %v10055 = vunpack.c.l.b16 %v9679
      %v10056 = vunpack.c.l.b16 %v9689
      %v10057 = vunpack.c.l.b16 %v9703
      %v10058 = vunpack.c.l.b16 %v9713
      %v10059 = vunpack.c.l.b16 %v9727
      %v10060 = vunpack.c.l.b16 %v9737
      %v10061 = vunpack.c.l.b16 %v9751
      %v10062 = vunpack.c.l.b16 %v9761
      %v10063 = vunpack.c.l.b16 %v9775
      %v10064 = vunpack.c.l.b16 %v9785
      %v10065 = vunpack.c.l.b16 %v9799
      %v10066 = vunpack.c.l.b16 %v9809
      %v10067 = vunpack.c.l.b16 %v9823
      %v10068 = vunpack.c.l.b16 %v9833
      %v10069 = vunpack.c.l.b16 %v9847
      %v10070 = vunpack.c.l.b16 %v9857
      %v10071 = vunpack.c.l.b16 %v9871
      %v10072 = vunpack.c.l.b16 %v9881
      %v10073 = vunpack.c.l.b16 %v9895
      %v10074 = vunpack.c.l.b16 %v9905
      %v10075 = vunpack.c.l.b16 %v9919
      %v10076 = vunpack.c.l.b16 %v9929
      %v10077 = vunpack.c.l.b16 %v9943
      %v10078 = vunpack.c.l.b16 %v9953
      %v10079 = vunpack.c.l.b16 %v9967
      %v10080 = vunpack.c.l.b16 %v9977
      %v10081 = vunpack.c.l.b16 %v9991
      %v10082 = vunpack.c.l.b16 %v10001
      %v10083 = vunpack.c.l.b16 %v10015
      %v10084 = vunpack.c.l.b16 %v10025
      %v10085 = vunpack.c.l.b16 %v10039
      %v10086 = vunpack.c.l.b16 %v10049
      %v10087 = vpack.c.b16 %v10056, %v10055
      %v10088 = vpack.c.b16 %v10058, %v10057
      %v10089 = vpack.c.b16 %v10060, %v10059
      %v10090 = vpack.c.b16 %v10062, %v10061
      %v10091 = vpack.c.b16 %v10064, %v10063
      %v10092 = vpack.c.b16 %v10066, %v10065
      %v10093 = vpack.c.b16 %v10068, %v10067
      %v10094 = vpack.c.b16 %v10070, %v10069
      %v10095 = vpack.c.b16 %v10072, %v10071
      %v10096 = vpack.c.b16 %v10074, %v10073
      %v10097 = vpack.c.b16 %v10076, %v10075
      %v10098 = vpack.c.b16 %v10078, %v10077
      %v10099 = vpack.c.b16 %v10080, %v10079
      %v10100 = vpack.c.b16 %v10082, %v10081
      %v10101 = vpack.c.b16 %v10084, %v10083
      %v10102 = vpack.c.b16 %v10086, %v10085
      %v10107 = vunpack.c.l.b16 %v10051
      %v10108 = vunpack.c.l.b16 %v10052
      %v10109 = vunpack.c.l.b16 %v10053
      %v10110 = vunpack.c.l.b16 %v10054
      %v10111 = vpack.c.b16 %v10108, %v10107
      %v10112 = vpack.c.b16 %v10110, %v10109
      %v10116 = vsel %vm8271, %v10087, 0
      %v10119 = vsel %vm8271, %v10088, 0
      %v10122 = vsel %vm8271, %v10089, 0
      %v10125 = vsel %vm8271, %v10090, 0
      %v10128 = vsel %vm8271, %v10091, 0
      %v10131 = vsel %vm8271, %v10092, 0
      %v10134 = vsel %vm8271, %v10093, 0
      %v10137 = vsel %vm8271, %v10094, 0
      %v10140 = vsel %vm8271, %v10095, 0
      %v10143 = vsel %vm8271, %v10096, 0
      %v10146 = vsel %vm8271, %v10097, 0
      %v10149 = vsel %vm8271, %v10098, 0
      %v10152 = vsel %vm8271, %v10099, 0
      %v10155 = vsel %vm8271, %v10100, 0
      %v10158 = vsel %vm8271, %v10101, 0
      %v10161 = vsel %vm8271, %v10102, 0
      %10163 = vmatprep.subr.bf16.mxu0 0
      %10164 = vmatpush1.bf16.msra.mxu0 0
      %10165 = vmatprep.subr.bf16.mxu0 0
      %10166 = vmatpush1.bf16.msra.mxu0 0
      %10167 = vmatprep.subr.bf16.mxu0 0
      %10168 = vmatpush1.bf16.msra.mxu0 0
      %10169 = vmatprep.subr.bf16.mxu0 0
      %10170 = vmatpush1.bf16.msra.mxu0 0
      %10171 = vmatprep.subr.bf16.mxu0 0
      %10172 = vmatpush1.bf16.msra.mxu0 0
      %10173 = vmatprep.subr.bf16.mxu0 0
      %10174 = vmatpush1.bf16.msra.mxu0 0
      %10175 = vmatprep.subr.bf16.mxu0 0
      %10176 = vmatpush1.bf16.msra.mxu0 %v10112
      %10177 = vmatprep.subr.bf16.mxu0 0
      %10178 = vmatpush1.bf16.msra.mxu0 %v10111
      %10179 = vmatprep.subr.bf16.mxu0 0
      %10180 = vmatpush2.bf16.msra.mxu0 0
      %10181 = vmatprep.subr.bf16.mxu0 0
      %10182 = vmatpush2.bf16.msra.mxu0 0
      %10183 = vmatprep.subr.bf16.mxu0 0
      %10184 = vmatpush2.bf16.msra.mxu0 0
      %10185 = vmatprep.subr.bf16.mxu0 0
      %10186 = vmatpush2.bf16.msra.mxu0 0
      %10187 = vmatprep.subr.bf16.mxu0 0
      %10188 = vmatpush2.bf16.msra.mxu0 0
      %10189 = vmatprep.subr.bf16.mxu0 0
      %10190 = vmatpush2.bf16.msra.mxu0 0
      %10191 = vmatprep.subr.bf16.mxu0 0
      %10192 = vmatpush2.bf16.msra.mxu0 0
      %10193 = vmatprep.subr.bf16.mxu0 0
      %10194 = vmatpush2.bf16.msra.mxu0 0
      %10195 = vmatprep.mubr.bf16.mxu0 0
      %10196 = vmatmul.mubr.bf16.gmra.mxu0 %v10116
      %v10197 = vpop.f32.mrf.mxu0
      %v10198 = vadd.f32 0.0, %v10197
      %v10199 = vpop.f32.mrf.mxu0
      %v10200 = vpop.f32.mrf.mxu0
      %v10201 = vadd.f32 0.0, %v10200
      %v10202 = vpop.f32.mrf.mxu0
      %10203 = vmatprep.mubr.bf16.mxu0 0
      %10204 = vmatmul.mubr.bf16.gmra.mxu0 %v10119
      %v10205 = vpop.f32.mrf.mxu0
      %v10206 = vadd.f32 0.0, %v10205
      %v10207 = vpop.f32.mrf.mxu0
      %v10208 = vpop.f32.mrf.mxu0
      %v10209 = vadd.f32 0.0, %v10208
      %v10210 = vpop.f32.mrf.mxu0
      %10211 = vmatprep.mubr.bf16.mxu0 0
      %10212 = vmatmul.mubr.bf16.gmra.mxu0 %v10122
      %v10213 = vpop.f32.mrf.mxu0
      %v10214 = vadd.f32 0.0, %v10213
      %v10215 = vpop.f32.mrf.mxu0
      %v10216 = vpop.f32.mrf.mxu0
      %v10217 = vadd.f32 0.0, %v10216
      %v10218 = vpop.f32.mrf.mxu0
      %10219 = vmatprep.mubr.bf16.mxu0 0
      %10220 = vmatmul.mubr.bf16.gmra.mxu0 %v10125
      %v10221 = vpop.f32.mrf.mxu0
      %v10222 = vadd.f32 0.0, %v10221
      %v10223 = vpop.f32.mrf.mxu0
      %v10224 = vpop.f32.mrf.mxu0
      %v10225 = vadd.f32 0.0, %v10224
      %v10226 = vpop.f32.mrf.mxu0
      %10227 = vmatprep.mubr.bf16.mxu0 0
      %10228 = vmatmul.mubr.bf16.gmra.mxu0 %v10128
      %v10229 = vpop.f32.mrf.mxu0
      %v10230 = vadd.f32 0.0, %v10229
      %v10231 = vpop.f32.mrf.mxu0
      %v10232 = vpop.f32.mrf.mxu0
      %v10233 = vadd.f32 0.0, %v10232
      %v10234 = vpop.f32.mrf.mxu0
      %10235 = vmatprep.mubr.bf16.mxu0 0
      %10236 = vmatmul.mubr.bf16.gmra.mxu0 %v10131
      %v10237 = vpop.f32.mrf.mxu0
      %v10238 = vadd.f32 0.0, %v10237
      %v10239 = vpop.f32.mrf.mxu0
      %v10240 = vpop.f32.mrf.mxu0
      %v10241 = vadd.f32 0.0, %v10240
      %v10242 = vpop.f32.mrf.mxu0
      %10243 = vmatprep.mubr.bf16.mxu0 0
      %10244 = vmatmul.mubr.bf16.gmra.mxu0 %v10134
      %v10245 = vpop.f32.mrf.mxu0
      %v10246 = vadd.f32 0.0, %v10245
      %v10247 = vpop.f32.mrf.mxu0
      %v10248 = vpop.f32.mrf.mxu0
      %v10249 = vadd.f32 0.0, %v10248
      %v10250 = vpop.f32.mrf.mxu0
      %10251 = vmatprep.mubr.bf16.mxu0 0
      %10252 = vmatmul.mubr.bf16.gmra.mxu0 %v10137
      %v10253 = vpop.f32.mrf.mxu0
      %v10254 = vadd.f32 0.0, %v10253
      %v10255 = vpop.f32.mrf.mxu0
      %v10256 = vpop.f32.mrf.mxu0
      %v10257 = vadd.f32 0.0, %v10256
      %v10258 = vpop.f32.mrf.mxu0
      %10259 = vmatprep.mubr.bf16.mxu0 0
      %10260 = vmatmul.mubr.bf16.gmra.mxu0 %v10140
      %v10261 = vpop.f32.mrf.mxu0
      %v10262 = vadd.f32 0.0, %v10261
      %v10263 = vpop.f32.mrf.mxu0
      %v10264 = vpop.f32.mrf.mxu0
      %v10265 = vadd.f32 0.0, %v10264
      %v10266 = vpop.f32.mrf.mxu0
      %10267 = vmatprep.mubr.bf16.mxu0 0
      %10268 = vmatmul.mubr.bf16.gmra.mxu0 %v10143
      %v10269 = vpop.f32.mrf.mxu0
      %v10270 = vadd.f32 0.0, %v10269
      %v10271 = vpop.f32.mrf.mxu0
      %v10272 = vpop.f32.mrf.mxu0
      %v10273 = vadd.f32 0.0, %v10272
      %v10274 = vpop.f32.mrf.mxu0
      %10275 = vmatprep.mubr.bf16.mxu0 0
      %10276 = vmatmul.mubr.bf16.gmra.mxu0 %v10146
      %v10277 = vpop.f32.mrf.mxu0
      %v10278 = vadd.f32 0.0, %v10277
      %v10279 = vpop.f32.mrf.mxu0
      %v10280 = vpop.f32.mrf.mxu0
      %v10281 = vadd.f32 0.0, %v10280
      %v10282 = vpop.f32.mrf.mxu0
      %10283 = vmatprep.mubr.bf16.mxu0 0
      %10284 = vmatmul.mubr.bf16.gmra.mxu0 %v10149
      %v10285 = vpop.f32.mrf.mxu0
      %v10286 = vadd.f32 0.0, %v10285
      %v10287 = vpop.f32.mrf.mxu0
      %v10288 = vpop.f32.mrf.mxu0
      %v10289 = vadd.f32 0.0, %v10288
      %v10290 = vpop.f32.mrf.mxu0
      %10291 = vmatprep.mubr.bf16.mxu0 0
      %10292 = vmatmul.mubr.bf16.gmra.mxu0 %v10152
      %v10293 = vpop.f32.mrf.mxu0
      %v10294 = vadd.f32 0.0, %v10293
      %v10295 = vpop.f32.mrf.mxu0
      %v10296 = vpop.f32.mrf.mxu0
      %v10297 = vadd.f32 0.0, %v10296
      %v10298 = vpop.f32.mrf.mxu0
      %10299 = vmatprep.mubr.bf16.mxu0 0
      %10300 = vmatmul.mubr.bf16.gmra.mxu0 %v10155
      %v10301 = vpop.f32.mrf.mxu0
      %v10302 = vadd.f32 0.0, %v10301
      %v10303 = vpop.f32.mrf.mxu0
      %v10304 = vpop.f32.mrf.mxu0
      %v10305 = vadd.f32 0.0, %v10304
      %v10306 = vpop.f32.mrf.mxu0
      %10307 = vmatprep.mubr.bf16.mxu0 0
      %10308 = vmatmul.mubr.bf16.gmra.mxu0 %v10158
      %v10309 = vpop.f32.mrf.mxu0
      %v10310 = vadd.f32 0.0, %v10309
      %v10311 = vpop.f32.mrf.mxu0
      %v10312 = vpop.f32.mrf.mxu0
      %v10313 = vadd.f32 0.0, %v10312
      %v10314 = vpop.f32.mrf.mxu0
      %10315 = vmatprep.mubr.bf16.mxu0 0
      %10316 = vmatmul.mubr.bf16.gmra.mxu0 %v10161
      %v10317 = vpop.f32.mrf.mxu0
      %v10318 = vadd.f32 0.0, %v10317
      %v10319 = vpop.f32.mrf.mxu0
      %v10320 = vpop.f32.mrf.mxu0
      %v10321 = vadd.f32 0.0, %v10320
      %v10322 = vpop.f32.mrf.mxu0
      %10323 = vdwg.mxu0
      %v10324 = vadd.f32 %v9586, %v10198
      %v10325 = vadd.f32 %v9587, %v10201
      %v10326 = vadd.f32 %v9588, %v10206
      %v10327 = vadd.f32 %v9589, %v10209
      %v10328 = vadd.f32 %v9590, %v10214
      %v10329 = vadd.f32 %v9591, %v10217
      %v10330 = vadd.f32 %v9592, %v10222
      %v10331 = vadd.f32 %v9593, %v10225
      %v10332 = vadd.f32 %v9594, %v10230
      %v10333 = vadd.f32 %v9595, %v10233
      %v10334 = vadd.f32 %v9596, %v10238
      %v10335 = vadd.f32 %v9597, %v10241
      %v10336 = vadd.f32 %v9598, %v10246
      %v10337 = vadd.f32 %v9599, %v10249
      %v10338 = vadd.f32 %v9600, %v10254
      %v10339 = vadd.f32 %v9601, %v10257
      %v10340 = vadd.f32 %v9602, %v10262
      %v10341 = vadd.f32 %v9603, %v10265
      %v10342 = vadd.f32 %v9604, %v10270
      %v10343 = vadd.f32 %v9605, %v10273
      %v10344 = vadd.f32 %v9606, %v10278
      %v10345 = vadd.f32 %v9607, %v10281
      %v10346 = vadd.f32 %v9608, %v10286
      %v10347 = vadd.f32 %v9609, %v10289
      %v10348 = vadd.f32 %v9610, %v10294
      %v10349 = vadd.f32 %v9611, %v10297
      %v10350 = vadd.f32 %v9612, %v10302
      %v10351 = vadd.f32 %v9613, %v10305
      %v10352 = vadd.f32 %v9614, %v10310
      %v10353 = vadd.f32 %v9615, %v10313
      %v10354 = vadd.f32 %v9616, %v10318
      %v10355 = vadd.f32 %v9617, %v10321
      %v10356 = vld [vmem:[%s528] sm:$0xe]
      %v10357 = vld [vmem:[%s528 + $0xc] sm:$0xe]
      %v10358 = vld [vmem:[%s528 + $0x18] sm:$0xe]
      %v10359 = vld [vmem:[%s528 + $0x24] sm:$0xe]
      %v10360 = vld [vmem:[%s528 + $0x30] sm:$0xe]
      %v10361 = vld [vmem:[%s528 + $0x3c] sm:$0xe]
      %v10362 = vld [vmem:[%s528 + $0x48] sm:$0xe]
      %v10363 = vld [vmem:[%s528 + $0x54] sm:$0xe]
      %v10364 = vld [vmem:[%s528 + $0x60] sm:$0xe]
      %v10365 = vld [vmem:[%s528 + $0x6c] sm:$0xe]
      %v10366 = vld [vmem:[%s528 + $0x78] sm:$0xe]
      %v10367 = vld [vmem:[%s528 + $0x84] sm:$0xe]
      %v10368 = vld [vmem:[%s528 + $0x90] sm:$0xe]
      %v10369 = vld [vmem:[%s528 + $0x9c] sm:$0xe]
      %v10370 = vld [vmem:[%s528 + $0xa8] sm:$0xe]
      %v10371 = vld [vmem:[%s528 + $0xb4] sm:$0xe]
      %v10420 = vrot.slane %v10356, 5
      %v10421 = vrot.slane %v10420, 4
      %v10422 = vrot.slane %v9619, 5
      %v10423 = vsel %vm3576, %v10421, %v10422
      %v10424 = vrot.slane %v10422, 4
      %v10425 = vrot.slane %v9620, 5
      %v10426 = vsel %vm3576, %v10424, %v10425
      %v10427 = vrot.slane %v10357, 5
      %v10428 = vrot.slane %v10427, 4
      %v10429 = vrot.slane %v9622, 5
      %v10430 = vsel %vm3576, %v10428, %v10429
      %v10431 = vrot.slane %v10429, 4
      %v10432 = vrot.slane %v9623, 5
      %v10433 = vsel %vm3576, %v10431, %v10432
      %v10434 = vrot.slane %v10358, 5
      %v10435 = vrot.slane %v10434, 4
      %v10436 = vrot.slane %v9625, 5
      %v10437 = vsel %vm3576, %v10435, %v10436
      %v10438 = vrot.slane %v10436, 4
      %v10439 = vrot.slane %v9626, 5
      %v10440 = vsel %vm3576, %v10438, %v10439
      %v10441 = vrot.slane %v10359, 5
      %v10442 = vrot.slane %v10441, 4
      %v10443 = vrot.slane %v9628, 5
      %v10444 = vsel %vm3576, %v10442, %v10443
      %v10445 = vrot.slane %v10443, 4
      %v10446 = vrot.slane %v9629, 5
      %v10447 = vsel %vm3576, %v10445, %v10446
      %v10448 = vrot.slane %v10360, 5
      %v10449 = vrot.slane %v10448, 4
      %v10450 = vrot.slane %v9631, 5
      %v10451 = vsel %vm3576, %v10449, %v10450
      %v10452 = vrot.slane %v10450, 4
      %v10453 = vrot.slane %v9632, 5
      %v10454 = vsel %vm3576, %v10452, %v10453
      %v10455 = vrot.slane %v10361, 5
      %v10456 = vrot.slane %v10455, 4
      %v10457 = vrot.slane %v9634, 5
      %v10458 = vsel %vm3576, %v10456, %v10457
      %v10459 = vrot.slane %v10457, 4
      %v10460 = vrot.slane %v9635, 5
      %v10461 = vsel %vm3576, %v10459, %v10460
      %v10462 = vrot.slane %v10362, 5
      %v10463 = vrot.slane %v10462, 4
      %v10464 = vrot.slane %v9637, 5
      %v10465 = vsel %vm3576, %v10463, %v10464
      %v10466 = vrot.slane %v10464, 4
      %v10467 = vrot.slane %v9638, 5
      %v10468 = vsel %vm3576, %v10466, %v10467
      %v10469 = vrot.slane %v10363, 5
      %v10470 = vrot.slane %v10469, 4
      %v10471 = vrot.slane %v9640, 5
      %v10472 = vsel %vm3576, %v10470, %v10471
      %v10473 = vrot.slane %v10471, 4
      %v10474 = vrot.slane %v9641, 5
      %v10475 = vsel %vm3576, %v10473, %v10474
      %v10476 = vrot.slane %v10364, 5
      %v10477 = vrot.slane %v10476, 4
      %v10478 = vrot.slane %v9643, 5
      %v10479 = vsel %vm3576, %v10477, %v10478
      %v10480 = vrot.slane %v10478, 4
      %v10481 = vrot.slane %v9644, 5
      %v10482 = vsel %vm3576, %v10480, %v10481
      %v10483 = vrot.slane %v10365, 5
      %v10484 = vrot.slane %v10483, 4
      %v10485 = vrot.slane %v9646, 5
      %v10486 = vsel %vm3576, %v10484, %v10485
      %v10487 = vrot.slane %v10485, 4
      %v10488 = vrot.slane %v9647, 5
      %v10489 = vsel %vm3576, %v10487, %v10488
      %v10490 = vrot.slane %v10366, 5
      %v10491 = vrot.slane %v10490, 4
      %v10492 = vrot.slane %v9649, 5
      %v10493 = vsel %vm3576, %v10491, %v10492
      %v10494 = vrot.slane %v10492, 4
      %v10495 = vrot.slane %v9650, 5
      %v10496 = vsel %vm3576, %v10494, %v10495
      %v10497 = vrot.slane %v10367, 5
      %v10498 = vrot.slane %v10497, 4
      %v10499 = vrot.slane %v9652, 5
      %v10500 = vsel %vm3576, %v10498, %v10499
      %v10501 = vrot.slane %v10499, 4
      %v10502 = vrot.slane %v9653, 5
      %v10503 = vsel %vm3576, %v10501, %v10502
      %v10504 = vrot.slane %v10368, 5
      %v10505 = vrot.slane %v10504, 4
      %v10506 = vrot.slane %v9655, 5
      %v10507 = vsel %vm3576, %v10505, %v10506
      %v10508 = vrot.slane %v10506, 4
      %v10509 = vrot.slane %v9656, 5
      %v10510 = vsel %vm3576, %v10508, %v10509
      %v10511 = vrot.slane %v10369, 5
      %v10512 = vrot.slane %v10511, 4
      %v10513 = vrot.slane %v9658, 5
      %v10514 = vsel %vm3576, %v10512, %v10513
      %v10515 = vrot.slane %v10513, 4
      %v10516 = vrot.slane %v9659, 5
      %v10517 = vsel %vm3576, %v10515, %v10516
      %v10518 = vrot.slane %v10370, 5
      %v10519 = vrot.slane %v10518, 4
      %v10520 = vrot.slane %v9661, 5
      %v10521 = vsel %vm3576, %v10519, %v10520
      %v10522 = vrot.slane %v10520, 4
      %v10523 = vrot.slane %v9662, 5
      %v10524 = vsel %vm3576, %v10522, %v10523
      %v10525 = vrot.slane %v10371, 5
      %v10526 = vrot.slane %v10525, 4
      %v10527 = vrot.slane %v9664, 5
      %v10528 = vsel %vm3576, %v10526, %v10527
      %v10529 = vrot.slane %v10527, 4
      %v10530 = vrot.slane %v9665, 5
      %v10531 = vsel %vm3576, %v10529, %v10530
      %s10532 = scalar_lea.vmem %s7, 80
      %v10533 = vld [vmem:[%s10532] sm:$0xf]
      %v10534 = vld [vmem:[%s10532 + $0x4] sm:$0xf]
      %v10535 = vld [vmem:[%s10532 + $0x8] sm:$0xf]
      %v10536 = vld [vmem:[%s10532 + $0xc] sm:$0xf]
      %v10537 = vunpack.c.l.b16 %v10423
      %v10538 = vunpack.c.l.b16 %v10426
      %v10539 = vunpack.c.l.b16 %v10430
      %v10540 = vunpack.c.l.b16 %v10433
      %v10541 = vunpack.c.l.b16 %v10437
      %v10542 = vunpack.c.l.b16 %v10440
      %v10543 = vunpack.c.l.b16 %v10444
      %v10544 = vunpack.c.l.b16 %v10447
      %v10545 = vunpack.c.l.b16 %v10451
      %v10546 = vunpack.c.l.b16 %v10454
      %v10547 = vunpack.c.l.b16 %v10458
      %v10548 = vunpack.c.l.b16 %v10461
      %v10549 = vunpack.c.l.b16 %v10465
      %v10550 = vunpack.c.l.b16 %v10468
      %v10551 = vunpack.c.l.b16 %v10472
      %v10552 = vunpack.c.l.b16 %v10475
      %v10553 = vunpack.c.l.b16 %v10479
      %v10554 = vunpack.c.l.b16 %v10482
      %v10555 = vunpack.c.l.b16 %v10486
      %v10556 = vunpack.c.l.b16 %v10489
      %v10557 = vunpack.c.l.b16 %v10493
      %v10558 = vunpack.c.l.b16 %v10496
      %v10559 = vunpack.c.l.b16 %v10500
      %v10560 = vunpack.c.l.b16 %v10503
      %v10561 = vunpack.c.l.b16 %v10507
      %v10562 = vunpack.c.l.b16 %v10510
      %v10563 = vunpack.c.l.b16 %v10514
      %v10564 = vunpack.c.l.b16 %v10517
      %v10565 = vunpack.c.l.b16 %v10521
      %v10566 = vunpack.c.l.b16 %v10524
      %v10567 = vunpack.c.l.b16 %v10528
      %v10568 = vunpack.c.l.b16 %v10531
      %v10569 = vpack.c.b16 %v10538, %v10537
      %v10570 = vpack.c.b16 %v10540, %v10539
      %v10571 = vpack.c.b16 %v10542, %v10541
      %v10572 = vpack.c.b16 %v10544, %v10543
      %v10573 = vpack.c.b16 %v10546, %v10545
      %v10574 = vpack.c.b16 %v10548, %v10547
      %v10575 = vpack.c.b16 %v10550, %v10549
      %v10576 = vpack.c.b16 %v10552, %v10551
      %v10577 = vpack.c.b16 %v10554, %v10553
      %v10578 = vpack.c.b16 %v10556, %v10555
      %v10579 = vpack.c.b16 %v10558, %v10557
      %v10580 = vpack.c.b16 %v10560, %v10559
      %v10581 = vpack.c.b16 %v10562, %v10561
      %v10582 = vpack.c.b16 %v10564, %v10563
      %v10583 = vpack.c.b16 %v10566, %v10565
      %v10584 = vpack.c.b16 %v10568, %v10567
      %v10589 = vunpack.c.l.b16 %v10533
      %v10590 = vunpack.c.l.b16 %v10534
      %v10591 = vunpack.c.l.b16 %v10535
      %v10592 = vunpack.c.l.b16 %v10536
      %v10593 = vpack.c.b16 %v10590, %v10589
      %v10594 = vpack.c.b16 %v10592, %v10591
      %v10598 = vsel %vm8271, %v10569, 0
      %v10601 = vsel %vm8271, %v10570, 0
      %v10604 = vsel %vm8271, %v10571, 0
      %v10607 = vsel %vm8271, %v10572, 0
      %v10610 = vsel %vm8271, %v10573, 0
      %v10613 = vsel %vm8271, %v10574, 0
      %v10616 = vsel %vm8271, %v10575, 0
      %v10619 = vsel %vm8271, %v10576, 0
      %v10622 = vsel %vm8271, %v10577, 0
      %v10625 = vsel %vm8271, %v10578, 0
      %v10628 = vsel %vm8271, %v10579, 0
      %v10631 = vsel %vm8271, %v10580, 0
      %v10634 = vsel %vm8271, %v10581, 0
      %v10637 = vsel %vm8271, %v10582, 0
      %v10640 = vsel %vm8271, %v10583, 0
      %v10643 = vsel %vm8271, %v10584, 0
      %10645 = vmatprep.subr.bf16.mxu0 0
      %10646 = vmatpush1.bf16.msra.mxu0 0
      %10647 = vmatprep.subr.bf16.mxu0 0
      %10648 = vmatpush1.bf16.msra.mxu0 0
      %10649 = vmatprep.subr.bf16.mxu0 0
      %10650 = vmatpush1.bf16.msra.mxu0 0
      %10651 = vmatprep.subr.bf16.mxu0 0
      %10652 = vmatpush1.bf16.msra.mxu0 0
      %10653 = vmatprep.subr.bf16.mxu0 0
      %10654 = vmatpush1.bf16.msra.mxu0 0
      %10655 = vmatprep.subr.bf16.mxu0 0
      %10656 = vmatpush1.bf16.msra.mxu0 0
      %10657 = vmatprep.subr.bf16.mxu0 0
      %10658 = vmatpush1.bf16.msra.mxu0 %v10594
      %10659 = vmatprep.subr.bf16.mxu0 0
      %10660 = vmatpush1.bf16.msra.mxu0 %v10593
      %10661 = vmatprep.subr.bf16.mxu0 0
      %10662 = vmatpush2.bf16.msra.mxu0 0
      %10663 = vmatprep.subr.bf16.mxu0 0
      %10664 = vmatpush2.bf16.msra.mxu0 0
      %10665 = vmatprep.subr.bf16.mxu0 0
      %10666 = vmatpush2.bf16.msra.mxu0 0
      %10667 = vmatprep.subr.bf16.mxu0 0
      %10668 = vmatpush2.bf16.msra.mxu0 0
      %10669 = vmatprep.subr.bf16.mxu0 0
      %10670 = vmatpush2.bf16.msra.mxu0 0
      %10671 = vmatprep.subr.bf16.mxu0 0
      %10672 = vmatpush2.bf16.msra.mxu0 0
      %10673 = vmatprep.subr.bf16.mxu0 0
      %10674 = vmatpush2.bf16.msra.mxu0 0
      %10675 = vmatprep.subr.bf16.mxu0 0
      %10676 = vmatpush2.bf16.msra.mxu0 0
      %10677 = vmatprep.mubr.bf16.mxu0 0
      %10678 = vmatmul.mubr.bf16.gmra.mxu0 %v10598
      %v10679 = vpop.f32.mrf.mxu0
      %v10680 = vadd.f32 0.0, %v10679
      %v10681 = vpop.f32.mrf.mxu0
      %v10682 = vpop.f32.mrf.mxu0
      %v10683 = vadd.f32 0.0, %v10682
      %v10684 = vpop.f32.mrf.mxu0
      %10685 = vmatprep.mubr.bf16.mxu0 0
      %10686 = vmatmul.mubr.bf16.gmra.mxu0 %v10601
      %v10687 = vpop.f32.mrf.mxu0
      %v10688 = vadd.f32 0.0, %v10687
      %v10689 = vpop.f32.mrf.mxu0
      %v10690 = vpop.f32.mrf.mxu0
      %v10691 = vadd.f32 0.0, %v10690
      %v10692 = vpop.f32.mrf.mxu0
      %10693 = vmatprep.mubr.bf16.mxu0 0
      %10694 = vmatmul.mubr.bf16.gmra.mxu0 %v10604
      %v10695 = vpop.f32.mrf.mxu0
      %v10696 = vadd.f32 0.0, %v10695
      %v10697 = vpop.f32.mrf.mxu0
      %v10698 = vpop.f32.mrf.mxu0
      %v10699 = vadd.f32 0.0, %v10698
      %v10700 = vpop.f32.mrf.mxu0
      %10701 = vmatprep.mubr.bf16.mxu0 0
      %10702 = vmatmul.mubr.bf16.gmra.mxu0 %v10607
      %v10703 = vpop.f32.mrf.mxu0
      %v10704 = vadd.f32 0.0, %v10703
      %v10705 = vpop.f32.mrf.mxu0
      %v10706 = vpop.f32.mrf.mxu0
      %v10707 = vadd.f32 0.0, %v10706
      %v10708 = vpop.f32.mrf.mxu0
      %10709 = vmatprep.mubr.bf16.mxu0 0
      %10710 = vmatmul.mubr.bf16.gmra.mxu0 %v10610
      %v10711 = vpop.f32.mrf.mxu0
      %v10712 = vadd.f32 0.0, %v10711
      %v10713 = vpop.f32.mrf.mxu0
      %v10714 = vpop.f32.mrf.mxu0
      %v10715 = vadd.f32 0.0, %v10714
      %v10716 = vpop.f32.mrf.mxu0
      %10717 = vmatprep.mubr.bf16.mxu0 0
      %10718 = vmatmul.mubr.bf16.gmra.mxu0 %v10613
      %v10719 = vpop.f32.mrf.mxu0
      %v10720 = vadd.f32 0.0, %v10719
      %v10721 = vpop.f32.mrf.mxu0
      %v10722 = vpop.f32.mrf.mxu0
      %v10723 = vadd.f32 0.0, %v10722
      %v10724 = vpop.f32.mrf.mxu0
      %10725 = vmatprep.mubr.bf16.mxu0 0
      %10726 = vmatmul.mubr.bf16.gmra.mxu0 %v10616
      %v10727 = vpop.f32.mrf.mxu0
      %v10728 = vadd.f32 0.0, %v10727
      %v10729 = vpop.f32.mrf.mxu0
      %v10730 = vpop.f32.mrf.mxu0
      %v10731 = vadd.f32 0.0, %v10730
      %v10732 = vpop.f32.mrf.mxu0
      %10733 = vmatprep.mubr.bf16.mxu0 0
      %10734 = vmatmul.mubr.bf16.gmra.mxu0 %v10619
      %v10735 = vpop.f32.mrf.mxu0
      %v10736 = vadd.f32 0.0, %v10735
      %v10737 = vpop.f32.mrf.mxu0
      %v10738 = vpop.f32.mrf.mxu0
      %v10739 = vadd.f32 0.0, %v10738
      %v10740 = vpop.f32.mrf.mxu0
      %10741 = vmatprep.mubr.bf16.mxu0 0
      %10742 = vmatmul.mubr.bf16.gmra.mxu0 %v10622
      %v10743 = vpop.f32.mrf.mxu0
      %v10744 = vadd.f32 0.0, %v10743
      %v10745 = vpop.f32.mrf.mxu0
      %v10746 = vpop.f32.mrf.mxu0
      %v10747 = vadd.f32 0.0, %v10746
      %v10748 = vpop.f32.mrf.mxu0
      %10749 = vmatprep.mubr.bf16.mxu0 0
      %10750 = vmatmul.mubr.bf16.gmra.mxu0 %v10625
      %v10751 = vpop.f32.mrf.mxu0
      %v10752 = vadd.f32 0.0, %v10751
      %v10753 = vpop.f32.mrf.mxu0
      %v10754 = vpop.f32.mrf.mxu0
      %v10755 = vadd.f32 0.0, %v10754
      %v10756 = vpop.f32.mrf.mxu0
      %10757 = vmatprep.mubr.bf16.mxu0 0
      %10758 = vmatmul.mubr.bf16.gmra.mxu0 %v10628
      %v10759 = vpop.f32.mrf.mxu0
      %v10760 = vadd.f32 0.0, %v10759
      %v10761 = vpop.f32.mrf.mxu0
      %v10762 = vpop.f32.mrf.mxu0
      %v10763 = vadd.f32 0.0, %v10762
      %v10764 = vpop.f32.mrf.mxu0
      %10765 = vmatprep.mubr.bf16.mxu0 0
      %10766 = vmatmul.mubr.bf16.gmra.mxu0 %v10631
      %v10767 = vpop.f32.mrf.mxu0
      %v10768 = vadd.f32 0.0, %v10767
      %v10769 = vpop.f32.mrf.mxu0
      %v10770 = vpop.f32.mrf.mxu0
      %v10771 = vadd.f32 0.0, %v10770
      %v10772 = vpop.f32.mrf.mxu0
      %10773 = vmatprep.mubr.bf16.mxu0 0
      %10774 = vmatmul.mubr.bf16.gmra.mxu0 %v10634
      %v10775 = vpop.f32.mrf.mxu0
      %v10776 = vadd.f32 0.0, %v10775
      %v10777 = vpop.f32.mrf.mxu0
      %v10778 = vpop.f32.mrf.mxu0
      %v10779 = vadd.f32 0.0, %v10778
      %v10780 = vpop.f32.mrf.mxu0
      %10781 = vmatprep.mubr.bf16.mxu0 0
      %10782 = vmatmul.mubr.bf16.gmra.mxu0 %v10637
      %v10783 = vpop.f32.mrf.mxu0
      %v10784 = vadd.f32 0.0, %v10783
      %v10785 = vpop.f32.mrf.mxu0
      %v10786 = vpop.f32.mrf.mxu0
      %v10787 = vadd.f32 0.0, %v10786
      %v10788 = vpop.f32.mrf.mxu0
      %10789 = vmatprep.mubr.bf16.mxu0 0
      %10790 = vmatmul.mubr.bf16.gmra.mxu0 %v10640
      %v10791 = vpop.f32.mrf.mxu0
      %v10792 = vadd.f32 0.0, %v10791
      %v10793 = vpop.f32.mrf.mxu0
      %v10794 = vpop.f32.mrf.mxu0
      %v10795 = vadd.f32 0.0, %v10794
      %v10796 = vpop.f32.mrf.mxu0
      %10797 = vmatprep.mubr.bf16.mxu0 0
      %10798 = vmatmul.mubr.bf16.gmra.mxu0 %v10643
      %v10799 = vpop.f32.mrf.mxu0
      %v10800 = vadd.f32 0.0, %v10799
      %v10801 = vpop.f32.mrf.mxu0
      %v10802 = vpop.f32.mrf.mxu0
      %v10803 = vadd.f32 0.0, %v10802
      %v10804 = vpop.f32.mrf.mxu0
      %10805 = vdwg.mxu0
      %v10806 = vadd.f32 %v10324, %v10680
      %v10807 = vadd.f32 %v10325, %v10683
      %v10808 = vadd.f32 %v10326, %v10688
      %v10809 = vadd.f32 %v10327, %v10691
      %v10810 = vadd.f32 %v10328, %v10696
      %v10811 = vadd.f32 %v10329, %v10699
      %v10812 = vadd.f32 %v10330, %v10704
      %v10813 = vadd.f32 %v10331, %v10707
      %v10814 = vadd.f32 %v10332, %v10712
      %v10815 = vadd.f32 %v10333, %v10715
      %v10816 = vadd.f32 %v10334, %v10720
      %v10817 = vadd.f32 %v10335, %v10723
      %v10818 = vadd.f32 %v10336, %v10728
      %v10819 = vadd.f32 %v10337, %v10731
      %v10820 = vadd.f32 %v10338, %v10736
      %v10821 = vadd.f32 %v10339, %v10739
      %v10822 = vadd.f32 %v10340, %v10744
      %v10823 = vadd.f32 %v10341, %v10747
      %v10824 = vadd.f32 %v10342, %v10752
      %v10825 = vadd.f32 %v10343, %v10755
      %v10826 = vadd.f32 %v10344, %v10760
      %v10827 = vadd.f32 %v10345, %v10763
      %v10828 = vadd.f32 %v10346, %v10768
      %v10829 = vadd.f32 %v10347, %v10771
      %v10830 = vadd.f32 %v10348, %v10776
      %v10831 = vadd.f32 %v10349, %v10779
      %v10832 = vadd.f32 %v10350, %v10784
      %v10833 = vadd.f32 %v10351, %v10787
      %v10834 = vadd.f32 %v10352, %v10792
      %v10835 = vadd.f32 %v10353, %v10795
      %v10836 = vadd.f32 %v10354, %v10800
      %v10837 = vadd.f32 %v10355, %v10803
      %s10838 = scalar_lea.vmem [#allocation3], 24
      %v10839 = vld [vmem:[%s10838] sm:$0xf]
      %v10840 = vld [vmem:[%s10838 + $0x4] sm:$0xf]
      %v10841 = vld [vmem:[%s10838 + $0xc] sm:$0xf]
      %v10842 = vld [vmem:[%s10838 + $0x10] sm:$0xf]
      %v10843 = vld [vmem:[%s10838 + $0x18] sm:$0xf]
      %v10844 = vld [vmem:[%s10838 + $0x1c] sm:$0xf]
      %v10845 = vld [vmem:[%s10838 + $0x24] sm:$0xf]
      %v10846 = vld [vmem:[%s10838 + $0x28] sm:$0xf]
      %v10847 = vld [vmem:[%s10838 + $0x30] sm:$0xf]
      %v10848 = vld [vmem:[%s10838 + $0x34] sm:$0xf]
      %v10849 = vld [vmem:[%s10838 + $0x3c] sm:$0xf]
      %v10850 = vld [vmem:[%s10838 + $0x40] sm:$0xf]
      %v10851 = vld [vmem:[%s10838 + $0x48] sm:$0xf]
      %v10852 = vld [vmem:[%s10838 + $0x4c] sm:$0xf]
      %v10853 = vld [vmem:[%s10838 + $0x54] sm:$0xf]
      %v10854 = vld [vmem:[%s10838 + $0x58] sm:$0xf]
      %v10855 = vld [vmem:[%s10838 + $0x60] sm:$0xf]
      %v10856 = vld [vmem:[%s10838 + $0x64] sm:$0xf]
      %v10857 = vld [vmem:[%s10838 + $0x6c] sm:$0xf]
      %v10858 = vld [vmem:[%s10838 + $0x70] sm:$0xf]
      %v10859 = vld [vmem:[%s10838 + $0x78] sm:$0xf]
      %v10860 = vld [vmem:[%s10838 + $0x7c] sm:$0xf]
      %v10861 = vld [vmem:[%s10838 + $0x84] sm:$0xf]
      %v10862 = vld [vmem:[%s10838 + $0x88] sm:$0xf]
      %v10863 = vld [vmem:[%s10838 + $0x90] sm:$0xf]
      %v10864 = vld [vmem:[%s10838 + $0x94] sm:$0xf]
      %v10865 = vld [vmem:[%s10838 + $0x9c] sm:$0xf]
      %v10866 = vld [vmem:[%s10838 + $0xa0] sm:$0xf]
      %v10867 = vld [vmem:[%s10838 + $0xa8] sm:$0xf]
      %v10868 = vld [vmem:[%s10838 + $0xac] sm:$0xf]
      %v10869 = vld [vmem:[%s10838 + $0xb4] sm:$0xf]
      %v10870 = vld [vmem:[%s10838 + $0xb8] sm:$0xf]
      %s10871 = scalar_lea.vmem %s7, 96
      %v10872 = vld [vmem:[%s10871] sm:$0xf]
      %v10873 = vld [vmem:[%s10871 + $0x4] sm:$0xf]
      %v10874 = vld [vmem:[%s10871 + $0x8] sm:$0xf]
      %v10875 = vld [vmem:[%s10871 + $0xc] sm:$0xf]
      %v10908 = vunpack.c.l.b16 %v10839
      %v10909 = vunpack.c.l.b16 %v10840
      %v10910 = vunpack.c.l.b16 %v10841
      %v10911 = vunpack.c.l.b16 %v10842
      %v10912 = vunpack.c.l.b16 %v10843
      %v10913 = vunpack.c.l.b16 %v10844
      %v10914 = vunpack.c.l.b16 %v10845
      %v10915 = vunpack.c.l.b16 %v10846
      %v10916 = vunpack.c.l.b16 %v10847
      %v10917 = vunpack.c.l.b16 %v10848
      %v10918 = vunpack.c.l.b16 %v10849
      %v10919 = vunpack.c.l.b16 %v10850
      %v10920 = vunpack.c.l.b16 %v10851
      %v10921 = vunpack.c.l.b16 %v10852
      %v10922 = vunpack.c.l.b16 %v10853
      %v10923 = vunpack.c.l.b16 %v10854
      %v10924 = vunpack.c.l.b16 %v10855
      %v10925 = vunpack.c.l.b16 %v10856
      %v10926 = vunpack.c.l.b16 %v10857
      %v10927 = vunpack.c.l.b16 %v10858
      %v10928 = vunpack.c.l.b16 %v10859
      %v10929 = vunpack.c.l.b16 %v10860
      %v10930 = vunpack.c.l.b16 %v10861
      %v10931 = vunpack.c.l.b16 %v10862
      %v10932 = vunpack.c.l.b16 %v10863
      %v10933 = vunpack.c.l.b16 %v10864
      %v10934 = vunpack.c.l.b16 %v10865
      %v10935 = vunpack.c.l.b16 %v10866
      %v10936 = vunpack.c.l.b16 %v10867
      %v10937 = vunpack.c.l.b16 %v10868
      %v10938 = vunpack.c.l.b16 %v10869
      %v10939 = vunpack.c.l.b16 %v10870
      %v10940 = vpack.c.b16 %v10909, %v10908
      %v10941 = vpack.c.b16 %v10911, %v10910
      %v10942 = vpack.c.b16 %v10913, %v10912
      %v10943 = vpack.c.b16 %v10915, %v10914
      %v10944 = vpack.c.b16 %v10917, %v10916
      %v10945 = vpack.c.b16 %v10919, %v10918
      %v10946 = vpack.c.b16 %v10921, %v10920
      %v10947 = vpack.c.b16 %v10923, %v10922
      %v10948 = vpack.c.b16 %v10925, %v10924
      %v10949 = vpack.c.b16 %v10927, %v10926
      %v10950 = vpack.c.b16 %v10929, %v10928
      %v10951 = vpack.c.b16 %v10931, %v10930
      %v10952 = vpack.c.b16 %v10933, %v10932
      %v10953 = vpack.c.b16 %v10935, %v10934
      %v10954 = vpack.c.b16 %v10937, %v10936
      %v10955 = vpack.c.b16 %v10939, %v10938
      %v10960 = vunpack.c.l.b16 %v10872
      %v10961 = vunpack.c.l.b16 %v10873
      %v10962 = vunpack.c.l.b16 %v10874
      %v10963 = vunpack.c.l.b16 %v10875
      %v10964 = vpack.c.b16 %v10961, %v10960
      %v10965 = vpack.c.b16 %v10963, %v10962
      %v10969 = vsel %vm8271, %v10940, 0
      %v10972 = vsel %vm8271, %v10941, 0
      %v10975 = vsel %vm8271, %v10942, 0
      %v10978 = vsel %vm8271, %v10943, 0
      %v10981 = vsel %vm8271, %v10944, 0
      %v10984 = vsel %vm8271, %v10945, 0
      %v10987 = vsel %vm8271, %v10946, 0
      %v10990 = vsel %vm8271, %v10947, 0
      %v10993 = vsel %vm8271, %v10948, 0
      %v10996 = vsel %vm8271, %v10949, 0
      %v10999 = vsel %vm8271, %v10950, 0
      %v11002 = vsel %vm8271, %v10951, 0
      %v11005 = vsel %vm8271, %v10952, 0
      %v11008 = vsel %vm8271, %v10953, 0
      %v11011 = vsel %vm8271, %v10954, 0
      %v11014 = vsel %vm8271, %v10955, 0
      %11016 = vmatprep.subr.bf16.mxu0 0
      %11017 = vmatpush1.bf16.msra.mxu0 0
      %11018 = vmatprep.subr.bf16.mxu0 0
      %11019 = vmatpush1.bf16.msra.mxu0 0
      %11020 = vmatprep.subr.bf16.mxu0 0
      %11021 = vmatpush1.bf16.msra.mxu0 0
      %11022 = vmatprep.subr.bf16.mxu0 0
      %11023 = vmatpush1.bf16.msra.mxu0 0
      %11024 = vmatprep.subr.bf16.mxu0 0
      %11025 = vmatpush1.bf16.msra.mxu0 0
      %11026 = vmatprep.subr.bf16.mxu0 0
      %11027 = vmatpush1.bf16.msra.mxu0 0
      %11028 = vmatprep.subr.bf16.mxu0 0
      %11029 = vmatpush1.bf16.msra.mxu0 %v10965
      %11030 = vmatprep.subr.bf16.mxu0 0
      %11031 = vmatpush1.bf16.msra.mxu0 %v10964
      %11032 = vmatprep.subr.bf16.mxu0 0
      %11033 = vmatpush2.bf16.msra.mxu0 0
      %11034 = vmatprep.subr.bf16.mxu0 0
      %11035 = vmatpush2.bf16.msra.mxu0 0
      %11036 = vmatprep.subr.bf16.mxu0 0
      %11037 = vmatpush2.bf16.msra.mxu0 0
      %11038 = vmatprep.subr.bf16.mxu0 0
      %11039 = vmatpush2.bf16.msra.mxu0 0
      %11040 = vmatprep.subr.bf16.mxu0 0
      %11041 = vmatpush2.bf16.msra.mxu0 0
      %11042 = vmatprep.subr.bf16.mxu0 0
      %11043 = vmatpush2.bf16.msra.mxu0 0
      %11044 = vmatprep.subr.bf16.mxu0 0
      %11045 = vmatpush2.bf16.msra.mxu0 0
      %11046 = vmatprep.subr.bf16.mxu0 0
      %11047 = vmatpush2.bf16.msra.mxu0 0
      %11048 = vmatprep.mubr.bf16.mxu0 0
      %11049 = vmatmul.mubr.bf16.gmra.mxu0 %v10969
      %v11050 = vpop.f32.mrf.mxu0
      %v11051 = vadd.f32 0.0, %v11050
      %v11052 = vpop.f32.mrf.mxu0
      %v11053 = vpop.f32.mrf.mxu0
      %v11054 = vadd.f32 0.0, %v11053
      %v11055 = vpop.f32.mrf.mxu0
      %11056 = vmatprep.mubr.bf16.mxu0 0
      %11057 = vmatmul.mubr.bf16.gmra.mxu0 %v10972
      %v11058 = vpop.f32.mrf.mxu0
      %v11059 = vadd.f32 0.0, %v11058
      %v11060 = vpop.f32.mrf.mxu0
      %v11061 = vpop.f32.mrf.mxu0
      %v11062 = vadd.f32 0.0, %v11061
      %v11063 = vpop.f32.mrf.mxu0
      %11064 = vmatprep.mubr.bf16.mxu0 0
      %11065 = vmatmul.mubr.bf16.gmra.mxu0 %v10975
      %v11066 = vpop.f32.mrf.mxu0
      %v11067 = vadd.f32 0.0, %v11066
      %v11068 = vpop.f32.mrf.mxu0
      %v11069 = vpop.f32.mrf.mxu0
      %v11070 = vadd.f32 0.0, %v11069
      %v11071 = vpop.f32.mrf.mxu0
      %11072 = vmatprep.mubr.bf16.mxu0 0
      %11073 = vmatmul.mubr.bf16.gmra.mxu0 %v10978
      %v11074 = vpop.f32.mrf.mxu0
      %v11075 = vadd.f32 0.0, %v11074
      %v11076 = vpop.f32.mrf.mxu0
      %v11077 = vpop.f32.mrf.mxu0
      %v11078 = vadd.f32 0.0, %v11077
      %v11079 = vpop.f32.mrf.mxu0
      %11080 = vmatprep.mubr.bf16.mxu0 0
      %11081 = vmatmul.mubr.bf16.gmra.mxu0 %v10981
      %v11082 = vpop.f32.mrf.mxu0
      %v11083 = vadd.f32 0.0, %v11082
      %v11084 = vpop.f32.mrf.mxu0
      %v11085 = vpop.f32.mrf.mxu0
      %v11086 = vadd.f32 0.0, %v11085
      %v11087 = vpop.f32.mrf.mxu0
      %11088 = vmatprep.mubr.bf16.mxu0 0
      %11089 = vmatmul.mubr.bf16.gmra.mxu0 %v10984
      %v11090 = vpop.f32.mrf.mxu0
      %v11091 = vadd.f32 0.0, %v11090
      %v11092 = vpop.f32.mrf.mxu0
      %v11093 = vpop.f32.mrf.mxu0
      %v11094 = vadd.f32 0.0, %v11093
      %v11095 = vpop.f32.mrf.mxu0
      %11096 = vmatprep.mubr.bf16.mxu0 0
      %11097 = vmatmul.mubr.bf16.gmra.mxu0 %v10987
      %v11098 = vpop.f32.mrf.mxu0
      %v11099 = vadd.f32 0.0, %v11098
      %v11100 = vpop.f32.mrf.mxu0
      %v11101 = vpop.f32.mrf.mxu0
      %v11102 = vadd.f32 0.0, %v11101
      %v11103 = vpop.f32.mrf.mxu0
      %11104 = vmatprep.mubr.bf16.mxu0 0
      %11105 = vmatmul.mubr.bf16.gmra.mxu0 %v10990
      %v11106 = vpop.f32.mrf.mxu0
      %v11107 = vadd.f32 0.0, %v11106
      %v11108 = vpop.f32.mrf.mxu0
      %v11109 = vpop.f32.mrf.mxu0
      %v11110 = vadd.f32 0.0, %v11109
      %v11111 = vpop.f32.mrf.mxu0
      %11112 = vmatprep.mubr.bf16.mxu0 0
      %11113 = vmatmul.mubr.bf16.gmra.mxu0 %v10993
      %v11114 = vpop.f32.mrf.mxu0
      %v11115 = vadd.f32 0.0, %v11114
      %v11116 = vpop.f32.mrf.mxu0
      %v11117 = vpop.f32.mrf.mxu0
      %v11118 = vadd.f32 0.0, %v11117
      %v11119 = vpop.f32.mrf.mxu0
      %11120 = vmatprep.mubr.bf16.mxu0 0
      %11121 = vmatmul.mubr.bf16.gmra.mxu0 %v10996
      %v11122 = vpop.f32.mrf.mxu0
      %v11123 = vadd.f32 0.0, %v11122
      %v11124 = vpop.f32.mrf.mxu0
      %v11125 = vpop.f32.mrf.mxu0
      %v11126 = vadd.f32 0.0, %v11125
      %v11127 = vpop.f32.mrf.mxu0
      %11128 = vmatprep.mubr.bf16.mxu0 0
      %11129 = vmatmul.mubr.bf16.gmra.mxu0 %v10999
      %v11130 = vpop.f32.mrf.mxu0
      %v11131 = vadd.f32 0.0, %v11130
      %v11132 = vpop.f32.mrf.mxu0
      %v11133 = vpop.f32.mrf.mxu0
      %v11134 = vadd.f32 0.0, %v11133
      %v11135 = vpop.f32.mrf.mxu0
      %11136 = vmatprep.mubr.bf16.mxu0 0
      %11137 = vmatmul.mubr.bf16.gmra.mxu0 %v11002
      %v11138 = vpop.f32.mrf.mxu0
      %v11139 = vadd.f32 0.0, %v11138
      %v11140 = vpop.f32.mrf.mxu0
      %v11141 = vpop.f32.mrf.mxu0
      %v11142 = vadd.f32 0.0, %v11141
      %v11143 = vpop.f32.mrf.mxu0
      %11144 = vmatprep.mubr.bf16.mxu0 0
      %11145 = vmatmul.mubr.bf16.gmra.mxu0 %v11005
      %v11146 = vpop.f32.mrf.mxu0
      %v11147 = vadd.f32 0.0, %v11146
      %v11148 = vpop.f32.mrf.mxu0
      %v11149 = vpop.f32.mrf.mxu0
      %v11150 = vadd.f32 0.0, %v11149
      %v11151 = vpop.f32.mrf.mxu0
      %11152 = vmatprep.mubr.bf16.mxu0 0
      %11153 = vmatmul.mubr.bf16.gmra.mxu0 %v11008
      %v11154 = vpop.f32.mrf.mxu0
      %v11155 = vadd.f32 0.0, %v11154
      %v11156 = vpop.f32.mrf.mxu0
      %v11157 = vpop.f32.mrf.mxu0
      %v11158 = vadd.f32 0.0, %v11157
      %v11159 = vpop.f32.mrf.mxu0
      %11160 = vmatprep.mubr.bf16.mxu0 0
      %11161 = vmatmul.mubr.bf16.gmra.mxu0 %v11011
      %v11162 = vpop.f32.mrf.mxu0
      %v11163 = vadd.f32 0.0, %v11162
      %v11164 = vpop.f32.mrf.mxu0
      %v11165 = vpop.f32.mrf.mxu0
      %v11166 = vadd.f32 0.0, %v11165
      %v11167 = vpop.f32.mrf.mxu0
      %11168 = vmatprep.mubr.bf16.mxu0 0
      %11169 = vmatmul.mubr.bf16.gmra.mxu0 %v11014
      %v11170 = vpop.f32.mrf.mxu0
      %v11171 = vadd.f32 0.0, %v11170
      %v11172 = vpop.f32.mrf.mxu0
      %v11173 = vpop.f32.mrf.mxu0
      %v11174 = vadd.f32 0.0, %v11173
      %v11175 = vpop.f32.mrf.mxu0
      %11176 = vdwg.mxu0
      %v11177 = vadd.f32 %v10806, %v11051
      %v11178 = vadd.f32 %v10807, %v11054
      %v11179 = vadd.f32 %v10808, %v11059
      %v11180 = vadd.f32 %v10809, %v11062
      %v11181 = vadd.f32 %v10810, %v11067
      %v11182 = vadd.f32 %v10811, %v11070
      %v11183 = vadd.f32 %v10812, %v11075
      %v11184 = vadd.f32 %v10813, %v11078
      %v11185 = vadd.f32 %v10814, %v11083
      %v11186 = vadd.f32 %v10815, %v11086
      %v11187 = vadd.f32 %v10816, %v11091
      %v11188 = vadd.f32 %v10817, %v11094
      %v11189 = vadd.f32 %v10818, %v11099
      %v11190 = vadd.f32 %v10819, %v11102
      %v11191 = vadd.f32 %v10820, %v11107
      %v11192 = vadd.f32 %v10821, %v11110
      %v11193 = vadd.f32 %v10822, %v11115
      %v11194 = vadd.f32 %v10823, %v11118
      %v11195 = vadd.f32 %v10824, %v11123
      %v11196 = vadd.f32 %v10825, %v11126
      %v11197 = vadd.f32 %v10826, %v11131
      %v11198 = vadd.f32 %v10827, %v11134
      %v11199 = vadd.f32 %v10828, %v11139
      %v11200 = vadd.f32 %v10829, %v11142
      %v11201 = vadd.f32 %v10830, %v11147
      %v11202 = vadd.f32 %v10831, %v11150
      %v11203 = vadd.f32 %v10832, %v11155
      %v11204 = vadd.f32 %v10833, %v11158
      %v11205 = vadd.f32 %v10834, %v11163
      %v11206 = vadd.f32 %v10835, %v11166
      %v11207 = vadd.f32 %v10836, %v11171
      %v11208 = vadd.f32 %v10837, %v11174
      %v11209 = vld [vmem:[%s10838] sm:$0xf]
      %v11210 = vld [vmem:[%s10838 + $0x4] sm:$0xf]
      %v11211 = vld [vmem:[%s10838 + $0x8] sm:$0x1]
      %v11212 = vld [vmem:[%s10838 + $0xc] sm:$0xf]
      %v11213 = vld [vmem:[%s10838 + $0x10] sm:$0xf]
      %v11214 = vld [vmem:[%s10838 + $0x14] sm:$0x1]
      %v11215 = vld [vmem:[%s10838 + $0x18] sm:$0xf]
      %v11216 = vld [vmem:[%s10838 + $0x1c] sm:$0xf]
      %v11217 = vld [vmem:[%s10838 + $0x20] sm:$0x1]
      %v11218 = vld [vmem:[%s10838 + $0x24] sm:$0xf]
      %v11219 = vld [vmem:[%s10838 + $0x28] sm:$0xf]
      %v11220 = vld [vmem:[%s10838 + $0x2c] sm:$0x1]
      %v11221 = vld [vmem:[%s10838 + $0x30] sm:$0xf]
      %v11222 = vld [vmem:[%s10838 + $0x34] sm:$0xf]
      %v11223 = vld [vmem:[%s10838 + $0x38] sm:$0x1]
      %v11224 = vld [vmem:[%s10838 + $0x3c] sm:$0xf]
      %v11225 = vld [vmem:[%s10838 + $0x40] sm:$0xf]
      %v11226 = vld [vmem:[%s10838 + $0x44] sm:$0x1]
      %v11227 = vld [vmem:[%s10838 + $0x48] sm:$0xf]
      %v11228 = vld [vmem:[%s10838 + $0x4c] sm:$0xf]
      %v11229 = vld [vmem:[%s10838 + $0x50] sm:$0x1]
      %v11230 = vld [vmem:[%s10838 + $0x54] sm:$0xf]
      %v11231 = vld [vmem:[%s10838 + $0x58] sm:$0xf]
      %v11232 = vld [vmem:[%s10838 + $0x5c] sm:$0x1]
      %v11233 = vld [vmem:[%s10838 + $0x60] sm:$0xf]
      %v11234 = vld [vmem:[%s10838 + $0x64] sm:$0xf]
      %v11235 = vld [vmem:[%s10838 + $0x68] sm:$0x1]
      %v11236 = vld [vmem:[%s10838 + $0x6c] sm:$0xf]
      %v11237 = vld [vmem:[%s10838 + $0x70] sm:$0xf]
      %v11238 = vld [vmem:[%s10838 + $0x74] sm:$0x1]
      %v11239 = vld [vmem:[%s10838 + $0x78] sm:$0xf]
      %v11240 = vld [vmem:[%s10838 + $0x7c] sm:$0xf]
      %v11241 = vld [vmem:[%s10838 + $0x80] sm:$0x1]
      %v11242 = vld [vmem:[%s10838 + $0x84] sm:$0xf]
      %v11243 = vld [vmem:[%s10838 + $0x88] sm:$0xf]
      %v11244 = vld [vmem:[%s10838 + $0x8c] sm:$0x1]
      %v11245 = vld [vmem:[%s10838 + $0x90] sm:$0xf]
      %v11246 = vld [vmem:[%s10838 + $0x94] sm:$0xf]
      %v11247 = vld [vmem:[%s10838 + $0x98] sm:$0x1]
      %v11248 = vld [vmem:[%s10838 + $0x9c] sm:$0xf]
      %v11249 = vld [vmem:[%s10838 + $0xa0] sm:$0xf]
      %v11250 = vld [vmem:[%s10838 + $0xa4] sm:$0x1]
      %v11251 = vld [vmem:[%s10838 + $0xa8] sm:$0xf]
      %v11252 = vld [vmem:[%s10838 + $0xac] sm:$0xf]
      %v11253 = vld [vmem:[%s10838 + $0xb0] sm:$0x1]
      %v11254 = vld [vmem:[%s10838 + $0xb4] sm:$0xf]
      %v11255 = vld [vmem:[%s10838 + $0xb8] sm:$0xf]
      %v11256 = vld [vmem:[%s10838 + $0xbc] sm:$0x1]
      %v11258 = vshrl.u32 %v11209, 16
      %v11260 = vrot.slane %v11258, 4
      %v11261 = vshll.u32 %v11209, 16
      %v11263 = vrot.slane %v11261, 5
      %v11264 = vor.u32 %v11260, %v11263
      %v11265 = vrot.slane %v11264, 4
      %v11267 = vshll.u32 %v11210, 16
      %v11269 = vrot.slane %v11267, 5
      %v11270 = vsel %vm2565, %v11265, %v11269
      %v11271 = vshrl.u32 %v11210, 16
      %v11273 = vrot.slane %v11271, 4
      %v11274 = vor.u32 %v11273, %v11269
      %v11275 = vrot.slane %v11274, 4
      %v11277 = vshll.u32 %v11211, 16
      %v11279 = vrot.slane %v11277, 5
      %v11280 = vsel %vm2565, %v11275, %v11279
      %v11282 = vshrl.u32 %v11212, 16
      %v11284 = vrot.slane %v11282, 4
      %v11285 = vshll.u32 %v11212, 16
      %v11287 = vrot.slane %v11285, 5
      %v11288 = vor.u32 %v11284, %v11287
      %v11289 = vrot.slane %v11288, 4
      %v11291 = vshll.u32 %v11213, 16
      %v11293 = vrot.slane %v11291, 5
      %v11294 = vsel %vm2565, %v11289, %v11293
      %v11295 = vshrl.u32 %v11213, 16
      %v11297 = vrot.slane %v11295, 4
      %v11298 = vor.u32 %v11297, %v11293
      %v11299 = vrot.slane %v11298, 4
      %v11301 = vshll.u32 %v11214, 16
      %v11303 = vrot.slane %v11301, 5
      %v11304 = vsel %vm2565, %v11299, %v11303
      %v11306 = vshrl.u32 %v11215, 16
      %v11308 = vrot.slane %v11306, 4
      %v11309 = vshll.u32 %v11215, 16
      %v11311 = vrot.slane %v11309, 5
      %v11312 = vor.u32 %v11308, %v11311
      %v11313 = vrot.slane %v11312, 4
      %v11315 = vshll.u32 %v11216, 16
      %v11317 = vrot.slane %v11315, 5
      %v11318 = vsel %vm2565, %v11313, %v11317
      %v11319 = vshrl.u32 %v11216, 16
      %v11321 = vrot.slane %v11319, 4
      %v11322 = vor.u32 %v11321, %v11317
      %v11323 = vrot.slane %v11322, 4
      %v11325 = vshll.u32 %v11217, 16
      %v11327 = vrot.slane %v11325, 5
      %v11328 = vsel %vm2565, %v11323, %v11327
      %v11330 = vshrl.u32 %v11218, 16
      %v11332 = vrot.slane %v11330, 4
      %v11333 = vshll.u32 %v11218, 16
      %v11335 = vrot.slane %v11333, 5
      %v11336 = vor.u32 %v11332, %v11335
      %v11337 = vrot.slane %v11336, 4
      %v11339 = vshll.u32 %v11219, 16
      %v11341 = vrot.slane %v11339, 5
      %v11342 = vsel %vm2565, %v11337, %v11341
      %v11343 = vshrl.u32 %v11219, 16
      %v11345 = vrot.slane %v11343, 4
      %v11346 = vor.u32 %v11345, %v11341
      %v11347 = vrot.slane %v11346, 4
      %v11349 = vshll.u32 %v11220, 16
      %v11351 = vrot.slane %v11349, 5
      %v11352 = vsel %vm2565, %v11347, %v11351
      %v11354 = vshrl.u32 %v11221, 16
      %v11356 = vrot.slane %v11354, 4
      %v11357 = vshll.u32 %v11221, 16
      %v11359 = vrot.slane %v11357, 5
      %v11360 = vor.u32 %v11356, %v11359
      %v11361 = vrot.slane %v11360, 4
      %v11363 = vshll.u32 %v11222, 16
      %v11365 = vrot.slane %v11363, 5
      %v11366 = vsel %vm2565, %v11361, %v11365
      %v11367 = vshrl.u32 %v11222, 16
      %v11369 = vrot.slane %v11367, 4
      %v11370 = vor.u32 %v11369, %v11365
      %v11371 = vrot.slane %v11370, 4
      %v11373 = vshll.u32 %v11223, 16
      %v11375 = vrot.slane %v11373, 5
      %v11376 = vsel %vm2565, %v11371, %v11375
      %v11378 = vshrl.u32 %v11224, 16
      %v11380 = vrot.slane %v11378, 4
      %v11381 = vshll.u32 %v11224, 16
      %v11383 = vrot.slane %v11381, 5
      %v11384 = vor.u32 %v11380, %v11383
      %v11385 = vrot.slane %v11384, 4
      %v11387 = vshll.u32 %v11225, 16
      %v11389 = vrot.slane %v11387, 5
      %v11390 = vsel %vm2565, %v11385, %v11389
      %v11391 = vshrl.u32 %v11225, 16
      %v11393 = vrot.slane %v11391, 4
      %v11394 = vor.u32 %v11393, %v11389
      %v11395 = vrot.slane %v11394, 4
      %v11397 = vshll.u32 %v11226, 16
      %v11399 = vrot.slane %v11397, 5
      %v11400 = vsel %vm2565, %v11395, %v11399
      %v11402 = vshrl.u32 %v11227, 16
      %v11404 = vrot.slane %v11402, 4
      %v11405 = vshll.u32 %v11227, 16
      %v11407 = vrot.slane %v11405, 5
      %v11408 = vor.u32 %v11404, %v11407
      %v11409 = vrot.slane %v11408, 4
      %v11411 = vshll.u32 %v11228, 16
      %v11413 = vrot.slane %v11411, 5
      %v11414 = vsel %vm2565, %v11409, %v11413
      %v11415 = vshrl.u32 %v11228, 16
      %v11417 = vrot.slane %v11415, 4
      %v11418 = vor.u32 %v11417, %v11413
      %v11419 = vrot.slane %v11418, 4
      %v11421 = vshll.u32 %v11229, 16
      %v11423 = vrot.slane %v11421, 5
      %v11424 = vsel %vm2565, %v11419, %v11423
      %v11426 = vshrl.u32 %v11230, 16
      %v11428 = vrot.slane %v11426, 4
      %v11429 = vshll.u32 %v11230, 16
      %v11431 = vrot.slane %v11429, 5
      %v11432 = vor.u32 %v11428, %v11431
      %v11433 = vrot.slane %v11432, 4
      %v11435 = vshll.u32 %v11231, 16
      %v11437 = vrot.slane %v11435, 5
      %v11438 = vsel %vm2565, %v11433, %v11437
      %v11439 = vshrl.u32 %v11231, 16
      %v11441 = vrot.slane %v11439, 4
      %v11442 = vor.u32 %v11441, %v11437
      %v11443 = vrot.slane %v11442, 4
      %v11445 = vshll.u32 %v11232, 16
      %v11447 = vrot.slane %v11445, 5
      %v11448 = vsel %vm2565, %v11443, %v11447
      %v11450 = vshrl.u32 %v11233, 16
      %v11452 = vrot.slane %v11450, 4
      %v11453 = vshll.u32 %v11233, 16
      %v11455 = vrot.slane %v11453, 5
      %v11456 = vor.u32 %v11452, %v11455
      %v11457 = vrot.slane %v11456, 4
      %v11459 = vshll.u32 %v11234, 16
      %v11461 = vrot.slane %v11459, 5
      %v11462 = vsel %vm2565, %v11457, %v11461
      %v11463 = vshrl.u32 %v11234, 16
      %v11465 = vrot.slane %v11463, 4
      %v11466 = vor.u32 %v11465, %v11461
      %v11467 = vrot.slane %v11466, 4
      %v11469 = vshll.u32 %v11235, 16
      %v11471 = vrot.slane %v11469, 5
      %v11472 = vsel %vm2565, %v11467, %v11471
      %v11474 = vshrl.u32 %v11236, 16
      %v11476 = vrot.slane %v11474, 4
      %v11477 = vshll.u32 %v11236, 16
      %v11479 = vrot.slane %v11477, 5
      %v11480 = vor.u32 %v11476, %v11479
      %v11481 = vrot.slane %v11480, 4
      %v11483 = vshll.u32 %v11237, 16
      %v11485 = vrot.slane %v11483, 5
      %v11486 = vsel %vm2565, %v11481, %v11485
      %v11487 = vshrl.u32 %v11237, 16
      %v11489 = vrot.slane %v11487, 4
      %v11490 = vor.u32 %v11489, %v11485
      %v11491 = vrot.slane %v11490, 4
      %v11493 = vshll.u32 %v11238, 16
      %v11495 = vrot.slane %v11493, 5
      %v11496 = vsel %vm2565, %v11491, %v11495
      %v11498 = vshrl.u32 %v11239, 16
      %v11500 = vrot.slane %v11498, 4
      %v11501 = vshll.u32 %v11239, 16
      %v11503 = vrot.slane %v11501, 5
      %v11504 = vor.u32 %v11500, %v11503
      %v11505 = vrot.slane %v11504, 4
      %v11507 = vshll.u32 %v11240, 16
      %v11509 = vrot.slane %v11507, 5
      %v11510 = vsel %vm2565, %v11505, %v11509
      %v11511 = vshrl.u32 %v11240, 16
      %v11513 = vrot.slane %v11511, 4
      %v11514 = vor.u32 %v11513, %v11509
      %v11515 = vrot.slane %v11514, 4
      %v11517 = vshll.u32 %v11241, 16
      %v11519 = vrot.slane %v11517, 5
      %v11520 = vsel %vm2565, %v11515, %v11519
      %v11522 = vshrl.u32 %v11242, 16
      %v11524 = vrot.slane %v11522, 4
      %v11525 = vshll.u32 %v11242, 16
      %v11527 = vrot.slane %v11525, 5
      %v11528 = vor.u32 %v11524, %v11527
      %v11529 = vrot.slane %v11528, 4
      %v11531 = vshll.u32 %v11243, 16
      %v11533 = vrot.slane %v11531, 5
      %v11534 = vsel %vm2565, %v11529, %v11533
      %v11535 = vshrl.u32 %v11243, 16
      %v11537 = vrot.slane %v11535, 4
      %v11538 = vor.u32 %v11537, %v11533
      %v11539 = vrot.slane %v11538, 4
      %v11541 = vshll.u32 %v11244, 16
      %v11543 = vrot.slane %v11541, 5
      %v11544 = vsel %vm2565, %v11539, %v11543
      %v11546 = vshrl.u32 %v11245, 16
      %v11548 = vrot.slane %v11546, 4
      %v11549 = vshll.u32 %v11245, 16
      %v11551 = vrot.slane %v11549, 5
      %v11552 = vor.u32 %v11548, %v11551
      %v11553 = vrot.slane %v11552, 4
      %v11555 = vshll.u32 %v11246, 16
      %v11557 = vrot.slane %v11555, 5
      %v11558 = vsel %vm2565, %v11553, %v11557
      %v11559 = vshrl.u32 %v11246, 16
      %v11561 = vrot.slane %v11559, 4
      %v11562 = vor.u32 %v11561, %v11557
      %v11563 = vrot.slane %v11562, 4
      %v11565 = vshll.u32 %v11247, 16
      %v11567 = vrot.slane %v11565, 5
      %v11568 = vsel %vm2565, %v11563, %v11567
      %v11570 = vshrl.u32 %v11248, 16
      %v11572 = vrot.slane %v11570, 4
      %v11573 = vshll.u32 %v11248, 16
      %v11575 = vrot.slane %v11573, 5
      %v11576 = vor.u32 %v11572, %v11575
      %v11577 = vrot.slane %v11576, 4
      %v11579 = vshll.u32 %v11249, 16
      %v11581 = vrot.slane %v11579, 5
      %v11582 = vsel %vm2565, %v11577, %v11581
      %v11583 = vshrl.u32 %v11249, 16
      %v11585 = vrot.slane %v11583, 4
      %v11586 = vor.u32 %v11585, %v11581
      %v11587 = vrot.slane %v11586, 4
      %v11589 = vshll.u32 %v11250, 16
      %v11591 = vrot.slane %v11589, 5
      %v11592 = vsel %vm2565, %v11587, %v11591
      %v11594 = vshrl.u32 %v11251, 16
      %v11596 = vrot.slane %v11594, 4
      %v11597 = vshll.u32 %v11251, 16
      %v11599 = vrot.slane %v11597, 5
      %v11600 = vor.u32 %v11596, %v11599
      %v11601 = vrot.slane %v11600, 4
      %v11603 = vshll.u32 %v11252, 16
      %v11605 = vrot.slane %v11603, 5
      %v11606 = vsel %vm2565, %v11601, %v11605
      %v11607 = vshrl.u32 %v11252, 16
      %v11609 = vrot.slane %v11607, 4
      %v11610 = vor.u32 %v11609, %v11605
      %v11611 = vrot.slane %v11610, 4
      %v11613 = vshll.u32 %v11253, 16
      %v11615 = vrot.slane %v11613, 5
      %v11616 = vsel %vm2565, %v11611, %v11615
      %v11618 = vshrl.u32 %v11254, 16
      %v11620 = vrot.slane %v11618, 4
      %v11621 = vshll.u32 %v11254, 16
      %v11623 = vrot.slane %v11621, 5
      %v11624 = vor.u32 %v11620, %v11623
      %v11625 = vrot.slane %v11624, 4
      %v11627 = vshll.u32 %v11255, 16
      %v11629 = vrot.slane %v11627, 5
      %v11630 = vsel %vm2565, %v11625, %v11629
      %v11631 = vshrl.u32 %v11255, 16
      %v11633 = vrot.slane %v11631, 4
      %v11634 = vor.u32 %v11633, %v11629
      %v11635 = vrot.slane %v11634, 4
      %v11637 = vshll.u32 %v11256, 16
      %v11639 = vrot.slane %v11637, 5
      %v11640 = vsel %vm2565, %v11635, %v11639
      %s11641 = scalar_lea.vmem %s7, 112
      %v11642 = vld [vmem:[%s11641] sm:$0xf]
      %v11643 = vld [vmem:[%s11641 + $0x4] sm:$0xf]
      %v11644 = vld [vmem:[%s11641 + $0x8] sm:$0xf]
      %v11645 = vld [vmem:[%s11641 + $0xc] sm:$0xf]
      %v11646 = vunpack.c.l.b16 %v11270
      %v11647 = vunpack.c.l.b16 %v11280
      %v11648 = vunpack.c.l.b16 %v11294
      %v11649 = vunpack.c.l.b16 %v11304
      %v11650 = vunpack.c.l.b16 %v11318
      %v11651 = vunpack.c.l.b16 %v11328
      %v11652 = vunpack.c.l.b16 %v11342
      %v11653 = vunpack.c.l.b16 %v11352
      %v11654 = vunpack.c.l.b16 %v11366
      %v11655 = vunpack.c.l.b16 %v11376
      %v11656 = vunpack.c.l.b16 %v11390
      %v11657 = vunpack.c.l.b16 %v11400
      %v11658 = vunpack.c.l.b16 %v11414
      %v11659 = vunpack.c.l.b16 %v11424
      %v11660 = vunpack.c.l.b16 %v11438
      %v11661 = vunpack.c.l.b16 %v11448
      %v11662 = vunpack.c.l.b16 %v11462
      %v11663 = vunpack.c.l.b16 %v11472
      %v11664 = vunpack.c.l.b16 %v11486
      %v11665 = vunpack.c.l.b16 %v11496
      %v11666 = vunpack.c.l.b16 %v11510
      %v11667 = vunpack.c.l.b16 %v11520
      %v11668 = vunpack.c.l.b16 %v11534
      %v11669 = vunpack.c.l.b16 %v11544
      %v11670 = vunpack.c.l.b16 %v11558
      %v11671 = vunpack.c.l.b16 %v11568
      %v11672 = vunpack.c.l.b16 %v11582
      %v11673 = vunpack.c.l.b16 %v11592
      %v11674 = vunpack.c.l.b16 %v11606
      %v11675 = vunpack.c.l.b16 %v11616
      %v11676 = vunpack.c.l.b16 %v11630
      %v11677 = vunpack.c.l.b16 %v11640
      %v11678 = vpack.c.b16 %v11647, %v11646
      %v11679 = vpack.c.b16 %v11649, %v11648
      %v11680 = vpack.c.b16 %v11651, %v11650
      %v11681 = vpack.c.b16 %v11653, %v11652
      %v11682 = vpack.c.b16 %v11655, %v11654
      %v11683 = vpack.c.b16 %v11657, %v11656
      %v11684 = vpack.c.b16 %v11659, %v11658
      %v11685 = vpack.c.b16 %v11661, %v11660
      %v11686 = vpack.c.b16 %v11663, %v11662
      %v11687 = vpack.c.b16 %v11665, %v11664
      %v11688 = vpack.c.b16 %v11667, %v11666
      %v11689 = vpack.c.b16 %v11669, %v11668
      %v11690 = vpack.c.b16 %v11671, %v11670
      %v11691 = vpack.c.b16 %v11673, %v11672
      %v11692 = vpack.c.b16 %v11675, %v11674
      %v11693 = vpack.c.b16 %v11677, %v11676
      %v11698 = vunpack.c.l.b16 %v11642
      %v11699 = vunpack.c.l.b16 %v11643
      %v11700 = vunpack.c.l.b16 %v11644
      %v11701 = vunpack.c.l.b16 %v11645
      %v11702 = vpack.c.b16 %v11699, %v11698
      %v11703 = vpack.c.b16 %v11701, %v11700
      %v11707 = vsel %vm8271, %v11678, 0
      %v11710 = vsel %vm8271, %v11679, 0
      %v11713 = vsel %vm8271, %v11680, 0
      %v11716 = vsel %vm8271, %v11681, 0
      %v11719 = vsel %vm8271, %v11682, 0
      %v11722 = vsel %vm8271, %v11683, 0
      %v11725 = vsel %vm8271, %v11684, 0
      %v11728 = vsel %vm8271, %v11685, 0
      %v11731 = vsel %vm8271, %v11686, 0
      %v11734 = vsel %vm8271, %v11687, 0
      %v11737 = vsel %vm8271, %v11688, 0
      %v11740 = vsel %vm8271, %v11689, 0
      %v11743 = vsel %vm8271, %v11690, 0
      %v11746 = vsel %vm8271, %v11691, 0
      %v11749 = vsel %vm8271, %v11692, 0
      %v11752 = vsel %vm8271, %v11693, 0
      %11754 = vmatprep.subr.bf16.mxu0 0
      %11755 = vmatpush1.bf16.msra.mxu0 0
      %11756 = vmatprep.subr.bf16.mxu0 0
      %11757 = vmatpush1.bf16.msra.mxu0 0
      %11758 = vmatprep.subr.bf16.mxu0 0
      %11759 = vmatpush1.bf16.msra.mxu0 0
      %11760 = vmatprep.subr.bf16.mxu0 0
      %11761 = vmatpush1.bf16.msra.mxu0 0
      %11762 = vmatprep.subr.bf16.mxu0 0
      %11763 = vmatpush1.bf16.msra.mxu0 0
      %11764 = vmatprep.subr.bf16.mxu0 0
      %11765 = vmatpush1.bf16.msra.mxu0 0
      %11766 = vmatprep.subr.bf16.mxu0 0
      %11767 = vmatpush1.bf16.msra.mxu0 %v11703
      %11768 = vmatprep.subr.bf16.mxu0 0
      %11769 = vmatpush1.bf16.msra.mxu0 %v11702
      %11770 = vmatprep.subr.bf16.mxu0 0
      %11771 = vmatpush2.bf16.msra.mxu0 0
      %11772 = vmatprep.subr.bf16.mxu0 0
      %11773 = vmatpush2.bf16.msra.mxu0 0
      %11774 = vmatprep.subr.bf16.mxu0 0
      %11775 = vmatpush2.bf16.msra.mxu0 0
      %11776 = vmatprep.subr.bf16.mxu0 0
      %11777 = vmatpush2.bf16.msra.mxu0 0
      %11778 = vmatprep.subr.bf16.mxu0 0
      %11779 = vmatpush2.bf16.msra.mxu0 0
      %11780 = vmatprep.subr.bf16.mxu0 0
      %11781 = vmatpush2.bf16.msra.mxu0 0
      %11782 = vmatprep.subr.bf16.mxu0 0
      %11783 = vmatpush2.bf16.msra.mxu0 0
      %11784 = vmatprep.subr.bf16.mxu0 0
      %11785 = vmatpush2.bf16.msra.mxu0 0
      %11786 = vmatprep.mubr.bf16.mxu0 0
      %11787 = vmatmul.mubr.bf16.gmra.mxu0 %v11707
      %v11788 = vpop.f32.mrf.mxu0
      %v11789 = vadd.f32 0.0, %v11788
      %v11790 = vpop.f32.mrf.mxu0
      %v11791 = vpop.f32.mrf.mxu0
      %v11792 = vadd.f32 0.0, %v11791
      %v11793 = vpop.f32.mrf.mxu0
      %11794 = vmatprep.mubr.bf16.mxu0 0
      %11795 = vmatmul.mubr.bf16.gmra.mxu0 %v11710
      %v11796 = vpop.f32.mrf.mxu0
      %v11797 = vadd.f32 0.0, %v11796
      %v11798 = vpop.f32.mrf.mxu0
      %v11799 = vpop.f32.mrf.mxu0
      %v11800 = vadd.f32 0.0, %v11799
      %v11801 = vpop.f32.mrf.mxu0
      %11802 = vmatprep.mubr.bf16.mxu0 0
      %11803 = vmatmul.mubr.bf16.gmra.mxu0 %v11713
      %v11804 = vpop.f32.mrf.mxu0
      %v11805 = vadd.f32 0.0, %v11804
      %v11806 = vpop.f32.mrf.mxu0
      %v11807 = vpop.f32.mrf.mxu0
      %v11808 = vadd.f32 0.0, %v11807
      %v11809 = vpop.f32.mrf.mxu0
      %11810 = vmatprep.mubr.bf16.mxu0 0
      %11811 = vmatmul.mubr.bf16.gmra.mxu0 %v11716
      %v11812 = vpop.f32.mrf.mxu0
      %v11813 = vadd.f32 0.0, %v11812
      %v11814 = vpop.f32.mrf.mxu0
      %v11815 = vpop.f32.mrf.mxu0
      %v11816 = vadd.f32 0.0, %v11815
      %v11817 = vpop.f32.mrf.mxu0
      %11818 = vmatprep.mubr.bf16.mxu0 0
      %11819 = vmatmul.mubr.bf16.gmra.mxu0 %v11719
      %v11820 = vpop.f32.mrf.mxu0
      %v11821 = vadd.f32 0.0, %v11820
      %v11822 = vpop.f32.mrf.mxu0
      %v11823 = vpop.f32.mrf.mxu0
      %v11824 = vadd.f32 0.0, %v11823
      %v11825 = vpop.f32.mrf.mxu0
      %11826 = vmatprep.mubr.bf16.mxu0 0
      %11827 = vmatmul.mubr.bf16.gmra.mxu0 %v11722
      %v11828 = vpop.f32.mrf.mxu0
      %v11829 = vadd.f32 0.0, %v11828
      %v11830 = vpop.f32.mrf.mxu0
      %v11831 = vpop.f32.mrf.mxu0
      %v11832 = vadd.f32 0.0, %v11831
      %v11833 = vpop.f32.mrf.mxu0
      %11834 = vmatprep.mubr.bf16.mxu0 0
      %11835 = vmatmul.mubr.bf16.gmra.mxu0 %v11725
      %v11836 = vpop.f32.mrf.mxu0
      %v11837 = vadd.f32 0.0, %v11836
      %v11838 = vpop.f32.mrf.mxu0
      %v11839 = vpop.f32.mrf.mxu0
      %v11840 = vadd.f32 0.0, %v11839
      %v11841 = vpop.f32.mrf.mxu0
      %11842 = vmatprep.mubr.bf16.mxu0 0
      %11843 = vmatmul.mubr.bf16.gmra.mxu0 %v11728
      %v11844 = vpop.f32.mrf.mxu0
      %v11845 = vadd.f32 0.0, %v11844
      %v11846 = vpop.f32.mrf.mxu0
      %v11847 = vpop.f32.mrf.mxu0
      %v11848 = vadd.f32 0.0, %v11847
      %v11849 = vpop.f32.mrf.mxu0
      %11850 = vmatprep.mubr.bf16.mxu0 0
      %11851 = vmatmul.mubr.bf16.gmra.mxu0 %v11731
      %v11852 = vpop.f32.mrf.mxu0
      %v11853 = vadd.f32 0.0, %v11852
      %v11854 = vpop.f32.mrf.mxu0
      %v11855 = vpop.f32.mrf.mxu0
      %v11856 = vadd.f32 0.0, %v11855
      %v11857 = vpop.f32.mrf.mxu0
      %11858 = vmatprep.mubr.bf16.mxu0 0
      %11859 = vmatmul.mubr.bf16.gmra.mxu0 %v11734
      %v11860 = vpop.f32.mrf.mxu0
      %v11861 = vadd.f32 0.0, %v11860
      %v11862 = vpop.f32.mrf.mxu0
      %v11863 = vpop.f32.mrf.mxu0
      %v11864 = vadd.f32 0.0, %v11863
      %v11865 = vpop.f32.mrf.mxu0
      %11866 = vmatprep.mubr.bf16.mxu0 0
      %11867 = vmatmul.mubr.bf16.gmra.mxu0 %v11737
      %v11868 = vpop.f32.mrf.mxu0
      %v11869 = vadd.f32 0.0, %v11868
      %v11870 = vpop.f32.mrf.mxu0
      %v11871 = vpop.f32.mrf.mxu0
      %v11872 = vadd.f32 0.0, %v11871
      %v11873 = vpop.f32.mrf.mxu0
      %11874 = vmatprep.mubr.bf16.mxu0 0
      %11875 = vmatmul.mubr.bf16.gmra.mxu0 %v11740
      %v11876 = vpop.f32.mrf.mxu0
      %v11877 = vadd.f32 0.0, %v11876
      %v11878 = vpop.f32.mrf.mxu0
      %v11879 = vpop.f32.mrf.mxu0
      %v11880 = vadd.f32 0.0, %v11879
      %v11881 = vpop.f32.mrf.mxu0
      %11882 = vmatprep.mubr.bf16.mxu0 0
      %11883 = vmatmul.mubr.bf16.gmra.mxu0 %v11743
      %v11884 = vpop.f32.mrf.mxu0
      %v11885 = vadd.f32 0.0, %v11884
      %v11886 = vpop.f32.mrf.mxu0
      %v11887 = vpop.f32.mrf.mxu0
      %v11888 = vadd.f32 0.0, %v11887
      %v11889 = vpop.f32.mrf.mxu0
      %11890 = vmatprep.mubr.bf16.mxu0 0
      %11891 = vmatmul.mubr.bf16.gmra.mxu0 %v11746
      %v11892 = vpop.f32.mrf.mxu0
      %v11893 = vadd.f32 0.0, %v11892
      %v11894 = vpop.f32.mrf.mxu0
      %v11895 = vpop.f32.mrf.mxu0
      %v11896 = vadd.f32 0.0, %v11895
      %v11897 = vpop.f32.mrf.mxu0
      %11898 = vmatprep.mubr.bf16.mxu0 0
      %11899 = vmatmul.mubr.bf16.gmra.mxu0 %v11749
      %v11900 = vpop.f32.mrf.mxu0
      %v11901 = vadd.f32 0.0, %v11900
      %v11902 = vpop.f32.mrf.mxu0
      %v11903 = vpop.f32.mrf.mxu0
      %v11904 = vadd.f32 0.0, %v11903
      %v11905 = vpop.f32.mrf.mxu0
      %11906 = vmatprep.mubr.bf16.mxu0 0
      %11907 = vmatmul.mubr.bf16.gmra.mxu0 %v11752
      %v11908 = vpop.f32.mrf.mxu0
      %v11909 = vadd.f32 0.0, %v11908
      %v11910 = vpop.f32.mrf.mxu0
      %v11911 = vpop.f32.mrf.mxu0
      %v11912 = vadd.f32 0.0, %v11911
      %v11913 = vpop.f32.mrf.mxu0
      %11914 = vdwg.mxu0
      %v11915 = vadd.f32 %v11177, %v11789
      %v11916 = vadd.f32 %v11178, %v11792
      %v11917 = vadd.f32 %v11179, %v11797
      %v11918 = vadd.f32 %v11180, %v11800
      %v11919 = vadd.f32 %v11181, %v11805
      %v11920 = vadd.f32 %v11182, %v11808
      %v11921 = vadd.f32 %v11183, %v11813
      %v11922 = vadd.f32 %v11184, %v11816
      %v11923 = vadd.f32 %v11185, %v11821
      %v11924 = vadd.f32 %v11186, %v11824
      %v11925 = vadd.f32 %v11187, %v11829
      %v11926 = vadd.f32 %v11188, %v11832
      %v11927 = vadd.f32 %v11189, %v11837
      %v11928 = vadd.f32 %v11190, %v11840
      %v11929 = vadd.f32 %v11191, %v11845
      %v11930 = vadd.f32 %v11192, %v11848
      %v11931 = vadd.f32 %v11193, %v11853
      %v11932 = vadd.f32 %v11194, %v11856
      %v11933 = vadd.f32 %v11195, %v11861
      %v11934 = vadd.f32 %v11196, %v11864
      %v11935 = vadd.f32 %v11197, %v11869
      %v11936 = vadd.f32 %v11198, %v11872
      %v11937 = vadd.f32 %v11199, %v11877
      %v11938 = vadd.f32 %v11200, %v11880
      %v11939 = vadd.f32 %v11201, %v11885
      %v11940 = vadd.f32 %v11202, %v11888
      %v11941 = vadd.f32 %v11203, %v11893
      %v11942 = vadd.f32 %v11204, %v11896
      %v11943 = vadd.f32 %v11205, %v11901
      %v11944 = vadd.f32 %v11206, %v11904
      %v11945 = vadd.f32 %v11207, %v11909
      %v11946 = vadd.f32 %v11208, %v11912
      %v11947 = vld [vmem:[%s10838] sm:$0xe]
      %v11948 = vld [vmem:[%s10838 + $0xc] sm:$0xe]
      %v11949 = vld [vmem:[%s10838 + $0x18] sm:$0xe]
      %v11950 = vld [vmem:[%s10838 + $0x24] sm:$0xe]
      %v11951 = vld [vmem:[%s10838 + $0x30] sm:$0xe]
      %v11952 = vld [vmem:[%s10838 + $0x3c] sm:$0xe]
      %v11953 = vld [vmem:[%s10838 + $0x48] sm:$0xe]
      %v11954 = vld [vmem:[%s10838 + $0x54] sm:$0xe]
      %v11955 = vld [vmem:[%s10838 + $0x60] sm:$0xe]
      %v11956 = vld [vmem:[%s10838 + $0x6c] sm:$0xe]
      %v11957 = vld [vmem:[%s10838 + $0x78] sm:$0xe]
      %v11958 = vld [vmem:[%s10838 + $0x84] sm:$0xe]
      %v11959 = vld [vmem:[%s10838 + $0x90] sm:$0xe]
      %v11960 = vld [vmem:[%s10838 + $0x9c] sm:$0xe]
      %v11961 = vld [vmem:[%s10838 + $0xa8] sm:$0xe]
      %v11962 = vld [vmem:[%s10838 + $0xb4] sm:$0xe]
      %v12011 = vrot.slane %v11947, 5
      %v12012 = vrot.slane %v12011, 4
      %v12013 = vrot.slane %v11210, 5
      %v12014 = vsel %vm3576, %v12012, %v12013
      %v12015 = vrot.slane %v12013, 4
      %v12016 = vrot.slane %v11211, 5
      %v12017 = vsel %vm3576, %v12015, %v12016
      %v12018 = vrot.slane %v11948, 5
      %v12019 = vrot.slane %v12018, 4
      %v12020 = vrot.slane %v11213, 5
      %v12021 = vsel %vm3576, %v12019, %v12020
      %v12022 = vrot.slane %v12020, 4
      %v12023 = vrot.slane %v11214, 5
      %v12024 = vsel %vm3576, %v12022, %v12023
      %v12025 = vrot.slane %v11949, 5
      %v12026 = vrot.slane %v12025, 4
      %v12027 = vrot.slane %v11216, 5
      %v12028 = vsel %vm3576, %v12026, %v12027
      %v12029 = vrot.slane %v12027, 4
      %v12030 = vrot.slane %v11217, 5
      %v12031 = vsel %vm3576, %v12029, %v12030
      %v12032 = vrot.slane %v11950, 5
      %v12033 = vrot.slane %v12032, 4
      %v12034 = vrot.slane %v11219, 5
      %v12035 = vsel %vm3576, %v12033, %v12034
      %v12036 = vrot.slane %v12034, 4
      %v12037 = vrot.slane %v11220, 5
      %v12038 = vsel %vm3576, %v12036, %v12037
      %v12039 = vrot.slane %v11951, 5
      %v12040 = vrot.slane %v12039, 4
      %v12041 = vrot.slane %v11222, 5
      %v12042 = vsel %vm3576, %v12040, %v12041
      %v12043 = vrot.slane %v12041, 4
      %v12044 = vrot.slane %v11223, 5
      %v12045 = vsel %vm3576, %v12043, %v12044
      %v12046 = vrot.slane %v11952, 5
      %v12047 = vrot.slane %v12046, 4
      %v12048 = vrot.slane %v11225, 5
      %v12049 = vsel %vm3576, %v12047, %v12048
      %v12050 = vrot.slane %v12048, 4
      %v12051 = vrot.slane %v11226, 5
      %v12052 = vsel %vm3576, %v12050, %v12051
      %v12053 = vrot.slane %v11953, 5
      %v12054 = vrot.slane %v12053, 4
      %v12055 = vrot.slane %v11228, 5
      %v12056 = vsel %vm3576, %v12054, %v12055
      %v12057 = vrot.slane %v12055, 4
      %v12058 = vrot.slane %v11229, 5
      %v12059 = vsel %vm3576, %v12057, %v12058
      %v12060 = vrot.slane %v11954, 5
      %v12061 = vrot.slane %v12060, 4
      %v12062 = vrot.slane %v11231, 5
      %v12063 = vsel %vm3576, %v12061, %v12062
      %v12064 = vrot.slane %v12062, 4
      %v12065 = vrot.slane %v11232, 5
      %v12066 = vsel %vm3576, %v12064, %v12065
      %v12067 = vrot.slane %v11955, 5
      %v12068 = vrot.slane %v12067, 4
      %v12069 = vrot.slane %v11234, 5
      %v12070 = vsel %vm3576, %v12068, %v12069
      %v12071 = vrot.slane %v12069, 4
      %v12072 = vrot.slane %v11235, 5
      %v12073 = vsel %vm3576, %v12071, %v12072
      %v12074 = vrot.slane %v11956, 5
      %v12075 = vrot.slane %v12074, 4
      %v12076 = vrot.slane %v11237, 5
      %v12077 = vsel %vm3576, %v12075, %v12076
      %v12078 = vrot.slane %v12076, 4
      %v12079 = vrot.slane %v11238, 5
      %v12080 = vsel %vm3576, %v12078, %v12079
      %v12081 = vrot.slane %v11957, 5
      %v12082 = vrot.slane %v12081, 4
      %v12083 = vrot.slane %v11240, 5
      %v12084 = vsel %vm3576, %v12082, %v12083
      %v12085 = vrot.slane %v12083, 4
      %v12086 = vrot.slane %v11241, 5
      %v12087 = vsel %vm3576, %v12085, %v12086
      %v12088 = vrot.slane %v11958, 5
      %v12089 = vrot.slane %v12088, 4
      %v12090 = vrot.slane %v11243, 5
      %v12091 = vsel %vm3576, %v12089, %v12090
      %v12092 = vrot.slane %v12090, 4
      %v12093 = vrot.slane %v11244, 5
      %v12094 = vsel %vm3576, %v12092, %v12093
      %v12095 = vrot.slane %v11959, 5
      %v12096 = vrot.slane %v12095, 4
      %v12097 = vrot.slane %v11246, 5
      %v12098 = vsel %vm3576, %v12096, %v12097
      %v12099 = vrot.slane %v12097, 4
      %v12100 = vrot.slane %v11247, 5
      %v12101 = vsel %vm3576, %v12099, %v12100
      %v12102 = vrot.slane %v11960, 5
      %v12103 = vrot.slane %v12102, 4
      %v12104 = vrot.slane %v11249, 5
      %v12105 = vsel %vm3576, %v12103, %v12104
      %v12106 = vrot.slane %v12104, 4
      %v12107 = vrot.slane %v11250, 5
      %v12108 = vsel %vm3576, %v12106, %v12107
      %v12109 = vrot.slane %v11961, 5
      %v12110 = vrot.slane %v12109, 4
      %v12111 = vrot.slane %v11252, 5
      %v12112 = vsel %vm3576, %v12110, %v12111
      %v12113 = vrot.slane %v12111, 4
      %v12114 = vrot.slane %v11253, 5
      %v12115 = vsel %vm3576, %v12113, %v12114
      %v12116 = vrot.slane %v11962, 5
      %v12117 = vrot.slane %v12116, 4
      %v12118 = vrot.slane %v11255, 5
      %v12119 = vsel %vm3576, %v12117, %v12118
      %v12120 = vrot.slane %v12118, 4
      %v12121 = vrot.slane %v11256, 5
      %v12122 = vsel %vm3576, %v12120, %v12121
      %s12123 = scalar_lea.vmem %s7, 128
      %v12124 = vld [vmem:[%s12123] sm:$0xf]
      %v12125 = vld [vmem:[%s12123 + $0x4] sm:$0xf]
      %v12126 = vld [vmem:[%s12123 + $0x8] sm:$0xf]
      %v12127 = vld [vmem:[%s12123 + $0xc] sm:$0xf]
      %v12128 = vunpack.c.l.b16 %v12014
      %v12129 = vunpack.c.l.b16 %v12017
      %v12130 = vunpack.c.l.b16 %v12021
      %v12131 = vunpack.c.l.b16 %v12024
      %v12132 = vunpack.c.l.b16 %v12028
      %v12133 = vunpack.c.l.b16 %v12031
      %v12134 = vunpack.c.l.b16 %v12035
      %v12135 = vunpack.c.l.b16 %v12038
      %v12136 = vunpack.c.l.b16 %v12042
      %v12137 = vunpack.c.l.b16 %v12045
      %v12138 = vunpack.c.l.b16 %v12049
      %v12139 = vunpack.c.l.b16 %v12052
      %v12140 = vunpack.c.l.b16 %v12056
      %v12141 = vunpack.c.l.b16 %v12059
      %v12142 = vunpack.c.l.b16 %v12063
      %v12143 = vunpack.c.l.b16 %v12066
      %v12144 = vunpack.c.l.b16 %v12070
      %v12145 = vunpack.c.l.b16 %v12073
      %v12146 = vunpack.c.l.b16 %v12077
      %v12147 = vunpack.c.l.b16 %v12080
      %v12148 = vunpack.c.l.b16 %v12084
      %v12149 = vunpack.c.l.b16 %v12087
      %v12150 = vunpack.c.l.b16 %v12091
      %v12151 = vunpack.c.l.b16 %v12094
      %v12152 = vunpack.c.l.b16 %v12098
      %v12153 = vunpack.c.l.b16 %v12101
      %v12154 = vunpack.c.l.b16 %v12105
      %v12155 = vunpack.c.l.b16 %v12108
      %v12156 = vunpack.c.l.b16 %v12112
      %v12157 = vunpack.c.l.b16 %v12115
      %v12158 = vunpack.c.l.b16 %v12119
      %v12159 = vunpack.c.l.b16 %v12122
      %v12160 = vpack.c.b16 %v12129, %v12128
      %v12161 = vpack.c.b16 %v12131, %v12130
      %v12162 = vpack.c.b16 %v12133, %v12132
      %v12163 = vpack.c.b16 %v12135, %v12134
      %v12164 = vpack.c.b16 %v12137, %v12136
      %v12165 = vpack.c.b16 %v12139, %v12138
      %v12166 = vpack.c.b16 %v12141, %v12140
      %v12167 = vpack.c.b16 %v12143, %v12142
      %v12168 = vpack.c.b16 %v12145, %v12144
      %v12169 = vpack.c.b16 %v12147, %v12146
      %v12170 = vpack.c.b16 %v12149, %v12148
      %v12171 = vpack.c.b16 %v12151, %v12150
      %v12172 = vpack.c.b16 %v12153, %v12152
      %v12173 = vpack.c.b16 %v12155, %v12154
      %v12174 = vpack.c.b16 %v12157, %v12156
      %v12175 = vpack.c.b16 %v12159, %v12158
      %v12180 = vunpack.c.l.b16 %v12124
      %v12181 = vunpack.c.l.b16 %v12125
      %v12182 = vunpack.c.l.b16 %v12126
      %v12183 = vunpack.c.l.b16 %v12127
      %v12184 = vpack.c.b16 %v12181, %v12180
      %v12185 = vpack.c.b16 %v12183, %v12182
      %v12189 = vsel %vm8271, %v12160, 0
      %v12192 = vsel %vm8271, %v12161, 0
      %v12195 = vsel %vm8271, %v12162, 0
      %v12198 = vsel %vm8271, %v12163, 0
      %v12201 = vsel %vm8271, %v12164, 0
      %v12204 = vsel %vm8271, %v12165, 0
      %v12207 = vsel %vm8271, %v12166, 0
      %v12210 = vsel %vm8271, %v12167, 0
      %v12213 = vsel %vm8271, %v12168, 0
      %v12216 = vsel %vm8271, %v12169, 0
      %v12219 = vsel %vm8271, %v12170, 0
      %v12222 = vsel %vm8271, %v12171, 0
      %v12225 = vsel %vm8271, %v12172, 0
      %v12228 = vsel %vm8271, %v12173, 0
      %v12231 = vsel %vm8271, %v12174, 0
      %v12234 = vsel %vm8271, %v12175, 0
      %12236 = vmatprep.subr.bf16.mxu0 0
      %12237 = vmatpush1.bf16.msra.mxu0 0
      %12238 = vmatprep.subr.bf16.mxu0 0
      %12239 = vmatpush1.bf16.msra.mxu0 0
      %12240 = vmatprep.subr.bf16.mxu0 0
      %12241 = vmatpush1.bf16.msra.mxu0 0
      %12242 = vmatprep.subr.bf16.mxu0 0
      %12243 = vmatpush1.bf16.msra.mxu0 0
      %12244 = vmatprep.subr.bf16.mxu0 0
      %12245 = vmatpush1.bf16.msra.mxu0 0
      %12246 = vmatprep.subr.bf16.mxu0 0
      %12247 = vmatpush1.bf16.msra.mxu0 0
      %12248 = vmatprep.subr.bf16.mxu0 0
      %12249 = vmatpush1.bf16.msra.mxu0 %v12185
      %12250 = vmatprep.subr.bf16.mxu0 0
      %12251 = vmatpush1.bf16.msra.mxu0 %v12184
      %12252 = vmatprep.subr.bf16.mxu0 0
      %12253 = vmatpush2.bf16.msra.mxu0 0
      %12254 = vmatprep.subr.bf16.mxu0 0
      %12255 = vmatpush2.bf16.msra.mxu0 0
      %12256 = vmatprep.subr.bf16.mxu0 0
      %12257 = vmatpush2.bf16.msra.mxu0 0
      %12258 = vmatprep.subr.bf16.mxu0 0
      %12259 = vmatpush2.bf16.msra.mxu0 0
      %12260 = vmatprep.subr.bf16.mxu0 0
      %12261 = vmatpush2.bf16.msra.mxu0 0
      %12262 = vmatprep.subr.bf16.mxu0 0
      %12263 = vmatpush2.bf16.msra.mxu0 0
      %12264 = vmatprep.subr.bf16.mxu0 0
      %12265 = vmatpush2.bf16.msra.mxu0 0
      %12266 = vmatprep.subr.bf16.mxu0 0
      %12267 = vmatpush2.bf16.msra.mxu0 0
      %12268 = vmatprep.mubr.bf16.mxu0 0
      %12269 = vmatmul.mubr.bf16.gmra.mxu0 %v12189
      %v12270 = vpop.f32.mrf.mxu0
      %v12271 = vadd.f32 0.0, %v12270
      %v12272 = vpop.f32.mrf.mxu0
      %v12273 = vpop.f32.mrf.mxu0
      %v12274 = vadd.f32 0.0, %v12273
      %v12275 = vpop.f32.mrf.mxu0
      %12276 = vmatprep.mubr.bf16.mxu0 0
      %12277 = vmatmul.mubr.bf16.gmra.mxu0 %v12192
      %v12278 = vpop.f32.mrf.mxu0
      %v12279 = vadd.f32 0.0, %v12278
      %v12280 = vpop.f32.mrf.mxu0
      %v12281 = vpop.f32.mrf.mxu0
      %v12282 = vadd.f32 0.0, %v12281
      %v12283 = vpop.f32.mrf.mxu0
      %12284 = vmatprep.mubr.bf16.mxu0 0
      %12285 = vmatmul.mubr.bf16.gmra.mxu0 %v12195
      %v12286 = vpop.f32.mrf.mxu0
      %v12287 = vadd.f32 0.0, %v12286
      %v12288 = vpop.f32.mrf.mxu0
      %v12289 = vpop.f32.mrf.mxu0
      %v12290 = vadd.f32 0.0, %v12289
      %v12291 = vpop.f32.mrf.mxu0
      %12292 = vmatprep.mubr.bf16.mxu0 0
      %12293 = vmatmul.mubr.bf16.gmra.mxu0 %v12198
      %v12294 = vpop.f32.mrf.mxu0
      %v12295 = vadd.f32 0.0, %v12294
      %v12296 = vpop.f32.mrf.mxu0
      %v12297 = vpop.f32.mrf.mxu0
      %v12298 = vadd.f32 0.0, %v12297
      %v12299 = vpop.f32.mrf.mxu0
      %12300 = vmatprep.mubr.bf16.mxu0 0
      %12301 = vmatmul.mubr.bf16.gmra.mxu0 %v12201
      %v12302 = vpop.f32.mrf.mxu0
      %v12303 = vadd.f32 0.0, %v12302
      %v12304 = vpop.f32.mrf.mxu0
      %v12305 = vpop.f32.mrf.mxu0
      %v12306 = vadd.f32 0.0, %v12305
      %v12307 = vpop.f32.mrf.mxu0
      %12308 = vmatprep.mubr.bf16.mxu0 0
      %12309 = vmatmul.mubr.bf16.gmra.mxu0 %v12204
      %v12310 = vpop.f32.mrf.mxu0
      %v12311 = vadd.f32 0.0, %v12310
      %v12312 = vpop.f32.mrf.mxu0
      %v12313 = vpop.f32.mrf.mxu0
      %v12314 = vadd.f32 0.0, %v12313
      %v12315 = vpop.f32.mrf.mxu0
      %12316 = vmatprep.mubr.bf16.mxu0 0
      %12317 = vmatmul.mubr.bf16.gmra.mxu0 %v12207
      %v12318 = vpop.f32.mrf.mxu0
      %v12319 = vadd.f32 0.0, %v12318
      %v12320 = vpop.f32.mrf.mxu0
      %v12321 = vpop.f32.mrf.mxu0
      %v12322 = vadd.f32 0.0, %v12321
      %v12323 = vpop.f32.mrf.mxu0
      %12324 = vmatprep.mubr.bf16.mxu0 0
      %12325 = vmatmul.mubr.bf16.gmra.mxu0 %v12210
      %v12326 = vpop.f32.mrf.mxu0
      %v12327 = vadd.f32 0.0, %v12326
      %v12328 = vpop.f32.mrf.mxu0
      %v12329 = vpop.f32.mrf.mxu0
      %v12330 = vadd.f32 0.0, %v12329
      %v12331 = vpop.f32.mrf.mxu0
      %12332 = vmatprep.mubr.bf16.mxu0 0
      %12333 = vmatmul.mubr.bf16.gmra.mxu0 %v12213
      %v12334 = vpop.f32.mrf.mxu0
      %v12335 = vadd.f32 0.0, %v12334
      %v12336 = vpop.f32.mrf.mxu0
      %v12337 = vpop.f32.mrf.mxu0
      %v12338 = vadd.f32 0.0, %v12337
      %v12339 = vpop.f32.mrf.mxu0
      %12340 = vmatprep.mubr.bf16.mxu0 0
      %12341 = vmatmul.mubr.bf16.gmra.mxu0 %v12216
      %v12342 = vpop.f32.mrf.mxu0
      %v12343 = vadd.f32 0.0, %v12342
      %v12344 = vpop.f32.mrf.mxu0
      %v12345 = vpop.f32.mrf.mxu0
      %v12346 = vadd.f32 0.0, %v12345
      %v12347 = vpop.f32.mrf.mxu0
      %12348 = vmatprep.mubr.bf16.mxu0 0
      %12349 = vmatmul.mubr.bf16.gmra.mxu0 %v12219
      %v12350 = vpop.f32.mrf.mxu0
      %v12351 = vadd.f32 0.0, %v12350
      %v12352 = vpop.f32.mrf.mxu0
      %v12353 = vpop.f32.mrf.mxu0
      %v12354 = vadd.f32 0.0, %v12353
      %v12355 = vpop.f32.mrf.mxu0
      %12356 = vmatprep.mubr.bf16.mxu0 0
      %12357 = vmatmul.mubr.bf16.gmra.mxu0 %v12222
      %v12358 = vpop.f32.mrf.mxu0
      %v12359 = vadd.f32 0.0, %v12358
      %v12360 = vpop.f32.mrf.mxu0
      %v12361 = vpop.f32.mrf.mxu0
      %v12362 = vadd.f32 0.0, %v12361
      %v12363 = vpop.f32.mrf.mxu0
      %12364 = vmatprep.mubr.bf16.mxu0 0
      %12365 = vmatmul.mubr.bf16.gmra.mxu0 %v12225
      %v12366 = vpop.f32.mrf.mxu0
      %v12367 = vadd.f32 0.0, %v12366
      %v12368 = vpop.f32.mrf.mxu0
      %v12369 = vpop.f32.mrf.mxu0
      %v12370 = vadd.f32 0.0, %v12369
      %v12371 = vpop.f32.mrf.mxu0
      %12372 = vmatprep.mubr.bf16.mxu0 0
      %12373 = vmatmul.mubr.bf16.gmra.mxu0 %v12228
      %v12374 = vpop.f32.mrf.mxu0
      %v12375 = vadd.f32 0.0, %v12374
      %v12376 = vpop.f32.mrf.mxu0
      %v12377 = vpop.f32.mrf.mxu0
      %v12378 = vadd.f32 0.0, %v12377
      %v12379 = vpop.f32.mrf.mxu0
      %12380 = vmatprep.mubr.bf16.mxu0 0
      %12381 = vmatmul.mubr.bf16.gmra.mxu0 %v12231
      %v12382 = vpop.f32.mrf.mxu0
      %v12383 = vadd.f32 0.0, %v12382
      %v12384 = vpop.f32.mrf.mxu0
      %v12385 = vpop.f32.mrf.mxu0
      %v12386 = vadd.f32 0.0, %v12385
      %v12387 = vpop.f32.mrf.mxu0
      %12388 = vmatprep.mubr.bf16.mxu0 0
      %12389 = vmatmul.mubr.bf16.gmra.mxu0 %v12234
      %v12390 = vpop.f32.mrf.mxu0
      %v12391 = vadd.f32 0.0, %v12390
      %v12392 = vpop.f32.mrf.mxu0
      %v12393 = vpop.f32.mrf.mxu0
      %v12394 = vadd.f32 0.0, %v12393
      %v12395 = vpop.f32.mrf.mxu0
      %12396 = vdwg.mxu0
      %v12397 = vadd.f32 %v11915, %v12271
      %v12398 = vadd.f32 %v11916, %v12274
      %v12399 = vadd.f32 %v11917, %v12279
      %v12400 = vadd.f32 %v11918, %v12282
      %v12401 = vadd.f32 %v11919, %v12287
      %v12402 = vadd.f32 %v11920, %v12290
      %v12403 = vadd.f32 %v11921, %v12295
      %v12404 = vadd.f32 %v11922, %v12298
      %v12405 = vadd.f32 %v11923, %v12303
      %v12406 = vadd.f32 %v11924, %v12306
      %v12407 = vadd.f32 %v11925, %v12311
      %v12408 = vadd.f32 %v11926, %v12314
      %v12409 = vadd.f32 %v11927, %v12319
      %v12410 = vadd.f32 %v11928, %v12322
      %v12411 = vadd.f32 %v11929, %v12327
      %v12412 = vadd.f32 %v11930, %v12330
      %v12413 = vadd.f32 %v11931, %v12335
      %v12414 = vadd.f32 %v11932, %v12338
      %v12415 = vadd.f32 %v11933, %v12343
      %v12416 = vadd.f32 %v11934, %v12346
      %v12417 = vadd.f32 %v11935, %v12351
      %v12418 = vadd.f32 %v11936, %v12354
      %v12419 = vadd.f32 %v11937, %v12359
      %v12420 = vadd.f32 %v11938, %v12362
      %v12421 = vadd.f32 %v11939, %v12367
      %v12422 = vadd.f32 %v11940, %v12370
      %v12423 = vadd.f32 %v11941, %v12375
      %v12424 = vadd.f32 %v11942, %v12378
      %v12425 = vadd.f32 %v11943, %v12383
      %v12426 = vadd.f32 %v11944, %v12386
      %v12427 = vadd.f32 %v11945, %v12391
      %v12428 = vadd.f32 %v11946, %v12394
      %v12429 = vld [vmem:[%s8] sm:$0x1]
      %v12431 = vlaneseq
      %v12432 = vshrl.u32 %v12431, 7
      %v12433 = vsub.s32 0, %v12432
      %v12434 = vrot.slane %v12429, %v12433
      %v12436 = vadd.f32 %v12397, %v12434
      %v12437 = vadd.f32 %v12398, %v12434
      %v12438 = vadd.f32 %v12399, %v12434
      %v12439 = vadd.f32 %v12400, %v12434
      %v12440 = vadd.f32 %v12401, %v12434
      %v12441 = vadd.f32 %v12402, %v12434
      %v12442 = vadd.f32 %v12403, %v12434
      %v12443 = vadd.f32 %v12404, %v12434
      %v12444 = vadd.f32 %v12405, %v12434
      %v12445 = vadd.f32 %v12406, %v12434
      %v12446 = vadd.f32 %v12407, %v12434
      %v12447 = vadd.f32 %v12408, %v12434
      %v12448 = vadd.f32 %v12409, %v12434
      %v12449 = vadd.f32 %v12410, %v12434
      %v12450 = vadd.f32 %v12411, %v12434
      %v12451 = vadd.f32 %v12412, %v12434
      %v12452 = vadd.f32 %v12413, %v12434
      %v12453 = vadd.f32 %v12414, %v12434
      %v12454 = vadd.f32 %v12415, %v12434
      %v12455 = vadd.f32 %v12416, %v12434
      %v12456 = vadd.f32 %v12417, %v12434
      %v12457 = vadd.f32 %v12418, %v12434
      %v12458 = vadd.f32 %v12419, %v12434
      %v12459 = vadd.f32 %v12420, %v12434
      %v12460 = vadd.f32 %v12421, %v12434
      %v12461 = vadd.f32 %v12422, %v12434
      %v12462 = vadd.f32 %v12423, %v12434
      %v12463 = vadd.f32 %v12424, %v12434
      %v12464 = vadd.f32 %v12425, %v12434
      %v12465 = vadd.f32 %v12426, %v12434
      %v12466 = vadd.f32 %v12427, %v12434
      %v12467 = vadd.f32 %v12428, %v12434
      %v12468 = vmax.f32 %v12436, 0.0
      %v12469 = vmax.f32 %v12437, 0.0
      %v12470 = vmax.f32 %v12438, 0.0
      %v12471 = vmax.f32 %v12439, 0.0
      %v12472 = vmax.f32 %v12440, 0.0
      %v12473 = vmax.f32 %v12441, 0.0
      %v12474 = vmax.f32 %v12442, 0.0
      %v12475 = vmax.f32 %v12443, 0.0
      %v12476 = vmax.f32 %v12444, 0.0
      %v12477 = vmax.f32 %v12445, 0.0
      %v12478 = vmax.f32 %v12446, 0.0
      %v12479 = vmax.f32 %v12447, 0.0
      %v12480 = vmax.f32 %v12448, 0.0
      %v12481 = vmax.f32 %v12449, 0.0
      %v12482 = vmax.f32 %v12450, 0.0
      %v12483 = vmax.f32 %v12451, 0.0
      %v12484 = vmax.f32 %v12452, 0.0
      %v12485 = vmax.f32 %v12453, 0.0
      %v12486 = vmax.f32 %v12454, 0.0
      %v12487 = vmax.f32 %v12455, 0.0
      %v12488 = vmax.f32 %v12456, 0.0
      %v12489 = vmax.f32 %v12457, 0.0
      %v12490 = vmax.f32 %v12458, 0.0
      %v12491 = vmax.f32 %v12459, 0.0
      %v12492 = vmax.f32 %v12460, 0.0
      %v12493 = vmax.f32 %v12461, 0.0
      %v12494 = vmax.f32 %v12462, 0.0
      %v12495 = vmax.f32 %v12463, 0.0
      %v12496 = vmax.f32 %v12464, 0.0
      %v12497 = vmax.f32 %v12465, 0.0
      %v12498 = vmax.f32 %v12466, 0.0
      %v12499 = vmax.f32 %v12467, 0.0
      %v12500 = vld [vmem:[%s9] sm:$0xf]
      %12501 = vxpose.xlu0.b32.start [1/16] %v12468, 128
      %12502 = vxpose.xlu0.b32.cont [2/16] %v12469, 128
      %12503 = vxpose.xlu0.b32.cont [3/16] %v12470, 128
      %12504 = vxpose.xlu0.b32.cont [4/16] %v12471, 128
      %12505 = vxpose.xlu0.b32.cont [5/16] %v12472, 128
      %12506 = vxpose.xlu0.b32.cont [6/16] %v12473, 128
      %12507 = vxpose.xlu0.b32.cont [7/16] %v12474, 128
      %12508 = vxpose.xlu0.b32.cont [8/16] %v12475, 128
      %12509 = vxpose.xlu0.b32.cont [9/16] %v12476, 128
      %12510 = vxpose.xlu0.b32.cont [10/16] %v12477, 128
      %12511 = vxpose.xlu0.b32.cont [11/16] %v12478, 128
      %12512 = vxpose.xlu0.b32.cont [12/16] %v12479, 128
      %12513 = vxpose.xlu0.b32.cont [13/16] %v12480, 128
      %12514 = vxpose.xlu0.b32.cont [14/16] %v12481, 128
      %12515 = vxpose.xlu0.b32.cont [15/16] %v12482, 128
      %12516 = vxpose.xlu0.b32.end [16/16] %v12483, 128
      %v12517 = vpop.trf.xlu0
      %v12518 = vpop.trf.xlu0
      %v12519 = vpop.trf.xlu0
      %v12520 = vpop.trf.xlu0
      %v12521 = vpop.trf.xlu0
      %v12522 = vpop.trf.xlu0
      %v12523 = vpop.trf.xlu0
      %v12524 = vpop.trf.xlu0
      %v12525 = vpop.trf.xlu0
      %v12526 = vpop.trf.xlu0
      %v12527 = vpop.trf.xlu0
      %v12528 = vpop.trf.xlu0
      %v12529 = vpop.trf.xlu0
      %v12530 = vpop.trf.xlu0
      %v12531 = vpop.trf.xlu0
      %v12532 = vpop.trf.xlu0
      %12533 = vxpose.xlu0.b32.start [1/16] %v12484, 128
      %12534 = vxpose.xlu0.b32.cont [2/16] %v12485, 128
      %12535 = vxpose.xlu0.b32.cont [3/16] %v12486, 128
      %12536 = vxpose.xlu0.b32.cont [4/16] %v12487, 128
      %12537 = vxpose.xlu0.b32.cont [5/16] %v12488, 128
      %12538 = vxpose.xlu0.b32.cont [6/16] %v12489, 128
      %12539 = vxpose.xlu0.b32.cont [7/16] %v12490, 128
      %12540 = vxpose.xlu0.b32.cont [8/16] %v12491, 128
      %12541 = vxpose.xlu0.b32.cont [9/16] %v12492, 128
      %12542 = vxpose.xlu0.b32.cont [10/16] %v12493, 128
      %12543 = vxpose.xlu0.b32.cont [11/16] %v12494, 128
      %12544 = vxpose.xlu0.b32.cont [12/16] %v12495, 128
      %12545 = vxpose.xlu0.b32.cont [13/16] %v12496, 128
      %12546 = vxpose.xlu0.b32.cont [14/16] %v12497, 128
      %12547 = vxpose.xlu0.b32.cont [15/16] %v12498, 128
      %12548 = vxpose.xlu0.b32.end [16/16] %v12499, 128
      %v12549 = vpop.trf.xlu0
      %v12550 = vpop.trf.xlu0
      %v12551 = vpop.trf.xlu0
      %v12552 = vpop.trf.xlu0
      %v12553 = vpop.trf.xlu0
      %v12554 = vpop.trf.xlu0
      %v12555 = vpop.trf.xlu0
      %v12556 = vpop.trf.xlu0
      %v12557 = vpop.trf.xlu0
      %v12558 = vpop.trf.xlu0
      %v12559 = vpop.trf.xlu0
      %v12560 = vpop.trf.xlu0
      %v12561 = vpop.trf.xlu0
      %v12562 = vpop.trf.xlu0
      %v12563 = vpop.trf.xlu0
      %v12564 = vpop.trf.xlu0
      %v12565 = vpack.c.bf16 %v12518, %v12517
      %v12566 = vpack.c.bf16 %v12550, %v12549
      %v12567 = vpack.c.bf16 %v12520, %v12519
      %v12568 = vpack.c.bf16 %v12552, %v12551
      %v12569 = vld [vmem:[%s10] sm:$0xff]
      %12571 = vset.pattern.permute.xlu0 0
      %12572 = vperm.xlu0 %12571, %v12569
      %v12573 = vpop.permute.xlu0 %12572
      %v12576 = vsel %vm8271, %v12500, 0
      %12578 = vmatprep.subr.bf16.mxu0 0
      %12579 = vmatpush1.bf16.msra.mxu0 0
      %12580 = vmatprep.subr.bf16.mxu0 0
      %12581 = vmatpush1.bf16.msra.mxu0 0
      %12582 = vmatprep.subr.bf16.mxu0 0
      %12583 = vmatpush1.bf16.msra.mxu0 0
      %12584 = vmatprep.subr.bf16.mxu0 0
      %12585 = vmatpush1.bf16.msra.mxu0 0
      %12586 = vmatprep.subr.bf16.mxu0 0
      %12587 = vmatpush1.bf16.msra.mxu0 0
      %12588 = vmatprep.subr.bf16.mxu0 0
      %12589 = vmatpush1.bf16.msra.mxu0 0
      %12590 = vmatprep.subr.bf16.mxu0 %v12568
      %12591 = vmatpush1.bf16.msra.mxu0 %v12567
      %12592 = vmatprep.subr.bf16.mxu0 %v12566
      %12593 = vmatpush1.bf16.msra.mxu0 %v12565
      %12594 = vmatprep.subr.bf16.mxu0 0
      %12595 = vmatpush2.bf16.msra.mxu0 0
      %12596 = vmatprep.subr.bf16.mxu0 0
      %12597 = vmatpush2.bf16.msra.mxu0 0
      %12598 = vmatprep.subr.bf16.mxu0 0
      %12599 = vmatpush2.bf16.msra.mxu0 0
      %12600 = vmatprep.subr.bf16.mxu0 0
      %12601 = vmatpush2.bf16.msra.mxu0 0
      %12602 = vmatprep.subr.bf16.mxu0 0
      %12603 = vmatpush2.bf16.msra.mxu0 0
      %12604 = vmatprep.subr.bf16.mxu0 0
      %12605 = vmatpush2.bf16.msra.mxu0 0
      %12606 = vmatprep.subr.bf16.mxu0 0
      %12607 = vmatpush2.bf16.msra.mxu0 0
      %12608 = vmatprep.subr.bf16.mxu0 0
      %12609 = vmatpush2.bf16.msra.mxu0 0
      %12610 = vmatprep.mubr.bf16.mxu0 0
      %12611 = vmatmul.mubr.bf16.gmra.mxu0 %v12576
      %v12612 = vpop.f32.mrf.mxu0
      %v12613 = vadd.f32 %v12573, %v12612
      %v12614 = vpop.f32.mrf.mxu0
      %v12615 = vadd.f32 %v12573, %v12614
      %v12616 = vpop.f32.mrf.mxu0
      %v12617 = vpop.f32.mrf.mxu0
      %12618 = vdwg.mxu0
      %12619 = vst [vmem:[%s406] sm:$0x1f] %v12613
      %12620 = vst [vmem:[%s406 + $0x8] sm:$0x1f] %v12615
      %p12621 = scmp.lt.s32.totalorder %s22, 1
      %s12622 = scalar_select %p12621, %s22, 1
      %s12623 = smul.addr %s12622, 2
      %s12624 = smul.addr %s12623, 8
      %s12625 = scalar_lea.vmem %s11, %s12624
      // Predicated region
      $region65: #{decoder_forward.1} parent=63 // pred_check
        %p12626 = pneg %p281
      $region66: #{decoder_forward.1} parent=63 // pred_check_branch
        %12628 = sbr.rel (%p12626) target = $region68
      $region67: #{decoder_forward.1} parent=63 // pred_region
        _
      $region68: #{decoder_forward.1} parent=63 // pred_fallthru
        _
    $region64: #{decoder_forward.1} parent=5 // pred_fallthru
      _
    %p12629 = scmp.le.s32.totalorder 2, %s17
    // Predicated region
    $region69: #{decoder_forward.1} parent=5 // pred_check
      %p12630 = pneg %p12629
    $region70: #{decoder_forward.1} parent=5 // pred_check_branch
      %12632 = sbr.rel (%p12630) target = $region72
    $region71: #{decoder_forward.1} parent=5 // pred_region
      %s12633 = ssub.s32 %s17, 2
      // Predicated region
      $region73: #{decoder_forward.1} parent=71 // pred_check
        %p12634 = pneg %p287
      $region74: #{decoder_forward.1} parent=71 // pred_check_branch
        %12636 = sbr.rel (%p12634) target = $region76
      $region75: #{decoder_forward.1} parent=71 // pred_region
        %p12637 = scmp.lt.s32.totalorder %s23, 1
        %s12638 = scalar_select %p12637, %s23, 1
        %s12639 = smul.addr %s12638, 2
        %s12640 = smul.addr %s12639, 8
        %s12641 = scalar_lea.vmem %s11, %s12640
      $region76: #{decoder_forward.1} parent=71 // pred_fallthru
        _
    $region72: #{decoder_forward.1} parent=5 // pred_fallthru
      _
  $region6: #{decoder_forward.1} parent=0 // loop_footer
    %s21 = sadd.s32 1, %s17
  $region7: #{decoder_forward.1} parent=0 // loop_footer_branch
    %16 = sbr.rel target = $region3
  $region8: #{decoder_forward.1} parent=0 // loop_exit
    _

</llo_original>
